<compile_context>
chip_gen: v7x
topology: tpu7x:2x2x1
jax: 0.10.0
libtpu: 0.0.40
codegen_flags: <defaults>
</compile_context>

<pallas_src>
import functools

import jax
import jax.numpy as jnp
from jax.experimental import pallas as pl
from jax.experimental.pallas import tpu as pltpu

EPS = 1e-5                      # nn.BatchNorm1d default eps
LANE = 128                      # pad channel dims to multiples of this (lane-dense)
HALO = 8                        # extra rows staged past the window for the last taps
TILE_L = 2048                   # length positions per tile (bf16 blocks, fits v7x VMEM)
VMEM_LIMIT = 48 * 1024 * 1024   # below v7x's 64 MiB physical, raised vs. 32 MiB default


def _round_up(n, m):
    return ((n + m - 1) // m) * m


def _length_tiling(lout):
    """Tile length (multiple of 8), padded length, #tiles, valid rows in last tile."""
    tl = min(TILE_L, _round_up(lout, 8))
    lout_p = _round_up(lout, tl)
    nm = lout_p // tl
    tail_valid = lout - (nm - 1) * tl
    return tl, lout_p, nm, tail_valid


def _mosaic(semantics):
    return pltpu.CompilerParams(dimension_semantics=semantics,
                                vmem_limit_bytes=VMEM_LIMIT)


# ---------------------------------------------------------------------------
# Pass A: conv (folded-tap matmul) + per-batch per-channel sum / sum-of-squares
# ---------------------------------------------------------------------------
def _conv_stats_kernel(cur_ref, halo_ref, w_ref, y_ref, sum_ref, ssq_ref, xbuf,
                       *, K, stride, tl, S_in, tail_valid, nm, folded):
    m = pl.program_id(1)

    @pl.when(m == 0)
    def _init():
        sum_ref[...] = jnp.zeros_like(sum_ref)
        ssq_ref[...] = jnp.zeros_like(ssq_ref)

    # Stage current window + halo once; taps are then plain (strided) slices.
    # Scratch kept f32 so strided sublane reads stay on the proven path.
    xbuf[0:S_in, :] = cur_ref[0].astype(xbuf.dtype)
    xbuf[S_in:S_in + HALO, :] = halo_ref[0].astype(xbuf.dtype)

    def tap(k):
        if stride == 1:
            xk = xbuf[pl.ds(k, tl), :]
        else:
            xk = xbuf[pl.ds(k, tl, stride=stride), :]
        return xk.astype(jnp.bfloat16)

    if folded:
        # Mini-im2col: one bf16 MXU matmul, contraction = K*Cin (lane-aligned concat).
        xcat = tap(0) if K == 1 else jnp.concatenate([tap(k) for k in range(K)], axis=1)
        acc = jnp.dot(xcat, w_ref[...], preferred_element_type=jnp.float32)
    else:
        # Tiny-Cin fallback (stem, Cin=input_channels): per-tap accumulation.
        cout = y_ref.shape[-1]
        acc = jnp.zeros((tl, cout), jnp.float32)
        for k in range(K):
            acc = acc + jnp.dot(tap(k), w_ref[k], preferred_element_type=jnp.float32)

    y_ref[0] = acc.astype(y_ref.dtype)          # bf16 hand-off to pass B

    def _accum(vals):
        sum_ref[0] += jnp.sum(vals, axis=0, keepdims=True)
        ssq_ref[0] += jnp.sum(vals * vals, axis=0, keepdims=True)

    if tail_valid == tl:
        _accum(acc)
    else:
        # Ragged tail: mask padded rows out of the BN stats, only on the last tile.
        @pl.when(m == nm - 1)
        def _ragged():
            rows = jax.lax.broadcasted_iota(jnp.int32, (tl, 1), 0)
            _accum(jnp.where(rows < tail_valid, acc, 0.0))

        @pl.when(m != nm - 1)
        def _full():
            _accum(acc)


# ---------------------------------------------------------------------------
# Pass B: y * scale + shift (+ residual) (+ ReLU)   -- scale/shift fold BN params
# ---------------------------------------------------------------------------
def _bn_apply_kernel(*refs, relu, has_res):
    if has_res:
        y_ref, sc_ref, sh_ref, r_ref, o_ref = refs
    else:
        y_ref, sc_ref, sh_ref, o_ref = refs
        r_ref = None
    out = y_ref[0].astype(jnp.float32) * sc_ref[...] + sh_ref[...]
    if r_ref is not None:
        out = out + r_ref[0].astype(jnp.float32)
    if relu:
        out = jnp.maximum(out, 0.0)
    o_ref[0] = out.astype(o_ref.dtype)


def conv1d_bn_act(x, w_pt, gamma, beta, *, stride, pad, residual=None, relu=True):
    """x: (B, L, Cin) channels-last bf16 (Cin possibly already 128-padded);
       w_pt: (Cout, Cin_w, K) PyTorch layout.  Conv bias is omitted on purpose:
       training-mode BN's batch-mean subtraction cancels it exactly."""
    B, L, Cin = x.shape
    Cout, Cin_w, K = w_pt.shape
    cout_p = _round_up(Cout, LANE)

    # Weight layout: folded -> (K*Cin, cout_p) rows ordered [tap, channel] to match
    # the in-kernel lane concat; stem fallback keeps (K, Cin, cout_p).
    w = jnp.transpose(w_pt, (2, 1, 0))                               # (K, Cin_w, Cout)
    w = jnp.pad(w, ((0, 0), (0, Cin - Cin_w), (0, cout_p - Cout)))
    folded = (Cin % LANE == 0)
    if folded:
        w = w.reshape(K * Cin, cout_p)
        w_spec = pl.BlockSpec((K * Cin, cout_p), lambda b, m: (0, 0))
    else:
        w_spec = pl.BlockSpec((K, Cin, cout_p), lambda b, m: (0, 0, 0))
    w = w.astype(jnp.bfloat16)

    Lout = (L + 2 * pad - K) // stride + 1
    tl, Lout_p, nm, tail_valid = _length_tiling(Lout)
    S_in = tl * stride
    Lpad = nm * S_in + HALO
    x_pad = jnp.pad(x.astype(jnp.bfloat16), ((0, 0), (pad, Lpad - pad - L), (0, 0)))

    kernel_a = functools.partial(_conv_stats_kernel, K=K, stride=stride, tl=tl,
                                 S_in=S_in, tail_valid=tail_valid, nm=nm, folded=folded)
    y, ssum_b, ssq_b = pl.pallas_call(
        kernel_a,
        out_shape=(jax.ShapeDtypeStruct((B, Lout_p, cout_p), jnp.bfloat16),
                   jax.ShapeDtypeStruct((B, 1, cout_p), jnp.float32),
                   jax.ShapeDtypeStruct((B, 1, cout_p), jnp.float32)),
        grid=(B, nm),
        in_specs=[pl.BlockSpec((1, S_in, Cin), lambda b, m: (b, m, 0)),
                  pl.BlockSpec((1, HALO, Cin), lambda b, m: (b, (m + 1) * (S_in // HALO), 0)),
                  w_spec],
        out_specs=(pl.BlockSpec((1, tl, cout_p), lambda b, m: (b, m, 0)),
                   pl.BlockSpec((1, 1, cout_p), lambda b, m: (b, 0, 0)),
                   pl.BlockSpec((1, 1, cout_p), lambda b, m: (b, 0, 0))),
        scratch_shapes=[pltpu.VMEM((S_in + HALO, Cin), jnp.float32)],
        compiler_params=_mosaic(("parallel", "arbitrary")),
    )(x_pad, x_pad, w)

    # Tiny wrapper-side BN parameter math (all f32, (1, C)-sized).
    count = float(B * Lout)
    ssum = jnp.sum(ssum_b, axis=0)                                   # (1, cout_p)
    ssq = jnp.sum(ssq_b, axis=0)
    mean = ssum / count
    var = jnp.maximum(ssq / count - mean * mean, 0.0)                # biased variance
    g = jnp.pad(gamma, (0, cout_p - Cout)).reshape(1, cout_p).astype(jnp.float32)
    bt = jnp.pad(beta, (0, cout_p - Cout)).reshape(1, cout_p).astype(jnp.float32)
    scale = g * jax.lax.rsqrt(var + EPS)
    shift = bt - mean * scale

    has_res = residual is not None
    args = [y, scale, shift]
    in_specs = [pl.BlockSpec((1, tl, cout_p), lambda b, m: (b, m, 0)),
                pl.BlockSpec((1, cout_p), lambda b, m: (0, 0)),
                pl.BlockSpec((1, cout_p), lambda b, m: (0, 0))]
    if has_res:
        r = residual.astype(jnp.bfloat16)
        if r.shape[1] != Lout_p:
            r = jnp.pad(r, ((0, 0), (0, Lout_p - r.shape[1]), (0, 0)))
        args.append(r)
        in_specs.append(pl.BlockSpec((1, tl, cout_p), lambda b, m: (b, m, 0)))

    out = pl.pallas_call(
        functools.partial(_bn_apply_kernel, relu=relu, has_res=has_res),
        out_shape=jax.ShapeDtypeStruct((B, Lout_p, cout_p), jnp.bfloat16),
        grid=(B, nm),
        in_specs=in_specs,
        out_specs=pl.BlockSpec((1, tl, cout_p), lambda b, m: (b, m, 0)),
        compiler_params=_mosaic(("parallel", "parallel")),
    )(*args)

    if Lout_p != Lout:
        out = out[:, :Lout, :]
    return out


# ---------------------------------------------------------------------------
# MaxPool1d(kernel=3, stride=2, padding=1): one padded copy, 3 in-kernel taps
# ---------------------------------------------------------------------------
def _maxpool_kernel(cur_ref, halo_ref, o_ref, xbuf, *, tl, S_in):
    xbuf[0:S_in, :] = cur_ref[0].astype(xbuf.dtype)
    xbuf[S_in:S_in + HALO, :] = halo_ref[0].astype(xbuf.dtype)
    t0 = xbuf[pl.ds(0, tl, stride=2), :]
    t1 = xbuf[pl.ds(1, tl, stride=2), :]
    t2 = xbuf[pl.ds(2, tl, stride=2), :]
    o_ref[0] = jnp.maximum(jnp.maximum(t0, t1), t2).astype(o_ref.dtype)


def maxpool1d(x):
    B, L, C = x.shape
    K, stride, pad = 3, 2, 1
    Lout = (L + 2 * pad - K) // stride + 1
    tl, Lout_p, nm, _ = _length_tiling(Lout)
    S_in = tl * stride
    Lpad = nm * S_in + HALO
    # Zero padding is exact here: the input is post-ReLU (>= 0), so max over a window
    # containing a zero pad equals PyTorch's implicit -inf-padded max.
    x_pad = jnp.pad(x.astype(jnp.bfloat16), ((0, 0), (pad, Lpad - pad - L), (0, 0)))
    out = pl.pallas_call(
        functools.partial(_maxpool_kernel, tl=tl, S_in=S_in),
        out_shape=jax.ShapeDtypeStruct((B, Lout_p, C), jnp.bfloat16),
        grid=(B, nm),
        in_specs=[pl.BlockSpec((1, S_in, C), lambda b, m: (b, m, 0)),
                  pl.BlockSpec((1, HALO, C), lambda b, m: (b, (m + 1) * (S_in // HALO), 0))],
        out_specs=pl.BlockSpec((1, tl, C), lambda b, m: (b, m, 0)),
        scratch_shapes=[pltpu.VMEM((S_in + HALO, C), jnp.float32)],
        compiler_params=_mosaic(("parallel", "parallel")),
    )(x_pad, x_pad)
    if Lout_p != Lout:
        out = out[:, :Lout, :]
    return out


# ---------------------------------------------------------------------------
# AdaptiveAvgPool1d(1) + Linear + Sigmoid, tiled over length with a resident acc
# ---------------------------------------------------------------------------
def _gap_fc_kernel(x_ref, w_ref, b_ref, o_ref, acc_ref, *, inv_len):
    m = pl.program_id(0)

    @pl.when(m == 0)
    def _init():
        acc_ref[...] = jnp.zeros_like(acc_ref)

    acc_ref[...] += jnp.sum(x_ref[...].astype(jnp.float32), axis=1)   # (B, C)

    @pl.when(m == pl.num_programs(0) - 1)
    def _fin():
        mean = acc_ref[...] * inv_len
        y = jnp.dot(mean, w_ref[...], preferred_element_type=jnp.float32) + b_ref[...]
        o_ref[...] = 1.0 / (1.0 + jnp.exp(-y))


def gap_fc_sigmoid(x, fc_w, fc_b):
    """x: (B, L, C) channels-last bf16 (C possibly 128-padded); fc_w: (N, C_real)."""
    B, L, C = x.shape
    N, Cw = fc_w.shape
    w = jnp.pad(fc_w, ((0, 0), (0, C - Cw))).T.astype(jnp.float32)     # (C, N)
    b = fc_b.reshape(1, N).astype(jnp.float32)

    tl, L_p, nm, _ = _length_tiling(L)
    x_p = jnp.pad(x.astype(jnp.bfloat16), ((0, 0), (0, L_p - L), (0, 0)))

    return pl.pallas_call(
        functools.partial(_gap_fc_kernel, inv_len=1.0 / float(L)),
        out_shape=jax.ShapeDtypeStruct((B, N), jnp.float32),
        grid=(nm,),
        in_specs=[pl.BlockSpec((B, tl, C), lambda m: (0, m, 0)),
                  pl.BlockSpec((C, N), lambda m: (0, 0)),
                  pl.BlockSpec((1, N), lambda m: (0, 0))],
        out_specs=pl.BlockSpec((B, N), lambda m: (0, 0)),
        scratch_shapes=[pltpu.VMEM((B, C), jnp.float32)],
        compiler_params=_mosaic(("arbitrary",)),
    )(x_p, w, b)


# ---------------------------------------------------------------------------
# Parameter init (mirrors nn.Conv1d / nn.Linear / nn.BatchNorm1d shapes)
# ---------------------------------------------------------------------------
def _conv_block_params(key, cout, cin, k):
    bound = float(cin * k) ** -0.5
    # Conv1d bias intentionally omitted -- followed by training-mode BatchNorm,
    # the per-channel bias is exactly cancelled by the batch-mean subtraction.
    return {
        "w": jax.random.uniform(key, (cout, cin, k), jnp.float32, -bound, bound),
        "gamma": jnp.ones((cout,), jnp.float32),
        "beta": jnp.zeros((cout,), jnp.float32),
    }


def init_resnet1d_params(key, input_channels, num_blocks_list, num_classes=1):
    keys = iter(jax.random.split(key, 256))
    params = {"stem": _conv_block_params(next(keys), 64, input_channels, 7)}
    blocks = []
    in_ch = 64
    for i, num_blocks in enumerate(num_blocks_list):
        out_ch = 64 * 2 ** i
        for j in range(num_blocks):
            downsample = (j == 0 and i > 0)
            blk = {
                "conv1": _conv_block_params(next(keys), out_ch, in_ch, 3),
                "conv2": _conv_block_params(next(keys), out_ch, out_ch, 3),
            }
            if downsample or in_ch != out_ch:
                blk["shortcut"] = _conv_block_params(next(keys), out_ch, in_ch, 1)
            blocks.append(blk)
            in_ch = out_ch
    params["blocks"] = blocks
    kw, kb = jax.random.split(next(keys))
    bound = float(in_ch) ** -0.5
    params["fc_w"] = jax.random.uniform(kw, (num_classes, in_ch), jnp.float32, -bound, bound)
    params["fc_b"] = jax.random.uniform(kb, (num_classes,), jnp.float32, -bound, bound)
    return params


# ---------------------------------------------------------------------------
# Forward pass (mirrors ResNet1D.forward / ResidualBlock.forward, training-mode BN)
# ---------------------------------------------------------------------------
def resnet1d_forward(params, x_ncl, *, num_blocks_list):
    # x_ncl: (B, C, L) PyTorch layout -> channels-last bf16 (B, L, C)
    x = jnp.transpose(x_ncl, (0, 2, 1)).astype(jnp.bfloat16)

    st = params["stem"]
    x = conv1d_bn_act(x, st["w"], st["gamma"], st["beta"], stride=2, pad=3, relu=True)
    x = maxpool1d(x)

    idx = 0
    for i, num_blocks in enumerate(num_blocks_list):
        for j in range(num_blocks):
            blk = params["blocks"][idx]
            idx += 1
            downsample = (j == 0 and i > 0)
            stride = 2 if downsample else 1
            if "shortcut" in blk:
                sc = blk["shortcut"]
                shortcut = conv1d_bn_act(x, sc["w"], sc["gamma"], sc["beta"],
                                         stride=stride, pad=0, relu=False)
            else:
                shortcut = x
            c1 = blk["conv1"]
            h = conv1d_bn_act(x, c1["w"], c1["gamma"], c1["beta"],
                              stride=stride, pad=1, relu=True)
            c2 = blk["conv2"]
            # bn2(conv2(h)) + shortcut, then relu -- residual & relu fused into pass B
            x = conv1d_bn_act(h, c2["w"], c2["gamma"], c2["beta"],
                              stride=1, pad=1, residual=shortcut, relu=True)

    return gap_fc_sigmoid(x, params["fc_w"], params["fc_b"])


if __name__ == "__main__":
    key = jax.random.PRNGKey(0)
    k_param, k_x = jax.random.split(key)

    B, C_in, L = 2, 4, 100
    num_blocks_list = [1, 1]     # final channel count = 128
    params = init_resnet1d_params(k_param, C_in, num_blocks_list, num_classes=1)

    x = jax.random.normal(k_x, (B, C_in, L), jnp.float32)   # PyTorch NCL input

    fwd = jax.jit(functools.partial(resnet1d_forward, num_blocks_list=num_blocks_list))
    out = jax.block_until_ready(fwd(params, x))

    assert out.shape == (B, 1)
    assert bool(jnp.all(jnp.isfinite(out)))
    assert bool(jnp.all((out >= 0.0) & (out <= 1.0)))        # sigmoid output range
    print("KERNEL_OK")
</pallas_src>

<mosaic_0001>
module attributes {stable_mosaic.version = 11 : i64} {
  func.func @_conv_stats_kernel(%arg0: i32, %arg1: i32, %arg2: memref<1x112x4xbf16, #tpu.memory_space<vmem>>, %arg3: memref<1x8x4xbf16, #tpu.memory_space<vmem>>, %arg4: memref<7x4x128xbf16, #tpu.memory_space<vmem>>, %arg5: memref<1x56x128xbf16, #tpu.memory_space<vmem>>, %arg6: memref<1x1x128xf32, #tpu.memory_space<vmem>>, %arg7: memref<1x1x128xf32, #tpu.memory_space<vmem>>, %arg8: memref<120x4xf32, #tpu.memory_space<vmem>>) attributes {dimension_semantics = [#tpu.dimension_semantics<parallel>, #tpu.dimension_semantics<arbitrary>], iteration_bounds = array<i64: 2, 1>, scalar_prefetch = 0 : i64, scratch_operands = 1 : i64, tpu.core_type = #tpu.core_type<tc>, window_params = [{transform_indices = @transform_0, window_bounds = array<i64: 1, 112, 4>}, {transform_indices = @transform_1, window_bounds = array<i64: 1, 8, 4>}, {pipeline_mode = #tpu.pipeline_mode<synchronous>, transform_indices = @transform_2, window_bounds = array<i64: 7, 4, 128>}, {transform_indices = @transform_3, window_bounds = array<i64: 1, 56, 128>}, {transform_indices = @transform_4, window_bounds = array<i64: 1, 1, 128>}, {transform_indices = @transform_5, window_bounds = array<i64: 1, 1, 128>}]} {
    %c0_i32 = arith.constant 0 : i32
    %0 = arith.cmpi eq, %arg1, %c0_i32 : i32
    %1 = arith.extui %0 : i1 to i32
    %c0_i32_0 = arith.constant 0 : i32
    %2 = arith.cmpi ne, %1, %c0_i32_0 : i32
    scf.if %2 {
      %cst_52 = arith.constant 0.000000e+00 : f32
      %64 = vector.broadcast %cst_52 : f32 to vector<1x1x128xf32>
      %c0_53 = arith.constant 0 : index
      %c0_54 = arith.constant 0 : index
      %c0_55 = arith.constant 0 : index
      %65 = vector.load %arg6[%c0_53, %c0_54, %c0_55] : memref<1x1x128xf32, #tpu.memory_space<vmem>>, vector<1x1x128xf32>
      tpu.vector_store %arg6[%c0_53, %c0_54, %c0_55], %64 {strides = array<i32>} : memref<1x1x128xf32, #tpu.memory_space<vmem>>, vector<1x1x128xf32>,
      %cst_56 = arith.constant 0.000000e+00 : f32
      %66 = vector.broadcast %cst_56 : f32 to vector<1x1x128xf32>
      %c0_57 = arith.constant 0 : index
      %c0_58 = arith.constant 0 : index
      %c0_59 = arith.constant 0 : index
      %67 = vector.load %arg7[%c0_57, %c0_58, %c0_59] : memref<1x1x128xf32, #tpu.memory_space<vmem>>, vector<1x1x128xf32>
      tpu.vector_store %arg7[%c0_57, %c0_58, %c0_59], %66 {strides = array<i32>} : memref<1x1x128xf32, #tpu.memory_space<vmem>>, vector<1x1x128xf32>,
    } else {
    }
    %c0 = arith.constant 0 : index
    %c0_1 = arith.constant 0 : index
    %c0_2 = arith.constant 0 : index
    %3 = vector.load %arg2[%c0, %c0_1, %c0_2] : memref<1x112x4xbf16, #tpu.memory_space<vmem>>, vector<1x112x4xbf16>
    %4 = vector.shape_cast %3 : vector<1x112x4xbf16> to vector<112x4xbf16>
    %5 = arith.extf %4 : vector<112x4xbf16> to vector<112x4xf32>
    %c0_3 = arith.constant 0 : index
    %c0_4 = arith.constant 0 : index
    %6 = vector.load %arg8[%c0_3, %c0_4] : memref<120x4xf32, #tpu.memory_space<vmem>>, vector<112x4xf32>
    tpu.vector_store %arg8[%c0_3, %c0_4], %5 {strides = array<i32>} : memref<120x4xf32, #tpu.memory_space<vmem>>, vector<112x4xf32>,
    %c0_5 = arith.constant 0 : index
    %c0_6 = arith.constant 0 : index
    %c0_7 = arith.constant 0 : index
    %7 = vector.load %arg3[%c0_5, %c0_6, %c0_7] : memref<1x8x4xbf16, #tpu.memory_space<vmem>>, vector<1x8x4xbf16>
    %8 = vector.shape_cast %7 : vector<1x8x4xbf16> to vector<8x4xbf16>
    %9 = arith.extf %8 : vector<8x4xbf16> to vector<8x4xf32>
    %c112 = arith.constant 112 : index
    %c0_8 = arith.constant 0 : index
    %10 = vector.load %arg8[%c112, %c0_8] : memref<120x4xf32, #tpu.memory_space<vmem>>, vector<8x4xf32>
    tpu.vector_store %arg8[%c112, %c0_8], %9 {strides = array<i32>} : memref<120x4xf32, #tpu.memory_space<vmem>>, vector<8x4xf32>,
    %cst = arith.constant 0.000000e+00 : f32
    %11 = vector.broadcast %cst : f32 to vector<56x128xf32>
    %c0_9 = arith.constant 0 : index
    %c0_10 = arith.constant 0 : index
    %12 = tpu.strided_load %arg8[%c0_9, %c0_10] {strides = array<i32: 2, 1>} : memref<120x4xf32, #tpu.memory_space<vmem>>, vector<56x4xf32>
    %13 = arith.truncf %12 : vector<56x4xf32> to vector<56x4xbf16>
    %c0_11 = arith.constant 0 : index
    %c0_12 = arith.constant 0 : index
    %c0_13 = arith.constant 0 : index
    %14 = vector.load %arg4[%c0_11, %c0_12, %c0_13] : memref<7x4x128xbf16, #tpu.memory_space<vmem>>, vector<1x4x128xbf16>
    %15 = vector.shape_cast %14 : vector<1x4x128xbf16> to vector<4x128xbf16>
    %cst_14 = arith.constant dense<0.000000e+00> : vector<56x128xf32>
    %16 = tpu.matmul %13, %15, %cst_14 {dimension_numbers = #tpu.dot_dimension_numbers<[1], [0], [0], [1], [0, 0, 1, 1], [], []>} : vector<56x4xbf16>, vector<4x128xbf16>, vector<56x128xf32> -> vector<56x128xf32>
    %17 = arith.addf %11, %16 : vector<56x128xf32>
    %c1 = arith.constant 1 : index
    %c0_15 = arith.constant 0 : index
    %18 = tpu.strided_load %arg8[%c1, %c0_15] {strides = array<i32: 2, 1>} : memref<120x4xf32, #tpu.memory_space<vmem>>, vector<56x4xf32>
    %19 = arith.truncf %18 : vector<56x4xf32> to vector<56x4xbf16>
    %c1_16 = arith.constant 1 : index
    %c0_17 = arith.constant 0 : index
    %c0_18 = arith.constant 0 : index
    %20 = vector.load %arg4[%c1_16, %c0_17, %c0_18] : memref<7x4x128xbf16, #tpu.memory_space<vmem>>, vector<1x4x128xbf16>
    %21 = vector.shape_cast %20 : vector<1x4x128xbf16> to vector<4x128xbf16>
    %cst_19 = arith.constant dense<0.000000e+00> : vector<56x128xf32>
    %22 = tpu.matmul %19, %21, %cst_19 {dimension_numbers = #tpu.dot_dimension_numbers<[1], [0], [0], [1], [0, 0, 1, 1], [], []>} : vector<56x4xbf16>, vector<4x128xbf16>, vector<56x128xf32> -> vector<56x128xf32>
    %23 = arith.addf %17, %22 : vector<56x128xf32>
    %c2 = arith.constant 2 : index
    %c0_20 = arith.constant 0 : index
    %24 = tpu.strided_load %arg8[%c2, %c0_20] {strides = array<i32: 2, 1>} : memref<120x4xf32, #tpu.memory_space<vmem>>, vector<56x4xf32>
    %25 = arith.truncf %24 : vector<56x4xf32> to vector<56x4xbf16>
    %c2_21 = arith.constant 2 : index
    %c0_22 = arith.constant 0 : index
    %c0_23 = arith.constant 0 : index
    %26 = vector.load %arg4[%c2_21, %c0_22, %c0_23] : memref<7x4x128xbf16, #tpu.memory_space<vmem>>, vector<1x4x128xbf16>
    %27 = vector.shape_cast %26 : vector<1x4x128xbf16> to vector<4x128xbf16>
    %cst_24 = arith.constant dense<0.000000e+00> : vector<56x128xf32>
    %28 = tpu.matmul %25, %27, %cst_24 {dimension_numbers = #tpu.dot_dimension_numbers<[1], [0], [0], [1], [0, 0, 1, 1], [], []>} : vector<56x4xbf16>, vector<4x128xbf16>, vector<56x128xf32> -> vector<56x128xf32>
    %29 = arith.addf %23, %28 : vector<56x128xf32>
    %c3 = arith.constant 3 : index
    %c0_25 = arith.constant 0 : index
    %30 = tpu.strided_load %arg8[%c3, %c0_25] {strides = array<i32: 2, 1>} : memref<120x4xf32, #tpu.memory_space<vmem>>, vector<56x4xf32>
    %31 = arith.truncf %30 : vector<56x4xf32> to vector<56x4xbf16>
    %c3_26 = arith.constant 3 : index
    %c0_27 = arith.constant 0 : index
    %c0_28 = arith.constant 0 : index
    %32 = vector.load %arg4[%c3_26, %c0_27, %c0_28] : memref<7x4x128xbf16, #tpu.memory_space<vmem>>, vector<1x4x128xbf16>
    %33 = vector.shape_cast %32 : vector<1x4x128xbf16> to vector<4x128xbf16>
    %cst_29 = arith.constant dense<0.000000e+00> : vector<56x128xf32>
    %34 = tpu.matmul %31, %33, %cst_29 {dimension_numbers = #tpu.dot_dimension_numbers<[1], [0], [0], [1], [0, 0, 1, 1], [], []>} : vector<56x4xbf16>, vector<4x128xbf16>, vector<56x128xf32> -> vector<56x128xf32>
    %35 = arith.addf %29, %34 : vector<56x128xf32>
    %c4 = arith.constant 4 : index
    %c0_30 = arith.constant 0 : index
    %36 = tpu.strided_load %arg8[%c4, %c0_30] {strides = array<i32: 2, 1>} : memref<120x4xf32, #tpu.memory_space<vmem>>, vector<56x4xf32>
    %37 = arith.truncf %36 : vector<56x4xf32> to vector<56x4xbf16>
    %c4_31 = arith.constant 4 : index
    %c0_32 = arith.constant 0 : index
    %c0_33 = arith.constant 0 : index
    %38 = vector.load %arg4[%c4_31, %c0_32, %c0_33] : memref<7x4x128xbf16, #tpu.memory_space<vmem>>, vector<1x4x128xbf16>
    %39 = vector.shape_cast %38 : vector<1x4x128xbf16> to vector<4x128xbf16>
    %cst_34 = arith.constant dense<0.000000e+00> : vector<56x128xf32>
    %40 = tpu.matmul %37, %39, %cst_34 {dimension_numbers = #tpu.dot_dimension_numbers<[1], [0], [0], [1], [0, 0, 1, 1], [], []>} : vector<56x4xbf16>, vector<4x128xbf16>, vector<56x128xf32> -> vector<56x128xf32>
    %41 = arith.addf %35, %40 : vector<56x128xf32>
    %c5 = arith.constant 5 : index
    %c0_35 = arith.constant 0 : index
    %42 = tpu.strided_load %arg8[%c5, %c0_35] {strides = array<i32: 2, 1>} : memref<120x4xf32, #tpu.memory_space<vmem>>, vector<56x4xf32>
    %43 = arith.truncf %42 : vector<56x4xf32> to vector<56x4xbf16>
    %c5_36 = arith.constant 5 : index
    %c0_37 = arith.constant 0 : index
    %c0_38 = arith.constant 0 : index
    %44 = vector.load %arg4[%c5_36, %c0_37, %c0_38] : memref<7x4x128xbf16, #tpu.memory_space<vmem>>, vector<1x4x128xbf16>
    %45 = vector.shape_cast %44 : vector<1x4x128xbf16> to vector<4x128xbf16>
    %cst_39 = arith.constant dense<0.000000e+00> : vector<56x128xf32>
    %46 = tpu.matmul %43, %45, %cst_39 {dimension_numbers = #tpu.dot_dimension_numbers<[1], [0], [0], [1], [0, 0, 1, 1], [], []>} : vector<56x4xbf16>, vector<4x128xbf16>, vector<56x128xf32> -> vector<56x128xf32>
    %47 = arith.addf %41, %46 : vector<56x128xf32>
    %c6 = arith.constant 6 : index
    %c0_40 = arith.constant 0 : index
    %48 = tpu.strided_load %arg8[%c6, %c0_40] {strides = array<i32: 2, 1>} : memref<120x4xf32, #tpu.memory_space<vmem>>, vector<56x4xf32>
    %49 = arith.truncf %48 : vector<56x4xf32> to vector<56x4xbf16>
    %c6_41 = arith.constant 6 : index
    %c0_42 = arith.constant 0 : index
    %c0_43 = arith.constant 0 : index
    %50 = vector.load %arg4[%c6_41, %c0_42, %c0_43] : memref<7x4x128xbf16, #tpu.memory_space<vmem>>, vector<1x4x128xbf16>
    %51 = vector.shape_cast %50 : vector<1x4x128xbf16> to vector<4x128xbf16>
    %cst_44 = arith.constant dense<0.000000e+00> : vector<56x128xf32>
    %52 = tpu.matmul %49, %51, %cst_44 {dimension_numbers = #tpu.dot_dimension_numbers<[1], [0], [0], [1], [0, 0, 1, 1], [], []>} : vector<56x4xbf16>, vector<4x128xbf16>, vector<56x128xf32> -> vector<56x128xf32>
    %53 = arith.addf %47, %52 : vector<56x128xf32>
    %54 = arith.truncf %53 : vector<56x128xf32> to vector<56x128xbf16>
    %c0_45 = arith.constant 0 : index
    %c0_46 = arith.constant 0 : index
    %c0_47 = arith.constant 0 : index
    %55 = vector.load %arg5[%c0_45, %c0_46, %c0_47] : memref<1x56x128xbf16, #tpu.memory_space<vmem>>, vector<1x56x128xbf16>
    %56 = vector.shape_cast %55 : vector<1x56x128xbf16> to vector<56x128xbf16>
    %57 = vector.shape_cast %54 : vector<56x128xbf16> to vector<1x56x128xbf16>
    tpu.vector_store %arg5[%c0_45, %c0_46, %c0_47], %57 {strides = array<i32>} : memref<1x56x128xbf16, #tpu.memory_space<vmem>>, vector<1x56x128xbf16>,
    %c0_i32_48 = arith.constant 0 : i32
    %58 = arith.cmpi eq, %arg1, %c0_i32_48 : i32
    %59 = arith.extui %58 : i1 to i32
    %c0_i32_49 = arith.constant 0 : i32
    %60 = arith.cmpi ne, %59, %c0_i32_49 : i32
    scf.if %60 {
      %64 = tpu.iota {dimensions = array<i32: 0>} : vector<56x1xi32>
      %c50_i32 = arith.constant 50 : i32
      %65 = vector.broadcast %c50_i32 : i32 to vector<56x1xi32>
      %66 = arith.cmpi slt, %64, %65 : vector<56x1xi32>
      %cst_52 = arith.constant 0.000000e+00 : f32
      %67 = vector.shape_cast %66 : vector<56x1xi1> to vector<56x1xi1>
      %68 = vector.broadcast %67 : vector<56x1xi1> to vector<56x128xi1>
      %69 = vector.broadcast %cst_52 : f32 to vector<56x128xf32>
      %70 = arith.select %68, %53, %69 : vector<56x128xi1>, vector<56x128xf32>
      %c0_53 = arith.constant 0 : index
      %c0_54 = arith.constant 0 : index
      %c0_55 = arith.constant 0 : index
      %71 = vector.load %arg6[%c0_53, %c0_54, %c0_55] : memref<1x1x128xf32, #tpu.memory_space<vmem>>, vector<1x1x128xf32>
      %72 = vector.shape_cast %71 : vector<1x1x128xf32> to vector<1x128xf32>
      %cst_56 = arith.constant dense<0.000000e+00> : vector<128xf32>
      %73 = vector.multi_reduction <add>, %70, %cst_56 [0] : vector<56x128xf32> to vector<128xf32>
      %74 = vector.shape_cast %73 : vector<128xf32> to vector<1x128xf32>
      %75 = arith.addf %72, %74 : vector<1x128xf32>
      %c0_57 = arith.constant 0 : index
      %c0_58 = arith.constant 0 : index
      %c0_59 = arith.constant 0 : index
      %76 = vector.load %arg6[%c0_57, %c0_58, %c0_59] : memref<1x1x128xf32, #tpu.memory_space<vmem>>, vector<1x1x128xf32>
      %77 = vector.shape_cast %76 : vector<1x1x128xf32> to vector<1x128xf32>
      %78 = vector.shape_cast %75 : vector<1x128xf32> to vector<1x1x128xf32>
      tpu.vector_store %arg6[%c0_57, %c0_58, %c0_59], %78 {strides = array<i32>} : memref<1x1x128xf32, #tpu.memory_space<vmem>>, vector<1x1x128xf32>,
      %c0_60 = arith.constant 0 : index
      %c0_61 = arith.constant 0 : index
      %c0_62 = arith.constant 0 : index
      %79 = vector.load %arg7[%c0_60, %c0_61, %c0_62] : memref<1x1x128xf32, #tpu.memory_space<vmem>>, vector<1x1x128xf32>
      %80 = vector.shape_cast %79 : vector<1x1x128xf32> to vector<1x128xf32>
      %81 = arith.mulf %70, %70 : vector<56x128xf32>
      %cst_63 = arith.constant dense<0.000000e+00> : vector<128xf32>
      %82 = vector.multi_reduction <add>, %81, %cst_63 [0] : vector<56x128xf32> to vector<128xf32>
      %83 = vector.shape_cast %82 : vector<128xf32> to vector<1x128xf32>
      %84 = arith.addf %80, %83 : vector<1x128xf32>
      %c0_64 = arith.constant 0 : index
      %c0_65 = arith.constant 0 : index
      %c0_66 = arith.constant 0 : index
      %85 = vector.load %arg7[%c0_64, %c0_65, %c0_66] : memref<1x1x128xf32, #tpu.memory_space<vmem>>, vector<1x1x128xf32>
      %86 = vector.shape_cast %85 : vector<1x1x128xf32> to vector<1x128xf32>
      %87 = vector.shape_cast %84 : vector<1x128xf32> to vector<1x1x128xf32>
      tpu.vector_store %arg7[%c0_64, %c0_65, %c0_66], %87 {strides = array<i32>} : memref<1x1x128xf32, #tpu.memory_space<vmem>>, vector<1x1x128xf32>,
    } else {
    }
    %c0_i32_50 = arith.constant 0 : i32
    %61 = arith.cmpi ne, %arg1, %c0_i32_50 : i32
    %62 = arith.extui %61 : i1 to i32
    %c0_i32_51 = arith.constant 0 : i32
    %63 = arith.cmpi ne, %62, %c0_i32_51 : i32
    scf.if %63 {
      %c0_52 = arith.constant 0 : index
      %c0_53 = arith.constant 0 : index
      %c0_54 = arith.constant 0 : index
      %64 = vector.load %arg6[%c0_52, %c0_53, %c0_54] : memref<1x1x128xf32, #tpu.memory_space<vmem>>, vector<1x1x128xf32>
      %65 = vector.shape_cast %64 : vector<1x1x128xf32> to vector<1x128xf32>
      %cst_55 = arith.constant dense<0.000000e+00> : vector<128xf32>
      %66 = vector.multi_reduction <add>, %53, %cst_55 [0] : vector<56x128xf32> to vector<128xf32>
      %67 = vector.shape_cast %66 : vector<128xf32> to vector<1x128xf32>
      %68 = arith.addf %65, %67 : vector<1x128xf32>
      %c0_56 = arith.constant 0 : index
      %c0_57 = arith.constant 0 : index
      %c0_58 = arith.constant 0 : index
      %69 = vector.load %arg6[%c0_56, %c0_57, %c0_58] : memref<1x1x128xf32, #tpu.memory_space<vmem>>, vector<1x1x128xf32>
      %70 = vector.shape_cast %69 : vector<1x1x128xf32> to vector<1x128xf32>
      %71 = vector.shape_cast %68 : vector<1x128xf32> to vector<1x1x128xf32>
      tpu.vector_store %arg6[%c0_56, %c0_57, %c0_58], %71 {strides = array<i32>} : memref<1x1x128xf32, #tpu.memory_space<vmem>>, vector<1x1x128xf32>,
      %c0_59 = arith.constant 0 : index
      %c0_60 = arith.constant 0 : index
      %c0_61 = arith.constant 0 : index
      %72 = vector.load %arg7[%c0_59, %c0_60, %c0_61] : memref<1x1x128xf32, #tpu.memory_space<vmem>>, vector<1x1x128xf32>
      %73 = vector.shape_cast %72 : vector<1x1x128xf32> to vector<1x128xf32>
      %74 = arith.mulf %53, %53 : vector<56x128xf32>
      %cst_62 = arith.constant dense<0.000000e+00> : vector<128xf32>
      %75 = vector.multi_reduction <add>, %74, %cst_62 [0] : vector<56x128xf32> to vector<128xf32>
      %76 = vector.shape_cast %75 : vector<128xf32> to vector<1x128xf32>
      %77 = arith.addf %73, %76 : vector<1x128xf32>
      %c0_63 = arith.constant 0 : index
      %c0_64 = arith.constant 0 : index
      %c0_65 = arith.constant 0 : index
      %78 = vector.load %arg7[%c0_63, %c0_64, %c0_65] : memref<1x1x128xf32, #tpu.memory_space<vmem>>, vector<1x1x128xf32>
      %79 = vector.shape_cast %78 : vector<1x1x128xf32> to vector<1x128xf32>
      %80 = vector.shape_cast %77 : vector<1x128xf32> to vector<1x1x128xf32>
      tpu.vector_store %arg7[%c0_63, %c0_64, %c0_65], %80 {strides = array<i32>} : memref<1x1x128xf32, #tpu.memory_space<vmem>>, vector<1x1x128xf32>,
    } else {
    }
    return
  }
  func.func @transform_0(%arg0: i32, %arg1: i32) -> (i32, i32, i32) {
    %c0_i32 = arith.constant 0 : i32
    %c0_i32_0 = arith.constant 0 : i32
    return %arg0, %arg1, %c0_i32 : i32, i32, i32
  }
  func.func @transform_1(%arg0: i32, %arg1: i32) -> (i32, i32, i32) {
    %c1_i32 = arith.constant 1 : i32
    %0 = arith.addi %arg1, %c1_i32 : i32
    %c14_i32 = arith.constant 14 : i32
    %1 = arith.muli %0, %c14_i32 : i32
    %c0_i32 = arith.constant 0 : i32
    %c0_i32_0 = arith.constant 0 : i32
    return %arg0, %1, %c0_i32 : i32, i32, i32
  }
  func.func @transform_2(%arg0: i32, %arg1: i32) -> (i32, i32, i32) {
    %c0_i32 = arith.constant 0 : i32
    %c0_i32_0 = arith.constant 0 : i32
    %c0_i32_1 = arith.constant 0 : i32
    %c0_i32_2 = arith.constant 0 : i32
    return %c0_i32, %c0_i32_0, %c0_i32_1 : i32, i32, i32
  }
  func.func @transform_3(%arg0: i32, %arg1: i32) -> (i32, i32, i32) {
    %c0_i32 = arith.constant 0 : i32
    %c0_i32_0 = arith.constant 0 : i32
    return %arg0, %arg1, %c0_i32 : i32, i32, i32
  }
  func.func @transform_4(%arg0: i32, %arg1: i32) -> (i32, i32, i32) {
    %c0_i32 = arith.constant 0 : i32
    %c0_i32_0 = arith.constant 0 : i32
    %c0_i32_1 = arith.constant 0 : i32
    return %arg0, %c0_i32, %c0_i32_0 : i32, i32, i32
  }
  func.func @transform_5(%arg0: i32, %arg1: i32) -> (i32, i32, i32) {
    %c0_i32 = arith.constant 0 : i32
    %c0_i32_0 = arith.constant 0 : i32
    %c0_i32_1 = arith.constant 0 : i32
    return %arg0, %c0_i32, %c0_i32_0 : i32, i32, i32
  }
}

module attributes {stable_mosaic.version = 11 : i64} {
  func.func @_bn_apply_kernel(%arg0: i32, %arg1: i32, %arg2: memref<1x56x128xbf16, #tpu.memory_space<vmem>>, %arg3: memref<1x128xf32, #tpu.memory_space<vmem>>, %arg4: memref<1x128xf32, #tpu.memory_space<vmem>>, %arg5: memref<1x56x128xbf16, #tpu.memory_space<vmem>>) attributes {dimension_semantics = [#tpu.dimension_semantics<parallel>, #tpu.dimension_semantics<parallel>], iteration_bounds = array<i64: 2, 1>, scalar_prefetch = 0 : i64, scratch_operands = 0 : i64, tpu.core_type = #tpu.core_type<tc>, window_params = [{transform_indices = @transform_0, window_bounds = array<i64: 1, 56, 128>}, {pipeline_mode = #tpu.pipeline_mode<synchronous>, transform_indices = @transform_1, window_bounds = array<i64: 1, 128>}, {pipeline_mode = #tpu.pipeline_mode<synchronous>, transform_indices = @transform_2, window_bounds = array<i64: 1, 128>}, {transform_indices = @transform_3, window_bounds = array<i64: 1, 56, 128>}]} {
    %c0 = arith.constant 0 : index
    %c0_0 = arith.constant 0 : index
    %c0_1 = arith.constant 0 : index
    %0 = vector.load %arg2[%c0, %c0_0, %c0_1] : memref<1x56x128xbf16, #tpu.memory_space<vmem>>, vector<1x56x128xbf16>
    %1 = vector.shape_cast %0 : vector<1x56x128xbf16> to vector<56x128xbf16>
    %2 = arith.extf %1 : vector<56x128xbf16> to vector<56x128xf32>
    %c0_2 = arith.constant 0 : index
    %c0_3 = arith.constant 0 : index
    %3 = vector.load %arg3[%c0_2, %c0_3] : memref<1x128xf32, #tpu.memory_space<vmem>>, vector<1x128xf32>
    %4 = vector.broadcast %3 : vector<1x128xf32> to vector<56x128xf32>
    %5 = arith.mulf %2, %4 : vector<56x128xf32>
    %c0_4 = arith.constant 0 : index
    %c0_5 = arith.constant 0 : index
    %6 = vector.load %arg4[%c0_4, %c0_5] : memref<1x128xf32, #tpu.memory_space<vmem>>, vector<1x128xf32>
    %7 = vector.broadcast %6 : vector<1x128xf32> to vector<56x128xf32>
    %8 = arith.addf %5, %7 : vector<56x128xf32>
    %cst = arith.constant 0.000000e+00 : f32
    %9 = vector.broadcast %cst : f32 to vector<56x128xf32>
    %10 = arith.maximumf %8, %9 : vector<56x128xf32>
    %11 = arith.truncf %10 : vector<56x128xf32> to vector<56x128xbf16>
    %c0_6 = arith.constant 0 : index
    %c0_7 = arith.constant 0 : index
    %c0_8 = arith.constant 0 : index
    %12 = vector.load %arg5[%c0_6, %c0_7, %c0_8] : memref<1x56x128xbf16, #tpu.memory_space<vmem>>, vector<1x56x128xbf16>
    %13 = vector.shape_cast %12 : vector<1x56x128xbf16> to vector<56x128xbf16>
    %14 = vector.shape_cast %11 : vector<56x128xbf16> to vector<1x56x128xbf16>
    tpu.vector_store %arg5[%c0_6, %c0_7, %c0_8], %14 {strides = array<i32>} : memref<1x56x128xbf16, #tpu.memory_space<vmem>>, vector<1x56x128xbf16>,
    return
  }
  func.func @transform_0(%arg0: i32, %arg1: i32) -> (i32, i32, i32) {
    %c0_i32 = arith.constant 0 : i32
    %c0_i32_0 = arith.constant 0 : i32
    return %arg0, %arg1, %c0_i32 : i32, i32, i32
  }
  func.func @transform_1(%arg0: i32, %arg1: i32) -> (i32, i32) {
    %c0_i32 = arith.constant 0 : i32
    %c0_i32_0 = arith.constant 0 : i32
    %c0_i32_1 = arith.constant 0 : i32
    return %c0_i32, %c0_i32_0 : i32, i32
  }
  func.func @transform_2(%arg0: i32, %arg1: i32) -> (i32, i32) {
    %c0_i32 = arith.constant 0 : i32
    %c0_i32_0 = arith.constant 0 : i32
    %c0_i32_1 = arith.constant 0 : i32
    return %c0_i32, %c0_i32_0 : i32, i32
  }
  func.func @transform_3(%arg0: i32, %arg1: i32) -> (i32, i32, i32) {
    %c0_i32 = arith.constant 0 : i32
    %c0_i32_0 = arith.constant 0 : i32
    return %arg0, %arg1, %c0_i32 : i32, i32, i32
  }
}

module attributes {stable_mosaic.version = 11 : i64} {
  func.func @_maxpool_kernel(%arg0: i32, %arg1: i32, %arg2: memref<1x64x128xbf16, #tpu.memory_space<vmem>>, %arg3: memref<1x8x128xbf16, #tpu.memory_space<vmem>>, %arg4: memref<1x32x128xbf16, #tpu.memory_space<vmem>>, %arg5: memref<72x128xf32, #tpu.memory_space<vmem>>) attributes {dimension_semantics = [#tpu.dimension_semantics<parallel>, #tpu.dimension_semantics<parallel>], iteration_bounds = array<i64: 2, 1>, scalar_prefetch = 0 : i64, scratch_operands = 1 : i64, tpu.core_type = #tpu.core_type<tc>, window_params = [{transform_indices = @transform_0, window_bounds = array<i64: 1, 64, 128>}, {transform_indices = @transform_1, window_bounds = array<i64: 1, 8, 128>}, {transform_indices = @transform_2, window_bounds = array<i64: 1, 32, 128>}]} {
    %c0 = arith.constant 0 : index
    %c0_0 = arith.constant 0 : index
    %c0_1 = arith.constant 0 : index
    %0 = vector.load %arg2[%c0, %c0_0, %c0_1] : memref<1x64x128xbf16, #tpu.memory_space<vmem>>, vector<1x64x128xbf16>
    %1 = vector.shape_cast %0 : vector<1x64x128xbf16> to vector<64x128xbf16>
    %2 = arith.extf %1 : vector<64x128xbf16> to vector<64x128xf32>
    %c0_2 = arith.constant 0 : index
    %c0_3 = arith.constant 0 : index
    %3 = vector.load %arg5[%c0_2, %c0_3] : memref<72x128xf32, #tpu.memory_space<vmem>>, vector<64x128xf32>
    tpu.vector_store %arg5[%c0_2, %c0_3], %2 {strides = array<i32>} : memref<72x128xf32, #tpu.memory_space<vmem>>, vector<64x128xf32>,
    %c0_4 = arith.constant 0 : index
    %c0_5 = arith.constant 0 : index
    %c0_6 = arith.constant 0 : index
    %4 = vector.load %arg3[%c0_4, %c0_5, %c0_6] : memref<1x8x128xbf16, #tpu.memory_space<vmem>>, vector<1x8x128xbf16>
    %5 = vector.shape_cast %4 : vector<1x8x128xbf16> to vector<8x128xbf16>
    %6 = arith.extf %5 : vector<8x128xbf16> to vector<8x128xf32>
    %c64 = arith.constant 64 : index
    %c0_7 = arith.constant 0 : index
    %7 = vector.load %arg5[%c64, %c0_7] : memref<72x128xf32, #tpu.memory_space<vmem>>, vector<8x128xf32>
    tpu.vector_store %arg5[%c64, %c0_7], %6 {strides = array<i32>} : memref<72x128xf32, #tpu.memory_space<vmem>>, vector<8x128xf32>,
    %c0_8 = arith.constant 0 : index
    %c0_9 = arith.constant 0 : index
    %8 = tpu.strided_load %arg5[%c0_8, %c0_9] {strides = array<i32: 2, 1>} : memref<72x128xf32, #tpu.memory_space<vmem>>, vector<32x128xf32>
    %c1 = arith.constant 1 : index
    %c0_10 = arith.constant 0 : index
    %9 = tpu.strided_load %arg5[%c1, %c0_10] {strides = array<i32: 2, 1>} : memref<72x128xf32, #tpu.memory_space<vmem>>, vector<32x128xf32>
    %c2 = arith.constant 2 : index
    %c0_11 = arith.constant 0 : index
    %10 = tpu.strided_load %arg5[%c2, %c0_11] {strides = array<i32: 2, 1>} : memref<72x128xf32, #tpu.memory_space<vmem>>, vector<32x128xf32>
    %11 = arith.maximumf %8, %9 : vector<32x128xf32>
    %12 = arith.maximumf %11, %10 : vector<32x128xf32>
    %13 = arith.truncf %12 : vector<32x128xf32> to vector<32x128xbf16>
    %c0_12 = arith.constant 0 : index
    %c0_13 = arith.constant 0 : index
    %c0_14 = arith.constant 0 : index
    %14 = vector.load %arg4[%c0_12, %c0_13, %c0_14] : memref<1x32x128xbf16, #tpu.memory_space<vmem>>, vector<1x32x128xbf16>
    %15 = vector.shape_cast %14 : vector<1x32x128xbf16> to vector<32x128xbf16>
    %16 = vector.shape_cast %13 : vector<32x128xbf16> to vector<1x32x128xbf16>
    tpu.vector_store %arg4[%c0_12, %c0_13, %c0_14], %16 {strides = array<i32>} : memref<1x32x128xbf16, #tpu.memory_space<vmem>>, vector<1x32x128xbf16>,
    return
  }
  func.func @transform_0(%arg0: i32, %arg1: i32) -> (i32, i32, i32) {
    %c0_i32 = arith.constant 0 : i32
    %c0_i32_0 = arith.constant 0 : i32
    return %arg0, %arg1, %c0_i32 : i32, i32, i32
  }
  func.func @transform_1(%arg0: i32, %arg1: i32) -> (i32, i32, i32) {
    %c1_i32 = arith.constant 1 : i32
    %0 = arith.addi %arg1, %c1_i32 : i32
    %c8_i32 = arith.constant 8 : i32
    %1 = arith.muli %0, %c8_i32 : i32
    %c0_i32 = arith.constant 0 : i32
    %c0_i32_0 = arith.constant 0 : i32
    return %arg0, %1, %c0_i32 : i32, i32, i32
  }
  func.func @transform_2(%arg0: i32, %arg1: i32) -> (i32, i32, i32) {
    %c0_i32 = arith.constant 0 : i32
    %c0_i32_0 = arith.constant 0 : i32
    return %arg0, %arg1, %c0_i32 : i32, i32, i32
  }
}

module attributes {stable_mosaic.version = 11 : i64} {
  func.func @_bn_apply_kernel(%arg0: i32, %arg1: i32, %arg2: memref<1x32x128xbf16, #tpu.memory_space<vmem>>, %arg3: memref<1x128xf32, #tpu.memory_space<vmem>>, %arg4: memref<1x128xf32, #tpu.memory_space<vmem>>, %arg5: memref<1x32x128xbf16, #tpu.memory_space<vmem>>) attributes {dimension_semantics = [#tpu.dimension_semantics<parallel>, #tpu.dimension_semantics<parallel>], iteration_bounds = array<i64: 2, 1>, scalar_prefetch = 0 : i64, scratch_operands = 0 : i64, tpu.core_type = #tpu.core_type<tc>, window_params = [{transform_indices = @transform_0, window_bounds = array<i64: 1, 32, 128>}, {pipeline_mode = #tpu.pipeline_mode<synchronous>, transform_indices = @transform_1, window_bounds = array<i64: 1, 128>}, {pipeline_mode = #tpu.pipeline_mode<synchronous>, transform_indices = @transform_2, window_bounds = array<i64: 1, 128>}, {transform_indices = @transform_3, window_bounds = array<i64: 1, 32, 128>}]} {
    %c0 = arith.constant 0 : index
    %c0_0 = arith.constant 0 : index
    %c0_1 = arith.constant 0 : index
    %0 = vector.load %arg2[%c0, %c0_0, %c0_1] : memref<1x32x128xbf16, #tpu.memory_space<vmem>>, vector<1x32x128xbf16>
    %1 = vector.shape_cast %0 : vector<1x32x128xbf16> to vector<32x128xbf16>
    %2 = arith.extf %1 : vector<32x128xbf16> to vector<32x128xf32>
    %c0_2 = arith.constant 0 : index
    %c0_3 = arith.constant 0 : index
    %3 = vector.load %arg3[%c0_2, %c0_3] : memref<1x128xf32, #tpu.memory_space<vmem>>, vector<1x128xf32>
    %4 = vector.broadcast %3 : vector<1x128xf32> to vector<32x128xf32>
    %5 = arith.mulf %2, %4 : vector<32x128xf32>
    %c0_4 = arith.constant 0 : index
    %c0_5 = arith.constant 0 : index
    %6 = vector.load %arg4[%c0_4, %c0_5] : memref<1x128xf32, #tpu.memory_space<vmem>>, vector<1x128xf32>
    %7 = vector.broadcast %6 : vector<1x128xf32> to vector<32x128xf32>
    %8 = arith.addf %5, %7 : vector<32x128xf32>
    %cst = arith.constant 0.000000e+00 : f32
    %9 = vector.broadcast %cst : f32 to vector<32x128xf32>
    %10 = arith.maximumf %8, %9 : vector<32x128xf32>
    %11 = arith.truncf %10 : vector<32x128xf32> to vector<32x128xbf16>
    %c0_6 = arith.constant 0 : index
    %c0_7 = arith.constant 0 : index
    %c0_8 = arith.constant 0 : index
    %12 = vector.load %arg5[%c0_6, %c0_7, %c0_8] : memref<1x32x128xbf16, #tpu.memory_space<vmem>>, vector<1x32x128xbf16>
    %13 = vector.shape_cast %12 : vector<1x32x128xbf16> to vector<32x128xbf16>
    %14 = vector.shape_cast %11 : vector<32x128xbf16> to vector<1x32x128xbf16>
    tpu.vector_store %arg5[%c0_6, %c0_7, %c0_8], %14 {strides = array<i32>} : memref<1x32x128xbf16, #tpu.memory_space<vmem>>, vector<1x32x128xbf16>,
    return
  }
  func.func @transform_0(%arg0: i32, %arg1: i32) -> (i32, i32, i32) {
    %c0_i32 = arith.constant 0 : i32
    %c0_i32_0 = arith.constant 0 : i32
    return %arg0, %arg1, %c0_i32 : i32, i32, i32
  }
  func.func @transform_1(%arg0: i32, %arg1: i32) -> (i32, i32) {
    %c0_i32 = arith.constant 0 : i32
    %c0_i32_0 = arith.constant 0 : i32
    %c0_i32_1 = arith.constant 0 : i32
    return %c0_i32, %c0_i32_0 : i32, i32
  }
  func.func @transform_2(%arg0: i32, %arg1: i32) -> (i32, i32) {
    %c0_i32 = arith.constant 0 : i32
    %c0_i32_0 = arith.constant 0 : i32
    %c0_i32_1 = arith.constant 0 : i32
    return %c0_i32, %c0_i32_0 : i32, i32
  }
  func.func @transform_3(%arg0: i32, %arg1: i32) -> (i32, i32, i32) {
    %c0_i32 = arith.constant 0 : i32
    %c0_i32_0 = arith.constant 0 : i32
    return %arg0, %arg1, %c0_i32 : i32, i32, i32
  }
}

module attributes {stable_mosaic.version = 11 : i64} {
  func.func @_conv_stats_kernel(%arg0: i32, %arg1: i32, %arg2: memref<1x32x128xbf16, #tpu.memory_space<vmem>>, %arg3: memref<1x8x128xbf16, #tpu.memory_space<vmem>>, %arg4: memref<384x128xbf16, #tpu.memory_space<vmem>>, %arg5: memref<1x32x128xbf16, #tpu.memory_space<vmem>>, %arg6: memref<1x1x128xf32, #tpu.memory_space<vmem>>, %arg7: memref<1x1x128xf32, #tpu.memory_space<vmem>>, %arg8: memref<40x128xf32, #tpu.memory_space<vmem>>) attributes {dimension_semantics = [#tpu.dimension_semantics<parallel>, #tpu.dimension_semantics<arbitrary>], iteration_bounds = array<i64: 2, 1>, scalar_prefetch = 0 : i64, scratch_operands = 1 : i64, tpu.core_type = #tpu.core_type<tc>, window_params = [{transform_indices = @transform_0, window_bounds = array<i64: 1, 32, 128>}, {transform_indices = @transform_1, window_bounds = array<i64: 1, 8, 128>}, {pipeline_mode = #tpu.pipeline_mode<synchronous>, transform_indices = @transform_2, window_bounds = array<i64: 384, 128>}, {transform_indices = @transform_3, window_bounds = array<i64: 1, 32, 128>}, {transform_indices = @transform_4, window_bounds = array<i64: 1, 1, 128>}, {transform_indices = @transform_5, window_bounds = array<i64: 1, 1, 128>}]} {
    %c0_i32 = arith.constant 0 : i32
    %0 = arith.cmpi eq, %arg1, %c0_i32 : i32
    %1 = arith.extui %0 : i1 to i32
    %c0_i32_0 = arith.constant 0 : i32
    %2 = arith.cmpi ne, %1, %c0_i32_0 : i32
    scf.if %2 {
      %cst_22 = arith.constant 0.000000e+00 : f32
      %30 = vector.broadcast %cst_22 : f32 to vector<1x1x128xf32>
      %c0_23 = arith.constant 0 : index
      %c0_24 = arith.constant 0 : index
      %c0_25 = arith.constant 0 : index
      %31 = vector.load %arg6[%c0_23, %c0_24, %c0_25] : memref<1x1x128xf32, #tpu.memory_space<vmem>>, vector<1x1x128xf32>
      tpu.vector_store %arg6[%c0_23, %c0_24, %c0_25], %30 {strides = array<i32>} : memref<1x1x128xf32, #tpu.memory_space<vmem>>, vector<1x1x128xf32>,
      %cst_26 = arith.constant 0.000000e+00 : f32
      %32 = vector.broadcast %cst_26 : f32 to vector<1x1x128xf32>
      %c0_27 = arith.constant 0 : index
      %c0_28 = arith.constant 0 : index
      %c0_29 = arith.constant 0 : index
      %33 = vector.load %arg7[%c0_27, %c0_28, %c0_29] : memref<1x1x128xf32, #tpu.memory_space<vmem>>, vector<1x1x128xf32>
      tpu.vector_store %arg7[%c0_27, %c0_28, %c0_29], %32 {strides = array<i32>} : memref<1x1x128xf32, #tpu.memory_space<vmem>>, vector<1x1x128xf32>,
    } else {
    }
    %c0 = arith.constant 0 : index
    %c0_1 = arith.constant 0 : index
    %c0_2 = arith.constant 0 : index
    %3 = vector.load %arg2[%c0, %c0_1, %c0_2] : memref<1x32x128xbf16, #tpu.memory_space<vmem>>, vector<1x32x128xbf16>
    %4 = vector.shape_cast %3 : vector<1x32x128xbf16> to vector<32x128xbf16>
    %5 = arith.extf %4 : vector<32x128xbf16> to vector<32x128xf32>
    %c0_3 = arith.constant 0 : index
    %c0_4 = arith.constant 0 : index
    %6 = vector.load %arg8[%c0_3, %c0_4] : memref<40x128xf32, #tpu.memory_space<vmem>>, vector<32x128xf32>
    tpu.vector_store %arg8[%c0_3, %c0_4], %5 {strides = array<i32>} : memref<40x128xf32, #tpu.memory_space<vmem>>, vector<32x128xf32>,
    %c0_5 = arith.constant 0 : index
    %c0_6 = arith.constant 0 : index
    %c0_7 = arith.constant 0 : index
    %7 = vector.load %arg3[%c0_5, %c0_6, %c0_7] : memref<1x8x128xbf16, #tpu.memory_space<vmem>>, vector<1x8x128xbf16>
    %8 = vector.shape_cast %7 : vector<1x8x128xbf16> to vector<8x128xbf16>
    %9 = arith.extf %8 : vector<8x128xbf16> to vector<8x128xf32>
    %c32 = arith.constant 32 : index
    %c0_8 = arith.constant 0 : index
    %10 = vector.load %arg8[%c32, %c0_8] : memref<40x128xf32, #tpu.memory_space<vmem>>, vector<8x128xf32>
    tpu.vector_store %arg8[%c32, %c0_8], %9 {strides = array<i32>} : memref<40x128xf32, #tpu.memory_space<vmem>>, vector<8x128xf32>,
    %c0_9 = arith.constant 0 : index
    %c0_10 = arith.constant 0 : index
    %11 = vector.load %arg8[%c0_9, %c0_10] : memref<40x128xf32, #tpu.memory_space<vmem>>, vector<32x128xf32>
    %12 = arith.truncf %11 : vector<32x128xf32> to vector<32x128xbf16>
    %c1 = arith.constant 1 : index
    %c0_11 = arith.constant 0 : index
    %13 = vector.load %arg8[%c1, %c0_11] : memref<40x128xf32, #tpu.memory_space<vmem>>, vector<32x128xf32>
    %14 = arith.truncf %13 : vector<32x128xf32> to vector<32x128xbf16>
    %c2 = arith.constant 2 : index
    %c0_12 = arith.constant 0 : index
    %15 = vector.load %arg8[%c2, %c0_12] : memref<40x128xf32, #tpu.memory_space<vmem>>, vector<32x128xf32>
    %16 = arith.truncf %15 : vector<32x128xf32> to vector<32x128xbf16>
    %17 = tpu.concatenate %12, %14, %16 in 1 : vector<32x128xbf16>, vector<32x128xbf16>, vector<32x128xbf16> -> vector<32x384xbf16>
    %c0_13 = arith.constant 0 : index
    %c0_14 = arith.constant 0 : index
    %18 = vector.load %arg4[%c0_13, %c0_14] : memref<384x128xbf16, #tpu.memory_space<vmem>>, vector<384x128xbf16>
    %cst = arith.constant dense<0.000000e+00> : vector<32x128xf32>
    %19 = tpu.matmul %17, %18, %cst {dimension_numbers = #tpu.dot_dimension_numbers<[1], [0], [0], [1], [0, 0, 1, 1], [], []>} : vector<32x384xbf16>, vector<384x128xbf16>, vector<32x128xf32> -> vector<32x128xf32>
    %20 = arith.truncf %19 : vector<32x128xf32> to vector<32x128xbf16>
    %c0_15 = arith.constant 0 : index
    %c0_16 = arith.constant 0 : index
    %c0_17 = arith.constant 0 : index
    %21 = vector.load %arg5[%c0_15, %c0_16, %c0_17] : memref<1x32x128xbf16, #tpu.memory_space<vmem>>, vector<1x32x128xbf16>
    %22 = vector.shape_cast %21 : vector<1x32x128xbf16> to vector<32x128xbf16>
    %23 = vector.shape_cast %20 : vector<32x128xbf16> to vector<1x32x128xbf16>
    tpu.vector_store %arg5[%c0_15, %c0_16, %c0_17], %23 {strides = array<i32>} : memref<1x32x128xbf16, #tpu.memory_space<vmem>>, vector<1x32x128xbf16>,
    %c0_i32_18 = arith.constant 0 : i32
    %24 = arith.cmpi eq, %arg1, %c0_i32_18 : i32
    %25 = arith.extui %24 : i1 to i32
    %c0_i32_19 = arith.constant 0 : i32
    %26 = arith.cmpi ne, %25, %c0_i32_19 : i32
    scf.if %26 {
      %30 = tpu.iota {dimensions = array<i32: 0>} : vector<32x1xi32>
      %c25_i32 = arith.constant 25 : i32
      %31 = vector.broadcast %c25_i32 : i32 to vector<32x1xi32>
      %32 = arith.cmpi slt, %30, %31 : vector<32x1xi32>
      %cst_22 = arith.constant 0.000000e+00 : f32
      %33 = vector.shape_cast %32 : vector<32x1xi1> to vector<32x1xi1>
      %34 = vector.broadcast %33 : vector<32x1xi1> to vector<32x128xi1>
      %35 = vector.broadcast %cst_22 : f32 to vector<32x128xf32>
      %36 = arith.select %34, %19, %35 : vector<32x128xi1>, vector<32x128xf32>
      %c0_23 = arith.constant 0 : index
      %c0_24 = arith.constant 0 : index
      %c0_25 = arith.constant 0 : index
      %37 = vector.load %arg6[%c0_23, %c0_24, %c0_25] : memref<1x1x128xf32, #tpu.memory_space<vmem>>, vector<1x1x128xf32>
      %38 = vector.shape_cast %37 : vector<1x1x128xf32> to vector<1x128xf32>
      %cst_26 = arith.constant dense<0.000000e+00> : vector<128xf32>
      %39 = vector.multi_reduction <add>, %36, %cst_26 [0] : vector<32x128xf32> to vector<128xf32>
      %40 = vector.shape_cast %39 : vector<128xf32> to vector<1x128xf32>
      %41 = arith.addf %38, %40 : vector<1x128xf32>
      %c0_27 = arith.constant 0 : index
      %c0_28 = arith.constant 0 : index
      %c0_29 = arith.constant 0 : index
      %42 = vector.load %arg6[%c0_27, %c0_28, %c0_29] : memref<1x1x128xf32, #tpu.memory_space<vmem>>, vector<1x1x128xf32>
      %43 = vector.shape_cast %42 : vector<1x1x128xf32> to vector<1x128xf32>
      %44 = vector.shape_cast %41 : vector<1x128xf32> to vector<1x1x128xf32>
      tpu.vector_store %arg6[%c0_27, %c0_28, %c0_29], %44 {strides = array<i32>} : memref<1x1x128xf32, #tpu.memory_space<vmem>>, vector<1x1x128xf32>,
      %c0_30 = arith.constant 0 : index
      %c0_31 = arith.constant 0 : index
      %c0_32 = arith.constant 0 : index
      %45 = vector.load %arg7[%c0_30, %c0_31, %c0_32] : memref<1x1x128xf32, #tpu.memory_space<vmem>>, vector<1x1x128xf32>
      %46 = vector.shape_cast %45 : vector<1x1x128xf32> to vector<1x128xf32>
      %47 = arith.mulf %36, %36 : vector<32x128xf32>
      %cst_33 = arith.constant dense<0.000000e+00> : vector<128xf32>
      %48 = vector.multi_reduction <add>, %47, %cst_33 [0] : vector<32x128xf32> to vector<128xf32>
      %49 = vector.shape_cast %48 : vector<128xf32> to vector<1x128xf32>
      %50 = arith.addf %46, %49 : vector<1x128xf32>
      %c0_34 = arith.constant 0 : index
      %c0_35 = arith.constant 0 : index
      %c0_36 = arith.constant 0 : index
      %51 = vector.load %arg7[%c0_34, %c0_35, %c0_36] : memref<1x1x128xf32, #tpu.memory_space<vmem>>, vector<1x1x128xf32>
      %52 = vector.shape_cast %51 : vector<1x1x128xf32> to vector<1x128xf32>
      %53 = vector.shape_cast %50 : vector<1x128xf32> to vector<1x1x128xf32>
      tpu.vector_store %arg7[%c0_34, %c0_35, %c0_36], %53 {strides = array<i32>} : memref<1x1x128xf32, #tpu.memory_space<vmem>>, vector<1x1x128xf32>,
    } else {
    }
    %c0_i32_20 = arith.constant 0 : i32
    %27 = arith.cmpi ne, %arg1, %c0_i32_20 : i32
    %28 = arith.extui %27 : i1 to i32
    %c0_i32_21 = arith.constant 0 : i32
    %29 = arith.cmpi ne, %28, %c0_i32_21 : i32
    scf.if %29 {
      %c0_22 = arith.constant 0 : index
      %c0_23 = arith.constant 0 : index
      %c0_24 = arith.constant 0 : index
      %30 = vector.load %arg6[%c0_22, %c0_23, %c0_24] : memref<1x1x128xf32, #tpu.memory_space<vmem>>, vector<1x1x128xf32>
      %31 = vector.shape_cast %30 : vector<1x1x128xf32> to vector<1x128xf32>
      %cst_25 = arith.constant dense<0.000000e+00> : vector<128xf32>
      %32 = vector.multi_reduction <add>, %19, %cst_25 [0] : vector<32x128xf32> to vector<128xf32>
      %33 = vector.shape_cast %32 : vector<128xf32> to vector<1x128xf32>
      %34 = arith.addf %31, %33 : vector<1x128xf32>
      %c0_26 = arith.constant 0 : index
      %c0_27 = arith.constant 0 : index
      %c0_28 = arith.constant 0 : index
      %35 = vector.load %arg6[%c0_26, %c0_27, %c0_28] : memref<1x1x128xf32, #tpu.memory_space<vmem>>, vector<1x1x128xf32>
      %36 = vector.shape_cast %35 : vector<1x1x128xf32> to vector<1x128xf32>
      %37 = vector.shape_cast %34 : vector<1x128xf32> to vector<1x1x128xf32>
      tpu.vector_store %arg6[%c0_26, %c0_27, %c0_28], %37 {strides = array<i32>} : memref<1x1x128xf32, #tpu.memory_space<vmem>>, vector<1x1x128xf32>,
      %c0_29 = arith.constant 0 : index
      %c0_30 = arith.constant 0 : index
      %c0_31 = arith.constant 0 : index
      %38 = vector.load %arg7[%c0_29, %c0_30, %c0_31] : memref<1x1x128xf32, #tpu.memory_space<vmem>>, vector<1x1x128xf32>
      %39 = vector.shape_cast %38 : vector<1x1x128xf32> to vector<1x128xf32>
      %40 = arith.mulf %19, %19 : vector<32x128xf32>
      %cst_32 = arith.constant dense<0.000000e+00> : vector<128xf32>
      %41 = vector.multi_reduction <add>, %40, %cst_32 [0] : vector<32x128xf32> to vector<128xf32>
      %42 = vector.shape_cast %41 : vector<128xf32> to vector<1x128xf32>
      %43 = arith.addf %39, %42 : vector<1x128xf32>
      %c0_33 = arith.constant 0 : index
      %c0_34 = arith.constant 0 : index
      %c0_35 = arith.constant 0 : index
      %44 = vector.load %arg7[%c0_33, %c0_34, %c0_35] : memref<1x1x128xf32, #tpu.memory_space<vmem>>, vector<1x1x128xf32>
      %45 = vector.shape_cast %44 : vector<1x1x128xf32> to vector<1x128xf32>
      %46 = vector.shape_cast %43 : vector<1x128xf32> to vector<1x1x128xf32>
      tpu.vector_store %arg7[%c0_33, %c0_34, %c0_35], %46 {strides = array<i32>} : memref<1x1x128xf32, #tpu.memory_space<vmem>>, vector<1x1x128xf32>,
    } else {
    }
    return
  }
  func.func @transform_0(%arg0: i32, %arg1: i32) -> (i32, i32, i32) {
    %c0_i32 = arith.constant 0 : i32
    %c0_i32_0 = arith.constant 0 : i32
    return %arg0, %arg1, %c0_i32 : i32, i32, i32
  }
  func.func @transform_1(%arg0: i32, %arg1: i32) -> (i32, i32, i32) {
    %c1_i32 = arith.constant 1 : i32
    %0 = arith.addi %arg1, %c1_i32 : i32
    %c4_i32 = arith.constant 4 : i32
    %1 = arith.muli %0, %c4_i32 : i32
    %c0_i32 = arith.constant 0 : i32
    %c0_i32_0 = arith.constant 0 : i32
    return %arg0, %1, %c0_i32 : i32, i32, i32
  }
  func.func @transform_2(%arg0: i32, %arg1: i32) -> (i32, i32) {
    %c0_i32 = arith.constant 0 : i32
    %c0_i32_0 = arith.constant 0 : i32
    %c0_i32_1 = arith.constant 0 : i32
    return %c0_i32, %c0_i32_0 : i32, i32
  }
  func.func @transform_3(%arg0: i32, %arg1: i32) -> (i32, i32, i32) {
    %c0_i32 = arith.constant 0 : i32
    %c0_i32_0 = arith.constant 0 : i32
    return %arg0, %arg1, %c0_i32 : i32, i32, i32
  }
  func.func @transform_4(%arg0: i32, %arg1: i32) -> (i32, i32, i32) {
    %c0_i32 = arith.constant 0 : i32
    %c0_i32_0 = arith.constant 0 : i32
    %c0_i32_1 = arith.constant 0 : i32
    return %arg0, %c0_i32, %c0_i32_0 : i32, i32, i32
  }
  func.func @transform_5(%arg0: i32, %arg1: i32) -> (i32, i32, i32) {
    %c0_i32 = arith.constant 0 : i32
    %c0_i32_0 = arith.constant 0 : i32
    %c0_i32_1 = arith.constant 0 : i32
    return %arg0, %c0_i32, %c0_i32_0 : i32, i32, i32
  }
}

module attributes {stable_mosaic.version = 11 : i64} {
  func.func @_bn_apply_kernel(%arg0: i32, %arg1: i32, %arg2: memref<1x32x128xbf16, #tpu.memory_space<vmem>>, %arg3: memref<1x128xf32, #tpu.memory_space<vmem>>, %arg4: memref<1x128xf32, #tpu.memory_space<vmem>>, %arg5: memref<1x32x128xbf16, #tpu.memory_space<vmem>>, %arg6: memref<1x32x128xbf16, #tpu.memory_space<vmem>>) attributes {dimension_semantics = [#tpu.dimension_semantics<parallel>, #tpu.dimension_semantics<parallel>], iteration_bounds = array<i64: 2, 1>, scalar_prefetch = 0 : i64, scratch_operands = 0 : i64, tpu.core_type = #tpu.core_type<tc>, window_params = [{transform_indices = @transform_0, window_bounds = array<i64: 1, 32, 128>}, {pipeline_mode = #tpu.pipeline_mode<synchronous>, transform_indices = @transform_1, window_bounds = array<i64: 1, 128>}, {pipeline_mode = #tpu.pipeline_mode<synchronous>, transform_indices = @transform_2, window_bounds = array<i64: 1, 128>}, {transform_indices = @transform_3, window_bounds = array<i64: 1, 32, 128>}, {transform_indices = @transform_4, window_bounds = array<i64: 1, 32, 128>}]} {
    %c0 = arith.constant 0 : index
    %c0_0 = arith.constant 0 : index
    %c0_1 = arith.constant 0 : index
    %0 = vector.load %arg2[%c0, %c0_0, %c0_1] : memref<1x32x128xbf16, #tpu.memory_space<vmem>>, vector<1x32x128xbf16>
    %1 = vector.shape_cast %0 : vector<1x32x128xbf16> to vector<32x128xbf16>
    %2 = arith.extf %1 : vector<32x128xbf16> to vector<32x128xf32>
    %c0_2 = arith.constant 0 : index
    %c0_3 = arith.constant 0 : index
    %3 = vector.load %arg3[%c0_2, %c0_3] : memref<1x128xf32, #tpu.memory_space<vmem>>, vector<1x128xf32>
    %4 = vector.broadcast %3 : vector<1x128xf32> to vector<32x128xf32>
    %5 = arith.mulf %2, %4 : vector<32x128xf32>
    %c0_4 = arith.constant 0 : index
    %c0_5 = arith.constant 0 : index
    %6 = vector.load %arg4[%c0_4, %c0_5] : memref<1x128xf32, #tpu.memory_space<vmem>>, vector<1x128xf32>
    %7 = vector.broadcast %6 : vector<1x128xf32> to vector<32x128xf32>
    %8 = arith.addf %5, %7 : vector<32x128xf32>
    %c0_6 = arith.constant 0 : index
    %c0_7 = arith.constant 0 : index
    %c0_8 = arith.constant 0 : index
    %9 = vector.load %arg5[%c0_6, %c0_7, %c0_8] : memref<1x32x128xbf16, #tpu.memory_space<vmem>>, vector<1x32x128xbf16>
    %10 = vector.shape_cast %9 : vector<1x32x128xbf16> to vector<32x128xbf16>
    %11 = arith.extf %10 : vector<32x128xbf16> to vector<32x128xf32>
    %12 = arith.addf %8, %11 : vector<32x128xf32>
    %cst = arith.constant 0.000000e+00 : f32
    %13 = vector.broadcast %cst : f32 to vector<32x128xf32>
    %14 = arith.maximumf %12, %13 : vector<32x128xf32>
    %15 = arith.truncf %14 : vector<32x128xf32> to vector<32x128xbf16>
    %c0_9 = arith.constant 0 : index
    %c0_10 = arith.constant 0 : index
    %c0_11 = arith.constant 0 : index
    %16 = vector.load %arg6[%c0_9, %c0_10, %c0_11] : memref<1x32x128xbf16, #tpu.memory_space<vmem>>, vector<1x32x128xbf16>
    %17 = vector.shape_cast %16 : vector<1x32x128xbf16> to vector<32x128xbf16>
    %18 = vector.shape_cast %15 : vector<32x128xbf16> to vector<1x32x128xbf16>
    tpu.vector_store %arg6[%c0_9, %c0_10, %c0_11], %18 {strides = array<i32>} : memref<1x32x128xbf16, #tpu.memory_space<vmem>>, vector<1x32x128xbf16>,
    return
  }
  func.func @transform_0(%arg0: i32, %arg1: i32) -> (i32, i32, i32) {
    %c0_i32 = arith.constant 0 : i32
    %c0_i32_0 = arith.constant 0 : i32
    return %arg0, %arg1, %c0_i32 : i32, i32, i32
  }
  func.func @transform_1(%arg0: i32, %arg1: i32) -> (i32, i32) {
    %c0_i32 = arith.constant 0 : i32
    %c0_i32_0 = arith.constant 0 : i32
    %c0_i32_1 = arith.constant 0 : i32
    return %c0_i32, %c0_i32_0 : i32, i32
  }
  func.func @transform_2(%arg0: i32, %arg1: i32) -> (i32, i32) {
    %c0_i32 = arith.constant 0 : i32
    %c0_i32_0 = arith.constant 0 : i32
    %c0_i32_1 = arith.constant 0 : i32
    return %c0_i32, %c0_i32_0 : i32, i32
  }
  func.func @transform_3(%arg0: i32, %arg1: i32) -> (i32, i32, i32) {
    %c0_i32 = arith.constant 0 : i32
    %c0_i32_0 = arith.constant 0 : i32
    return %arg0, %arg1, %c0_i32 : i32, i32, i32
  }
  func.func @transform_4(%arg0: i32, %arg1: i32) -> (i32, i32, i32) {
    %c0_i32 = arith.constant 0 : i32
    %c0_i32_0 = arith.constant 0 : i32
    return %arg0, %arg1, %c0_i32 : i32, i32, i32
  }
}

module attributes {stable_mosaic.version = 11 : i64} {
  func.func @_conv_stats_kernel(%arg0: i32, %arg1: i32, %arg2: memref<1x32x128xbf16, #tpu.memory_space<vmem>>, %arg3: memref<1x8x128xbf16, #tpu.memory_space<vmem>>, %arg4: memref<128x128xbf16, #tpu.memory_space<vmem>>, %arg5: memref<1x16x128xbf16, #tpu.memory_space<vmem>>, %arg6: memref<1x1x128xf32, #tpu.memory_space<vmem>>, %arg7: memref<1x1x128xf32, #tpu.memory_space<vmem>>, %arg8: memref<40x128xf32, #tpu.memory_space<vmem>>) attributes {dimension_semantics = [#tpu.dimension_semantics<parallel>, #tpu.dimension_semantics<arbitrary>], iteration_bounds = array<i64: 2, 1>, scalar_prefetch = 0 : i64, scratch_operands = 1 : i64, tpu.core_type = #tpu.core_type<tc>, window_params = [{transform_indices = @transform_0, window_bounds = array<i64: 1, 32, 128>}, {transform_indices = @transform_1, window_bounds = array<i64: 1, 8, 128>}, {pipeline_mode = #tpu.pipeline_mode<synchronous>, transform_indices = @transform_2, window_bounds = array<i64: 128, 128>}, {transform_indices = @transform_3, window_bounds = array<i64: 1, 16, 128>}, {transform_indices = @transform_4, window_bounds = array<i64: 1, 1, 128>}, {transform_indices = @transform_5, window_bounds = array<i64: 1, 1, 128>}]} {
    %c0_i32 = arith.constant 0 : i32
    %0 = arith.cmpi eq, %arg1, %c0_i32 : i32
    %1 = arith.extui %0 : i1 to i32
    %c0_i32_0 = arith.constant 0 : i32
    %2 = arith.cmpi ne, %1, %c0_i32_0 : i32
    scf.if %2 {
      %cst_20 = arith.constant 0.000000e+00 : f32
      %25 = vector.broadcast %cst_20 : f32 to vector<1x1x128xf32>
      %c0_21 = arith.constant 0 : index
      %c0_22 = arith.constant 0 : index
      %c0_23 = arith.constant 0 : index
      %26 = vector.load %arg6[%c0_21, %c0_22, %c0_23] : memref<1x1x128xf32, #tpu.memory_space<vmem>>, vector<1x1x128xf32>
      tpu.vector_store %arg6[%c0_21, %c0_22, %c0_23], %25 {strides = array<i32>} : memref<1x1x128xf32, #tpu.memory_space<vmem>>, vector<1x1x128xf32>,
      %cst_24 = arith.constant 0.000000e+00 : f32
      %27 = vector.broadcast %cst_24 : f32 to vector<1x1x128xf32>
      %c0_25 = arith.constant 0 : index
      %c0_26 = arith.constant 0 : index
      %c0_27 = arith.constant 0 : index
      %28 = vector.load %arg7[%c0_25, %c0_26, %c0_27] : memref<1x1x128xf32, #tpu.memory_space<vmem>>, vector<1x1x128xf32>
      tpu.vector_store %arg7[%c0_25, %c0_26, %c0_27], %27 {strides = array<i32>} : memref<1x1x128xf32, #tpu.memory_space<vmem>>, vector<1x1x128xf32>,
    } else {
    }
    %c0 = arith.constant 0 : index
    %c0_1 = arith.constant 0 : index
    %c0_2 = arith.constant 0 : index
    %3 = vector.load %arg2[%c0, %c0_1, %c0_2] : memref<1x32x128xbf16, #tpu.memory_space<vmem>>, vector<1x32x128xbf16>
    %4 = vector.shape_cast %3 : vector<1x32x128xbf16> to vector<32x128xbf16>
    %5 = arith.extf %4 : vector<32x128xbf16> to vector<32x128xf32>
    %c0_3 = arith.constant 0 : index
    %c0_4 = arith.constant 0 : index
    %6 = vector.load %arg8[%c0_3, %c0_4] : memref<40x128xf32, #tpu.memory_space<vmem>>, vector<32x128xf32>
    tpu.vector_store %arg8[%c0_3, %c0_4], %5 {strides = array<i32>} : memref<40x128xf32, #tpu.memory_space<vmem>>, vector<32x128xf32>,
    %c0_5 = arith.constant 0 : index
    %c0_6 = arith.constant 0 : index
    %c0_7 = arith.constant 0 : index
    %7 = vector.load %arg3[%c0_5, %c0_6, %c0_7] : memref<1x8x128xbf16, #tpu.memory_space<vmem>>, vector<1x8x128xbf16>
    %8 = vector.shape_cast %7 : vector<1x8x128xbf16> to vector<8x128xbf16>
    %9 = arith.extf %8 : vector<8x128xbf16> to vector<8x128xf32>
    %c32 = arith.constant 32 : index
    %c0_8 = arith.constant 0 : index
    %10 = vector.load %arg8[%c32, %c0_8] : memref<40x128xf32, #tpu.memory_space<vmem>>, vector<8x128xf32>
    tpu.vector_store %arg8[%c32, %c0_8], %9 {strides = array<i32>} : memref<40x128xf32, #tpu.memory_space<vmem>>, vector<8x128xf32>,
    %c0_9 = arith.constant 0 : index
    %c0_10 = arith.constant 0 : index
    %11 = tpu.strided_load %arg8[%c0_9, %c0_10] {strides = array<i32: 2, 1>} : memref<40x128xf32, #tpu.memory_space<vmem>>, vector<16x128xf32>
    %12 = arith.truncf %11 : vector<16x128xf32> to vector<16x128xbf16>
    %c0_11 = arith.constant 0 : index
    %c0_12 = arith.constant 0 : index
    %13 = vector.load %arg4[%c0_11, %c0_12] : memref<128x128xbf16, #tpu.memory_space<vmem>>, vector<128x128xbf16>
    %cst = arith.constant dense<0.000000e+00> : vector<16x128xf32>
    %14 = tpu.matmul %12, %13, %cst {dimension_numbers = #tpu.dot_dimension_numbers<[1], [0], [0], [1], [0, 0, 1, 1], [], []>} : vector<16x128xbf16>, vector<128x128xbf16>, vector<16x128xf32> -> vector<16x128xf32>
    %15 = arith.truncf %14 : vector<16x128xf32> to vector<16x128xbf16>
    %c0_13 = arith.constant 0 : index
    %c0_14 = arith.constant 0 : index
    %c0_15 = arith.constant 0 : index
    %16 = vector.load %arg5[%c0_13, %c0_14, %c0_15] : memref<1x16x128xbf16, #tpu.memory_space<vmem>>, vector<1x16x128xbf16>
    %17 = vector.shape_cast %16 : vector<1x16x128xbf16> to vector<16x128xbf16>
    %18 = vector.shape_cast %15 : vector<16x128xbf16> to vector<1x16x128xbf16>
    tpu.vector_store %arg5[%c0_13, %c0_14, %c0_15], %18 {strides = array<i32>} : memref<1x16x128xbf16, #tpu.memory_space<vmem>>, vector<1x16x128xbf16>,
    %c0_i32_16 = arith.constant 0 : i32
    %19 = arith.cmpi eq, %arg1, %c0_i32_16 : i32
    %20 = arith.extui %19 : i1 to i32
    %c0_i32_17 = arith.constant 0 : i32
    %21 = arith.cmpi ne, %20, %c0_i32_17 : i32
    scf.if %21 {
      %25 = tpu.iota {dimensions = array<i32: 0>} : vector<16x1xi32>
      %c13_i32 = arith.constant 13 : i32
      %26 = vector.broadcast %c13_i32 : i32 to vector<16x1xi32>
      %27 = arith.cmpi slt, %25, %26 : vector<16x1xi32>
      %cst_20 = arith.constant 0.000000e+00 : f32
      %28 = vector.shape_cast %27 : vector<16x1xi1> to vector<16x1xi1>
      %29 = vector.broadcast %28 : vector<16x1xi1> to vector<16x128xi1>
      %30 = vector.broadcast %cst_20 : f32 to vector<16x128xf32>
      %31 = arith.select %29, %14, %30 : vector<16x128xi1>, vector<16x128xf32>
      %c0_21 = arith.constant 0 : index
      %c0_22 = arith.constant 0 : index
      %c0_23 = arith.constant 0 : index
      %32 = vector.load %arg6[%c0_21, %c0_22, %c0_23] : memref<1x1x128xf32, #tpu.memory_space<vmem>>, vector<1x1x128xf32>
      %33 = vector.shape_cast %32 : vector<1x1x128xf32> to vector<1x128xf32>
      %cst_24 = arith.constant dense<0.000000e+00> : vector<128xf32>
      %34 = vector.multi_reduction <add>, %31, %cst_24 [0] : vector<16x128xf32> to vector<128xf32>
      %35 = vector.shape_cast %34 : vector<128xf32> to vector<1x128xf32>
      %36 = arith.addf %33, %35 : vector<1x128xf32>
      %c0_25 = arith.constant 0 : index
      %c0_26 = arith.constant 0 : index
      %c0_27 = arith.constant 0 : index
      %37 = vector.load %arg6[%c0_25, %c0_26, %c0_27] : memref<1x1x128xf32, #tpu.memory_space<vmem>>, vector<1x1x128xf32>
      %38 = vector.shape_cast %37 : vector<1x1x128xf32> to vector<1x128xf32>
      %39 = vector.shape_cast %36 : vector<1x128xf32> to vector<1x1x128xf32>
      tpu.vector_store %arg6[%c0_25, %c0_26, %c0_27], %39 {strides = array<i32>} : memref<1x1x128xf32, #tpu.memory_space<vmem>>, vector<1x1x128xf32>,
      %c0_28 = arith.constant 0 : index
      %c0_29 = arith.constant 0 : index
      %c0_30 = arith.constant 0 : index
      %40 = vector.load %arg7[%c0_28, %c0_29, %c0_30] : memref<1x1x128xf32, #tpu.memory_space<vmem>>, vector<1x1x128xf32>
      %41 = vector.shape_cast %40 : vector<1x1x128xf32> to vector<1x128xf32>
      %42 = arith.mulf %31, %31 : vector<16x128xf32>
      %cst_31 = arith.constant dense<0.000000e+00> : vector<128xf32>
      %43 = vector.multi_reduction <add>, %42, %cst_31 [0] : vector<16x128xf32> to vector<128xf32>
      %44 = vector.shape_cast %43 : vector<128xf32> to vector<1x128xf32>
      %45 = arith.addf %41, %44 : vector<1x128xf32>
      %c0_32 = arith.constant 0 : index
      %c0_33 = arith.constant 0 : index
      %c0_34 = arith.constant 0 : index
      %46 = vector.load %arg7[%c0_32, %c0_33, %c0_34] : memref<1x1x128xf32, #tpu.memory_space<vmem>>, vector<1x1x128xf32>
      %47 = vector.shape_cast %46 : vector<1x1x128xf32> to vector<1x128xf32>
      %48 = vector.shape_cast %45 : vector<1x128xf32> to vector<1x1x128xf32>
      tpu.vector_store %arg7[%c0_32, %c0_33, %c0_34], %48 {strides = array<i32>} : memref<1x1x128xf32, #tpu.memory_space<vmem>>, vector<1x1x128xf32>,
    } else {
    }
    %c0_i32_18 = arith.constant 0 : i32
    %22 = arith.cmpi ne, %arg1, %c0_i32_18 : i32
    %23 = arith.extui %22 : i1 to i32
    %c0_i32_19 = arith.constant 0 : i32
    %24 = arith.cmpi ne, %23, %c0_i32_19 : i32
    scf.if %24 {
      %c0_20 = arith.constant 0 : index
      %c0_21 = arith.constant 0 : index
      %c0_22 = arith.constant 0 : index
      %25 = vector.load %arg6[%c0_20, %c0_21, %c0_22] : memref<1x1x128xf32, #tpu.memory_space<vmem>>, vector<1x1x128xf32>
      %26 = vector.shape_cast %25 : vector<1x1x128xf32> to vector<1x128xf32>
      %cst_23 = arith.constant dense<0.000000e+00> : vector<128xf32>
      %27 = vector.multi_reduction <add>, %14, %cst_23 [0] : vector<16x128xf32> to vector<128xf32>
      %28 = vector.shape_cast %27 : vector<128xf32> to vector<1x128xf32>
      %29 = arith.addf %26, %28 : vector<1x128xf32>
      %c0_24 = arith.constant 0 : index
      %c0_25 = arith.constant 0 : index
      %c0_26 = arith.constant 0 : index
      %30 = vector.load %arg6[%c0_24, %c0_25, %c0_26] : memref<1x1x128xf32, #tpu.memory_space<vmem>>, vector<1x1x128xf32>
      %31 = vector.shape_cast %30 : vector<1x1x128xf32> to vector<1x128xf32>
      %32 = vector.shape_cast %29 : vector<1x128xf32> to vector<1x1x128xf32>
      tpu.vector_store %arg6[%c0_24, %c0_25, %c0_26], %32 {strides = array<i32>} : memref<1x1x128xf32, #tpu.memory_space<vmem>>, vector<1x1x128xf32>,
      %c0_27 = arith.constant 0 : index
      %c0_28 = arith.constant 0 : index
      %c0_29 = arith.constant 0 : index
      %33 = vector.load %arg7[%c0_27, %c0_28, %c0_29] : memref<1x1x128xf32, #tpu.memory_space<vmem>>, vector<1x1x128xf32>
      %34 = vector.shape_cast %33 : vector<1x1x128xf32> to vector<1x128xf32>
      %35 = arith.mulf %14, %14 : vector<16x128xf32>
      %cst_30 = arith.constant dense<0.000000e+00> : vector<128xf32>
      %36 = vector.multi_reduction <add>, %35, %cst_30 [0] : vector<16x128xf32> to vector<128xf32>
      %37 = vector.shape_cast %36 : vector<128xf32> to vector<1x128xf32>
      %38 = arith.addf %34, %37 : vector<1x128xf32>
      %c0_31 = arith.constant 0 : index
      %c0_32 = arith.constant 0 : index
      %c0_33 = arith.constant 0 : index
      %39 = vector.load %arg7[%c0_31, %c0_32, %c0_33] : memref<1x1x128xf32, #tpu.memory_space<vmem>>, vector<1x1x128xf32>
      %40 = vector.shape_cast %39 : vector<1x1x128xf32> to vector<1x128xf32>
      %41 = vector.shape_cast %38 : vector<1x128xf32> to vector<1x1x128xf32>
      tpu.vector_store %arg7[%c0_31, %c0_32, %c0_33], %41 {strides = array<i32>} : memref<1x1x128xf32, #tpu.memory_space<vmem>>, vector<1x1x128xf32>,
    } else {
    }
    return
  }
  func.func @transform_0(%arg0: i32, %arg1: i32) -> (i32, i32, i32) {
    %c0_i32 = arith.constant 0 : i32
    %c0_i32_0 = arith.constant 0 : i32
    return %arg0, %arg1, %c0_i32 : i32, i32, i32
  }
  func.func @transform_1(%arg0: i32, %arg1: i32) -> (i32, i32, i32) {
    %c1_i32 = arith.constant 1 : i32
    %0 = arith.addi %arg1, %c1_i32 : i32
    %c4_i32 = arith.constant 4 : i32
    %1 = arith.muli %0, %c4_i32 : i32
    %c0_i32 = arith.constant 0 : i32
    %c0_i32_0 = arith.constant 0 : i32
    return %arg0, %1, %c0_i32 : i32, i32, i32
  }
  func.func @transform_2(%arg0: i32, %arg1: i32) -> (i32, i32) {
    %c0_i32 = arith.constant 0 : i32
    %c0_i32_0 = arith.constant 0 : i32
    %c0_i32_1 = arith.constant 0 : i32
    return %c0_i32, %c0_i32_0 : i32, i32
  }
  func.func @transform_3(%arg0: i32, %arg1: i32) -> (i32, i32, i32) {
    %c0_i32 = arith.constant 0 : i32
    %c0_i32_0 = arith.constant 0 : i32
    return %arg0, %arg1, %c0_i32 : i32, i32, i32
  }
  func.func @transform_4(%arg0: i32, %arg1: i32) -> (i32, i32, i32) {
    %c0_i32 = arith.constant 0 : i32
    %c0_i32_0 = arith.constant 0 : i32
    %c0_i32_1 = arith.constant 0 : i32
    return %arg0, %c0_i32, %c0_i32_0 : i32, i32, i32
  }
  func.func @transform_5(%arg0: i32, %arg1: i32) -> (i32, i32, i32) {
    %c0_i32 = arith.constant 0 : i32
    %c0_i32_0 = arith.constant 0 : i32
    %c0_i32_1 = arith.constant 0 : i32
    return %arg0, %c0_i32, %c0_i32_0 : i32, i32, i32
  }
}

module attributes {stable_mosaic.version = 11 : i64} {
  func.func @_bn_apply_kernel(%arg0: i32, %arg1: i32, %arg2: memref<1x16x128xbf16, #tpu.memory_space<vmem>>, %arg3: memref<1x128xf32, #tpu.memory_space<vmem>>, %arg4: memref<1x128xf32, #tpu.memory_space<vmem>>, %arg5: memref<1x16x128xbf16, #tpu.memory_space<vmem>>) attributes {dimension_semantics = [#tpu.dimension_semantics<parallel>, #tpu.dimension_semantics<parallel>], iteration_bounds = array<i64: 2, 1>, scalar_prefetch = 0 : i64, scratch_operands = 0 : i64, tpu.core_type = #tpu.core_type<tc>, window_params = [{transform_indices = @transform_0, window_bounds = array<i64: 1, 16, 128>}, {pipeline_mode = #tpu.pipeline_mode<synchronous>, transform_indices = @transform_1, window_bounds = array<i64: 1, 128>}, {pipeline_mode = #tpu.pipeline_mode<synchronous>, transform_indices = @transform_2, window_bounds = array<i64: 1, 128>}, {transform_indices = @transform_3, window_bounds = array<i64: 1, 16, 128>}]} {
    %c0 = arith.constant 0 : index
    %c0_0 = arith.constant 0 : index
    %c0_1 = arith.constant 0 : index
    %0 = vector.load %arg2[%c0, %c0_0, %c0_1] : memref<1x16x128xbf16, #tpu.memory_space<vmem>>, vector<1x16x128xbf16>
    %1 = vector.shape_cast %0 : vector<1x16x128xbf16> to vector<16x128xbf16>
    %2 = arith.extf %1 : vector<16x128xbf16> to vector<16x128xf32>
    %c0_2 = arith.constant 0 : index
    %c0_3 = arith.constant 0 : index
    %3 = vector.load %arg3[%c0_2, %c0_3] : memref<1x128xf32, #tpu.memory_space<vmem>>, vector<1x128xf32>
    %4 = vector.broadcast %3 : vector<1x128xf32> to vector<16x128xf32>
    %5 = arith.mulf %2, %4 : vector<16x128xf32>
    %c0_4 = arith.constant 0 : index
    %c0_5 = arith.constant 0 : index
    %6 = vector.load %arg4[%c0_4, %c0_5] : memref<1x128xf32, #tpu.memory_space<vmem>>, vector<1x128xf32>
    %7 = vector.broadcast %6 : vector<1x128xf32> to vector<16x128xf32>
    %8 = arith.addf %5, %7 : vector<16x128xf32>
    %9 = arith.truncf %8 : vector<16x128xf32> to vector<16x128xbf16>
    %c0_6 = arith.constant 0 : index
    %c0_7 = arith.constant 0 : index
    %c0_8 = arith.constant 0 : index
    %10 = vector.load %arg5[%c0_6, %c0_7, %c0_8] : memref<1x16x128xbf16, #tpu.memory_space<vmem>>, vector<1x16x128xbf16>
    %11 = vector.shape_cast %10 : vector<1x16x128xbf16> to vector<16x128xbf16>
    %12 = vector.shape_cast %9 : vector<16x128xbf16> to vector<1x16x128xbf16>
    tpu.vector_store %arg5[%c0_6, %c0_7, %c0_8], %12 {strides = array<i32>} : memref<1x16x128xbf16, #tpu.memory_space<vmem>>, vector<1x16x128xbf16>,
    return
  }
  func.func @transform_0(%arg0: i32, %arg1: i32) -> (i32, i32, i32) {
    %c0_i32 = arith.constant 0 : i32
    %c0_i32_0 = arith.constant 0 : i32
    return %arg0, %arg1, %c0_i32 : i32, i32, i32
  }
  func.func @transform_1(%arg0: i32, %arg1: i32) -> (i32, i32) {
    %c0_i32 = arith.constant 0 : i32
    %c0_i32_0 = arith.constant 0 : i32
    %c0_i32_1 = arith.constant 0 : i32
    return %c0_i32, %c0_i32_0 : i32, i32
  }
  func.func @transform_2(%arg0: i32, %arg1: i32) -> (i32, i32) {
    %c0_i32 = arith.constant 0 : i32
    %c0_i32_0 = arith.constant 0 : i32
    %c0_i32_1 = arith.constant 0 : i32
    return %c0_i32, %c0_i32_0 : i32, i32
  }
  func.func @transform_3(%arg0: i32, %arg1: i32) -> (i32, i32, i32) {
    %c0_i32 = arith.constant 0 : i32
    %c0_i32_0 = arith.constant 0 : i32
    return %arg0, %arg1, %c0_i32 : i32, i32, i32
  }
}

module attributes {stable_mosaic.version = 11 : i64} {
  func.func @_bn_apply_kernel(%arg0: i32, %arg1: i32, %arg2: memref<1x16x128xbf16, #tpu.memory_space<vmem>>, %arg3: memref<1x128xf32, #tpu.memory_space<vmem>>, %arg4: memref<1x128xf32, #tpu.memory_space<vmem>>, %arg5: memref<1x16x128xbf16, #tpu.memory_space<vmem>>) attributes {dimension_semantics = [#tpu.dimension_semantics<parallel>, #tpu.dimension_semantics<parallel>], iteration_bounds = array<i64: 2, 1>, scalar_prefetch = 0 : i64, scratch_operands = 0 : i64, tpu.core_type = #tpu.core_type<tc>, window_params = [{transform_indices = @transform_0, window_bounds = array<i64: 1, 16, 128>}, {pipeline_mode = #tpu.pipeline_mode<synchronous>, transform_indices = @transform_1, window_bounds = array<i64: 1, 128>}, {pipeline_mode = #tpu.pipeline_mode<synchronous>, transform_indices = @transform_2, window_bounds = array<i64: 1, 128>}, {transform_indices = @transform_3, window_bounds = array<i64: 1, 16, 128>}]} {
    %c0 = arith.constant 0 : index
    %c0_0 = arith.constant 0 : index
    %c0_1 = arith.constant 0 : index
    %0 = vector.load %arg2[%c0, %c0_0, %c0_1] : memref<1x16x128xbf16, #tpu.memory_space<vmem>>, vector<1x16x128xbf16>
    %1 = vector.shape_cast %0 : vector<1x16x128xbf16> to vector<16x128xbf16>
    %2 = arith.extf %1 : vector<16x128xbf16> to vector<16x128xf32>
    %c0_2 = arith.constant 0 : index
    %c0_3 = arith.constant 0 : index
    %3 = vector.load %arg3[%c0_2, %c0_3] : memref<1x128xf32, #tpu.memory_space<vmem>>, vector<1x128xf32>
    %4 = vector.broadcast %3 : vector<1x128xf32> to vector<16x128xf32>
    %5 = arith.mulf %2, %4 : vector<16x128xf32>
    %c0_4 = arith.constant 0 : index
    %c0_5 = arith.constant 0 : index
    %6 = vector.load %arg4[%c0_4, %c0_5] : memref<1x128xf32, #tpu.memory_space<vmem>>, vector<1x128xf32>
    %7 = vector.broadcast %6 : vector<1x128xf32> to vector<16x128xf32>
    %8 = arith.addf %5, %7 : vector<16x128xf32>
    %cst = arith.constant 0.000000e+00 : f32
    %9 = vector.broadcast %cst : f32 to vector<16x128xf32>
    %10 = arith.maximumf %8, %9 : vector<16x128xf32>
    %11 = arith.truncf %10 : vector<16x128xf32> to vector<16x128xbf16>
    %c0_6 = arith.constant 0 : index
    %c0_7 = arith.constant 0 : index
    %c0_8 = arith.constant 0 : index
    %12 = vector.load %arg5[%c0_6, %c0_7, %c0_8] : memref<1x16x128xbf16, #tpu.memory_space<vmem>>, vector<1x16x128xbf16>
    %13 = vector.shape_cast %12 : vector<1x16x128xbf16> to vector<16x128xbf16>
    %14 = vector.shape_cast %11 : vector<16x128xbf16> to vector<1x16x128xbf16>
    tpu.vector_store %arg5[%c0_6, %c0_7, %c0_8], %14 {strides = array<i32>} : memref<1x16x128xbf16, #tpu.memory_space<vmem>>, vector<1x16x128xbf16>,
    return
  }
  func.func @transform_0(%arg0: i32, %arg1: i32) -> (i32, i32, i32) {
    %c0_i32 = arith.constant 0 : i32
    %c0_i32_0 = arith.constant 0 : i32
    return %arg0, %arg1, %c0_i32 : i32, i32, i32
  }
  func.func @transform_1(%arg0: i32, %arg1: i32) -> (i32, i32) {
    %c0_i32 = arith.constant 0 : i32
    %c0_i32_0 = arith.constant 0 : i32
    %c0_i32_1 = arith.constant 0 : i32
    return %c0_i32, %c0_i32_0 : i32, i32
  }
  func.func @transform_2(%arg0: i32, %arg1: i32) -> (i32, i32) {
    %c0_i32 = arith.constant 0 : i32
    %c0_i32_0 = arith.constant 0 : i32
    %c0_i32_1 = arith.constant 0 : i32
    return %c0_i32, %c0_i32_0 : i32, i32
  }
  func.func @transform_3(%arg0: i32, %arg1: i32) -> (i32, i32, i32) {
    %c0_i32 = arith.constant 0 : i32
    %c0_i32_0 = arith.constant 0 : i32
    return %arg0, %arg1, %c0_i32 : i32, i32, i32
  }
}

module attributes {stable_mosaic.version = 11 : i64} {
  func.func @_conv_stats_kernel(%arg0: i32, %arg1: i32, %arg2: memref<1x32x128xbf16, #tpu.memory_space<vmem>>, %arg3: memref<1x8x128xbf16, #tpu.memory_space<vmem>>, %arg4: memref<384x128xbf16, #tpu.memory_space<vmem>>, %arg5: memref<1x16x128xbf16, #tpu.memory_space<vmem>>, %arg6: memref<1x1x128xf32, #tpu.memory_space<vmem>>, %arg7: memref<1x1x128xf32, #tpu.memory_space<vmem>>, %arg8: memref<40x128xf32, #tpu.memory_space<vmem>>) attributes {dimension_semantics = [#tpu.dimension_semantics<parallel>, #tpu.dimension_semantics<arbitrary>], iteration_bounds = array<i64: 2, 1>, scalar_prefetch = 0 : i64, scratch_operands = 1 : i64, tpu.core_type = #tpu.core_type<tc>, window_params = [{transform_indices = @transform_0, window_bounds = array<i64: 1, 32, 128>}, {transform_indices = @transform_1, window_bounds = array<i64: 1, 8, 128>}, {pipeline_mode = #tpu.pipeline_mode<synchronous>, transform_indices = @transform_2, window_bounds = array<i64: 384, 128>}, {transform_indices = @transform_3, window_bounds = array<i64: 1, 16, 128>}, {transform_indices = @transform_4, window_bounds = array<i64: 1, 1, 128>}, {transform_indices = @transform_5, window_bounds = array<i64: 1, 1, 128>}]} {
    %c0_i32 = arith.constant 0 : i32
    %0 = arith.cmpi eq, %arg1, %c0_i32 : i32
    %1 = arith.extui %0 : i1 to i32
    %c0_i32_0 = arith.constant 0 : i32
    %2 = arith.cmpi ne, %1, %c0_i32_0 : i32
    scf.if %2 {
      %cst_22 = arith.constant 0.000000e+00 : f32
      %30 = vector.broadcast %cst_22 : f32 to vector<1x1x128xf32>
      %c0_23 = arith.constant 0 : index
      %c0_24 = arith.constant 0 : index
      %c0_25 = arith.constant 0 : index
      %31 = vector.load %arg6[%c0_23, %c0_24, %c0_25] : memref<1x1x128xf32, #tpu.memory_space<vmem>>, vector<1x1x128xf32>
      tpu.vector_store %arg6[%c0_23, %c0_24, %c0_25], %30 {strides = array<i32>} : memref<1x1x128xf32, #tpu.memory_space<vmem>>, vector<1x1x128xf32>,
      %cst_26 = arith.constant 0.000000e+00 : f32
      %32 = vector.broadcast %cst_26 : f32 to vector<1x1x128xf32>
      %c0_27 = arith.constant 0 : index
      %c0_28 = arith.constant 0 : index
      %c0_29 = arith.constant 0 : index
      %33 = vector.load %arg7[%c0_27, %c0_28, %c0_29] : memref<1x1x128xf32, #tpu.memory_space<vmem>>, vector<1x1x128xf32>
      tpu.vector_store %arg7[%c0_27, %c0_28, %c0_29], %32 {strides = array<i32>} : memref<1x1x128xf32, #tpu.memory_space<vmem>>, vector<1x1x128xf32>,
    } else {
    }
    %c0 = arith.constant 0 : index
    %c0_1 = arith.constant 0 : index
    %c0_2 = arith.constant 0 : index
    %3 = vector.load %arg2[%c0, %c0_1, %c0_2] : memref<1x32x128xbf16, #tpu.memory_space<vmem>>, vector<1x32x128xbf16>
    %4 = vector.shape_cast %3 : vector<1x32x128xbf16> to vector<32x128xbf16>
    %5 = arith.extf %4 : vector<32x128xbf16> to vector<32x128xf32>
    %c0_3 = arith.constant 0 : index
    %c0_4 = arith.constant 0 : index
    %6 = vector.load %arg8[%c0_3, %c0_4] : memref<40x128xf32, #tpu.memory_space<vmem>>, vector<32x128xf32>
    tpu.vector_store %arg8[%c0_3, %c0_4], %5 {strides = array<i32>} : memref<40x128xf32, #tpu.memory_space<vmem>>, vector<32x128xf32>,
    %c0_5 = arith.constant 0 : index
    %c0_6 = arith.constant 0 : index
    %c0_7 = arith.constant 0 : index
    %7 = vector.load %arg3[%c0_5, %c0_6, %c0_7] : memref<1x8x128xbf16, #tpu.memory_space<vmem>>, vector<1x8x128xbf16>
    %8 = vector.shape_cast %7 : vector<1x8x128xbf16> to vector<8x128xbf16>
    %9 = arith.extf %8 : vector<8x128xbf16> to vector<8x128xf32>
    %c32 = arith.constant 32 : index
    %c0_8 = arith.constant 0 : index
    %10 = vector.load %arg8[%c32, %c0_8] : memref<40x128xf32, #tpu.memory_space<vmem>>, vector<8x128xf32>
    tpu.vector_store %arg8[%c32, %c0_8], %9 {strides = array<i32>} : memref<40x128xf32, #tpu.memory_space<vmem>>, vector<8x128xf32>,
    %c0_9 = arith.constant 0 : index
    %c0_10 = arith.constant 0 : index
    %11 = tpu.strided_load %arg8[%c0_9, %c0_10] {strides = array<i32: 2, 1>} : memref<40x128xf32, #tpu.memory_space<vmem>>, vector<16x128xf32>
    %12 = arith.truncf %11 : vector<16x128xf32> to vector<16x128xbf16>
    %c1 = arith.constant 1 : index
    %c0_11 = arith.constant 0 : index
    %13 = tpu.strided_load %arg8[%c1, %c0_11] {strides = array<i32: 2, 1>} : memref<40x128xf32, #tpu.memory_space<vmem>>, vector<16x128xf32>
    %14 = arith.truncf %13 : vector<16x128xf32> to vector<16x128xbf16>
    %c2 = arith.constant 2 : index
    %c0_12 = arith.constant 0 : index
    %15 = tpu.strided_load %arg8[%c2, %c0_12] {strides = array<i32: 2, 1>} : memref<40x128xf32, #tpu.memory_space<vmem>>, vector<16x128xf32>
    %16 = arith.truncf %15 : vector<16x128xf32> to vector<16x128xbf16>
    %17 = tpu.concatenate %12, %14, %16 in 1 : vector<16x128xbf16>, vector<16x128xbf16>, vector<16x128xbf16> -> vector<16x384xbf16>
    %c0_13 = arith.constant 0 : index
    %c0_14 = arith.constant 0 : index
    %18 = vector.load %arg4[%c0_13, %c0_14] : memref<384x128xbf16, #tpu.memory_space<vmem>>, vector<384x128xbf16>
    %cst = arith.constant dense<0.000000e+00> : vector<16x128xf32>
    %19 = tpu.matmul %17, %18, %cst {dimension_numbers = #tpu.dot_dimension_numbers<[1], [0], [0], [1], [0, 0, 1, 1], [], []>} : vector<16x384xbf16>, vector<384x128xbf16>, vector<16x128xf32> -> vector<16x128xf32>
    %20 = arith.truncf %19 : vector<16x128xf32> to vector<16x128xbf16>
    %c0_15 = arith.constant 0 : index
    %c0_16 = arith.constant 0 : index
    %c0_17 = arith.constant 0 : index
    %21 = vector.load %arg5[%c0_15, %c0_16, %c0_17] : memref<1x16x128xbf16, #tpu.memory_space<vmem>>, vector<1x16x128xbf16>
    %22 = vector.shape_cast %21 : vector<1x16x128xbf16> to vector<16x128xbf16>
    %23 = vector.shape_cast %20 : vector<16x128xbf16> to vector<1x16x128xbf16>
    tpu.vector_store %arg5[%c0_15, %c0_16, %c0_17], %23 {strides = array<i32>} : memref<1x16x128xbf16, #tpu.memory_space<vmem>>, vector<1x16x128xbf16>,
    %c0_i32_18 = arith.constant 0 : i32
    %24 = arith.cmpi eq, %arg1, %c0_i32_18 : i32
    %25 = arith.extui %24 : i1 to i32
    %c0_i32_19 = arith.constant 0 : i32
    %26 = arith.cmpi ne, %25, %c0_i32_19 : i32
    scf.if %26 {
      %30 = tpu.iota {dimensions = array<i32: 0>} : vector<16x1xi32>
      %c13_i32 = arith.constant 13 : i32
      %31 = vector.broadcast %c13_i32 : i32 to vector<16x1xi32>
      %32 = arith.cmpi slt, %30, %31 : vector<16x1xi32>
      %cst_22 = arith.constant 0.000000e+00 : f32
      %33 = vector.shape_cast %32 : vector<16x1xi1> to vector<16x1xi1>
      %34 = vector.broadcast %33 : vector<16x1xi1> to vector<16x128xi1>
      %35 = vector.broadcast %cst_22 : f32 to vector<16x128xf32>
      %36 = arith.select %34, %19, %35 : vector<16x128xi1>, vector<16x128xf32>
      %c0_23 = arith.constant 0 : index
      %c0_24 = arith.constant 0 : index
      %c0_25 = arith.constant 0 : index
      %37 = vector.load %arg6[%c0_23, %c0_24, %c0_25] : memref<1x1x128xf32, #tpu.memory_space<vmem>>, vector<1x1x128xf32>
      %38 = vector.shape_cast %37 : vector<1x1x128xf32> to vector<1x128xf32>
      %cst_26 = arith.constant dense<0.000000e+00> : vector<128xf32>
      %39 = vector.multi_reduction <add>, %36, %cst_26 [0] : vector<16x128xf32> to vector<128xf32>
      %40 = vector.shape_cast %39 : vector<128xf32> to vector<1x128xf32>
      %41 = arith.addf %38, %40 : vector<1x128xf32>
      %c0_27 = arith.constant 0 : index
      %c0_28 = arith.constant 0 : index
      %c0_29 = arith.constant 0 : index
      %42 = vector.load %arg6[%c0_27, %c0_28, %c0_29] : memref<1x1x128xf32, #tpu.memory_space<vmem>>, vector<1x1x128xf32>
      %43 = vector.shape_cast %42 : vector<1x1x128xf32> to vector<1x128xf32>
      %44 = vector.shape_cast %41 : vector<1x128xf32> to vector<1x1x128xf32>
      tpu.vector_store %arg6[%c0_27, %c0_28, %c0_29], %44 {strides = array<i32>} : memref<1x1x128xf32, #tpu.memory_space<vmem>>, vector<1x1x128xf32>,
      %c0_30 = arith.constant 0 : index
      %c0_31 = arith.constant 0 : index
      %c0_32 = arith.constant 0 : index
      %45 = vector.load %arg7[%c0_30, %c0_31, %c0_32] : memref<1x1x128xf32, #tpu.memory_space<vmem>>, vector<1x1x128xf32>
      %46 = vector.shape_cast %45 : vector<1x1x128xf32> to vector<1x128xf32>
      %47 = arith.mulf %36, %36 : vector<16x128xf32>
      %cst_33 = arith.constant dense<0.000000e+00> : vector<128xf32>
      %48 = vector.multi_reduction <add>, %47, %cst_33 [0] : vector<16x128xf32> to vector<128xf32>
      %49 = vector.shape_cast %48 : vector<128xf32> to vector<1x128xf32>
      %50 = arith.addf %46, %49 : vector<1x128xf32>
      %c0_34 = arith.constant 0 : index
      %c0_35 = arith.constant 0 : index
      %c0_36 = arith.constant 0 : index
      %51 = vector.load %arg7[%c0_34, %c0_35, %c0_36] : memref<1x1x128xf32, #tpu.memory_space<vmem>>, vector<1x1x128xf32>
      %52 = vector.shape_cast %51 : vector<1x1x128xf32> to vector<1x128xf32>
      %53 = vector.shape_cast %50 : vector<1x128xf32> to vector<1x1x128xf32>
      tpu.vector_store %arg7[%c0_34, %c0_35, %c0_36], %53 {strides = array<i32>} : memref<1x1x128xf32, #tpu.memory_space<vmem>>, vector<1x1x128xf32>,
    } else {
    }
    %c0_i32_20 = arith.constant 0 : i32
    %27 = arith.cmpi ne, %arg1, %c0_i32_20 : i32
    %28 = arith.extui %27 : i1 to i32
    %c0_i32_21 = arith.constant 0 : i32
    %29 = arith.cmpi ne, %28, %c0_i32_21 : i32
    scf.if %29 {
      %c0_22 = arith.constant 0 : index
      %c0_23 = arith.constant 0 : index
      %c0_24 = arith.constant 0 : index
      %30 = vector.load %arg6[%c0_22, %c0_23, %c0_24] : memref<1x1x128xf32, #tpu.memory_space<vmem>>, vector<1x1x128xf32>
      %31 = vector.shape_cast %30 : vector<1x1x128xf32> to vector<1x128xf32>
      %cst_25 = arith.constant dense<0.000000e+00> : vector<128xf32>
      %32 = vector.multi_reduction <add>, %19, %cst_25 [0] : vector<16x128xf32> to vector<128xf32>
      %33 = vector.shape_cast %32 : vector<128xf32> to vector<1x128xf32>
      %34 = arith.addf %31, %33 : vector<1x128xf32>
      %c0_26 = arith.constant 0 : index
      %c0_27 = arith.constant 0 : index
      %c0_28 = arith.constant 0 : index
      %35 = vector.load %arg6[%c0_26, %c0_27, %c0_28] : memref<1x1x128xf32, #tpu.memory_space<vmem>>, vector<1x1x128xf32>
      %36 = vector.shape_cast %35 : vector<1x1x128xf32> to vector<1x128xf32>
      %37 = vector.shape_cast %34 : vector<1x128xf32> to vector<1x1x128xf32>
      tpu.vector_store %arg6[%c0_26, %c0_27, %c0_28], %37 {strides = array<i32>} : memref<1x1x128xf32, #tpu.memory_space<vmem>>, vector<1x1x128xf32>,
      %c0_29 = arith.constant 0 : index
      %c0_30 = arith.constant 0 : index
      %c0_31 = arith.constant 0 : index
      %38 = vector.load %arg7[%c0_29, %c0_30, %c0_31] : memref<1x1x128xf32, #tpu.memory_space<vmem>>, vector<1x1x128xf32>
      %39 = vector.shape_cast %38 : vector<1x1x128xf32> to vector<1x128xf32>
      %40 = arith.mulf %19, %19 : vector<16x128xf32>
      %cst_32 = arith.constant dense<0.000000e+00> : vector<128xf32>
      %41 = vector.multi_reduction <add>, %40, %cst_32 [0] : vector<16x128xf32> to vector<128xf32>
      %42 = vector.shape_cast %41 : vector<128xf32> to vector<1x128xf32>
      %43 = arith.addf %39, %42 : vector<1x128xf32>
      %c0_33 = arith.constant 0 : index
      %c0_34 = arith.constant 0 : index
      %c0_35 = arith.constant 0 : index
      %44 = vector.load %arg7[%c0_33, %c0_34, %c0_35] : memref<1x1x128xf32, #tpu.memory_space<vmem>>, vector<1x1x128xf32>
      %45 = vector.shape_cast %44 : vector<1x1x128xf32> to vector<1x128xf32>
      %46 = vector.shape_cast %43 : vector<1x128xf32> to vector<1x1x128xf32>
      tpu.vector_store %arg7[%c0_33, %c0_34, %c0_35], %46 {strides = array<i32>} : memref<1x1x128xf32, #tpu.memory_space<vmem>>, vector<1x1x128xf32>,
    } else {
    }
    return
  }
  func.func @transform_0(%arg0: i32, %arg1: i32) -> (i32, i32, i32) {
    %c0_i32 = arith.constant 0 : i32
    %c0_i32_0 = arith.constant 0 : i32
    return %arg0, %arg1, %c0_i32 : i32, i32, i32
  }
  func.func @transform_1(%arg0: i32, %arg1: i32) -> (i32, i32, i32) {
    %c1_i32 = arith.constant 1 : i32
    %0 = arith.addi %arg1, %c1_i32 : i32
    %c4_i32 = arith.constant 4 : i32
    %1 = arith.muli %0, %c4_i32 : i32
    %c0_i32 = arith.constant 0 : i32
    %c0_i32_0 = arith.constant 0 : i32
    return %arg0, %1, %c0_i32 : i32, i32, i32
  }
  func.func @transform_2(%arg0: i32, %arg1: i32) -> (i32, i32) {
    %c0_i32 = arith.constant 0 : i32
    %c0_i32_0 = arith.constant 0 : i32
    %c0_i32_1 = arith.constant 0 : i32
    return %c0_i32, %c0_i32_0 : i32, i32
  }
  func.func @transform_3(%arg0: i32, %arg1: i32) -> (i32, i32, i32) {
    %c0_i32 = arith.constant 0 : i32
    %c0_i32_0 = arith.constant 0 : i32
    return %arg0, %arg1, %c0_i32 : i32, i32, i32
  }
  func.func @transform_4(%arg0: i32, %arg1: i32) -> (i32, i32, i32) {
    %c0_i32 = arith.constant 0 : i32
    %c0_i32_0 = arith.constant 0 : i32
    %c0_i32_1 = arith.constant 0 : i32
    return %arg0, %c0_i32, %c0_i32_0 : i32, i32, i32
  }
  func.func @transform_5(%arg0: i32, %arg1: i32) -> (i32, i32, i32) {
    %c0_i32 = arith.constant 0 : i32
    %c0_i32_0 = arith.constant 0 : i32
    %c0_i32_1 = arith.constant 0 : i32
    return %arg0, %c0_i32, %c0_i32_0 : i32, i32, i32
  }
}

module attributes {stable_mosaic.version = 11 : i64} {
  func.func @_conv_stats_kernel(%arg0: i32, %arg1: i32, %arg2: memref<1x16x128xbf16, #tpu.memory_space<vmem>>, %arg3: memref<1x8x128xbf16, #tpu.memory_space<vmem>>, %arg4: memref<384x128xbf16, #tpu.memory_space<vmem>>, %arg5: memref<1x16x128xbf16, #tpu.memory_space<vmem>>, %arg6: memref<1x1x128xf32, #tpu.memory_space<vmem>>, %arg7: memref<1x1x128xf32, #tpu.memory_space<vmem>>, %arg8: memref<24x128xf32, #tpu.memory_space<vmem>>) attributes {dimension_semantics = [#tpu.dimension_semantics<parallel>, #tpu.dimension_semantics<arbitrary>], iteration_bounds = array<i64: 2, 1>, scalar_prefetch = 0 : i64, scratch_operands = 1 : i64, tpu.core_type = #tpu.core_type<tc>, window_params = [{transform_indices = @transform_0, window_bounds = array<i64: 1, 16, 128>}, {transform_indices = @transform_1, window_bounds = array<i64: 1, 8, 128>}, {pipeline_mode = #tpu.pipeline_mode<synchronous>, transform_indices = @transform_2, window_bounds = array<i64: 384, 128>}, {transform_indices = @transform_3, window_bounds = array<i64: 1, 16, 128>}, {transform_indices = @transform_4, window_bounds = array<i64: 1, 1, 128>}, {transform_indices = @transform_5, window_bounds = array<i64: 1, 1, 128>}]} {
    %c0_i32 = arith.constant 0 : i32
    %0 = arith.cmpi eq, %arg1, %c0_i32 : i32
    %1 = arith.extui %0 : i1 to i32
    %c0_i32_0 = arith.constant 0 : i32
    %2 = arith.cmpi ne, %1, %c0_i32_0 : i32
    scf.if %2 {
      %cst_22 = arith.constant 0.000000e+00 : f32
      %30 = vector.broadcast %cst_22 : f32 to vector<1x1x128xf32>
      %c0_23 = arith.constant 0 : index
      %c0_24 = arith.constant 0 : index
      %c0_25 = arith.constant 0 : index
      %31 = vector.load %arg6[%c0_23, %c0_24, %c0_25] : memref<1x1x128xf32, #tpu.memory_space<vmem>>, vector<1x1x128xf32>
      tpu.vector_store %arg6[%c0_23, %c0_24, %c0_25], %30 {strides = array<i32>} : memref<1x1x128xf32, #tpu.memory_space<vmem>>, vector<1x1x128xf32>,
      %cst_26 = arith.constant 0.000000e+00 : f32
      %32 = vector.broadcast %cst_26 : f32 to vector<1x1x128xf32>
      %c0_27 = arith.constant 0 : index
      %c0_28 = arith.constant 0 : index
      %c0_29 = arith.constant 0 : index
      %33 = vector.load %arg7[%c0_27, %c0_28, %c0_29] : memref<1x1x128xf32, #tpu.memory_space<vmem>>, vector<1x1x128xf32>
      tpu.vector_store %arg7[%c0_27, %c0_28, %c0_29], %32 {strides = array<i32>} : memref<1x1x128xf32, #tpu.memory_space<vmem>>, vector<1x1x128xf32>,
    } else {
    }
    %c0 = arith.constant 0 : index
    %c0_1 = arith.constant 0 : index
    %c0_2 = arith.constant 0 : index
    %3 = vector.load %arg2[%c0, %c0_1, %c0_2] : memref<1x16x128xbf16, #tpu.memory_space<vmem>>, vector<1x16x128xbf16>
    %4 = vector.shape_cast %3 : vector<1x16x128xbf16> to vector<16x128xbf16>
    %5 = arith.extf %4 : vector<16x128xbf16> to vector<16x128xf32>
    %c0_3 = arith.constant 0 : index
    %c0_4 = arith.constant 0 : index
    %6 = vector.load %arg8[%c0_3, %c0_4] : memref<24x128xf32, #tpu.memory_space<vmem>>, vector<16x128xf32>
    tpu.vector_store %arg8[%c0_3, %c0_4], %5 {strides = array<i32>} : memref<24x128xf32, #tpu.memory_space<vmem>>, vector<16x128xf32>,
    %c0_5 = arith.constant 0 : index
    %c0_6 = arith.constant 0 : index
    %c0_7 = arith.constant 0 : index
    %7 = vector.load %arg3[%c0_5, %c0_6, %c0_7] : memref<1x8x128xbf16, #tpu.memory_space<vmem>>, vector<1x8x128xbf16>
    %8 = vector.shape_cast %7 : vector<1x8x128xbf16> to vector<8x128xbf16>
    %9 = arith.extf %8 : vector<8x128xbf16> to vector<8x128xf32>
    %c16 = arith.constant 16 : index
    %c0_8 = arith.constant 0 : index
    %10 = vector.load %arg8[%c16, %c0_8] : memref<24x128xf32, #tpu.memory_space<vmem>>, vector<8x128xf32>
    tpu.vector_store %arg8[%c16, %c0_8], %9 {strides = array<i32>} : memref<24x128xf32, #tpu.memory_space<vmem>>, vector<8x128xf32>,
    %c0_9 = arith.constant 0 : index
    %c0_10 = arith.constant 0 : index
    %11 = vector.load %arg8[%c0_9, %c0_10] : memref<24x128xf32, #tpu.memory_space<vmem>>, vector<16x128xf32>
    %12 = arith.truncf %11 : vector<16x128xf32> to vector<16x128xbf16>
    %c1 = arith.constant 1 : index
    %c0_11 = arith.constant 0 : index
    %13 = vector.load %arg8[%c1, %c0_11] : memref<24x128xf32, #tpu.memory_space<vmem>>, vector<16x128xf32>
    %14 = arith.truncf %13 : vector<16x128xf32> to vector<16x128xbf16>
    %c2 = arith.constant 2 : index
    %c0_12 = arith.constant 0 : index
    %15 = vector.load %arg8[%c2, %c0_12] : memref<24x128xf32, #tpu.memory_space<vmem>>, vector<16x128xf32>
    %16 = arith.truncf %15 : vector<16x128xf32> to vector<16x128xbf16>
    %17 = tpu.concatenate %12, %14, %16 in 1 : vector<16x128xbf16>, vector<16x128xbf16>, vector<16x128xbf16> -> vector<16x384xbf16>
    %c0_13 = arith.constant 0 : index
    %c0_14 = arith.constant 0 : index
    %18 = vector.load %arg4[%c0_13, %c0_14] : memref<384x128xbf16, #tpu.memory_space<vmem>>, vector<384x128xbf16>
    %cst = arith.constant dense<0.000000e+00> : vector<16x128xf32>
    %19 = tpu.matmul %17, %18, %cst {dimension_numbers = #tpu.dot_dimension_numbers<[1], [0], [0], [1], [0, 0, 1, 1], [], []>} : vector<16x384xbf16>, vector<384x128xbf16>, vector<16x128xf32> -> vector<16x128xf32>
    %20 = arith.truncf %19 : vector<16x128xf32> to vector<16x128xbf16>
    %c0_15 = arith.constant 0 : index
    %c0_16 = arith.constant 0 : index
    %c0_17 = arith.constant 0 : index
    %21 = vector.load %arg5[%c0_15, %c0_16, %c0_17] : memref<1x16x128xbf16, #tpu.memory_space<vmem>>, vector<1x16x128xbf16>
    %22 = vector.shape_cast %21 : vector<1x16x128xbf16> to vector<16x128xbf16>
    %23 = vector.shape_cast %20 : vector<16x128xbf16> to vector<1x16x128xbf16>
    tpu.vector_store %arg5[%c0_15, %c0_16, %c0_17], %23 {strides = array<i32>} : memref<1x16x128xbf16, #tpu.memory_space<vmem>>, vector<1x16x128xbf16>,
    %c0_i32_18 = arith.constant 0 : i32
    %24 = arith.cmpi eq, %arg1, %c0_i32_18 : i32
    %25 = arith.extui %24 : i1 to i32
    %c0_i32_19 = arith.constant 0 : i32
    %26 = arith.cmpi ne, %25, %c0_i32_19 : i32
    scf.if %26 {
      %30 = tpu.iota {dimensions = array<i32: 0>} : vector<16x1xi32>
      %c13_i32 = arith.constant 13 : i32
      %31 = vector.broadcast %c13_i32 : i32 to vector<16x1xi32>
      %32 = arith.cmpi slt, %30, %31 : vector<16x1xi32>
      %cst_22 = arith.constant 0.000000e+00 : f32
      %33 = vector.shape_cast %32 : vector<16x1xi1> to vector<16x1xi1>
      %34 = vector.broadcast %33 : vector<16x1xi1> to vector<16x128xi1>
      %35 = vector.broadcast %cst_22 : f32 to vector<16x128xf32>
      %36 = arith.select %34, %19, %35 : vector<16x128xi1>, vector<16x128xf32>
      %c0_23 = arith.constant 0 : index
      %c0_24 = arith.constant 0 : index
      %c0_25 = arith.constant 0 : index
      %37 = vector.load %arg6[%c0_23, %c0_24, %c0_25] : memref<1x1x128xf32, #tpu.memory_space<vmem>>, vector<1x1x128xf32>
      %38 = vector.shape_cast %37 : vector<1x1x128xf32> to vector<1x128xf32>
      %cst_26 = arith.constant dense<0.000000e+00> : vector<128xf32>
      %39 = vector.multi_reduction <add>, %36, %cst_26 [0] : vector<16x128xf32> to vector<128xf32>
      %40 = vector.shape_cast %39 : vector<128xf32> to vector<1x128xf32>
      %41 = arith.addf %38, %40 : vector<1x128xf32>
      %c0_27 = arith.constant 0 : index
      %c0_28 = arith.constant 0 : index
      %c0_29 = arith.constant 0 : index
      %42 = vector.load %arg6[%c0_27, %c0_28, %c0_29] : memref<1x1x128xf32, #tpu.memory_space<vmem>>, vector<1x1x128xf32>
      %43 = vector.shape_cast %42 : vector<1x1x128xf32> to vector<1x128xf32>
      %44 = vector.shape_cast %41 : vector<1x128xf32> to vector<1x1x128xf32>
      tpu.vector_store %arg6[%c0_27, %c0_28, %c0_29], %44 {strides = array<i32>} : memref<1x1x128xf32, #tpu.memory_space<vmem>>, vector<1x1x128xf32>,
      %c0_30 = arith.constant 0 : index
      %c0_31 = arith.constant 0 : index
      %c0_32 = arith.constant 0 : index
      %45 = vector.load %arg7[%c0_30, %c0_31, %c0_32] : memref<1x1x128xf32, #tpu.memory_space<vmem>>, vector<1x1x128xf32>
      %46 = vector.shape_cast %45 : vector<1x1x128xf32> to vector<1x128xf32>
      %47 = arith.mulf %36, %36 : vector<16x128xf32>
      %cst_33 = arith.constant dense<0.000000e+00> : vector<128xf32>
      %48 = vector.multi_reduction <add>, %47, %cst_33 [0] : vector<16x128xf32> to vector<128xf32>
      %49 = vector.shape_cast %48 : vector<128xf32> to vector<1x128xf32>
      %50 = arith.addf %46, %49 : vector<1x128xf32>
      %c0_34 = arith.constant 0 : index
      %c0_35 = arith.constant 0 : index
      %c0_36 = arith.constant 0 : index
      %51 = vector.load %arg7[%c0_34, %c0_35, %c0_36] : memref<1x1x128xf32, #tpu.memory_space<vmem>>, vector<1x1x128xf32>
      %52 = vector.shape_cast %51 : vector<1x1x128xf32> to vector<1x128xf32>
      %53 = vector.shape_cast %50 : vector<1x128xf32> to vector<1x1x128xf32>
      tpu.vector_store %arg7[%c0_34, %c0_35, %c0_36], %53 {strides = array<i32>} : memref<1x1x128xf32, #tpu.memory_space<vmem>>, vector<1x1x128xf32>,
    } else {
    }
    %c0_i32_20 = arith.constant 0 : i32
    %27 = arith.cmpi ne, %arg1, %c0_i32_20 : i32
    %28 = arith.extui %27 : i1 to i32
    %c0_i32_21 = arith.constant 0 : i32
    %29 = arith.cmpi ne, %28, %c0_i32_21 : i32
    scf.if %29 {
      %c0_22 = arith.constant 0 : index
      %c0_23 = arith.constant 0 : index
      %c0_24 = arith.constant 0 : index
      %30 = vector.load %arg6[%c0_22, %c0_23, %c0_24] : memref<1x1x128xf32, #tpu.memory_space<vmem>>, vector<1x1x128xf32>
      %31 = vector.shape_cast %30 : vector<1x1x128xf32> to vector<1x128xf32>
      %cst_25 = arith.constant dense<0.000000e+00> : vector<128xf32>
      %32 = vector.multi_reduction <add>, %19, %cst_25 [0] : vector<16x128xf32> to vector<128xf32>
      %33 = vector.shape_cast %32 : vector<128xf32> to vector<1x128xf32>
      %34 = arith.addf %31, %33 : vector<1x128xf32>
      %c0_26 = arith.constant 0 : index
      %c0_27 = arith.constant 0 : index
      %c0_28 = arith.constant 0 : index
      %35 = vector.load %arg6[%c0_26, %c0_27, %c0_28] : memref<1x1x128xf32, #tpu.memory_space<vmem>>, vector<1x1x128xf32>
      %36 = vector.shape_cast %35 : vector<1x1x128xf32> to vector<1x128xf32>
      %37 = vector.shape_cast %34 : vector<1x128xf32> to vector<1x1x128xf32>
      tpu.vector_store %arg6[%c0_26, %c0_27, %c0_28], %37 {strides = array<i32>} : memref<1x1x128xf32, #tpu.memory_space<vmem>>, vector<1x1x128xf32>,
      %c0_29 = arith.constant 0 : index
      %c0_30 = arith.constant 0 : index
      %c0_31 = arith.constant 0 : index
      %38 = vector.load %arg7[%c0_29, %c0_30, %c0_31] : memref<1x1x128xf32, #tpu.memory_space<vmem>>, vector<1x1x128xf32>
      %39 = vector.shape_cast %38 : vector<1x1x128xf32> to vector<1x128xf32>
      %40 = arith.mulf %19, %19 : vector<16x128xf32>
      %cst_32 = arith.constant dense<0.000000e+00> : vector<128xf32>
      %41 = vector.multi_reduction <add>, %40, %cst_32 [0] : vector<16x128xf32> to vector<128xf32>
      %42 = vector.shape_cast %41 : vector<128xf32> to vector<1x128xf32>
      %43 = arith.addf %39, %42 : vector<1x128xf32>
      %c0_33 = arith.constant 0 : index
      %c0_34 = arith.constant 0 : index
      %c0_35 = arith.constant 0 : index
      %44 = vector.load %arg7[%c0_33, %c0_34, %c0_35] : memref<1x1x128xf32, #tpu.memory_space<vmem>>, vector<1x1x128xf32>
      %45 = vector.shape_cast %44 : vector<1x1x128xf32> to vector<1x128xf32>
      %46 = vector.shape_cast %43 : vector<1x128xf32> to vector<1x1x128xf32>
      tpu.vector_store %arg7[%c0_33, %c0_34, %c0_35], %46 {strides = array<i32>} : memref<1x1x128xf32, #tpu.memory_space<vmem>>, vector<1x1x128xf32>,
    } else {
    }
    return
  }
  func.func @transform_0(%arg0: i32, %arg1: i32) -> (i32, i32, i32) {
    %c0_i32 = arith.constant 0 : i32
    %c0_i32_0 = arith.constant 0 : i32
    return %arg0, %arg1, %c0_i32 : i32, i32, i32
  }
  func.func @transform_1(%arg0: i32, %arg1: i32) -> (i32, i32, i32) {
    %c1_i32 = arith.constant 1 : i32
    %0 = arith.addi %arg1, %c1_i32 : i32
    %c2_i32 = arith.constant 2 : i32
    %1 = arith.muli %0, %c2_i32 : i32
    %c0_i32 = arith.constant 0 : i32
    %c0_i32_0 = arith.constant 0 : i32
    return %arg0, %1, %c0_i32 : i32, i32, i32
  }
  func.func @transform_2(%arg0: i32, %arg1: i32) -> (i32, i32) {
    %c0_i32 = arith.constant 0 : i32
    %c0_i32_0 = arith.constant 0 : i32
    %c0_i32_1 = arith.constant 0 : i32
    return %c0_i32, %c0_i32_0 : i32, i32
  }
  func.func @transform_3(%arg0: i32, %arg1: i32) -> (i32, i32, i32) {
    %c0_i32 = arith.constant 0 : i32
    %c0_i32_0 = arith.constant 0 : i32
    return %arg0, %arg1, %c0_i32 : i32, i32, i32
  }
  func.func @transform_4(%arg0: i32, %arg1: i32) -> (i32, i32, i32) {
    %c0_i32 = arith.constant 0 : i32
    %c0_i32_0 = arith.constant 0 : i32
    %c0_i32_1 = arith.constant 0 : i32
    return %arg0, %c0_i32, %c0_i32_0 : i32, i32, i32
  }
  func.func @transform_5(%arg0: i32, %arg1: i32) -> (i32, i32, i32) {
    %c0_i32 = arith.constant 0 : i32
    %c0_i32_0 = arith.constant 0 : i32
    %c0_i32_1 = arith.constant 0 : i32
    return %arg0, %c0_i32, %c0_i32_0 : i32, i32, i32
  }
}

module attributes {stable_mosaic.version = 11 : i64} {
  func.func @_bn_apply_kernel(%arg0: i32, %arg1: i32, %arg2: memref<1x16x128xbf16, #tpu.memory_space<vmem>>, %arg3: memref<1x128xf32, #tpu.memory_space<vmem>>, %arg4: memref<1x128xf32, #tpu.memory_space<vmem>>, %arg5: memref<1x16x128xbf16, #tpu.memory_space<vmem>>, %arg6: memref<1x16x128xbf16, #tpu.memory_space<vmem>>) attributes {dimension_semantics = [#tpu.dimension_semantics<parallel>, #tpu.dimension_semantics<parallel>], iteration_bounds = array<i64: 2, 1>, scalar_prefetch = 0 : i64, scratch_operands = 0 : i64, tpu.core_type = #tpu.core_type<tc>, window_params = [{transform_indices = @transform_0, window_bounds = array<i64: 1, 16, 128>}, {pipeline_mode = #tpu.pipeline_mode<synchronous>, transform_indices = @transform_1, window_bounds = array<i64: 1, 128>}, {pipeline_mode = #tpu.pipeline_mode<synchronous>, transform_indices = @transform_2, window_bounds = array<i64: 1, 128>}, {transform_indices = @transform_3, window_bounds = array<i64: 1, 16, 128>}, {transform_indices = @transform_4, window_bounds = array<i64: 1, 16, 128>}]} {
    %c0 = arith.constant 0 : index
    %c0_0 = arith.constant 0 : index
    %c0_1 = arith.constant 0 : index
    %0 = vector.load %arg2[%c0, %c0_0, %c0_1] : memref<1x16x128xbf16, #tpu.memory_space<vmem>>, vector<1x16x128xbf16>
    %1 = vector.shape_cast %0 : vector<1x16x128xbf16> to vector<16x128xbf16>
    %2 = arith.extf %1 : vector<16x128xbf16> to vector<16x128xf32>
    %c0_2 = arith.constant 0 : index
    %c0_3 = arith.constant 0 : index
    %3 = vector.load %arg3[%c0_2, %c0_3] : memref<1x128xf32, #tpu.memory_space<vmem>>, vector<1x128xf32>
    %4 = vector.broadcast %3 : vector<1x128xf32> to vector<16x128xf32>
    %5 = arith.mulf %2, %4 : vector<16x128xf32>
    %c0_4 = arith.constant 0 : index
    %c0_5 = arith.constant 0 : index
    %6 = vector.load %arg4[%c0_4, %c0_5] : memref<1x128xf32, #tpu.memory_space<vmem>>, vector<1x128xf32>
    %7 = vector.broadcast %6 : vector<1x128xf32> to vector<16x128xf32>
    %8 = arith.addf %5, %7 : vector<16x128xf32>
    %c0_6 = arith.constant 0 : index
    %c0_7 = arith.constant 0 : index
    %c0_8 = arith.constant 0 : index
    %9 = vector.load %arg5[%c0_6, %c0_7, %c0_8] : memref<1x16x128xbf16, #tpu.memory_space<vmem>>, vector<1x16x128xbf16>
    %10 = vector.shape_cast %9 : vector<1x16x128xbf16> to vector<16x128xbf16>
    %11 = arith.extf %10 : vector<16x128xbf16> to vector<16x128xf32>
    %12 = arith.addf %8, %11 : vector<16x128xf32>
    %cst = arith.constant 0.000000e+00 : f32
    %13 = vector.broadcast %cst : f32 to vector<16x128xf32>
    %14 = arith.maximumf %12, %13 : vector<16x128xf32>
    %15 = arith.truncf %14 : vector<16x128xf32> to vector<16x128xbf16>
    %c0_9 = arith.constant 0 : index
    %c0_10 = arith.constant 0 : index
    %c0_11 = arith.constant 0 : index
    %16 = vector.load %arg6[%c0_9, %c0_10, %c0_11] : memref<1x16x128xbf16, #tpu.memory_space<vmem>>, vector<1x16x128xbf16>
    %17 = vector.shape_cast %16 : vector<1x16x128xbf16> to vector<16x128xbf16>
    %18 = vector.shape_cast %15 : vector<16x128xbf16> to vector<1x16x128xbf16>
    tpu.vector_store %arg6[%c0_9, %c0_10, %c0_11], %18 {strides = array<i32>} : memref<1x16x128xbf16, #tpu.memory_space<vmem>>, vector<1x16x128xbf16>,
    return
  }
  func.func @transform_0(%arg0: i32, %arg1: i32) -> (i32, i32, i32) {
    %c0_i32 = arith.constant 0 : i32
    %c0_i32_0 = arith.constant 0 : i32
    return %arg0, %arg1, %c0_i32 : i32, i32, i32
  }
  func.func @transform_1(%arg0: i32, %arg1: i32) -> (i32, i32) {
    %c0_i32 = arith.constant 0 : i32
    %c0_i32_0 = arith.constant 0 : i32
    %c0_i32_1 = arith.constant 0 : i32
    return %c0_i32, %c0_i32_0 : i32, i32
  }
  func.func @transform_2(%arg0: i32, %arg1: i32) -> (i32, i32) {
    %c0_i32 = arith.constant 0 : i32
    %c0_i32_0 = arith.constant 0 : i32
    %c0_i32_1 = arith.constant 0 : i32
    return %c0_i32, %c0_i32_0 : i32, i32
  }
  func.func @transform_3(%arg0: i32, %arg1: i32) -> (i32, i32, i32) {
    %c0_i32 = arith.constant 0 : i32
    %c0_i32_0 = arith.constant 0 : i32
    return %arg0, %arg1, %c0_i32 : i32, i32, i32
  }
  func.func @transform_4(%arg0: i32, %arg1: i32) -> (i32, i32, i32) {
    %c0_i32 = arith.constant 0 : i32
    %c0_i32_0 = arith.constant 0 : i32
    return %arg0, %arg1, %c0_i32 : i32, i32, i32
  }
}

module attributes {stable_mosaic.version = 11 : i64} {
  func.func @_gap_fc_kernel(%arg0: i32, %arg1: memref<2x16x128xbf16, #tpu.memory_space<vmem>>, %arg2: memref<128x1xf32, #tpu.memory_space<vmem>>, %arg3: memref<1x1xf32, #tpu.memory_space<vmem>>, %arg4: memref<2x1xf32, #tpu.memory_space<vmem>>, %arg5: memref<2x128xf32, #tpu.memory_space<vmem>>) attributes {dimension_semantics = [#tpu.dimension_semantics<arbitrary>], iteration_bounds = array<i64: 1>, scalar_prefetch = 0 : i64, scratch_operands = 1 : i64, tpu.core_type = #tpu.core_type<tc>, window_params = [{transform_indices = @transform_0, window_bounds = array<i64: 2, 16, 128>}, {pipeline_mode = #tpu.pipeline_mode<synchronous>, transform_indices = @transform_1, window_bounds = array<i64: 128, 1>}, {pipeline_mode = #tpu.pipeline_mode<synchronous>, transform_indices = @transform_2, window_bounds = array<i64: 1, 1>}, {pipeline_mode = #tpu.pipeline_mode<synchronous>, transform_indices = @transform_3, window_bounds = array<i64: 2, 1>}]} {
    %c0_i32 = arith.constant 0 : i32
    %0 = arith.cmpi eq, %arg0, %c0_i32 : i32
    %1 = arith.extui %0 : i1 to i32
    %c0_i32_0 = arith.constant 0 : i32
    %2 = arith.cmpi ne, %1, %c0_i32_0 : i32
    scf.if %2 {
      %cst_9 = arith.constant 0.000000e+00 : f32
      %12 = vector.broadcast %cst_9 : f32 to vector<2x128xf32>
      %c0_10 = arith.constant 0 : index
      %c0_11 = arith.constant 0 : index
      %13 = vector.load %arg5[%c0_10, %c0_11] : memref<2x128xf32, #tpu.memory_space<vmem>>, vector<2x128xf32>
      tpu.vector_store %arg5[%c0_10, %c0_11], %12 {strides = array<i32>} : memref<2x128xf32, #tpu.memory_space<vmem>>, vector<2x128xf32>,
    } else {
    }
    %c0 = arith.constant 0 : index
    %c0_1 = arith.constant 0 : index
    %3 = vector.load %arg5[%c0, %c0_1] : memref<2x128xf32, #tpu.memory_space<vmem>>, vector<2x128xf32>
    %c0_2 = arith.constant 0 : index
    %c0_3 = arith.constant 0 : index
    %c0_4 = arith.constant 0 : index
    %4 = vector.load %arg1[%c0_2, %c0_3, %c0_4] : memref<2x16x128xbf16, #tpu.memory_space<vmem>>, vector<2x16x128xbf16>
    %5 = arith.extf %4 : vector<2x16x128xbf16> to vector<2x16x128xf32>
    %cst = arith.constant dense<0.000000e+00> : vector<2x128xf32>
    %6 = vector.multi_reduction <add>, %5, %cst [1] : vector<2x16x128xf32> to vector<2x128xf32>
    %7 = arith.addf %3, %6 : vector<2x128xf32>
    %c0_5 = arith.constant 0 : index
    %c0_6 = arith.constant 0 : index
    %8 = vector.load %arg5[%c0_5, %c0_6] : memref<2x128xf32, #tpu.memory_space<vmem>>, vector<2x128xf32>
    tpu.vector_store %arg5[%c0_5, %c0_6], %7 {strides = array<i32>} : memref<2x128xf32, #tpu.memory_space<vmem>>, vector<2x128xf32>,
    %c0_i32_7 = arith.constant 0 : i32
    %9 = arith.cmpi eq, %arg0, %c0_i32_7 : i32
    %10 = arith.extui %9 : i1 to i32
    %c0_i32_8 = arith.constant 0 : i32
    %11 = arith.cmpi ne, %10, %c0_i32_8 : i32
    scf.if %11 {
      %c0_9 = arith.constant 0 : index
      %c0_10 = arith.constant 0 : index
      %12 = vector.load %arg5[%c0_9, %c0_10] : memref<2x128xf32, #tpu.memory_space<vmem>>, vector<2x128xf32>
      %cst_11 = arith.constant 0.0769230798 : f32
      %13 = vector.broadcast %cst_11 : f32 to vector<2x128xf32>
      %14 = arith.mulf %12, %13 : vector<2x128xf32>
      %c0_12 = arith.constant 0 : index
      %c0_13 = arith.constant 0 : index
      %15 = vector.load %arg2[%c0_12, %c0_13] : memref<128x1xf32, #tpu.memory_space<vmem>>, vector<128x1xf32>
      %cst_14 = arith.constant dense<0.000000e+00> : vector<2x1xf32>
      %16 = tpu.matmul %14, %15, %cst_14 {dimension_numbers = #tpu.dot_dimension_numbers<[1], [0], [0], [1], [0, 0, 1, 1], [], []>} : vector<2x128xf32>, vector<128x1xf32>, vector<2x1xf32> -> vector<2x1xf32>
      %c0_15 = arith.constant 0 : index
      %c0_16 = arith.constant 0 : index
      %17 = vector.load %arg3[%c0_15, %c0_16] : memref<1x1xf32, #tpu.memory_space<vmem>>, vector<1x1xf32>
      %18 = vector.broadcast %17 : vector<1x1xf32> to vector<2x1xf32>
      %19 = arith.addf %16, %18 : vector<2x1xf32>
      %cst_17 = arith.constant 0.000000e+00 : f32
      %20 = vector.broadcast %cst_17 : f32 to vector<2x1xf32>
      %21 = arith.subf %20, %19 : vector<2x1xf32>
      %22 = math.exp %21 : vector<2x1xf32>
      %cst_18 = arith.constant 1.000000e+00 : f32
      %23 = vector.broadcast %cst_18 : f32 to vector<2x1xf32>
      %24 = arith.addf %23, %22 : vector<2x1xf32>
      %cst_19 = arith.constant 1.000000e+00 : f32
      %25 = vector.broadcast %cst_19 : f32 to vector<2x1xf32>
      %26 = arith.divf %25, %24 : vector<2x1xf32>
      %c0_20 = arith.constant 0 : index
      %c0_21 = arith.constant 0 : index
      %27 = vector.load %arg4[%c0_20, %c0_21] : memref<2x1xf32, #tpu.memory_space<vmem>>, vector<2x1xf32>
      tpu.vector_store %arg4[%c0_20, %c0_21], %26 {strides = array<i32>} : memref<2x1xf32, #tpu.memory_space<vmem>>, vector<2x1xf32>,
    } else {
    }
    return
  }
  func.func @transform_0(%arg0: i32) -> (i32, i32, i32) {
    %c0_i32 = arith.constant 0 : i32
    %c0_i32_0 = arith.constant 0 : i32
    %c0_i32_1 = arith.constant 0 : i32
    return %c0_i32, %arg0, %c0_i32_0 : i32, i32, i32
  }
  func.func @transform_1(%arg0: i32) -> (i32, i32) {
    %c0_i32 = arith.constant 0 : i32
    %c0_i32_0 = arith.constant 0 : i32
    %c0_i32_1 = arith.constant 0 : i32
    return %c0_i32, %c0_i32_0 : i32, i32
  }
  func.func @transform_2(%arg0: i32) -> (i32, i32) {
    %c0_i32 = arith.constant 0 : i32
    %c0_i32_0 = arith.constant 0 : i32
    %c0_i32_1 = arith.constant 0 : i32
    return %c0_i32, %c0_i32_0 : i32, i32
  }
  func.func @transform_3(%arg0: i32) -> (i32, i32) {
    %c0_i32 = arith.constant 0 : i32
    %c0_i32_0 = arith.constant 0 : i32
    %c0_i32_1 = arith.constant 0 : i32
    return %c0_i32, %c0_i32_0 : i32, i32
  }
}

</mosaic_0001>

<llo_original>
// kernel: resnet1d_forward.16
$region0: #{resnet1d_forward.16}
  #allocation0 [shape = 'u32[]', space=smem, size = 0x4, offset = 0x4, fixed_abs, tag = 'smem constant byte address 0x4 - core index']
  #allocation1 [shape = 'u32[144,128]{1,0:T(1,128)}', space=vmem, size = 0x12000, scoped, tag = 'internal scratch']
  #allocation2 [shape = 'f32[72,128]{1,0:T(8,128)}', space=vmem, size = 0x9000, scoped, tag = 'scratch operand']
  %s0 = inlined_call_operand.vmem [shape: bf16[2,72,128], index: 0, kind: input, shape index: {}, may-alias: {0,1}]
  %s1 = inlined_call_operand.vmem [shape: bf16[2,72,128], index: 1, kind: input, shape index: {}, may-alias: {0,1}]
  %s2 = inlined_call_operand.vmem [shape: bf16[2,32,128], index: 2, kind: output, shape index: {}]
  %s3 = sld [smem:[#allocation0]]
  $region41: #{resnet1d_forward.16} parent=0
    _
  %s5 = ssub.s32 1, %s3
  %s6 = scalar_select 0, %s5, %s3
  loop: start=0, step=1, limit=4
  $region2: #{resnet1d_forward.16} parent=0 // loop_pre_header
    _
  $region3: #{resnet1d_forward.16} parent=0 // loop_header
    %s8 = sphi 0, %s12
    %p9 = scmp.ge.s32.totalorder %s8, 4
    %s15 = sphi 0, %s27
    %s16 = sphi 0, %s23
    %s17 = sphi 0, %s15
    %s18 = sphi 0, %s16
    %s19 = sphi 0, %s17
    %s20 = sphi 0, %s18
    %s32 = sphi 0, %s34
    %s35 = sphi 0, %s32
    %s36 = sphi 0, %s35
    %s52 = sphi 0, %s36
    %s64 = sphi 0, %s66
    %s67 = sphi 0, %s64
    %s68 = sphi 0, %s67
    %s84 = sphi 0, %s68
    %s92 = sphi 0, %s94
    %s95 = sphi 0, %s92
    %s96 = sphi 0, %s95
    %s112 = sphi 0, %s96
  $region4: #{resnet1d_forward.16} parent=0 // loop_header_branch
    %11 = sbr.rel (%p9) target = $region8
  $region5: #{resnet1d_forward.16} parent=0 // loop_body
    %s13 = ssub.s32 %s8, 1
    %s14 = ssub.s32 %s8, 2
    %s21 = sadd.s32 1, %s16
    %p22 = scmp.ge.s32.totalorder %s21, 1
    %s23 = scalar_select %p22, 0, %s21
    %s24 = sadd.s32 1, %s15
    %s25 = scalar_select %p22, %s24, %s15
    %p26 = scmp.ge.s32.totalorder %s25, 2
    %s27 = scalar_select %p26, 0, %s25
    %s28 = ssub.s32 %s15, %s27
    %s29 = ssub.s32 %s16, %s23
    %s30 = sor.u32 %s28, %s29
    %p31 = scmp.eq.s32.totalorder %s30, 0
    %s33 = sadd.s32 %s32, 1
    %s34 = scalar_select %p31, %s32, %s33
    %p37 = pneg %p31
    %p38 = scmp.eq.s32.totalorder %s8, 1
    %p39 = por %p37, %p38
    %p40 = scmp.ne.s32.totalorder %s32, %s35
    %p41 = scmp.eq.s32.totalorder %s8, 0
    %p42 = por %p40, %p41
    %p43 = scmp.ne.s32.totalorder %s32, %s35
    %p44 = scmp.eq.s32.totalorder %s13, 1
    %p45 = por %p43, %p44
    %p46 = scmp.ne.s32.totalorder %s35, %s36
    %p47 = scmp.eq.s32.totalorder %s13, 0
    %p48 = por %p46, %p47
    %p49 = scmp.ne.s32.totalorder %s35, %s36
    %p50 = scmp.eq.s32.totalorder %s14, 1
    %p51 = por %p49, %p50
    %p53 = scmp.ne.s32.totalorder %s36, %s52
    %p54 = scmp.eq.s32.totalorder %s14, 0
    %p55 = por %p53, %p54
    %s56 = sadd.s32 %s16, 1
    %s57 = smul.u32 %s56, 8
    %s58 = sadd.s32 %s23, 1
    %s59 = smul.u32 %s58, 8
    %s60 = ssub.s32 %s15, %s27
    %s61 = ssub.s32 %s57, %s59
    %s62 = sor.u32 %s60, %s61
    %p63 = scmp.eq.s32.totalorder %s62, 0
    %s65 = sadd.s32 %s64, 1
    %s66 = scalar_select %p63, %s64, %s65
    %p69 = pneg %p63
    %p70 = scmp.eq.s32.totalorder %s8, 1
    %p71 = por %p69, %p70
    %p72 = scmp.ne.s32.totalorder %s64, %s67
    %p73 = scmp.eq.s32.totalorder %s8, 0
    %p74 = por %p72, %p73
    %p75 = scmp.ne.s32.totalorder %s64, %s67
    %p76 = scmp.eq.s32.totalorder %s13, 1
    %p77 = por %p75, %p76
    %p78 = scmp.ne.s32.totalorder %s67, %s68
    %p79 = scmp.eq.s32.totalorder %s13, 0
    %p80 = por %p78, %p79
    %p81 = scmp.ne.s32.totalorder %s67, %s68
    %p82 = scmp.eq.s32.totalorder %s14, 1
    %p83 = por %p81, %p82
    %p85 = scmp.ne.s32.totalorder %s68, %s84
    %p86 = scmp.eq.s32.totalorder %s14, 0
    %p87 = por %p85, %p86
    %s88 = ssub.s32 %s15, %s27
    %s89 = ssub.s32 %s16, %s23
    %s90 = sor.u32 %s88, %s89
    %p91 = scmp.eq.s32.totalorder %s90, 0
    %s93 = sadd.s32 %s92, 1
    %s94 = scalar_select %p91, %s92, %s93
    %p97 = pneg %p91
    %p98 = scmp.eq.s32.totalorder %s8, 1
    %p99 = por %p97, %p98
    %p100 = scmp.ne.s32.totalorder %s92, %s95
    %p101 = scmp.eq.s32.totalorder %s8, 0
    %p102 = por %p100, %p101
    %p103 = scmp.ne.s32.totalorder %s92, %s95
    %p104 = scmp.eq.s32.totalorder %s13, 1
    %p105 = por %p103, %p104
    %p106 = scmp.ne.s32.totalorder %s95, %s96
    %p107 = scmp.eq.s32.totalorder %s13, 0
    %p108 = por %p106, %p107
    %p109 = scmp.ne.s32.totalorder %s95, %s96
    %p110 = scmp.eq.s32.totalorder %s14, 1
    %p111 = por %p109, %p110
    %p113 = scmp.ne.s32.totalorder %s96, %s112
    %p114 = scmp.eq.s32.totalorder %s14, 0
    %p115 = por %p113, %p114
    %p116 = scmp.le.s32.totalorder 1, %s8
    %p117 = scmp.lt.s32.totalorder %s8, 3
    %p118 = pnand %p116, %p117
    %p119 = pneg %p118
    // Predicated region
    $region9: #{resnet1d_forward.16} parent=5 // pred_check
      _
    $region10: #{resnet1d_forward.16} parent=5 // pred_check_branch
      %121 = sbr.rel (%p118) target = $region12
    $region11: #{resnet1d_forward.16} parent=5 // pred_region
      %s122 = ssub.s32 %s8, 1
    $region12: #{resnet1d_forward.16} parent=5 // pred_fallthru
      _
    %p123 = scmp.lt.s32.totalorder %s8, 2
    // Predicated region
    $region13: #{resnet1d_forward.16} parent=5 // pred_check
      %p124 = pneg %p123
    $region14: #{resnet1d_forward.16} parent=5 // pred_check_branch
      %126 = sbr.rel (%p124) target = $region16
    $region15: #{resnet1d_forward.16} parent=5 // pred_region
      // Predicated region
      $region17: #{resnet1d_forward.16} parent=15 // pred_check
        %p127 = pneg %p42
      $region18: #{resnet1d_forward.16} parent=15 // pred_check_branch
        %129 = sbr.rel (%p127) target = $region20
      $region19: #{resnet1d_forward.16} parent=15 // pred_region
        %s130 = smul.u32 8, %s16
        %s131 = ssub.s32 9, %s130
        %p132 = scmp.lt.s32.totalorder %s131, 8
        %s133 = scalar_select %p132, %s131, 8
        %s134 = smul.u32 64, %s133
        %p135 = scmp.lt.s32.totalorder %s15, 1
        %s136 = scalar_select %p135, %s15, 1
        %p137 = scmp.lt.s32.totalorder %s130, 8
        %s138 = scalar_select %p137, %s130, 8
        %s139 = smul.addr %s136, 9
        %s140 = sadd.s32 %s138, %s139
        %s141 = smul.addr %s140, 4
        %s142 = scalar_lea.vmem %s0, %s141
        %s143 = smul.u32 8, %s16
        %s144 = ssub.s32 9, %s143
        %p145 = scmp.lt.s32.totalorder %s144, 8
        %s146 = scalar_select %p145, %s144, 8
        %s147 = smul.u32 64, %s146
      $region20: #{resnet1d_forward.16} parent=15 // pred_fallthru
        _
      // Predicated region
      $region21: #{resnet1d_forward.16} parent=15 // pred_check
        %p148 = pneg %p74
      $region22: #{resnet1d_forward.16} parent=15 // pred_check_branch
        %150 = sbr.rel (%p148) target = $region24
      $region23: #{resnet1d_forward.16} parent=15 // pred_region
        %s151 = sadd.s32 %s16, 1
        %s152 = smul.u32 %s151, 8
        %p153 = scmp.lt.s32.totalorder %s15, 1
        %s154 = scalar_select %p153, %s15, 1
        %p155 = scmp.lt.s32.totalorder %s152, 8
        %s156 = scalar_select %p155, %s152, 8
        %s157 = smul.addr %s154, 9
        %s158 = sadd.s32 %s156, %s157
        %s159 = smul.addr %s158, 4
        %s160 = scalar_lea.vmem %s1, %s159
        %s161 = sadd.s32 %s16, 1
        %s162 = smul.u32 %s161, 8
      $region24: #{resnet1d_forward.16} parent=15 // pred_fallthru
        _
    $region16: #{resnet1d_forward.16} parent=5 // pred_fallthru
      _
    %p163 = scmp.le.s32.totalorder 1, %s8
    %p164 = scmp.lt.s32.totalorder %s8, 3
    %p165 = pnand %p163, %p164
    %p166 = pneg %p165
    // Predicated region
    $region25: #{resnet1d_forward.16} parent=5 // pred_check
      _
    $region26: #{resnet1d_forward.16} parent=5 // pred_check_branch
      %168 = sbr.rel (%p165) target = $region28
    $region27: #{resnet1d_forward.16} parent=5 // pred_region
      %s169 = ssub.s32 %s8, 1
      %s170 = smul.u32 8, %s18
      %s171 = ssub.s32 9, %s170
      %p172 = scmp.lt.s32.totalorder %s171, 8
      %s173 = scalar_select %p172, %s171, 8
      %s174 = smul.u32 64, %s173
      %p175 = scmp.lt.s32.totalorder %s17, 1
      %s176 = scalar_select %p175, %s17, 1
      %p177 = scmp.lt.s32.totalorder %s170, 8
      %s178 = scalar_select %p177, %s170, 8
      %s179 = smul.addr %s176, 9
      %s180 = sadd.s32 %s178, %s179
      %s181 = smul.addr %s180, 4
      %s182 = scalar_lea.vmem %s0, %s181
      %p183 = pneg %p48
      %p184 = pneg %p45
      %s185 = sadd.s32 %s18, 1
      %s186 = smul.u32 %s185, 8
      %p187 = scmp.lt.s32.totalorder %s17, 1
      %s188 = scalar_select %p187, %s17, 1
      %p189 = scmp.lt.s32.totalorder %s186, 8
      %s190 = scalar_select %p189, %s186, 8
      %s191 = smul.addr %s188, 9
      %s192 = sadd.s32 %s190, %s191
      %s193 = smul.addr %s192, 4
      %s194 = scalar_lea.vmem %s1, %s193
      %p195 = pneg %p80
      %p196 = pneg %p77
      %p197 = pneg %p108
      %p198 = pneg %p105
      %s199 = smul.u32 4, %s18
      %p200 = scmp.lt.s32.totalorder %s17, 1
      %s201 = scalar_select %p200, %s17, 1
      %p202 = scmp.lt.s32.totalorder %s199, 3
      %s203 = scalar_select %p202, %s199, 3
      %s204 = smul.addr %s201, 4
      %s205 = sadd.s32 %s203, %s204
      %s206 = smul.addr %s205, 4
      %s207 = scalar_lea.vmem %s2, %s206
      %s208 = smul.u32 8, %s18
      %s209 = ssub.s32 9, %s208
      %p210 = scmp.lt.s32.totalorder %s209, 8
      %s211 = scalar_select %p210, %s209, 8
      %s212 = smul.u32 64, %s211
      %p213 = scmp.lt.s32.totalorder %s17, 1
      %s214 = scalar_select %p213, %s17, 1
      %p215 = scmp.lt.s32.totalorder %s208, 8
      %s216 = scalar_select %p215, %s208, 8
      %s217 = smul.addr %s214, 9
      %s218 = sadd.s32 %s216, %s217
      %s219 = smul.addr %s218, 4
      %s220 = scalar_lea.vmem %s0, %s219
      %s221 = smul.u32 8, %s18
      %s222 = ssub.s32 9, %s221
      %p223 = scmp.lt.s32.totalorder %s222, 8
      %s224 = scalar_select %p223, %s222, 8
      %s225 = smul.u32 64, %s224
      %s226 = sadd.s32 %s18, 1
      %s227 = smul.u32 %s226, 8
      %p228 = scmp.lt.s32.totalorder %s17, 1
      %s229 = scalar_select %p228, %s17, 1
      %p230 = scmp.lt.s32.totalorder %s227, 8
      %s231 = scalar_select %p230, %s227, 8
      %s232 = smul.addr %s229, 9
      %s233 = sadd.s32 %s231, %s232
      %s234 = smul.addr %s233, 4
      %s235 = scalar_lea.vmem %s1, %s234
      %s236 = sadd.s32 %s18, 1
      %s237 = smul.u32 %s236, 8
      %s238 = smul.u32 4, %s18
      %p239 = scmp.lt.s32.totalorder %s17, 1
      %s240 = scalar_select %p239, %s17, 1
      %p241 = scmp.lt.s32.totalorder %s238, 3
      %s242 = scalar_select %p241, %s238, 3
      %s243 = smul.addr %s240, 4
      %s244 = sadd.s32 %s242, %s243
      %s245 = smul.addr %s244, 4
      %s246 = scalar_lea.vmem %s2, %s245
      %s247 = smul.u32 4, %s18
      %v248 = vld [vmem:[%s220] sm:$0xf]
      %v249 = vld [vmem:[%s220 + $0x4] sm:$0xf]
      %v250 = vld [vmem:[%s220 + $0x8] sm:$0xf]
      %v251 = vld [vmem:[%s220 + $0xc] sm:$0xf]
      %v252 = vld [vmem:[%s220 + $0x10] sm:$0xf]
      %v253 = vld [vmem:[%s220 + $0x14] sm:$0xf]
      %v254 = vld [vmem:[%s220 + $0x18] sm:$0xf]
      %v255 = vld [vmem:[%s220 + $0x1c] sm:$0xf]
      %v256 = vunpack.c.l.bf16 %v248
      %v257 = vunpack.c.l.bf16 %v249
      %v258 = vunpack.c.l.bf16 %v250
      %v259 = vunpack.c.l.bf16 %v251
      %v260 = vunpack.c.l.bf16 %v252
      %v261 = vunpack.c.l.bf16 %v253
      %v262 = vunpack.c.l.bf16 %v254
      %v263 = vunpack.c.l.bf16 %v255
      %264 = vst [vmem:[#allocation2] sm:$0xff] %v256
      %265 = vst [vmem:[#allocation2 + $0x8] sm:$0xff] %v257
      %266 = vst [vmem:[#allocation2 + $0x10] sm:$0xff] %v258
      %267 = vst [vmem:[#allocation2 + $0x18] sm:$0xff] %v259
      %268 = vst [vmem:[#allocation2 + $0x20] sm:$0xff] %v260
      %269 = vst [vmem:[#allocation2 + $0x28] sm:$0xff] %v261
      %270 = vst [vmem:[#allocation2 + $0x30] sm:$0xff] %v262
      %271 = vst [vmem:[#allocation2 + $0x38] sm:$0xff] %v263
      %v272 = vld [vmem:[%s235] sm:$0xf]
      %v273 = vunpack.c.l.bf16 %v272
      %274 = vst [vmem:[#allocation2 + $0x40] sm:$0xff] %v273
      %v275 = vld [vmem:[#allocation2] ss:$2 sm:$0xff]
      %s276 = scalar_lea.vmem [#allocation2], 16
      %v277 = vld [vmem:[%s276] ss:$2 sm:$0xff]
      %s278 = scalar_lea.vmem [#allocation2], 32
      %v279 = vld [vmem:[%s278] ss:$2 sm:$0xff]
      %s280 = scalar_lea.vmem [#allocation2], 48
      %v281 = vld [vmem:[%s280] ss:$2 sm:$0xff]
      %s282 = scalar_lea.vmem [#allocation2], 1
      %v283 = vld [vmem:[%s282] ss:$2 sm:$0xff]
      %s284 = scalar_lea.vmem [#allocation2], 17
      %v285 = vld [vmem:[%s284] ss:$2 sm:$0xff]
      %s286 = scalar_lea.vmem [#allocation2], 33
      %v287 = vld [vmem:[%s286] ss:$2 sm:$0xff]
      %s288 = scalar_lea.vmem [#allocation2], 49
      %v289 = vld [vmem:[%s288] ss:$2 sm:$0xff]
      %s290 = scalar_lea.vmem [#allocation2], 2
      %v291 = vld [vmem:[%s290] ss:$2 sm:$0xff]
      %s292 = scalar_lea.vmem [#allocation2], 18
      %v293 = vld [vmem:[%s292] ss:$2 sm:$0xff]
      %s294 = scalar_lea.vmem [#allocation2], 34
      %v295 = vld [vmem:[%s294] ss:$2 sm:$0xff]
      %s296 = scalar_lea.vmem [#allocation2], 50
      %v297 = vld [vmem:[%s296] ss:$2 sm:$0xff]
      %v298 = vmax.f32 %v275, %v283
      %v299 = vmax.f32 %v277, %v285
      %v300 = vmax.f32 %v279, %v287
      %v301 = vmax.f32 %v281, %v289
      %v302 = vmax.f32 %v298, %v291
      %v303 = vmax.f32 %v299, %v293
      %v304 = vmax.f32 %v300, %v295
      %v305 = vmax.f32 %v301, %v297
      %v306 = vpack.c.bf16 %v303, %v302
      %v307 = vpack.c.bf16 %v305, %v304
      %v310 = vunpack.c.l.b16 %v306
      %v311 = vunpack.c.h.b16 %v306
      %v312 = vunpack.c.l.b16 %v307
      %v313 = vunpack.c.h.b16 %v307
      %v314 = vpack.c.b16 %v310, %v310
      %v315 = vpack.c.b16 %v311, %v311
      %v316 = vpack.c.b16 %v312, %v312
      %v317 = vpack.c.b16 %v313, %v313
      %322 = vst [vmem:[%s246] sm:$0xf] %v314
      %323 = vst [vmem:[%s246 + $0x4] sm:$0xf] %v315
      %324 = vst [vmem:[%s246 + $0x8] sm:$0xf] %v316
      %325 = vst [vmem:[%s246 + $0xc] sm:$0xf] %v317
      %s326 = smul.u32 4, %s18
      %p327 = scmp.lt.s32.totalorder %s17, 1
      %s328 = scalar_select %p327, %s17, 1
      %p329 = scmp.lt.s32.totalorder %s326, 3
      %s330 = scalar_select %p329, %s326, 3
      %s331 = smul.addr %s328, 4
      %s332 = sadd.s32 %s330, %s331
      %s333 = smul.addr %s332, 4
      %s334 = scalar_lea.vmem %s2, %s333
      // Predicated region
      $region29: #{resnet1d_forward.16} parent=27 // pred_check
        %p335 = pneg %p105
      $region30: #{resnet1d_forward.16} parent=27 // pred_check_branch
        %337 = sbr.rel (%p335) target = $region32
      $region31: #{resnet1d_forward.16} parent=27 // pred_region
        %s338 = smul.u32 4, %s18
      $region32: #{resnet1d_forward.16} parent=27 // pred_fallthru
        _
    $region28: #{resnet1d_forward.16} parent=5 // pred_fallthru
      _
    %p339 = scmp.le.s32.totalorder 2, %s8
    // Predicated region
    $region33: #{resnet1d_forward.16} parent=5 // pred_check
      %p340 = pneg %p339
    $region34: #{resnet1d_forward.16} parent=5 // pred_check_branch
      %342 = sbr.rel (%p340) target = $region36
    $region35: #{resnet1d_forward.16} parent=5 // pred_region
      %s343 = ssub.s32 %s8, 2
      // Predicated region
      $region37: #{resnet1d_forward.16} parent=35 // pred_check
        %p344 = pneg %p111
      $region38: #{resnet1d_forward.16} parent=35 // pred_check_branch
        %346 = sbr.rel (%p344) target = $region40
      $region39: #{resnet1d_forward.16} parent=35 // pred_region
        %s347 = smul.u32 4, %s20
        %p348 = scmp.lt.s32.totalorder %s19, 1
        %s349 = scalar_select %p348, %s19, 1
        %p350 = scmp.lt.s32.totalorder %s347, 3
        %s351 = scalar_select %p350, %s347, 3
        %s352 = smul.addr %s349, 4
        %s353 = sadd.s32 %s351, %s352
        %s354 = smul.addr %s353, 4
        %s355 = scalar_lea.vmem %s2, %s354
      $region40: #{resnet1d_forward.16} parent=35 // pred_fallthru
        _
    $region36: #{resnet1d_forward.16} parent=5 // pred_fallthru
      _
  $region6: #{resnet1d_forward.16} parent=0 // loop_footer
    %s12 = sadd.s32 1, %s8
  $region7: #{resnet1d_forward.16} parent=0 // loop_footer_branch
    %7 = sbr.rel target = $region3
  $region8: #{resnet1d_forward.16} parent=0 // loop_exit
    _

// kernel: resnet1d_forward.15
$region0: #{resnet1d_forward.15}
  #allocation0 [shape = 'u32[]', space=smem, size = 0x4, offset = 0x4, fixed_abs, tag = 'smem constant byte address 0x4 - core index']
  #allocation1 [shape = 'u32[144,128]{1,0:T(1,128)}', space=vmem, size = 0x12000, scoped, tag = 'internal scratch']
  %s0 = inlined_call_operand.vmem [shape: bf16[2,56,128], index: 0, kind: input, shape index: {}]
  %s1 = inlined_call_operand.vmem [shape: f32[1,128], index: 1, kind: input, shape index: {}]
  %s2 = inlined_call_operand.vmem [shape: f32[1,128], index: 2, kind: input, shape index: {}]
  %s3 = inlined_call_operand.vmem [shape: bf16[2,56,128], index: 3, kind: output, shape index: {}]
  %s4 = sld [smem:[#allocation0]]
  $region45: #{resnet1d_forward.15} parent=0
    _
  %s6 = ssub.s32 1, %s4
  %s7 = scalar_select 0, %s6, %s4
  loop: start=0, step=1, limit=4
  $region2: #{resnet1d_forward.15} parent=0 // loop_pre_header
    _
  $region3: #{resnet1d_forward.15} parent=0 // loop_header
    %s9 = sphi 0, %s13
    %p10 = scmp.ge.s32.totalorder %s9, 4
    %s16 = sphi 0, %s28
    %s17 = sphi 0, %s24
    %s18 = sphi 0, %s16
    %s19 = sphi 0, %s17
    %s20 = sphi 0, %s18
    %s21 = sphi 0, %s19
    %s33 = sphi 0, %s35
    %s36 = sphi 0, %s33
    %s37 = sphi 0, %s36
    %s53 = sphi 0, %s37
    %s57 = sphi 0, %s57
    %s59 = sphi 0, %s57
    %s60 = sphi 0, %s59
    %s74 = sphi 0, %s60
    %s78 = sphi 0, %s78
    %s80 = sphi 0, %s78
    %s81 = sphi 0, %s80
    %s95 = sphi 0, %s81
    %s103 = sphi 0, %s105
    %s106 = sphi 0, %s103
    %s107 = sphi 0, %s106
    %s123 = sphi 0, %s107
  $region4: #{resnet1d_forward.15} parent=0 // loop_header_branch
    %12 = sbr.rel (%p10) target = $region8
  $region5: #{resnet1d_forward.15} parent=0 // loop_body
    %s14 = ssub.s32 %s9, 1
    %s15 = ssub.s32 %s9, 2
    %s22 = sadd.s32 1, %s17
    %p23 = scmp.ge.s32.totalorder %s22, 1
    %s24 = scalar_select %p23, 0, %s22
    %s25 = sadd.s32 1, %s16
    %s26 = scalar_select %p23, %s25, %s16
    %p27 = scmp.ge.s32.totalorder %s26, 2
    %s28 = scalar_select %p27, 0, %s26
    %s29 = ssub.s32 %s16, %s28
    %s30 = ssub.s32 %s17, %s24
    %s31 = sor.u32 %s29, %s30
    %p32 = scmp.eq.s32.totalorder %s31, 0
    %s34 = sadd.s32 %s33, 1
    %s35 = scalar_select %p32, %s33, %s34
    %p38 = pneg %p32
    %p39 = scmp.eq.s32.totalorder %s9, 1
    %p40 = por %p38, %p39
    %p41 = scmp.ne.s32.totalorder %s33, %s36
    %p42 = scmp.eq.s32.totalorder %s9, 0
    %p43 = por %p41, %p42
    %p44 = scmp.ne.s32.totalorder %s33, %s36
    %p45 = scmp.eq.s32.totalorder %s14, 1
    %p46 = por %p44, %p45
    %p47 = scmp.ne.s32.totalorder %s36, %s37
    %p48 = scmp.eq.s32.totalorder %s14, 0
    %p49 = por %p47, %p48
    %p50 = scmp.ne.s32.totalorder %s36, %s37
    %p51 = scmp.eq.s32.totalorder %s15, 1
    %p52 = por %p50, %p51
    %p54 = scmp.ne.s32.totalorder %s37, %s53
    %p55 = scmp.eq.s32.totalorder %s15, 0
    %p56 = por %p54, %p55
    %s58 = sadd.s32 %s57, 1
    %p61 = scmp.eq.s32.totalorder %s9, 1
    %p62 = scmp.ne.s32.totalorder %s57, %s59
    %p63 = scmp.eq.s32.totalorder %s9, 0
    %p64 = por %p62, %p63
    %p65 = scmp.ne.s32.totalorder %s57, %s59
    %p66 = scmp.eq.s32.totalorder %s14, 1
    %p67 = por %p65, %p66
    %p68 = scmp.ne.s32.totalorder %s59, %s60
    %p69 = scmp.eq.s32.totalorder %s14, 0
    %p70 = por %p68, %p69
    %p71 = scmp.ne.s32.totalorder %s59, %s60
    %p72 = scmp.eq.s32.totalorder %s15, 1
    %p73 = por %p71, %p72
    %p75 = scmp.ne.s32.totalorder %s60, %s74
    %p76 = scmp.eq.s32.totalorder %s15, 0
    %p77 = por %p75, %p76
    %s79 = sadd.s32 %s78, 1
    %p82 = scmp.eq.s32.totalorder %s9, 1
    %p83 = scmp.ne.s32.totalorder %s78, %s80
    %p84 = scmp.eq.s32.totalorder %s9, 0
    %p85 = por %p83, %p84
    %p86 = scmp.ne.s32.totalorder %s78, %s80
    %p87 = scmp.eq.s32.totalorder %s14, 1
    %p88 = por %p86, %p87
    %p89 = scmp.ne.s32.totalorder %s80, %s81
    %p90 = scmp.eq.s32.totalorder %s14, 0
    %p91 = por %p89, %p90
    %p92 = scmp.ne.s32.totalorder %s80, %s81
    %p93 = scmp.eq.s32.totalorder %s15, 1
    %p94 = por %p92, %p93
    %p96 = scmp.ne.s32.totalorder %s81, %s95
    %p97 = scmp.eq.s32.totalorder %s15, 0
    %p98 = por %p96, %p97
    %s99 = ssub.s32 %s16, %s28
    %s100 = ssub.s32 %s17, %s24
    %s101 = sor.u32 %s99, %s100
    %p102 = scmp.eq.s32.totalorder %s101, 0
    %s104 = sadd.s32 %s103, 1
    %s105 = scalar_select %p102, %s103, %s104
    %p108 = pneg %p102
    %p109 = scmp.eq.s32.totalorder %s9, 1
    %p110 = por %p108, %p109
    %p111 = scmp.ne.s32.totalorder %s103, %s106
    %p112 = scmp.eq.s32.totalorder %s9, 0
    %p113 = por %p111, %p112
    %p114 = scmp.ne.s32.totalorder %s103, %s106
    %p115 = scmp.eq.s32.totalorder %s14, 1
    %p116 = por %p114, %p115
    %p117 = scmp.ne.s32.totalorder %s106, %s107
    %p118 = scmp.eq.s32.totalorder %s14, 0
    %p119 = por %p117, %p118
    %p120 = scmp.ne.s32.totalorder %s106, %s107
    %p121 = scmp.eq.s32.totalorder %s15, 1
    %p122 = por %p120, %p121
    %p124 = scmp.ne.s32.totalorder %s107, %s123
    %p125 = scmp.eq.s32.totalorder %s15, 0
    %p126 = por %p124, %p125
    %p127 = scmp.le.s32.totalorder 1, %s9
    %p128 = scmp.lt.s32.totalorder %s9, 3
    %p129 = pnand %p127, %p128
    %p130 = pneg %p129
    // Predicated region
    $region9: #{resnet1d_forward.15} parent=5 // pred_check
      _
    $region10: #{resnet1d_forward.15} parent=5 // pred_check_branch
      %132 = sbr.rel (%p129) target = $region12
    $region11: #{resnet1d_forward.15} parent=5 // pred_region
      %s133 = ssub.s32 %s9, 1
      // Predicated region
      $region13: #{resnet1d_forward.15} parent=11 // pred_check
        %p134 = pneg %p70
      $region14: #{resnet1d_forward.15} parent=11 // pred_check_branch
        %136 = sbr.rel (%p134) target = $region16
      $region15: #{resnet1d_forward.15} parent=11 // pred_region
        _
      $region16: #{resnet1d_forward.15} parent=11 // pred_fallthru
        _
      // Predicated region
      $region17: #{resnet1d_forward.15} parent=11 // pred_check
        %p137 = pneg %p91
      $region18: #{resnet1d_forward.15} parent=11 // pred_check_branch
        %139 = sbr.rel (%p137) target = $region20
      $region19: #{resnet1d_forward.15} parent=11 // pred_region
        _
      $region20: #{resnet1d_forward.15} parent=11 // pred_fallthru
        _
    $region12: #{resnet1d_forward.15} parent=5 // pred_fallthru
      _
    %p140 = scmp.lt.s32.totalorder %s9, 2
    // Predicated region
    $region21: #{resnet1d_forward.15} parent=5 // pred_check
      %p141 = pneg %p140
    $region22: #{resnet1d_forward.15} parent=5 // pred_check_branch
      %143 = sbr.rel (%p141) target = $region24
    $region23: #{resnet1d_forward.15} parent=5 // pred_region
      // Predicated region
      $region25: #{resnet1d_forward.15} parent=23 // pred_check
        %p144 = pneg %p43
      $region26: #{resnet1d_forward.15} parent=23 // pred_check_branch
        %146 = sbr.rel (%p144) target = $region28
      $region27: #{resnet1d_forward.15} parent=23 // pred_region
        %s147 = smul.u32 7, %s17
        %p148 = scmp.lt.s32.totalorder %s16, 1
        %s149 = scalar_select %p148, %s16, 1
        %p150 = scmp.lt.s32.totalorder %s147, 6
        %s151 = scalar_select %p150, %s147, 6
        %s152 = smul.addr %s149, 7
        %s153 = sadd.s32 %s151, %s152
        %s154 = smul.addr %s153, 4
        %s155 = scalar_lea.vmem %s0, %s154
        %s156 = smul.u32 7, %s17
      $region28: #{resnet1d_forward.15} parent=23 // pred_fallthru
        _
    $region24: #{resnet1d_forward.15} parent=5 // pred_fallthru
      _
    %p157 = scmp.le.s32.totalorder 1, %s9
    %p158 = scmp.lt.s32.totalorder %s9, 3
    %p159 = pnand %p157, %p158
    %p160 = pneg %p159
    // Predicated region
    $region29: #{resnet1d_forward.15} parent=5 // pred_check
      _
    $region30: #{resnet1d_forward.15} parent=5 // pred_check_branch
      %162 = sbr.rel (%p159) target = $region32
    $region31: #{resnet1d_forward.15} parent=5 // pred_region
      %s163 = ssub.s32 %s9, 1
      %s164 = smul.u32 7, %s19
      %p165 = scmp.lt.s32.totalorder %s18, 1
      %s166 = scalar_select %p165, %s18, 1
      %p167 = scmp.lt.s32.totalorder %s164, 6
      %s168 = scalar_select %p167, %s164, 6
      %s169 = smul.addr %s166, 7
      %s170 = sadd.s32 %s168, %s169
      %s171 = smul.addr %s170, 4
      %s172 = scalar_lea.vmem %s0, %s171
      %p173 = pneg %p49
      %p174 = pneg %p46
      %p175 = pneg %p70
      %p176 = pneg %p67
      %p177 = pneg %p91
      %p178 = pneg %p88
      %p179 = pneg %p119
      %p180 = pneg %p116
      %s181 = smul.u32 7, %s19
      %p182 = scmp.lt.s32.totalorder %s18, 1
      %s183 = scalar_select %p182, %s18, 1
      %p184 = scmp.lt.s32.totalorder %s181, 6
      %s185 = scalar_select %p184, %s181, 6
      %s186 = smul.addr %s183, 7
      %s187 = sadd.s32 %s185, %s186
      %s188 = smul.addr %s187, 4
      %s189 = scalar_lea.vmem %s3, %s188
      %s190 = smul.u32 7, %s19
      %p191 = scmp.lt.s32.totalorder %s18, 1
      %s192 = scalar_select %p191, %s18, 1
      %p193 = scmp.lt.s32.totalorder %s190, 6
      %s194 = scalar_select %p193, %s190, 6
      %s195 = smul.addr %s192, 7
      %s196 = sadd.s32 %s194, %s195
      %s197 = smul.addr %s196, 4
      %s198 = scalar_lea.vmem %s0, %s197
      %s199 = smul.u32 7, %s19
      %s200 = smul.u32 7, %s19
      %p201 = scmp.lt.s32.totalorder %s18, 1
      %s202 = scalar_select %p201, %s18, 1
      %p203 = scmp.lt.s32.totalorder %s200, 6
      %s204 = scalar_select %p203, %s200, 6
      %s205 = smul.addr %s202, 7
      %s206 = sadd.s32 %s204, %s205
      %s207 = smul.addr %s206, 4
      %s208 = scalar_lea.vmem %s3, %s207
      %s209 = smul.u32 7, %s19
      %v210 = vld [vmem:[%s198] sm:$0xf]
      %v211 = vld [vmem:[%s198 + $0x4] sm:$0xf]
      %v212 = vld [vmem:[%s198 + $0x8] sm:$0xf]
      %v213 = vld [vmem:[%s198 + $0xc] sm:$0xf]
      %v214 = vld [vmem:[%s198 + $0x10] sm:$0xf]
      %v215 = vld [vmem:[%s198 + $0x14] sm:$0xf]
      %v216 = vld [vmem:[%s198 + $0x18] sm:$0xf]
      %v217 = vunpack.c.l.bf16 %v210
      %v218 = vunpack.c.l.bf16 %v211
      %v219 = vunpack.c.l.bf16 %v212
      %v220 = vunpack.c.l.bf16 %v213
      %v221 = vunpack.c.l.bf16 %v214
      %v222 = vunpack.c.l.bf16 %v215
      %v223 = vunpack.c.l.bf16 %v216
      %v224 = vld [vmem:[%s1] sm:$0x1]
      %v226 = vlaneseq
      %v227 = vshrl.u32 %v226, 7
      %v228 = vsub.s32 0, %v227
      %v229 = vrot.slane %v224, %v228
      %v231 = vmul.f32 %v217, %v229
      %v232 = vmul.f32 %v218, %v229
      %v233 = vmul.f32 %v219, %v229
      %v234 = vmul.f32 %v220, %v229
      %v235 = vmul.f32 %v221, %v229
      %v236 = vmul.f32 %v222, %v229
      %v237 = vmul.f32 %v223, %v229
      %v238 = vld [vmem:[%s2] sm:$0x1]
      %v240 = vlaneseq
      %v241 = vshrl.u32 %v240, 7
      %v242 = vsub.s32 0, %v241
      %v243 = vrot.slane %v238, %v242
      %v245 = vadd.f32 %v231, %v243
      %v246 = vadd.f32 %v232, %v243
      %v247 = vadd.f32 %v233, %v243
      %v248 = vadd.f32 %v234, %v243
      %v249 = vadd.f32 %v235, %v243
      %v250 = vadd.f32 %v236, %v243
      %v251 = vadd.f32 %v237, %v243
      %v252 = vmax.f32 %v245, 0.0
      %v253 = vmax.f32 %v246, 0.0
      %v254 = vmax.f32 %v247, 0.0
      %v255 = vmax.f32 %v248, 0.0
      %v256 = vmax.f32 %v249, 0.0
      %v257 = vmax.f32 %v250, 0.0
      %v258 = vmax.f32 %v251, 0.0
      %v259 = vpack.c.bf16 %v253, %v252
      %v260 = vpack.c.bf16 %v255, %v254
      %v261 = vpack.c.bf16 %v257, %v256
      %v262 = vpack.c.bf16 %v258, %v258
      %v267 = vunpack.c.l.b16 %v259
      %v268 = vunpack.c.h.b16 %v259
      %v269 = vunpack.c.l.b16 %v260
      %v270 = vunpack.c.h.b16 %v260
      %v271 = vunpack.c.l.b16 %v261
      %v272 = vunpack.c.h.b16 %v261
      %v273 = vunpack.c.l.b16 %v262
      %v274 = vpack.c.b16 %v267, %v267
      %v275 = vpack.c.b16 %v268, %v268
      %v276 = vpack.c.b16 %v269, %v269
      %v277 = vpack.c.b16 %v270, %v270
      %v278 = vpack.c.b16 %v271, %v271
      %v279 = vpack.c.b16 %v272, %v272
      %v280 = vpack.c.b16 %v273, %v273
      %288 = vst [vmem:[%s208] sm:$0xf] %v274
      %289 = vst [vmem:[%s208 + $0x4] sm:$0xf] %v275
      %290 = vst [vmem:[%s208 + $0x8] sm:$0xf] %v276
      %291 = vst [vmem:[%s208 + $0xc] sm:$0xf] %v277
      %292 = vst [vmem:[%s208 + $0x10] sm:$0xf] %v278
      %293 = vst [vmem:[%s208 + $0x14] sm:$0xf] %v279
      %294 = vst [vmem:[%s208 + $0x18] sm:$0xf] %v280
      %s295 = smul.u32 7, %s19
      %p296 = scmp.lt.s32.totalorder %s18, 1
      %s297 = scalar_select %p296, %s18, 1
      %p298 = scmp.lt.s32.totalorder %s295, 6
      %s299 = scalar_select %p298, %s295, 6
      %s300 = smul.addr %s297, 7
      %s301 = sadd.s32 %s299, %s300
      %s302 = smul.addr %s301, 4
      %s303 = scalar_lea.vmem %s3, %s302
      // Predicated region
      $region33: #{resnet1d_forward.15} parent=31 // pred_check
        %p304 = pneg %p116
      $region34: #{resnet1d_forward.15} parent=31 // pred_check_branch
        %306 = sbr.rel (%p304) target = $region36
      $region35: #{resnet1d_forward.15} parent=31 // pred_region
        %s307 = smul.u32 7, %s19
      $region36: #{resnet1d_forward.15} parent=31 // pred_fallthru
        _
    $region32: #{resnet1d_forward.15} parent=5 // pred_fallthru
      _
    %p308 = scmp.le.s32.totalorder 2, %s9
    // Predicated region
    $region37: #{resnet1d_forward.15} parent=5 // pred_check
      %p309 = pneg %p308
    $region38: #{resnet1d_forward.15} parent=5 // pred_check_branch
      %311 = sbr.rel (%p309) target = $region40
    $region39: #{resnet1d_forward.15} parent=5 // pred_region
      %s312 = ssub.s32 %s9, 2
      // Predicated region
      $region41: #{resnet1d_forward.15} parent=39 // pred_check
        %p313 = pneg %p122
      $region42: #{resnet1d_forward.15} parent=39 // pred_check_branch
        %315 = sbr.rel (%p313) target = $region44
      $region43: #{resnet1d_forward.15} parent=39 // pred_region
        %s316 = smul.u32 7, %s21
        %p317 = scmp.lt.s32.totalorder %s20, 1
        %s318 = scalar_select %p317, %s20, 1
        %p319 = scmp.lt.s32.totalorder %s316, 6
        %s320 = scalar_select %p319, %s316, 6
        %s321 = smul.addr %s318, 7
        %s322 = sadd.s32 %s320, %s321
        %s323 = smul.addr %s322, 4
        %s324 = scalar_lea.vmem %s3, %s323
      $region44: #{resnet1d_forward.15} parent=39 // pred_fallthru
        _
    $region40: #{resnet1d_forward.15} parent=5 // pred_fallthru
      _
  $region6: #{resnet1d_forward.15} parent=0 // loop_footer
    %s13 = sadd.s32 1, %s9
  $region7: #{resnet1d_forward.15} parent=0 // loop_footer_branch
    %8 = sbr.rel target = $region3
  $region8: #{resnet1d_forward.15} parent=0 // loop_exit
    _

// kernel: resnet1d_forward.18
$region0: #{resnet1d_forward.18}
  #allocation0 [shape = 'u32[]', space=smem, size = 0x4, offset = 0x4, fixed_abs, tag = 'smem constant byte address 0x4 - core index']
  #allocation1 [shape = 'u32[144,128]{1,0:T(1,128)}', space=vmem, size = 0x12000, scoped, tag = 'internal scratch']
  %s0 = inlined_call_operand.vmem [shape: bf16[2,32,128], index: 0, kind: input, shape index: {}]
  %s1 = inlined_call_operand.vmem [shape: f32[1,128], index: 1, kind: input, shape index: {}]
  %s2 = inlined_call_operand.vmem [shape: f32[1,128], index: 2, kind: input, shape index: {}]
  %s3 = inlined_call_operand.vmem [shape: bf16[2,32,128], index: 3, kind: output, shape index: {}]
  %s4 = sld [smem:[#allocation0]]
  $region45: #{resnet1d_forward.18} parent=0
    _
  %s6 = ssub.s32 1, %s4
  %s7 = scalar_select 0, %s6, %s4
  loop: start=0, step=1, limit=4
  $region2: #{resnet1d_forward.18} parent=0 // loop_pre_header
    _
  $region3: #{resnet1d_forward.18} parent=0 // loop_header
    %s9 = sphi 0, %s13
    %p10 = scmp.ge.s32.totalorder %s9, 4
    %s16 = sphi 0, %s28
    %s17 = sphi 0, %s24
    %s18 = sphi 0, %s16
    %s19 = sphi 0, %s17
    %s20 = sphi 0, %s18
    %s21 = sphi 0, %s19
    %s33 = sphi 0, %s35
    %s36 = sphi 0, %s33
    %s37 = sphi 0, %s36
    %s53 = sphi 0, %s37
    %s57 = sphi 0, %s57
    %s59 = sphi 0, %s57
    %s60 = sphi 0, %s59
    %s74 = sphi 0, %s60
    %s78 = sphi 0, %s78
    %s80 = sphi 0, %s78
    %s81 = sphi 0, %s80
    %s95 = sphi 0, %s81
    %s103 = sphi 0, %s105
    %s106 = sphi 0, %s103
    %s107 = sphi 0, %s106
    %s123 = sphi 0, %s107
  $region4: #{resnet1d_forward.18} parent=0 // loop_header_branch
    %12 = sbr.rel (%p10) target = $region8
  $region5: #{resnet1d_forward.18} parent=0 // loop_body
    %s14 = ssub.s32 %s9, 1
    %s15 = ssub.s32 %s9, 2
    %s22 = sadd.s32 1, %s17
    %p23 = scmp.ge.s32.totalorder %s22, 1
    %s24 = scalar_select %p23, 0, %s22
    %s25 = sadd.s32 1, %s16
    %s26 = scalar_select %p23, %s25, %s16
    %p27 = scmp.ge.s32.totalorder %s26, 2
    %s28 = scalar_select %p27, 0, %s26
    %s29 = ssub.s32 %s16, %s28
    %s30 = ssub.s32 %s17, %s24
    %s31 = sor.u32 %s29, %s30
    %p32 = scmp.eq.s32.totalorder %s31, 0
    %s34 = sadd.s32 %s33, 1
    %s35 = scalar_select %p32, %s33, %s34
    %p38 = pneg %p32
    %p39 = scmp.eq.s32.totalorder %s9, 1
    %p40 = por %p38, %p39
    %p41 = scmp.ne.s32.totalorder %s33, %s36
    %p42 = scmp.eq.s32.totalorder %s9, 0
    %p43 = por %p41, %p42
    %p44 = scmp.ne.s32.totalorder %s33, %s36
    %p45 = scmp.eq.s32.totalorder %s14, 1
    %p46 = por %p44, %p45
    %p47 = scmp.ne.s32.totalorder %s36, %s37
    %p48 = scmp.eq.s32.totalorder %s14, 0
    %p49 = por %p47, %p48
    %p50 = scmp.ne.s32.totalorder %s36, %s37
    %p51 = scmp.eq.s32.totalorder %s15, 1
    %p52 = por %p50, %p51
    %p54 = scmp.ne.s32.totalorder %s37, %s53
    %p55 = scmp.eq.s32.totalorder %s15, 0
    %p56 = por %p54, %p55
    %s58 = sadd.s32 %s57, 1
    %p61 = scmp.eq.s32.totalorder %s9, 1
    %p62 = scmp.ne.s32.totalorder %s57, %s59
    %p63 = scmp.eq.s32.totalorder %s9, 0
    %p64 = por %p62, %p63
    %p65 = scmp.ne.s32.totalorder %s57, %s59
    %p66 = scmp.eq.s32.totalorder %s14, 1
    %p67 = por %p65, %p66
    %p68 = scmp.ne.s32.totalorder %s59, %s60
    %p69 = scmp.eq.s32.totalorder %s14, 0
    %p70 = por %p68, %p69
    %p71 = scmp.ne.s32.totalorder %s59, %s60
    %p72 = scmp.eq.s32.totalorder %s15, 1
    %p73 = por %p71, %p72
    %p75 = scmp.ne.s32.totalorder %s60, %s74
    %p76 = scmp.eq.s32.totalorder %s15, 0
    %p77 = por %p75, %p76
    %s79 = sadd.s32 %s78, 1
    %p82 = scmp.eq.s32.totalorder %s9, 1
    %p83 = scmp.ne.s32.totalorder %s78, %s80
    %p84 = scmp.eq.s32.totalorder %s9, 0
    %p85 = por %p83, %p84
    %p86 = scmp.ne.s32.totalorder %s78, %s80
    %p87 = scmp.eq.s32.totalorder %s14, 1
    %p88 = por %p86, %p87
    %p89 = scmp.ne.s32.totalorder %s80, %s81
    %p90 = scmp.eq.s32.totalorder %s14, 0
    %p91 = por %p89, %p90
    %p92 = scmp.ne.s32.totalorder %s80, %s81
    %p93 = scmp.eq.s32.totalorder %s15, 1
    %p94 = por %p92, %p93
    %p96 = scmp.ne.s32.totalorder %s81, %s95
    %p97 = scmp.eq.s32.totalorder %s15, 0
    %p98 = por %p96, %p97
    %s99 = ssub.s32 %s16, %s28
    %s100 = ssub.s32 %s17, %s24
    %s101 = sor.u32 %s99, %s100
    %p102 = scmp.eq.s32.totalorder %s101, 0
    %s104 = sadd.s32 %s103, 1
    %s105 = scalar_select %p102, %s103, %s104
    %p108 = pneg %p102
    %p109 = scmp.eq.s32.totalorder %s9, 1
    %p110 = por %p108, %p109
    %p111 = scmp.ne.s32.totalorder %s103, %s106
    %p112 = scmp.eq.s32.totalorder %s9, 0
    %p113 = por %p111, %p112
    %p114 = scmp.ne.s32.totalorder %s103, %s106
    %p115 = scmp.eq.s32.totalorder %s14, 1
    %p116 = por %p114, %p115
    %p117 = scmp.ne.s32.totalorder %s106, %s107
    %p118 = scmp.eq.s32.totalorder %s14, 0
    %p119 = por %p117, %p118
    %p120 = scmp.ne.s32.totalorder %s106, %s107
    %p121 = scmp.eq.s32.totalorder %s15, 1
    %p122 = por %p120, %p121
    %p124 = scmp.ne.s32.totalorder %s107, %s123
    %p125 = scmp.eq.s32.totalorder %s15, 0
    %p126 = por %p124, %p125
    %p127 = scmp.le.s32.totalorder 1, %s9
    %p128 = scmp.lt.s32.totalorder %s9, 3
    %p129 = pnand %p127, %p128
    %p130 = pneg %p129
    // Predicated region
    $region9: #{resnet1d_forward.18} parent=5 // pred_check
      _
    $region10: #{resnet1d_forward.18} parent=5 // pred_check_branch
      %132 = sbr.rel (%p129) target = $region12
    $region11: #{resnet1d_forward.18} parent=5 // pred_region
      %s133 = ssub.s32 %s9, 1
      // Predicated region
      $region13: #{resnet1d_forward.18} parent=11 // pred_check
        %p134 = pneg %p70
      $region14: #{resnet1d_forward.18} parent=11 // pred_check_branch
        %136 = sbr.rel (%p134) target = $region16
      $region15: #{resnet1d_forward.18} parent=11 // pred_region
        _
      $region16: #{resnet1d_forward.18} parent=11 // pred_fallthru
        _
      // Predicated region
      $region17: #{resnet1d_forward.18} parent=11 // pred_check
        %p137 = pneg %p91
      $region18: #{resnet1d_forward.18} parent=11 // pred_check_branch
        %139 = sbr.rel (%p137) target = $region20
      $region19: #{resnet1d_forward.18} parent=11 // pred_region
        _
      $region20: #{resnet1d_forward.18} parent=11 // pred_fallthru
        _
    $region12: #{resnet1d_forward.18} parent=5 // pred_fallthru
      _
    %p140 = scmp.lt.s32.totalorder %s9, 2
    // Predicated region
    $region21: #{resnet1d_forward.18} parent=5 // pred_check
      %p141 = pneg %p140
    $region22: #{resnet1d_forward.18} parent=5 // pred_check_branch
      %143 = sbr.rel (%p141) target = $region24
    $region23: #{resnet1d_forward.18} parent=5 // pred_region
      // Predicated region
      $region25: #{resnet1d_forward.18} parent=23 // pred_check
        %p144 = pneg %p43
      $region26: #{resnet1d_forward.18} parent=23 // pred_check_branch
        %146 = sbr.rel (%p144) target = $region28
      $region27: #{resnet1d_forward.18} parent=23 // pred_region
        %s147 = smul.u32 4, %s17
        %p148 = scmp.lt.s32.totalorder %s16, 1
        %s149 = scalar_select %p148, %s16, 1
        %p150 = scmp.lt.s32.totalorder %s147, 3
        %s151 = scalar_select %p150, %s147, 3
        %s152 = smul.addr %s149, 4
        %s153 = sadd.s32 %s151, %s152
        %s154 = smul.addr %s153, 4
        %s155 = scalar_lea.vmem %s0, %s154
        %s156 = smul.u32 4, %s17
      $region28: #{resnet1d_forward.18} parent=23 // pred_fallthru
        _
    $region24: #{resnet1d_forward.18} parent=5 // pred_fallthru
      _
    %p157 = scmp.le.s32.totalorder 1, %s9
    %p158 = scmp.lt.s32.totalorder %s9, 3
    %p159 = pnand %p157, %p158
    %p160 = pneg %p159
    // Predicated region
    $region29: #{resnet1d_forward.18} parent=5 // pred_check
      _
    $region30: #{resnet1d_forward.18} parent=5 // pred_check_branch
      %162 = sbr.rel (%p159) target = $region32
    $region31: #{resnet1d_forward.18} parent=5 // pred_region
      %s163 = ssub.s32 %s9, 1
      %s164 = smul.u32 4, %s19
      %p165 = scmp.lt.s32.totalorder %s18, 1
      %s166 = scalar_select %p165, %s18, 1
      %p167 = scmp.lt.s32.totalorder %s164, 3
      %s168 = scalar_select %p167, %s164, 3
      %s169 = smul.addr %s166, 4
      %s170 = sadd.s32 %s168, %s169
      %s171 = smul.addr %s170, 4
      %s172 = scalar_lea.vmem %s0, %s171
      %p173 = pneg %p49
      %p174 = pneg %p46
      %p175 = pneg %p70
      %p176 = pneg %p67
      %p177 = pneg %p91
      %p178 = pneg %p88
      %p179 = pneg %p119
      %p180 = pneg %p116
      %s181 = smul.u32 4, %s19
      %p182 = scmp.lt.s32.totalorder %s18, 1
      %s183 = scalar_select %p182, %s18, 1
      %p184 = scmp.lt.s32.totalorder %s181, 3
      %s185 = scalar_select %p184, %s181, 3
      %s186 = smul.addr %s183, 4
      %s187 = sadd.s32 %s185, %s186
      %s188 = smul.addr %s187, 4
      %s189 = scalar_lea.vmem %s3, %s188
      %s190 = smul.u32 4, %s19
      %p191 = scmp.lt.s32.totalorder %s18, 1
      %s192 = scalar_select %p191, %s18, 1
      %p193 = scmp.lt.s32.totalorder %s190, 3
      %s194 = scalar_select %p193, %s190, 3
      %s195 = smul.addr %s192, 4
      %s196 = sadd.s32 %s194, %s195
      %s197 = smul.addr %s196, 4
      %s198 = scalar_lea.vmem %s0, %s197
      %s199 = smul.u32 4, %s19
      %s200 = smul.u32 4, %s19
      %p201 = scmp.lt.s32.totalorder %s18, 1
      %s202 = scalar_select %p201, %s18, 1
      %p203 = scmp.lt.s32.totalorder %s200, 3
      %s204 = scalar_select %p203, %s200, 3
      %s205 = smul.addr %s202, 4
      %s206 = sadd.s32 %s204, %s205
      %s207 = smul.addr %s206, 4
      %s208 = scalar_lea.vmem %s3, %s207
      %s209 = smul.u32 4, %s19
      %v210 = vld [vmem:[%s198] sm:$0xf]
      %v211 = vld [vmem:[%s198 + $0x4] sm:$0xf]
      %v212 = vld [vmem:[%s198 + $0x8] sm:$0xf]
      %v213 = vld [vmem:[%s198 + $0xc] sm:$0xf]
      %v214 = vunpack.c.l.bf16 %v210
      %v215 = vunpack.c.l.bf16 %v211
      %v216 = vunpack.c.l.bf16 %v212
      %v217 = vunpack.c.l.bf16 %v213
      %v218 = vld [vmem:[%s1] sm:$0x1]
      %v220 = vlaneseq
      %v221 = vshrl.u32 %v220, 7
      %v222 = vsub.s32 0, %v221
      %v223 = vrot.slane %v218, %v222
      %v225 = vmul.f32 %v214, %v223
      %v226 = vmul.f32 %v215, %v223
      %v227 = vmul.f32 %v216, %v223
      %v228 = vmul.f32 %v217, %v223
      %v229 = vld [vmem:[%s2] sm:$0x1]
      %v231 = vlaneseq
      %v232 = vshrl.u32 %v231, 7
      %v233 = vsub.s32 0, %v232
      %v234 = vrot.slane %v229, %v233
      %v236 = vadd.f32 %v225, %v234
      %v237 = vadd.f32 %v226, %v234
      %v238 = vadd.f32 %v227, %v234
      %v239 = vadd.f32 %v228, %v234
      %v240 = vmax.f32 %v236, 0.0
      %v241 = vmax.f32 %v237, 0.0
      %v242 = vmax.f32 %v238, 0.0
      %v243 = vmax.f32 %v239, 0.0
      %v244 = vpack.c.bf16 %v241, %v240
      %v245 = vpack.c.bf16 %v243, %v242
      %v248 = vunpack.c.l.b16 %v244
      %v249 = vunpack.c.h.b16 %v244
      %v250 = vunpack.c.l.b16 %v245
      %v251 = vunpack.c.h.b16 %v245
      %v252 = vpack.c.b16 %v248, %v248
      %v253 = vpack.c.b16 %v249, %v249
      %v254 = vpack.c.b16 %v250, %v250
      %v255 = vpack.c.b16 %v251, %v251
      %260 = vst [vmem:[%s208] sm:$0xf] %v252
      %261 = vst [vmem:[%s208 + $0x4] sm:$0xf] %v253
      %262 = vst [vmem:[%s208 + $0x8] sm:$0xf] %v254
      %263 = vst [vmem:[%s208 + $0xc] sm:$0xf] %v255
      %s264 = smul.u32 4, %s19
      %p265 = scmp.lt.s32.totalorder %s18, 1
      %s266 = scalar_select %p265, %s18, 1
      %p267 = scmp.lt.s32.totalorder %s264, 3
      %s268 = scalar_select %p267, %s264, 3
      %s269 = smul.addr %s266, 4
      %s270 = sadd.s32 %s268, %s269
      %s271 = smul.addr %s270, 4
      %s272 = scalar_lea.vmem %s3, %s271
      // Predicated region
      $region33: #{resnet1d_forward.18} parent=31 // pred_check
        %p273 = pneg %p116
      $region34: #{resnet1d_forward.18} parent=31 // pred_check_branch
        %275 = sbr.rel (%p273) target = $region36
      $region35: #{resnet1d_forward.18} parent=31 // pred_region
        %s276 = smul.u32 4, %s19
      $region36: #{resnet1d_forward.18} parent=31 // pred_fallthru
        _
    $region32: #{resnet1d_forward.18} parent=5 // pred_fallthru
      _
    %p277 = scmp.le.s32.totalorder 2, %s9
    // Predicated region
    $region37: #{resnet1d_forward.18} parent=5 // pred_check
      %p278 = pneg %p277
    $region38: #{resnet1d_forward.18} parent=5 // pred_check_branch
      %280 = sbr.rel (%p278) target = $region40
    $region39: #{resnet1d_forward.18} parent=5 // pred_region
      %s281 = ssub.s32 %s9, 2
      // Predicated region
      $region41: #{resnet1d_forward.18} parent=39 // pred_check
        %p282 = pneg %p122
      $region42: #{resnet1d_forward.18} parent=39 // pred_check_branch
        %284 = sbr.rel (%p282) target = $region44
      $region43: #{resnet1d_forward.18} parent=39 // pred_region
        %s285 = smul.u32 4, %s21
        %p286 = scmp.lt.s32.totalorder %s20, 1
        %s287 = scalar_select %p286, %s20, 1
        %p288 = scmp.lt.s32.totalorder %s285, 3
        %s289 = scalar_select %p288, %s285, 3
        %s290 = smul.addr %s287, 4
        %s291 = sadd.s32 %s289, %s290
        %s292 = smul.addr %s291, 4
        %s293 = scalar_lea.vmem %s3, %s292
      $region44: #{resnet1d_forward.18} parent=39 // pred_fallthru
        _
    $region40: #{resnet1d_forward.18} parent=5 // pred_fallthru
      _
  $region6: #{resnet1d_forward.18} parent=0 // loop_footer
    %s13 = sadd.s32 1, %s9
  $region7: #{resnet1d_forward.18} parent=0 // loop_footer_branch
    %8 = sbr.rel target = $region3
  $region8: #{resnet1d_forward.18} parent=0 // loop_exit
    _

// kernel: resnet1d_forward.14
$region0: #{resnet1d_forward.14}
  #allocation0 [shape = 'u32[]', space=smem, size = 0x4, offset = 0x4, fixed_abs, tag = 'smem constant byte address 0x4 - core index']
  #allocation1 [shape = 'u32[144,128]{1,0:T(1,128)}', space=vmem, size = 0x12000, scoped, tag = 'internal scratch']
  #allocation2 [shape = 'f32[120,4]{1,0:T(8,128)}', space=vmem, size = 0xf000, scoped, tag = 'scratch operand']
  %s0 = inlined_call_operand.vmem [shape: bf16[2,120,4], index: 0, kind: input, shape index: {}, may-alias: {0,1}]
  %s1 = inlined_call_operand.vmem [shape: bf16[2,120,4], index: 1, kind: input, shape index: {}, may-alias: {0,1}]
  %s2 = inlined_call_operand.vmem [shape: bf16[7,4,128], index: 2, kind: input, shape index: {}]
  %s3 = inlined_call_operand.vmem [shape: bf16[2,56,128], index: 3, kind: output, shape index: {0}]
  %s4 = inlined_call_operand.vmem [shape: f32[2,1,128], index: 4, kind: output, shape index: {1}]
  %s5 = inlined_call_operand.vmem [shape: f32[2,1,128], index: 5, kind: output, shape index: {2}]
  %6 = xla_tuple %s3, %s4, %s5
  %s7 = sld [smem:[#allocation0]]
  $region73: #{resnet1d_forward.14} parent=0
    _
  %s9 = ssub.s32 1, %s7
  %s10 = scalar_select 0, %s9, %s7
  loop: start=0, step=1, limit=4
  $region2: #{resnet1d_forward.14} parent=0 // loop_pre_header
    _
  $region3: #{resnet1d_forward.14} parent=0 // loop_header
    %s12 = sphi 0, %s16
    %p13 = scmp.ge.s32.totalorder %s12, 4
    %s19 = sphi 0, %s31
    %s20 = sphi 0, %s27
    %s21 = sphi 0, %s19
    %s22 = sphi 0, %s20
    %s23 = sphi 0, %s21
    %s24 = sphi 0, %s22
    %s36 = sphi 0, %s38
    %s39 = sphi 0, %s36
    %s40 = sphi 0, %s39
    %s56 = sphi 0, %s40
    %s68 = sphi 0, %s70
    %s71 = sphi 0, %s68
    %s72 = sphi 0, %s71
    %s88 = sphi 0, %s72
    %s92 = sphi 0, %s92
    %s94 = sphi 0, %s92
    %s95 = sphi 0, %s94
    %s109 = sphi 0, %s95
    %s117 = sphi 0, %s119
    %s120 = sphi 0, %s117
    %s121 = sphi 0, %s120
    %s137 = sphi 0, %s121
    %s143 = sphi 0, %s145
    %s146 = sphi 0, %s143
    %s147 = sphi 0, %s146
    %s163 = sphi 0, %s147
    %s169 = sphi 0, %s171
    %s172 = sphi 0, %s169
    %s173 = sphi 0, %s172
    %s189 = sphi 0, %s173
  $region4: #{resnet1d_forward.14} parent=0 // loop_header_branch
    %15 = sbr.rel (%p13) target = $region8
  $region5: #{resnet1d_forward.14} parent=0 // loop_body
    %s17 = ssub.s32 %s12, 1
    %s18 = ssub.s32 %s12, 2
    %s25 = sadd.s32 1, %s20
    %p26 = scmp.ge.s32.totalorder %s25, 1
    %s27 = scalar_select %p26, 0, %s25
    %s28 = sadd.s32 1, %s19
    %s29 = scalar_select %p26, %s28, %s19
    %p30 = scmp.ge.s32.totalorder %s29, 2
    %s31 = scalar_select %p30, 0, %s29
    %s32 = ssub.s32 %s19, %s31
    %s33 = ssub.s32 %s20, %s27
    %s34 = sor.u32 %s32, %s33
    %p35 = scmp.eq.s32.totalorder %s34, 0
    %s37 = sadd.s32 %s36, 1
    %s38 = scalar_select %p35, %s36, %s37
    %p41 = pneg %p35
    %p42 = scmp.eq.s32.totalorder %s12, 1
    %p43 = por %p41, %p42
    %p44 = scmp.ne.s32.totalorder %s36, %s39
    %p45 = scmp.eq.s32.totalorder %s12, 0
    %p46 = por %p44, %p45
    %p47 = scmp.ne.s32.totalorder %s36, %s39
    %p48 = scmp.eq.s32.totalorder %s17, 1
    %p49 = por %p47, %p48
    %p50 = scmp.ne.s32.totalorder %s39, %s40
    %p51 = scmp.eq.s32.totalorder %s17, 0
    %p52 = por %p50, %p51
    %p53 = scmp.ne.s32.totalorder %s39, %s40
    %p54 = scmp.eq.s32.totalorder %s18, 1
    %p55 = por %p53, %p54
    %p57 = scmp.ne.s32.totalorder %s40, %s56
    %p58 = scmp.eq.s32.totalorder %s18, 0
    %p59 = por %p57, %p58
    %s60 = sadd.s32 %s20, 1
    %s61 = smul.u32 %s60, 14
    %s62 = sadd.s32 %s27, 1
    %s63 = smul.u32 %s62, 14
    %s64 = ssub.s32 %s19, %s31
    %s65 = ssub.s32 %s61, %s63
    %s66 = sor.u32 %s64, %s65
    %p67 = scmp.eq.s32.totalorder %s66, 0
    %s69 = sadd.s32 %s68, 1
    %s70 = scalar_select %p67, %s68, %s69
    %p73 = pneg %p67
    %p74 = scmp.eq.s32.totalorder %s12, 1
    %p75 = por %p73, %p74
    %p76 = scmp.ne.s32.totalorder %s68, %s71
    %p77 = scmp.eq.s32.totalorder %s12, 0
    %p78 = por %p76, %p77
    %p79 = scmp.ne.s32.totalorder %s68, %s71
    %p80 = scmp.eq.s32.totalorder %s17, 1
    %p81 = por %p79, %p80
    %p82 = scmp.ne.s32.totalorder %s71, %s72
    %p83 = scmp.eq.s32.totalorder %s17, 0
    %p84 = por %p82, %p83
    %p85 = scmp.ne.s32.totalorder %s71, %s72
    %p86 = scmp.eq.s32.totalorder %s18, 1
    %p87 = por %p85, %p86
    %p89 = scmp.ne.s32.totalorder %s72, %s88
    %p90 = scmp.eq.s32.totalorder %s18, 0
    %p91 = por %p89, %p90
    %s93 = sadd.s32 %s92, 1
    %p96 = scmp.eq.s32.totalorder %s12, 1
    %p97 = scmp.ne.s32.totalorder %s92, %s94
    %p98 = scmp.eq.s32.totalorder %s12, 0
    %p99 = por %p97, %p98
    %p100 = scmp.ne.s32.totalorder %s92, %s94
    %p101 = scmp.eq.s32.totalorder %s17, 1
    %p102 = por %p100, %p101
    %p103 = scmp.ne.s32.totalorder %s94, %s95
    %p104 = scmp.eq.s32.totalorder %s17, 0
    %p105 = por %p103, %p104
    %p106 = scmp.ne.s32.totalorder %s94, %s95
    %p107 = scmp.eq.s32.totalorder %s18, 1
    %p108 = por %p106, %p107
    %p110 = scmp.ne.s32.totalorder %s95, %s109
    %p111 = scmp.eq.s32.totalorder %s18, 0
    %p112 = por %p110, %p111
    %s113 = ssub.s32 %s19, %s31
    %s114 = ssub.s32 %s20, %s27
    %s115 = sor.u32 %s113, %s114
    %p116 = scmp.eq.s32.totalorder %s115, 0
    %s118 = sadd.s32 %s117, 1
    %s119 = scalar_select %p116, %s117, %s118
    %p122 = pneg %p116
    %p123 = scmp.eq.s32.totalorder %s12, 1
    %p124 = por %p122, %p123
    %p125 = scmp.ne.s32.totalorder %s117, %s120
    %p126 = scmp.eq.s32.totalorder %s12, 0
    %p127 = por %p125, %p126
    %p128 = scmp.ne.s32.totalorder %s117, %s120
    %p129 = scmp.eq.s32.totalorder %s17, 1
    %p130 = por %p128, %p129
    %p131 = scmp.ne.s32.totalorder %s120, %s121
    %p132 = scmp.eq.s32.totalorder %s17, 0
    %p133 = por %p131, %p132
    %p134 = scmp.ne.s32.totalorder %s120, %s121
    %p135 = scmp.eq.s32.totalorder %s18, 1
    %p136 = por %p134, %p135
    %p138 = scmp.ne.s32.totalorder %s121, %s137
    %p139 = scmp.eq.s32.totalorder %s18, 0
    %p140 = por %p138, %p139
    %s141 = ssub.s32 %s19, %s31
    %p142 = scmp.eq.s32.totalorder %s141, 0
    %s144 = sadd.s32 %s143, 1
    %s145 = scalar_select %p142, %s143, %s144
    %p148 = pneg %p142
    %p149 = scmp.eq.s32.totalorder %s12, 1
    %p150 = por %p148, %p149
    %p151 = scmp.ne.s32.totalorder %s143, %s146
    %p152 = scmp.eq.s32.totalorder %s12, 0
    %p153 = por %p151, %p152
    %p154 = scmp.ne.s32.totalorder %s143, %s146
    %p155 = scmp.eq.s32.totalorder %s17, 1
    %p156 = por %p154, %p155
    %p157 = scmp.ne.s32.totalorder %s146, %s147
    %p158 = scmp.eq.s32.totalorder %s17, 0
    %p159 = por %p157, %p158
    %p160 = scmp.ne.s32.totalorder %s146, %s147
    %p161 = scmp.eq.s32.totalorder %s18, 1
    %p162 = por %p160, %p161
    %p164 = scmp.ne.s32.totalorder %s147, %s163
    %p165 = scmp.eq.s32.totalorder %s18, 0
    %p166 = por %p164, %p165
    %s167 = ssub.s32 %s19, %s31
    %p168 = scmp.eq.s32.totalorder %s167, 0
    %s170 = sadd.s32 %s169, 1
    %s171 = scalar_select %p168, %s169, %s170
    %p174 = pneg %p168
    %p175 = scmp.eq.s32.totalorder %s12, 1
    %p176 = por %p174, %p175
    %p177 = scmp.ne.s32.totalorder %s169, %s172
    %p178 = scmp.eq.s32.totalorder %s12, 0
    %p179 = por %p177, %p178
    %p180 = scmp.ne.s32.totalorder %s169, %s172
    %p181 = scmp.eq.s32.totalorder %s17, 1
    %p182 = por %p180, %p181
    %p183 = scmp.ne.s32.totalorder %s172, %s173
    %p184 = scmp.eq.s32.totalorder %s17, 0
    %p185 = por %p183, %p184
    %p186 = scmp.ne.s32.totalorder %s172, %s173
    %p187 = scmp.eq.s32.totalorder %s18, 1
    %p188 = por %p186, %p187
    %p190 = scmp.ne.s32.totalorder %s173, %s189
    %p191 = scmp.eq.s32.totalorder %s18, 0
    %p192 = por %p190, %p191
    %p193 = scmp.le.s32.totalorder 1, %s12
    %p194 = scmp.lt.s32.totalorder %s12, 3
    %p195 = pnand %p193, %p194
    %p196 = pneg %p195
    // Predicated region
    $region9: #{resnet1d_forward.14} parent=5 // pred_check
      _
    $region10: #{resnet1d_forward.14} parent=5 // pred_check_branch
      %198 = sbr.rel (%p195) target = $region12
    $region11: #{resnet1d_forward.14} parent=5 // pred_region
      %s199 = ssub.s32 %s12, 1
      // Predicated region
      $region13: #{resnet1d_forward.14} parent=11 // pred_check
        %p200 = pneg %p105
      $region14: #{resnet1d_forward.14} parent=11 // pred_check_branch
        %202 = sbr.rel (%p200) target = $region16
      $region15: #{resnet1d_forward.14} parent=11 // pred_region
        _
      $region16: #{resnet1d_forward.14} parent=11 // pred_fallthru
        _
    $region12: #{resnet1d_forward.14} parent=5 // pred_fallthru
      _
    %p203 = scmp.lt.s32.totalorder %s12, 2
    // Predicated region
    $region17: #{resnet1d_forward.14} parent=5 // pred_check
      %p204 = pneg %p203
    $region18: #{resnet1d_forward.14} parent=5 // pred_check_branch
      %206 = sbr.rel (%p204) target = $region20
    $region19: #{resnet1d_forward.14} parent=5 // pred_region
      // Predicated region
      $region21: #{resnet1d_forward.14} parent=19 // pred_check
        %p207 = pneg %p46
      $region22: #{resnet1d_forward.14} parent=19 // pred_check_branch
        %209 = sbr.rel (%p207) target = $region24
      $region23: #{resnet1d_forward.14} parent=19 // pred_region
        %s210 = smul.u32 14, %s20
        %s211 = ssub.s32 15, %s210
        %p212 = scmp.lt.s32.totalorder %s211, 14
        %s213 = scalar_select %p212, %s211, 14
        %s214 = smul.u32 64, %s213
        %p215 = scmp.lt.s32.totalorder %s19, 1
        %s216 = scalar_select %p215, %s19, 1
        %p217 = scmp.lt.s32.totalorder %s210, 14
        %s218 = scalar_select %p217, %s210, 14
        %s219 = smul.addr %s216, 15
        %s220 = sadd.s32 %s218, %s219
        %s221 = smul.addr %s220, 4
        %s222 = scalar_lea.vmem %s0, %s221
        %s223 = smul.u32 14, %s20
        %s224 = ssub.s32 15, %s223
        %p225 = scmp.lt.s32.totalorder %s224, 14
        %s226 = scalar_select %p225, %s224, 14
        %s227 = smul.u32 64, %s226
      $region24: #{resnet1d_forward.14} parent=19 // pred_fallthru
        _
      // Predicated region
      $region25: #{resnet1d_forward.14} parent=19 // pred_check
        %p228 = pneg %p78
      $region26: #{resnet1d_forward.14} parent=19 // pred_check_branch
        %230 = sbr.rel (%p228) target = $region28
      $region27: #{resnet1d_forward.14} parent=19 // pred_region
        %s231 = sadd.s32 %s20, 1
        %s232 = smul.u32 %s231, 14
        %p233 = scmp.lt.s32.totalorder %s19, 1
        %s234 = scalar_select %p233, %s19, 1
        %p235 = scmp.lt.s32.totalorder %s232, 14
        %s236 = scalar_select %p235, %s232, 14
        %s237 = smul.addr %s234, 15
        %s238 = sadd.s32 %s236, %s237
        %s239 = smul.addr %s238, 4
        %s240 = scalar_lea.vmem %s1, %s239
        %s241 = sadd.s32 %s20, 1
        %s242 = smul.u32 %s241, 14
      $region28: #{resnet1d_forward.14} parent=19 // pred_fallthru
        _
    $region20: #{resnet1d_forward.14} parent=5 // pred_fallthru
      _
    %p243 = scmp.le.s32.totalorder 1, %s12
    %p244 = scmp.lt.s32.totalorder %s12, 3
    %p245 = pnand %p243, %p244
    %p246 = pneg %p245
    // Predicated region
    $region29: #{resnet1d_forward.14} parent=5 // pred_check
      _
    $region30: #{resnet1d_forward.14} parent=5 // pred_check_branch
      %248 = sbr.rel (%p245) target = $region32
    $region31: #{resnet1d_forward.14} parent=5 // pred_region
      %s249 = ssub.s32 %s12, 1
      %s250 = smul.u32 14, %s22
      %s251 = ssub.s32 15, %s250
      %p252 = scmp.lt.s32.totalorder %s251, 14
      %s253 = scalar_select %p252, %s251, 14
      %s254 = smul.u32 64, %s253
      %p255 = scmp.lt.s32.totalorder %s21, 1
      %s256 = scalar_select %p255, %s21, 1
      %p257 = scmp.lt.s32.totalorder %s250, 14
      %s258 = scalar_select %p257, %s250, 14
      %s259 = smul.addr %s256, 15
      %s260 = sadd.s32 %s258, %s259
      %s261 = smul.addr %s260, 4
      %s262 = scalar_lea.vmem %s0, %s261
      %p263 = pneg %p52
      %p264 = pneg %p49
      %s265 = sadd.s32 %s22, 1
      %s266 = smul.u32 %s265, 14
      %p267 = scmp.lt.s32.totalorder %s21, 1
      %s268 = scalar_select %p267, %s21, 1
      %p269 = scmp.lt.s32.totalorder %s266, 14
      %s270 = scalar_select %p269, %s266, 14
      %s271 = smul.addr %s268, 15
      %s272 = sadd.s32 %s270, %s271
      %s273 = smul.addr %s272, 4
      %s274 = scalar_lea.vmem %s1, %s273
      %p275 = pneg %p84
      %p276 = pneg %p81
      %p277 = pneg %p105
      %p278 = pneg %p102
      %p279 = pneg %p133
      %p280 = pneg %p130
      %s281 = smul.u32 7, %s22
      %p282 = scmp.lt.s32.totalorder %s21, 1
      %s283 = scalar_select %p282, %s21, 1
      %p284 = scmp.lt.s32.totalorder %s281, 6
      %s285 = scalar_select %p284, %s281, 6
      %s286 = smul.addr %s283, 7
      %s287 = sadd.s32 %s285, %s286
      %s288 = smul.addr %s287, 4
      %s289 = scalar_lea.vmem %s3, %s288
      %p290 = pneg %p159
      %p291 = pneg %p156
      %p292 = scmp.lt.s32.totalorder %s21, 1
      %s293 = scalar_select %p292, %s21, 1
      %s294 = scalar_lea.vmem %s4, %s293
      %p295 = pneg %p185
      %p296 = pneg %p182
      %p297 = scmp.lt.s32.totalorder %s21, 1
      %s298 = scalar_select %p297, %s21, 1
      %s299 = scalar_lea.vmem %s5, %s298
      %s300 = smul.u32 14, %s22
      %s301 = ssub.s32 15, %s300
      %p302 = scmp.lt.s32.totalorder %s301, 14
      %s303 = scalar_select %p302, %s301, 14
      %s304 = smul.u32 64, %s303
      %p305 = scmp.lt.s32.totalorder %s21, 1
      %s306 = scalar_select %p305, %s21, 1
      %p307 = scmp.lt.s32.totalorder %s300, 14
      %s308 = scalar_select %p307, %s300, 14
      %s309 = smul.addr %s306, 15
      %s310 = sadd.s32 %s308, %s309
      %s311 = smul.addr %s310, 4
      %s312 = scalar_lea.vmem %s0, %s311
      %s313 = smul.u32 14, %s22
      %s314 = ssub.s32 15, %s313
      %p315 = scmp.lt.s32.totalorder %s314, 14
      %s316 = scalar_select %p315, %s314, 14
      %s317 = smul.u32 64, %s316
      %s318 = sadd.s32 %s22, 1
      %s319 = smul.u32 %s318, 14
      %p320 = scmp.lt.s32.totalorder %s21, 1
      %s321 = scalar_select %p320, %s21, 1
      %p322 = scmp.lt.s32.totalorder %s319, 14
      %s323 = scalar_select %p322, %s319, 14
      %s324 = smul.addr %s321, 15
      %s325 = sadd.s32 %s323, %s324
      %s326 = smul.addr %s325, 4
      %s327 = scalar_lea.vmem %s1, %s326
      %s328 = sadd.s32 %s22, 1
      %s329 = smul.u32 %s328, 14
      %s330 = smul.u32 7, %s22
      %p331 = scmp.lt.s32.totalorder %s21, 1
      %s332 = scalar_select %p331, %s21, 1
      %p333 = scmp.lt.s32.totalorder %s330, 6
      %s334 = scalar_select %p333, %s330, 6
      %s335 = smul.addr %s332, 7
      %s336 = sadd.s32 %s334, %s335
      %s337 = smul.addr %s336, 4
      %s338 = scalar_lea.vmem %s3, %s337
      %s339 = smul.u32 7, %s22
      %p340 = scmp.lt.s32.totalorder %s21, 1
      %s341 = scalar_select %p340, %s21, 1
      %s342 = scalar_lea.vmem %s4, %s341
      %p343 = scmp.lt.s32.totalorder %s21, 1
      %s344 = scalar_select %p343, %s21, 1
      %s345 = scalar_lea.vmem %s5, %s344
      %p347 = scmp.eq.s32.totalorder %s22, 0
      // Predicated region
      $region33: #{resnet1d_forward.14} parent=31 // pred_check
        %p348 = pneg %p347
      $region34: #{resnet1d_forward.14} parent=31 // pred_check_branch
        %350 = sbr.rel (%p348) target = $region36
      $region35: #{resnet1d_forward.14} parent=31 // pred_region
        %351 = vst [vmem:[%s342] sm:$0x1] 0.0
        %352 = vst [vmem:[%s345] sm:$0x1] 0.0
      $region36: #{resnet1d_forward.14} parent=31 // pred_fallthru
        _
      %v353 = vld [vmem:[%s312] sm:$0xf]
      %v354 = vld [vmem:[%s312 + $0x4] sm:$0xf]
      %v355 = vld [vmem:[%s312 + $0x8] sm:$0xf]
      %v356 = vld [vmem:[%s312 + $0xc] sm:$0xf]
      %v357 = vld [vmem:[%s312 + $0x10] sm:$0xf]
      %v358 = vld [vmem:[%s312 + $0x14] sm:$0xf]
      %v359 = vld [vmem:[%s312 + $0x18] sm:$0xf]
      %v360 = vld [vmem:[%s312 + $0x1c] sm:$0xf]
      %v361 = vld [vmem:[%s312 + $0x20] sm:$0xf]
      %v362 = vld [vmem:[%s312 + $0x24] sm:$0xf]
      %v363 = vld [vmem:[%s312 + $0x28] sm:$0xf]
      %v364 = vld [vmem:[%s312 + $0x2c] sm:$0xf]
      %v365 = vld [vmem:[%s312 + $0x30] sm:$0xf]
      %v366 = vld [vmem:[%s312 + $0x34] sm:$0xf]
      %v367 = vunpack.c.l.bf16 %v353
      %v368 = vunpack.c.l.bf16 %v354
      %v369 = vunpack.c.l.bf16 %v355
      %v370 = vunpack.c.l.bf16 %v356
      %v371 = vunpack.c.l.bf16 %v357
      %v372 = vunpack.c.l.bf16 %v358
      %v373 = vunpack.c.l.bf16 %v359
      %v374 = vunpack.c.l.bf16 %v360
      %v375 = vunpack.c.l.bf16 %v361
      %v376 = vunpack.c.l.bf16 %v362
      %v377 = vunpack.c.l.bf16 %v363
      %v378 = vunpack.c.l.bf16 %v364
      %v379 = vunpack.c.l.bf16 %v365
      %v380 = vunpack.c.l.bf16 %v366
      %vm381 = vcmask 31744
      %382 = vst.msk [vmem:[#allocation2] sm:$0xff] %vm381, %v367
      %383 = vst.msk [vmem:[#allocation2 + $0x8] sm:$0xff] %vm381, %v368
      %384 = vst.msk [vmem:[#allocation2 + $0x10] sm:$0xff] %vm381, %v369
      %385 = vst.msk [vmem:[#allocation2 + $0x18] sm:$0xff] %vm381, %v370
      %386 = vst.msk [vmem:[#allocation2 + $0x20] sm:$0xff] %vm381, %v371
      %387 = vst.msk [vmem:[#allocation2 + $0x28] sm:$0xff] %vm381, %v372
      %388 = vst.msk [vmem:[#allocation2 + $0x30] sm:$0xff] %vm381, %v373
      %389 = vst.msk [vmem:[#allocation2 + $0x38] sm:$0xff] %vm381, %v374
      %390 = vst.msk [vmem:[#allocation2 + $0x40] sm:$0xff] %vm381, %v375
      %391 = vst.msk [vmem:[#allocation2 + $0x48] sm:$0xff] %vm381, %v376
      %392 = vst.msk [vmem:[#allocation2 + $0x50] sm:$0xff] %vm381, %v377
      %393 = vst.msk [vmem:[#allocation2 + $0x58] sm:$0xff] %vm381, %v378
      %394 = vst.msk [vmem:[#allocation2 + $0x60] sm:$0xff] %vm381, %v379
      %395 = vst.msk [vmem:[#allocation2 + $0x68] sm:$0xff] %vm381, %v380
      %v396 = vld [vmem:[%s327] sm:$0xf]
      %v397 = vunpack.c.l.bf16 %v396
      %398 = vst.msk [vmem:[#allocation2 + $0x70] sm:$0xff] %vm381, %v397
      %v399 = vld [vmem:[#allocation2] ss:$2 sm:$0xff]
      %s400 = scalar_lea.vmem [#allocation2], 16
      %v401 = vld [vmem:[%s400] ss:$2 sm:$0xff]
      %s402 = scalar_lea.vmem [#allocation2], 32
      %v403 = vld [vmem:[%s402] ss:$2 sm:$0xff]
      %s404 = scalar_lea.vmem [#allocation2], 48
      %v405 = vld [vmem:[%s404] ss:$2 sm:$0xff]
      %s406 = scalar_lea.vmem [#allocation2], 64
      %v407 = vld [vmem:[%s406] ss:$2 sm:$0xff]
      %s408 = scalar_lea.vmem [#allocation2], 80
      %v409 = vld [vmem:[%s408] ss:$2 sm:$0xff]
      %s410 = scalar_lea.vmem [#allocation2], 96
      %v411 = vld [vmem:[%s410] ss:$2 sm:$0xff]
      %v412 = vpack.c.bf16 %v401, %v399
      %v413 = vpack.c.bf16 %v405, %v403
      %v414 = vpack.c.bf16 %v409, %v407
      %v415 = vpack.c.bf16 %v411, %v411
      %v416 = vld [vmem:[%s2] sm:$0x3]
      %s417 = scalar_lea.vmem [#allocation2], 1
      %v418 = vld [vmem:[%s417] ss:$2 sm:$0xff]
      %s419 = scalar_lea.vmem [#allocation2], 17
      %v420 = vld [vmem:[%s419] ss:$2 sm:$0xff]
      %s421 = scalar_lea.vmem [#allocation2], 33
      %v422 = vld [vmem:[%s421] ss:$2 sm:$0xff]
      %s423 = scalar_lea.vmem [#allocation2], 49
      %v424 = vld [vmem:[%s423] ss:$2 sm:$0xff]
      %s425 = scalar_lea.vmem [#allocation2], 65
      %v426 = vld [vmem:[%s425] ss:$2 sm:$0xff]
      %s427 = scalar_lea.vmem [#allocation2], 81
      %v428 = vld [vmem:[%s427] ss:$2 sm:$0xff]
      %s429 = scalar_lea.vmem [#allocation2], 97
      %v430 = vld [vmem:[%s429] ss:$2 sm:$0xff]
      %v431 = vpack.c.bf16 %v420, %v418
      %v432 = vpack.c.bf16 %v424, %v422
      %v433 = vpack.c.bf16 %v428, %v426
      %v434 = vpack.c.bf16 %v430, %v430
      %s435 = scalar_lea.vmem %s2, 2
      %v436 = vld [vmem:[%s435] sm:$0x3]
      %v438 = vsel %vm381, %v431, 0
      %v441 = vsel %vm381, %v432, 0
      %v444 = vsel %vm381, %v433, 0
      %v447 = vsel %vm381, %v434, 0
      %vm449 = vcmask 1041408
      %v451 = vsel %vm449, %v436, 0
      %453 = vmatprep.subr.bf16.mxu0 0
      %454 = vmatpush1.bf16.msra.mxu0 %v451
      %455 = vmatprep.subr.bf16.mxu0 0
      %456 = vmatpush1.bf16.msra.mxu0 0
      %457 = vmatprep.subr.bf16.mxu0 0
      %458 = vmatpush1.bf16.msra.mxu0 0
      %459 = vmatprep.subr.bf16.mxu0 0
      %460 = vmatpush1.bf16.msra.mxu0 0
      %461 = vmatprep.subr.bf16.mxu0 0
      %462 = vmatpush1.bf16.msra.mxu0 0
      %463 = vmatprep.subr.bf16.mxu0 0
      %464 = vmatpush1.bf16.msra.mxu0 0
      %465 = vmatprep.subr.bf16.mxu0 0
      %466 = vmatpush1.bf16.msra.mxu0 0
      %467 = vmatprep.subr.bf16.mxu0 0
      %468 = vmatpush1.bf16.msra.mxu0 0
      %469 = vmatprep.subr.bf16.mxu0 0
      %470 = vmatpush1.bf16.msra.mxu0 0
      %471 = vmatprep.subr.bf16.mxu0 0
      %472 = vmatpush1.bf16.msra.mxu0 0
      %473 = vmatprep.subr.bf16.mxu0 0
      %474 = vmatpush1.bf16.msra.mxu0 0
      %475 = vmatprep.subr.bf16.mxu0 0
      %476 = vmatpush1.bf16.msra.mxu0 0
      %477 = vmatprep.subr.bf16.mxu0 0
      %478 = vmatpush1.bf16.msra.mxu0 0
      %479 = vmatprep.subr.bf16.mxu0 0
      %480 = vmatpush1.bf16.msra.mxu0 0
      %481 = vmatprep.subr.bf16.mxu0 0
      %482 = vmatpush1.bf16.msra.mxu0 0
      %483 = vmatprep.subr.bf16.mxu0 0
      %484 = vmatpush1.bf16.msra.mxu0 0
      %485 = vmatprep.mubr.bf16.mxu0 0
      %486 = vmatmul.mubr.bf16.gmra.mrb[0].mxu0 %v438
      %v487 = vpop.f32.mrb[0].mxu0
      %v488 = vadd.f32 0.0, %v487
      %v489 = vpop.f32.mrb[0].mxu0
      %v490 = vpop.f32.mrb[0].mxu0
      %v491 = vadd.f32 0.0, %v490
      %v492 = vpop.f32.mrb[0].mxu0
      %493 = vmatprep.mubr.bf16.mxu0 0
      %494 = vmatmul.mubr.bf16.gmra.mrb[0].mxu0 %v441
      %v495 = vpop.f32.mrb[0].mxu0
      %v496 = vadd.f32 0.0, %v495
      %v497 = vpop.f32.mrb[0].mxu0
      %v498 = vpop.f32.mrb[0].mxu0
      %v499 = vadd.f32 0.0, %v498
      %v500 = vpop.f32.mrb[0].mxu0
      %501 = vmatprep.mubr.bf16.mxu0 0
      %502 = vmatmul.mubr.bf16.gmra.mrb[0].mxu0 %v444
      %v503 = vpop.f32.mrb[0].mxu0
      %v504 = vadd.f32 0.0, %v503
      %v505 = vpop.f32.mrb[0].mxu0
      %v506 = vpop.f32.mrb[0].mxu0
      %v507 = vadd.f32 0.0, %v506
      %v508 = vpop.f32.mrb[0].mxu0
      %509 = vmatprep.mubr.bf16.mxu0 0
      %510 = vmatmul.mubr.bf16.gmra.mrb[0].mxu0 %v447
      %v511 = vpop.f32.mrb[0].mxu0
      %v512 = vadd.f32 0.0, %v511
      %v513 = vpop.f32.mrb[0].mxu0
      %v514 = vpop.f32.mrb[0].mxu0
      %v515 = vpop.f32.mrb[0].mxu0
      %516 = vdwg.mxu0
      %v518 = vsel %vm381, %v412, 0
      %v521 = vsel %vm381, %v413, 0
      %v524 = vsel %vm381, %v414, 0
      %v527 = vsel %vm381, %v415, 0
      %v530 = vsel %vm449, %v416, 0
      %532 = vmatprep.subr.bf16.mxu0 0
      %533 = vmatpush1.bf16.msra.mxu0 %v530
      %534 = vmatprep.subr.bf16.mxu0 0
      %535 = vmatpush1.bf16.msra.mxu0 0
      %536 = vmatprep.subr.bf16.mxu0 0
      %537 = vmatpush1.bf16.msra.mxu0 0
      %538 = vmatprep.subr.bf16.mxu0 0
      %539 = vmatpush1.bf16.msra.mxu0 0
      %540 = vmatprep.subr.bf16.mxu0 0
      %541 = vmatpush1.bf16.msra.mxu0 0
      %542 = vmatprep.subr.bf16.mxu0 0
      %543 = vmatpush1.bf16.msra.mxu0 0
      %544 = vmatprep.subr.bf16.mxu0 0
      %545 = vmatpush1.bf16.msra.mxu0 0
      %546 = vmatprep.subr.bf16.mxu0 0
      %547 = vmatpush1.bf16.msra.mxu0 0
      %548 = vmatprep.subr.bf16.mxu0 0
      %549 = vmatpush1.bf16.msra.mxu0 0
      %550 = vmatprep.subr.bf16.mxu0 0
      %551 = vmatpush1.bf16.msra.mxu0 0
      %552 = vmatprep.subr.bf16.mxu0 0
      %553 = vmatpush1.bf16.msra.mxu0 0
      %554 = vmatprep.subr.bf16.mxu0 0
      %555 = vmatpush1.bf16.msra.mxu0 0
      %556 = vmatprep.subr.bf16.mxu0 0
      %557 = vmatpush1.bf16.msra.mxu0 0
      %558 = vmatprep.subr.bf16.mxu0 0
      %559 = vmatpush1.bf16.msra.mxu0 0
      %560 = vmatprep.subr.bf16.mxu0 0
      %561 = vmatpush1.bf16.msra.mxu0 0
      %562 = vmatprep.subr.bf16.mxu0 0
      %563 = vmatpush1.bf16.msra.mxu0 0
      %564 = vmatprep.mubr.bf16.mxu0 0
      %565 = vmatmul.mubr.bf16.gmra.mrb[0].mxu0 %v518
      %v566 = vpop.f32.mrb[0].mxu0
      %v567 = vadd.f32 %v488, %v566
      %v568 = vpop.f32.mrb[0].mxu0
      %v569 = vpop.f32.mrb[0].mxu0
      %v570 = vadd.f32 %v491, %v569
      %v571 = vpop.f32.mrb[0].mxu0
      %572 = vmatprep.mubr.bf16.mxu0 0
      %573 = vmatmul.mubr.bf16.gmra.mrb[0].mxu0 %v521
      %v574 = vpop.f32.mrb[0].mxu0
      %v575 = vadd.f32 %v496, %v574
      %v576 = vpop.f32.mrb[0].mxu0
      %v577 = vpop.f32.mrb[0].mxu0
      %v578 = vadd.f32 %v499, %v577
      %v579 = vpop.f32.mrb[0].mxu0
      %580 = vmatprep.mubr.bf16.mxu0 0
      %581 = vmatmul.mubr.bf16.gmra.mrb[0].mxu0 %v524
      %v582 = vpop.f32.mrb[0].mxu0
      %v583 = vadd.f32 %v504, %v582
      %v584 = vpop.f32.mrb[0].mxu0
      %v585 = vpop.f32.mrb[0].mxu0
      %v586 = vadd.f32 %v507, %v585
      %v587 = vpop.f32.mrb[0].mxu0
      %588 = vmatprep.mubr.bf16.mxu0 0
      %589 = vmatmul.mubr.bf16.gmra.mrb[0].mxu0 %v527
      %v590 = vpop.f32.mrb[0].mxu0
      %v591 = vadd.f32 %v512, %v590
      %v592 = vpop.f32.mrb[0].mxu0
      %v593 = vpop.f32.mrb[0].mxu0
      %v594 = vpop.f32.mrb[0].mxu0
      %595 = vdwg.mxu0
      %s596 = scalar_lea.vmem [#allocation2], 2
      %v597 = vld [vmem:[%s596] ss:$2 sm:$0xff]
      %s598 = scalar_lea.vmem [#allocation2], 18
      %v599 = vld [vmem:[%s598] ss:$2 sm:$0xff]
      %s600 = scalar_lea.vmem [#allocation2], 34
      %v601 = vld [vmem:[%s600] ss:$2 sm:$0xff]
      %s602 = scalar_lea.vmem [#allocation2], 50
      %v603 = vld [vmem:[%s602] ss:$2 sm:$0xff]
      %s604 = scalar_lea.vmem [#allocation2], 66
      %v605 = vld [vmem:[%s604] ss:$2 sm:$0xff]
      %s606 = scalar_lea.vmem [#allocation2], 82
      %v607 = vld [vmem:[%s606] ss:$2 sm:$0xff]
      %s608 = scalar_lea.vmem [#allocation2], 98
      %v609 = vld [vmem:[%s608] ss:$2 sm:$0xff]
      %v610 = vpack.c.bf16 %v599, %v597
      %v611 = vpack.c.bf16 %v603, %v601
      %v612 = vpack.c.bf16 %v607, %v605
      %v613 = vpack.c.bf16 %v609, %v609
      %s614 = scalar_lea.vmem %s2, 4
      %v615 = vld [vmem:[%s614] sm:$0x3]
      %v617 = vsel %vm381, %v610, 0
      %v620 = vsel %vm381, %v611, 0
      %v623 = vsel %vm381, %v612, 0
      %v626 = vsel %vm381, %v613, 0
      %v629 = vsel %vm449, %v615, 0
      %631 = vmatprep.subr.bf16.mxu0 0
      %632 = vmatpush1.bf16.msra.mxu0 %v629
      %633 = vmatprep.subr.bf16.mxu0 0
      %634 = vmatpush1.bf16.msra.mxu0 0
      %635 = vmatprep.subr.bf16.mxu0 0
      %636 = vmatpush1.bf16.msra.mxu0 0
      %637 = vmatprep.subr.bf16.mxu0 0
      %638 = vmatpush1.bf16.msra.mxu0 0
      %639 = vmatprep.subr.bf16.mxu0 0
      %640 = vmatpush1.bf16.msra.mxu0 0
      %641 = vmatprep.subr.bf16.mxu0 0
      %642 = vmatpush1.bf16.msra.mxu0 0
      %643 = vmatprep.subr.bf16.mxu0 0
      %644 = vmatpush1.bf16.msra.mxu0 0
      %645 = vmatprep.subr.bf16.mxu0 0
      %646 = vmatpush1.bf16.msra.mxu0 0
      %647 = vmatprep.subr.bf16.mxu0 0
      %648 = vmatpush1.bf16.msra.mxu0 0
      %649 = vmatprep.subr.bf16.mxu0 0
      %650 = vmatpush1.bf16.msra.mxu0 0
      %651 = vmatprep.subr.bf16.mxu0 0
      %652 = vmatpush1.bf16.msra.mxu0 0
      %653 = vmatprep.subr.bf16.mxu0 0
      %654 = vmatpush1.bf16.msra.mxu0 0
      %655 = vmatprep.subr.bf16.mxu0 0
      %656 = vmatpush1.bf16.msra.mxu0 0
      %657 = vmatprep.subr.bf16.mxu0 0
      %658 = vmatpush1.bf16.msra.mxu0 0
      %659 = vmatprep.subr.bf16.mxu0 0
      %660 = vmatpush1.bf16.msra.mxu0 0
      %661 = vmatprep.subr.bf16.mxu0 0
      %662 = vmatpush1.bf16.msra.mxu0 0
      %663 = vmatprep.mubr.bf16.mxu0 0
      %664 = vmatmul.mubr.bf16.gmra.mrb[0].mxu0 %v617
      %v665 = vpop.f32.mrb[0].mxu0
      %v666 = vadd.f32 0.0, %v665
      %v667 = vpop.f32.mrb[0].mxu0
      %v668 = vpop.f32.mrb[0].mxu0
      %v669 = vadd.f32 0.0, %v668
      %v670 = vpop.f32.mrb[0].mxu0
      %671 = vmatprep.mubr.bf16.mxu0 0
      %672 = vmatmul.mubr.bf16.gmra.mrb[0].mxu0 %v620
      %v673 = vpop.f32.mrb[0].mxu0
      %v674 = vadd.f32 0.0, %v673
      %v675 = vpop.f32.mrb[0].mxu0
      %v676 = vpop.f32.mrb[0].mxu0
      %v677 = vadd.f32 0.0, %v676
      %v678 = vpop.f32.mrb[0].mxu0
      %679 = vmatprep.mubr.bf16.mxu0 0
      %680 = vmatmul.mubr.bf16.gmra.mrb[0].mxu0 %v623
      %v681 = vpop.f32.mrb[0].mxu0
      %v682 = vadd.f32 0.0, %v681
      %v683 = vpop.f32.mrb[0].mxu0
      %v684 = vpop.f32.mrb[0].mxu0
      %v685 = vadd.f32 0.0, %v684
      %v686 = vpop.f32.mrb[0].mxu0
      %687 = vmatprep.mubr.bf16.mxu0 0
      %688 = vmatmul.mubr.bf16.gmra.mrb[0].mxu0 %v626
      %v689 = vpop.f32.mrb[0].mxu0
      %v690 = vadd.f32 0.0, %v689
      %v691 = vpop.f32.mrb[0].mxu0
      %v692 = vpop.f32.mrb[0].mxu0
      %v693 = vpop.f32.mrb[0].mxu0
      %694 = vdwg.mxu0
      %v695 = vadd.f32 %v567, %v666
      %v696 = vadd.f32 %v570, %v669
      %v697 = vadd.f32 %v575, %v674
      %v698 = vadd.f32 %v578, %v677
      %v699 = vadd.f32 %v583, %v682
      %v700 = vadd.f32 %v586, %v685
      %v701 = vadd.f32 %v591, %v690
      %s702 = scalar_lea.vmem [#allocation2], 3
      %v703 = vld [vmem:[%s702] ss:$2 sm:$0xff]
      %s704 = scalar_lea.vmem [#allocation2], 19
      %v705 = vld [vmem:[%s704] ss:$2 sm:$0xff]
      %s706 = scalar_lea.vmem [#allocation2], 35
      %v707 = vld [vmem:[%s706] ss:$2 sm:$0xff]
      %s708 = scalar_lea.vmem [#allocation2], 51
      %v709 = vld [vmem:[%s708] ss:$2 sm:$0xff]
      %s710 = scalar_lea.vmem [#allocation2], 67
      %v711 = vld [vmem:[%s710] ss:$2 sm:$0xff]
      %s712 = scalar_lea.vmem [#allocation2], 83
      %v713 = vld [vmem:[%s712] ss:$2 sm:$0xff]
      %s714 = scalar_lea.vmem [#allocation2], 99
      %v715 = vld [vmem:[%s714] ss:$2 sm:$0xff]
      %v716 = vpack.c.bf16 %v705, %v703
      %v717 = vpack.c.bf16 %v709, %v707
      %v718 = vpack.c.bf16 %v713, %v711
      %v719 = vpack.c.bf16 %v715, %v715
      %s720 = scalar_lea.vmem %s2, 6
      %v721 = vld [vmem:[%s720] sm:$0x3]
      %v723 = vsel %vm381, %v716, 0
      %v726 = vsel %vm381, %v717, 0
      %v729 = vsel %vm381, %v718, 0
      %v732 = vsel %vm381, %v719, 0
      %v735 = vsel %vm449, %v721, 0
      %737 = vmatprep.subr.bf16.mxu0 0
      %738 = vmatpush1.bf16.msra.mxu0 %v735
      %739 = vmatprep.subr.bf16.mxu0 0
      %740 = vmatpush1.bf16.msra.mxu0 0
      %741 = vmatprep.subr.bf16.mxu0 0
      %742 = vmatpush1.bf16.msra.mxu0 0
      %743 = vmatprep.subr.bf16.mxu0 0
      %744 = vmatpush1.bf16.msra.mxu0 0
      %745 = vmatprep.subr.bf16.mxu0 0
      %746 = vmatpush1.bf16.msra.mxu0 0
      %747 = vmatprep.subr.bf16.mxu0 0
      %748 = vmatpush1.bf16.msra.mxu0 0
      %749 = vmatprep.subr.bf16.mxu0 0
      %750 = vmatpush1.bf16.msra.mxu0 0
      %751 = vmatprep.subr.bf16.mxu0 0
      %752 = vmatpush1.bf16.msra.mxu0 0
      %753 = vmatprep.subr.bf16.mxu0 0
      %754 = vmatpush1.bf16.msra.mxu0 0
      %755 = vmatprep.subr.bf16.mxu0 0
      %756 = vmatpush1.bf16.msra.mxu0 0
      %757 = vmatprep.subr.bf16.mxu0 0
      %758 = vmatpush1.bf16.msra.mxu0 0
      %759 = vmatprep.subr.bf16.mxu0 0
      %760 = vmatpush1.bf16.msra.mxu0 0
      %761 = vmatprep.subr.bf16.mxu0 0
      %762 = vmatpush1.bf16.msra.mxu0 0
      %763 = vmatprep.subr.bf16.mxu0 0
      %764 = vmatpush1.bf16.msra.mxu0 0
      %765 = vmatprep.subr.bf16.mxu0 0
      %766 = vmatpush1.bf16.msra.mxu0 0
      %767 = vmatprep.subr.bf16.mxu0 0
      %768 = vmatpush1.bf16.msra.mxu0 0
      %769 = vmatprep.mubr.bf16.mxu0 0
      %770 = vmatmul.mubr.bf16.gmra.mrb[0].mxu0 %v723
      %v771 = vpop.f32.mrb[0].mxu0
      %v772 = vadd.f32 0.0, %v771
      %v773 = vpop.f32.mrb[0].mxu0
      %v774 = vpop.f32.mrb[0].mxu0
      %v775 = vadd.f32 0.0, %v774
      %v776 = vpop.f32.mrb[0].mxu0
      %777 = vmatprep.mubr.bf16.mxu0 0
      %778 = vmatmul.mubr.bf16.gmra.mrb[0].mxu0 %v726
      %v779 = vpop.f32.mrb[0].mxu0
      %v780 = vadd.f32 0.0, %v779
      %v781 = vpop.f32.mrb[0].mxu0
      %v782 = vpop.f32.mrb[0].mxu0
      %v783 = vadd.f32 0.0, %v782
      %v784 = vpop.f32.mrb[0].mxu0
      %785 = vmatprep.mubr.bf16.mxu0 0
      %786 = vmatmul.mubr.bf16.gmra.mrb[0].mxu0 %v729
      %v787 = vpop.f32.mrb[0].mxu0
      %v788 = vadd.f32 0.0, %v787
      %v789 = vpop.f32.mrb[0].mxu0
      %v790 = vpop.f32.mrb[0].mxu0
      %v791 = vadd.f32 0.0, %v790
      %v792 = vpop.f32.mrb[0].mxu0
      %793 = vmatprep.mubr.bf16.mxu0 0
      %794 = vmatmul.mubr.bf16.gmra.mrb[0].mxu0 %v732
      %v795 = vpop.f32.mrb[0].mxu0
      %v796 = vadd.f32 0.0, %v795
      %v797 = vpop.f32.mrb[0].mxu0
      %v798 = vpop.f32.mrb[0].mxu0
      %v799 = vpop.f32.mrb[0].mxu0
      %800 = vdwg.mxu0
      %v801 = vadd.f32 %v695, %v772
      %v802 = vadd.f32 %v696, %v775
      %v803 = vadd.f32 %v697, %v780
      %v804 = vadd.f32 %v698, %v783
      %v805 = vadd.f32 %v699, %v788
      %v806 = vadd.f32 %v700, %v791
      %v807 = vadd.f32 %v701, %v796
      %s808 = scalar_lea.vmem [#allocation2], 4
      %v809 = vld [vmem:[%s808] ss:$2 sm:$0xff]
      %s810 = scalar_lea.vmem [#allocation2], 20
      %v811 = vld [vmem:[%s810] ss:$2 sm:$0xff]
      %s812 = scalar_lea.vmem [#allocation2], 36
      %v813 = vld [vmem:[%s812] ss:$2 sm:$0xff]
      %s814 = scalar_lea.vmem [#allocation2], 52
      %v815 = vld [vmem:[%s814] ss:$2 sm:$0xff]
      %s816 = scalar_lea.vmem [#allocation2], 68
      %v817 = vld [vmem:[%s816] ss:$2 sm:$0xff]
      %s818 = scalar_lea.vmem [#allocation2], 84
      %v819 = vld [vmem:[%s818] ss:$2 sm:$0xff]
      %s820 = scalar_lea.vmem [#allocation2], 100
      %v821 = vld [vmem:[%s820] ss:$2 sm:$0xff]
      %v822 = vpack.c.bf16 %v811, %v809
      %v823 = vpack.c.bf16 %v815, %v813
      %v824 = vpack.c.bf16 %v819, %v817
      %v825 = vpack.c.bf16 %v821, %v821
      %s826 = scalar_lea.vmem %s2, 8
      %v827 = vld [vmem:[%s826] sm:$0x3]
      %v829 = vsel %vm381, %v822, 0
      %v832 = vsel %vm381, %v823, 0
      %v835 = vsel %vm381, %v824, 0
      %v838 = vsel %vm381, %v825, 0
      %v841 = vsel %vm449, %v827, 0
      %843 = vmatprep.subr.bf16.mxu0 0
      %844 = vmatpush1.bf16.msra.mxu0 %v841
      %845 = vmatprep.subr.bf16.mxu0 0
      %846 = vmatpush1.bf16.msra.mxu0 0
      %847 = vmatprep.subr.bf16.mxu0 0
      %848 = vmatpush1.bf16.msra.mxu0 0
      %849 = vmatprep.subr.bf16.mxu0 0
      %850 = vmatpush1.bf16.msra.mxu0 0
      %851 = vmatprep.subr.bf16.mxu0 0
      %852 = vmatpush1.bf16.msra.mxu0 0
      %853 = vmatprep.subr.bf16.mxu0 0
      %854 = vmatpush1.bf16.msra.mxu0 0
      %855 = vmatprep.subr.bf16.mxu0 0
      %856 = vmatpush1.bf16.msra.mxu0 0
      %857 = vmatprep.subr.bf16.mxu0 0
      %858 = vmatpush1.bf16.msra.mxu0 0
      %859 = vmatprep.subr.bf16.mxu0 0
      %860 = vmatpush1.bf16.msra.mxu0 0
      %861 = vmatprep.subr.bf16.mxu0 0
      %862 = vmatpush1.bf16.msra.mxu0 0
      %863 = vmatprep.subr.bf16.mxu0 0
      %864 = vmatpush1.bf16.msra.mxu0 0
      %865 = vmatprep.subr.bf16.mxu0 0
      %866 = vmatpush1.bf16.msra.mxu0 0
      %867 = vmatprep.subr.bf16.mxu0 0
      %868 = vmatpush1.bf16.msra.mxu0 0
      %869 = vmatprep.subr.bf16.mxu0 0
      %870 = vmatpush1.bf16.msra.mxu0 0
      %871 = vmatprep.subr.bf16.mxu0 0
      %872 = vmatpush1.bf16.msra.mxu0 0
      %873 = vmatprep.subr.bf16.mxu0 0
      %874 = vmatpush1.bf16.msra.mxu0 0
      %875 = vmatprep.mubr.bf16.mxu0 0
      %876 = vmatmul.mubr.bf16.gmra.mrb[0].mxu0 %v829
      %v877 = vpop.f32.mrb[0].mxu0
      %v878 = vadd.f32 0.0, %v877
      %v879 = vpop.f32.mrb[0].mxu0
      %v880 = vpop.f32.mrb[0].mxu0
      %v881 = vadd.f32 0.0, %v880
      %v882 = vpop.f32.mrb[0].mxu0
      %883 = vmatprep.mubr.bf16.mxu0 0
      %884 = vmatmul.mubr.bf16.gmra.mrb[0].mxu0 %v832
      %v885 = vpop.f32.mrb[0].mxu0
      %v886 = vadd.f32 0.0, %v885
      %v887 = vpop.f32.mrb[0].mxu0
      %v888 = vpop.f32.mrb[0].mxu0
      %v889 = vadd.f32 0.0, %v888
      %v890 = vpop.f32.mrb[0].mxu0
      %891 = vmatprep.mubr.bf16.mxu0 0
      %892 = vmatmul.mubr.bf16.gmra.mrb[0].mxu0 %v835
      %v893 = vpop.f32.mrb[0].mxu0
      %v894 = vadd.f32 0.0, %v893
      %v895 = vpop.f32.mrb[0].mxu0
      %v896 = vpop.f32.mrb[0].mxu0
      %v897 = vadd.f32 0.0, %v896
      %v898 = vpop.f32.mrb[0].mxu0
      %899 = vmatprep.mubr.bf16.mxu0 0
      %900 = vmatmul.mubr.bf16.gmra.mrb[0].mxu0 %v838
      %v901 = vpop.f32.mrb[0].mxu0
      %v902 = vadd.f32 0.0, %v901
      %v903 = vpop.f32.mrb[0].mxu0
      %v904 = vpop.f32.mrb[0].mxu0
      %v905 = vpop.f32.mrb[0].mxu0
      %906 = vdwg.mxu0
      %v907 = vadd.f32 %v801, %v878
      %v908 = vadd.f32 %v802, %v881
      %v909 = vadd.f32 %v803, %v886
      %v910 = vadd.f32 %v804, %v889
      %v911 = vadd.f32 %v805, %v894
      %v912 = vadd.f32 %v806, %v897
      %v913 = vadd.f32 %v807, %v902
      %s914 = scalar_lea.vmem [#allocation2], 5
      %v915 = vld [vmem:[%s914] ss:$2 sm:$0xff]
      %s916 = scalar_lea.vmem [#allocation2], 21
      %v917 = vld [vmem:[%s916] ss:$2 sm:$0xff]
      %s918 = scalar_lea.vmem [#allocation2], 37
      %v919 = vld [vmem:[%s918] ss:$2 sm:$0xff]
      %s920 = scalar_lea.vmem [#allocation2], 53
      %v921 = vld [vmem:[%s920] ss:$2 sm:$0xff]
      %s922 = scalar_lea.vmem [#allocation2], 69
      %v923 = vld [vmem:[%s922] ss:$2 sm:$0xff]
      %s924 = scalar_lea.vmem [#allocation2], 85
      %v925 = vld [vmem:[%s924] ss:$2 sm:$0xff]
      %s926 = scalar_lea.vmem [#allocation2], 101
      %v927 = vld [vmem:[%s926] ss:$2 sm:$0xff]
      %v928 = vpack.c.bf16 %v917, %v915
      %v929 = vpack.c.bf16 %v921, %v919
      %v930 = vpack.c.bf16 %v925, %v923
      %v931 = vpack.c.bf16 %v927, %v927
      %s932 = scalar_lea.vmem %s2, 10
      %v933 = vld [vmem:[%s932] sm:$0x3]
      %v935 = vsel %vm381, %v928, 0
      %v938 = vsel %vm381, %v929, 0
      %v941 = vsel %vm381, %v930, 0
      %v944 = vsel %vm381, %v931, 0
      %v947 = vsel %vm449, %v933, 0
      %949 = vmatprep.subr.bf16.mxu0 0
      %950 = vmatpush1.bf16.msra.mxu0 %v947
      %951 = vmatprep.subr.bf16.mxu0 0
      %952 = vmatpush1.bf16.msra.mxu0 0
      %953 = vmatprep.subr.bf16.mxu0 0
      %954 = vmatpush1.bf16.msra.mxu0 0
      %955 = vmatprep.subr.bf16.mxu0 0
      %956 = vmatpush1.bf16.msra.mxu0 0
      %957 = vmatprep.subr.bf16.mxu0 0
      %958 = vmatpush1.bf16.msra.mxu0 0
      %959 = vmatprep.subr.bf16.mxu0 0
      %960 = vmatpush1.bf16.msra.mxu0 0
      %961 = vmatprep.subr.bf16.mxu0 0
      %962 = vmatpush1.bf16.msra.mxu0 0
      %963 = vmatprep.subr.bf16.mxu0 0
      %964 = vmatpush1.bf16.msra.mxu0 0
      %965 = vmatprep.subr.bf16.mxu0 0
      %966 = vmatpush1.bf16.msra.mxu0 0
      %967 = vmatprep.subr.bf16.mxu0 0
      %968 = vmatpush1.bf16.msra.mxu0 0
      %969 = vmatprep.subr.bf16.mxu0 0
      %970 = vmatpush1.bf16.msra.mxu0 0
      %971 = vmatprep.subr.bf16.mxu0 0
      %972 = vmatpush1.bf16.msra.mxu0 0
      %973 = vmatprep.subr.bf16.mxu0 0
      %974 = vmatpush1.bf16.msra.mxu0 0
      %975 = vmatprep.subr.bf16.mxu0 0
      %976 = vmatpush1.bf16.msra.mxu0 0
      %977 = vmatprep.subr.bf16.mxu0 0
      %978 = vmatpush1.bf16.msra.mxu0 0
      %979 = vmatprep.subr.bf16.mxu0 0
      %980 = vmatpush1.bf16.msra.mxu0 0
      %981 = vmatprep.mubr.bf16.mxu0 0
      %982 = vmatmul.mubr.bf16.gmra.mrb[0].mxu0 %v935
      %v983 = vpop.f32.mrb[0].mxu0
      %v984 = vadd.f32 0.0, %v983
      %v985 = vpop.f32.mrb[0].mxu0
      %v986 = vpop.f32.mrb[0].mxu0
      %v987 = vadd.f32 0.0, %v986
      %v988 = vpop.f32.mrb[0].mxu0
      %989 = vmatprep.mubr.bf16.mxu0 0
      %990 = vmatmul.mubr.bf16.gmra.mrb[0].mxu0 %v938
      %v991 = vpop.f32.mrb[0].mxu0
      %v992 = vadd.f32 0.0, %v991
      %v993 = vpop.f32.mrb[0].mxu0
      %v994 = vpop.f32.mrb[0].mxu0
      %v995 = vadd.f32 0.0, %v994
      %v996 = vpop.f32.mrb[0].mxu0
      %997 = vmatprep.mubr.bf16.mxu0 0
      %998 = vmatmul.mubr.bf16.gmra.mrb[0].mxu0 %v941
      %v999 = vpop.f32.mrb[0].mxu0
      %v1000 = vadd.f32 0.0, %v999
      %v1001 = vpop.f32.mrb[0].mxu0
      %v1002 = vpop.f32.mrb[0].mxu0
      %v1003 = vadd.f32 0.0, %v1002
      %v1004 = vpop.f32.mrb[0].mxu0
      %1005 = vmatprep.mubr.bf16.mxu0 0
      %1006 = vmatmul.mubr.bf16.gmra.mrb[0].mxu0 %v944
      %v1007 = vpop.f32.mrb[0].mxu0
      %v1008 = vadd.f32 0.0, %v1007
      %v1009 = vpop.f32.mrb[0].mxu0
      %v1010 = vpop.f32.mrb[0].mxu0
      %v1011 = vpop.f32.mrb[0].mxu0
      %1012 = vdwg.mxu0
      %v1013 = vadd.f32 %v907, %v984
      %v1014 = vadd.f32 %v908, %v987
      %v1015 = vadd.f32 %v909, %v992
      %v1016 = vadd.f32 %v910, %v995
      %v1017 = vadd.f32 %v911, %v1000
      %v1018 = vadd.f32 %v912, %v1003
      %v1019 = vadd.f32 %v913, %v1008
      %s1020 = scalar_lea.vmem [#allocation2], 6
      %v1021 = vld [vmem:[%s1020] ss:$2 sm:$0xff]
      %s1022 = scalar_lea.vmem [#allocation2], 22
      %v1023 = vld [vmem:[%s1022] ss:$2 sm:$0xff]
      %s1024 = scalar_lea.vmem [#allocation2], 38
      %v1025 = vld [vmem:[%s1024] ss:$2 sm:$0xff]
      %s1026 = scalar_lea.vmem [#allocation2], 54
      %v1027 = vld [vmem:[%s1026] ss:$2 sm:$0xff]
      %s1028 = scalar_lea.vmem [#allocation2], 70
      %v1029 = vld [vmem:[%s1028] ss:$2 sm:$0xff]
      %s1030 = scalar_lea.vmem [#allocation2], 86
      %v1031 = vld [vmem:[%s1030] ss:$2 sm:$0xff]
      %s1032 = scalar_lea.vmem [#allocation2], 102
      %v1033 = vld [vmem:[%s1032] ss:$2 sm:$0xff]
      %v1034 = vpack.c.bf16 %v1023, %v1021
      %v1035 = vpack.c.bf16 %v1027, %v1025
      %v1036 = vpack.c.bf16 %v1031, %v1029
      %v1037 = vpack.c.bf16 %v1033, %v1033
      %s1038 = scalar_lea.vmem %s2, 12
      %v1039 = vld [vmem:[%s1038] sm:$0x3]
      %v1041 = vsel %vm381, %v1034, 0
      %v1044 = vsel %vm381, %v1035, 0
      %v1047 = vsel %vm381, %v1036, 0
      %v1050 = vsel %vm381, %v1037, 0
      %v1053 = vsel %vm449, %v1039, 0
      %1055 = vmatprep.subr.bf16.mxu0 0
      %1056 = vmatpush1.bf16.msra.mxu0 %v1053
      %1057 = vmatprep.subr.bf16.mxu0 0
      %1058 = vmatpush1.bf16.msra.mxu0 0
      %1059 = vmatprep.subr.bf16.mxu0 0
      %1060 = vmatpush1.bf16.msra.mxu0 0
      %1061 = vmatprep.subr.bf16.mxu0 0
      %1062 = vmatpush1.bf16.msra.mxu0 0
      %1063 = vmatprep.subr.bf16.mxu0 0
      %1064 = vmatpush1.bf16.msra.mxu0 0
      %1065 = vmatprep.subr.bf16.mxu0 0
      %1066 = vmatpush1.bf16.msra.mxu0 0
      %1067 = vmatprep.subr.bf16.mxu0 0
      %1068 = vmatpush1.bf16.msra.mxu0 0
      %1069 = vmatprep.subr.bf16.mxu0 0
      %1070 = vmatpush1.bf16.msra.mxu0 0
      %1071 = vmatprep.subr.bf16.mxu0 0
      %1072 = vmatpush1.bf16.msra.mxu0 0
      %1073 = vmatprep.subr.bf16.mxu0 0
      %1074 = vmatpush1.bf16.msra.mxu0 0
      %1075 = vmatprep.subr.bf16.mxu0 0
      %1076 = vmatpush1.bf16.msra.mxu0 0
      %1077 = vmatprep.subr.bf16.mxu0 0
      %1078 = vmatpush1.bf16.msra.mxu0 0
      %1079 = vmatprep.subr.bf16.mxu0 0
      %1080 = vmatpush1.bf16.msra.mxu0 0
      %1081 = vmatprep.subr.bf16.mxu0 0
      %1082 = vmatpush1.bf16.msra.mxu0 0
      %1083 = vmatprep.subr.bf16.mxu0 0
      %1084 = vmatpush1.bf16.msra.mxu0 0
      %1085 = vmatprep.subr.bf16.mxu0 0
      %1086 = vmatpush1.bf16.msra.mxu0 0
      %1087 = vmatprep.mubr.bf16.mxu0 0
      %1088 = vmatmul.mubr.bf16.gmra.mrb[0].mxu0 %v1041
      %v1089 = vpop.f32.mrb[0].mxu0
      %v1090 = vadd.f32 0.0, %v1089
      %v1091 = vpop.f32.mrb[0].mxu0
      %v1092 = vpop.f32.mrb[0].mxu0
      %v1093 = vadd.f32 0.0, %v1092
      %v1094 = vpop.f32.mrb[0].mxu0
      %1095 = vmatprep.mubr.bf16.mxu0 0
      %1096 = vmatmul.mubr.bf16.gmra.mrb[0].mxu0 %v1044
      %v1097 = vpop.f32.mrb[0].mxu0
      %v1098 = vadd.f32 0.0, %v1097
      %v1099 = vpop.f32.mrb[0].mxu0
      %v1100 = vpop.f32.mrb[0].mxu0
      %v1101 = vadd.f32 0.0, %v1100
      %v1102 = vpop.f32.mrb[0].mxu0
      %1103 = vmatprep.mubr.bf16.mxu0 0
      %1104 = vmatmul.mubr.bf16.gmra.mrb[0].mxu0 %v1047
      %v1105 = vpop.f32.mrb[0].mxu0
      %v1106 = vadd.f32 0.0, %v1105
      %v1107 = vpop.f32.mrb[0].mxu0
      %v1108 = vpop.f32.mrb[0].mxu0
      %v1109 = vadd.f32 0.0, %v1108
      %v1110 = vpop.f32.mrb[0].mxu0
      %1111 = vmatprep.mubr.bf16.mxu0 0
      %1112 = vmatmul.mubr.bf16.gmra.mrb[0].mxu0 %v1050
      %v1113 = vpop.f32.mrb[0].mxu0
      %v1114 = vadd.f32 0.0, %v1113
      %v1115 = vpop.f32.mrb[0].mxu0
      %v1116 = vpop.f32.mrb[0].mxu0
      %v1117 = vpop.f32.mrb[0].mxu0
      %1118 = vdwg.mxu0
      %v1119 = vadd.f32 %v1013, %v1090
      %v1120 = vadd.f32 %v1014, %v1093
      %v1121 = vadd.f32 %v1015, %v1098
      %v1122 = vadd.f32 %v1016, %v1101
      %v1123 = vadd.f32 %v1017, %v1106
      %v1124 = vadd.f32 %v1018, %v1109
      %v1125 = vadd.f32 %v1019, %v1114
      %v1126 = vpack.c.bf16 %v1120, %v1119
      %v1127 = vpack.c.bf16 %v1122, %v1121
      %v1128 = vpack.c.bf16 %v1124, %v1123
      %v1129 = vpack.c.bf16 %v1125, %v1125
      %v1134 = vunpack.c.l.b16 %v1126
      %v1135 = vunpack.c.h.b16 %v1126
      %v1136 = vunpack.c.l.b16 %v1127
      %v1137 = vunpack.c.h.b16 %v1127
      %v1138 = vunpack.c.l.b16 %v1128
      %v1139 = vunpack.c.h.b16 %v1128
      %v1140 = vunpack.c.l.b16 %v1129
      %v1141 = vpack.c.b16 %v1134, %v1134
      %v1142 = vpack.c.b16 %v1135, %v1135
      %v1143 = vpack.c.b16 %v1136, %v1136
      %v1144 = vpack.c.b16 %v1137, %v1137
      %v1145 = vpack.c.b16 %v1138, %v1138
      %v1146 = vpack.c.b16 %v1139, %v1139
      %v1147 = vpack.c.b16 %v1140, %v1140
      %1155 = vst [vmem:[%s338] sm:$0xf] %v1141
      %1156 = vst [vmem:[%s338 + $0x4] sm:$0xf] %v1142
      %1157 = vst [vmem:[%s338 + $0x8] sm:$0xf] %v1143
      %1158 = vst [vmem:[%s338 + $0xc] sm:$0xf] %v1144
      %1159 = vst [vmem:[%s338 + $0x10] sm:$0xf] %v1145
      %1160 = vst [vmem:[%s338 + $0x14] sm:$0xf] %v1146
      %1161 = vst [vmem:[%s338 + $0x18] sm:$0xf] %v1147
      // Predicated region
      $region37: #{resnet1d_forward.14} parent=31 // pred_check
        %p1162 = pneg %p347
      $region38: #{resnet1d_forward.14} parent=31 // pred_check_branch
        %1164 = sbr.rel (%p1162) target = $region40
      $region39: #{resnet1d_forward.14} parent=31 // pred_region
        %v1165 = vlaneseq
        %v1166 = vshrl.u32 %v1165, 7
        %v1167 = vadd.s32 %v1166, 8
        %v1168 = vadd.s32 %v1166, 16
        %v1169 = vadd.s32 %v1166, 24
        %v1170 = vadd.s32 %v1166, 32
        %v1171 = vadd.s32 %v1166, 40
        %v1172 = vadd.s32 %v1166, 48
        %vm1173 = vcmp.lt.s32.totalorder %v1166, 50
        %vm1174 = vcmp.lt.s32.totalorder %v1167, 50
        %vm1175 = vcmp.lt.s32.totalorder %v1168, 50
        %vm1176 = vcmp.lt.s32.totalorder %v1169, 50
        %vm1177 = vcmp.lt.s32.totalorder %v1170, 50
        %vm1178 = vcmp.lt.s32.totalorder %v1171, 50
        %vm1179 = vcmp.lt.s32.totalorder %v1172, 50
        %v1180 = vsel %vm1173, 1, 0
        %v1181 = vsel %vm1174, 1, 0
        %v1182 = vsel %vm1175, 1, 0
        %v1183 = vsel %vm1176, 1, 0
        %v1184 = vsel %vm1177, 1, 0
        %v1185 = vsel %vm1178, 1, 0
        %v1186 = vsel %vm1179, 1, 0
        %vm1187 = vcmp.eq.s32.totalorder %v1180, 1
        %vm1188 = vcmp.eq.s32.totalorder %v1181, 1
        %vm1189 = vcmp.eq.s32.totalorder %v1182, 1
        %vm1190 = vcmp.eq.s32.totalorder %v1183, 1
        %vm1191 = vcmp.eq.s32.totalorder %v1184, 1
        %vm1192 = vcmp.eq.s32.totalorder %v1185, 1
        %vm1193 = vcmp.eq.s32.totalorder %v1186, 1
        %v1194 = vsel %vm1187, %v1119, 0.0
        %v1195 = vsel %vm1188, %v1120, 0.0
        %v1196 = vsel %vm1189, %v1121, 0.0
        %v1197 = vsel %vm1190, %v1122, 0.0
        %v1198 = vsel %vm1191, %v1123, 0.0
        %v1199 = vsel %vm1192, %v1124, 0.0
        %v1200 = vsel %vm1193, %v1125, 0.0
        %v1201 = vld [vmem:[%s342] sm:$0x1]
        %v1202 = vadd.f32 %v1194, %v1195
        %v1203 = vadd.f32 %v1202, %v1196
        %v1204 = vadd.f32 %v1203, %v1197
        %v1205 = vadd.f32 %v1204, %v1198
        %v1206 = vadd.f32 %v1205, %v1199
        %v1207 = vadd.f32 %v1206, %v1200
        %v1208 = vrot.slane %v1207, 4
        %v1209 = vadd.f32 %v1207, %v1208
        %v1210 = vrot.slane %v1209, 2
        %v1211 = vadd.f32 %v1209, %v1210
        %v1212 = vrot.slane %v1211, 1
        %v1213 = vadd.f32 %v1211, %v1212
        %v1214 = vadd.f32 %v1201, %v1213
        %1215 = vst [vmem:[%s342] sm:$0x1] %v1214
        %v1216 = vld [vmem:[%s345] sm:$0x1]
        %v1217 = vmul.f32 %v1194, %v1194
        %v1218 = vmul.f32 %v1195, %v1195
        %v1219 = vmul.f32 %v1196, %v1196
        %v1220 = vmul.f32 %v1197, %v1197
        %v1221 = vmul.f32 %v1198, %v1198
        %v1222 = vmul.f32 %v1199, %v1199
        %v1223 = vmul.f32 %v1200, %v1200
        %v1224 = vadd.f32 %v1217, %v1218
        %v1225 = vadd.f32 %v1224, %v1219
        %v1226 = vadd.f32 %v1225, %v1220
        %v1227 = vadd.f32 %v1226, %v1221
        %v1228 = vadd.f32 %v1227, %v1222
        %v1229 = vadd.f32 %v1228, %v1223
        %v1230 = vrot.slane %v1229, 4
        %v1231 = vadd.f32 %v1229, %v1230
        %v1232 = vrot.slane %v1231, 2
        %v1233 = vadd.f32 %v1231, %v1232
        %v1234 = vrot.slane %v1233, 1
        %v1235 = vadd.f32 %v1233, %v1234
        %v1236 = vadd.f32 %v1216, %v1235
        %1237 = vst [vmem:[%s345] sm:$0x1] %v1236
      $region40: #{resnet1d_forward.14} parent=31 // pred_fallthru
        _
      %p1238 = scmp.ne.s32.totalorder %s22, 0
      // Predicated region
      $region41: #{resnet1d_forward.14} parent=31 // pred_check
        %p1239 = pneg %p1238
      $region42: #{resnet1d_forward.14} parent=31 // pred_check_branch
        %1241 = sbr.rel (%p1239) target = $region44
      $region43: #{resnet1d_forward.14} parent=31 // pred_region
        %v1242 = vld [vmem:[%s342] sm:$0x1]
        %v1243 = vadd.f32 %v1119, %v1120
        %v1244 = vadd.f32 %v1243, %v1121
        %v1245 = vadd.f32 %v1244, %v1122
        %v1246 = vadd.f32 %v1245, %v1123
        %v1247 = vadd.f32 %v1246, %v1124
        %v1248 = vadd.f32 %v1247, %v1125
        %v1249 = vrot.slane %v1248, 4
        %v1250 = vadd.f32 %v1248, %v1249
        %v1251 = vrot.slane %v1250, 2
        %v1252 = vadd.f32 %v1250, %v1251
        %v1253 = vrot.slane %v1252, 1
        %v1254 = vadd.f32 %v1252, %v1253
        %v1255 = vadd.f32 %v1242, %v1254
        %1256 = vst [vmem:[%s342] sm:$0x1] %v1255
        %v1257 = vld [vmem:[%s345] sm:$0x1]
        %v1258 = vmul.f32 %v1119, %v1119
        %v1259 = vmul.f32 %v1120, %v1120
        %v1260 = vmul.f32 %v1121, %v1121
        %v1261 = vmul.f32 %v1122, %v1122
        %v1262 = vmul.f32 %v1123, %v1123
        %v1263 = vmul.f32 %v1124, %v1124
        %v1264 = vmul.f32 %v1125, %v1125
        %v1265 = vadd.f32 %v1258, %v1259
        %v1266 = vadd.f32 %v1265, %v1260
        %v1267 = vadd.f32 %v1266, %v1261
        %v1268 = vadd.f32 %v1267, %v1262
        %v1269 = vadd.f32 %v1268, %v1263
        %v1270 = vadd.f32 %v1269, %v1264
        %v1271 = vrot.slane %v1270, 4
        %v1272 = vadd.f32 %v1270, %v1271
        %v1273 = vrot.slane %v1272, 2
        %v1274 = vadd.f32 %v1272, %v1273
        %v1275 = vrot.slane %v1274, 1
        %v1276 = vadd.f32 %v1274, %v1275
        %v1277 = vadd.f32 %v1257, %v1276
        %1278 = vst [vmem:[%s345] sm:$0x1] %v1277
      $region44: #{resnet1d_forward.14} parent=31 // pred_fallthru
        _
      %s1279 = smul.u32 7, %s22
      %p1280 = scmp.lt.s32.totalorder %s21, 1
      %s1281 = scalar_select %p1280, %s21, 1
      %p1282 = scmp.lt.s32.totalorder %s1279, 6
      %s1283 = scalar_select %p1282, %s1279, 6
      %s1284 = smul.addr %s1281, 7
      %s1285 = sadd.s32 %s1283, %s1284
      %s1286 = smul.addr %s1285, 4
      %s1287 = scalar_lea.vmem %s3, %s1286
      %p1288 = scmp.lt.s32.totalorder %s21, 1
      %s1289 = scalar_select %p1288, %s21, 1
      %s1290 = scalar_lea.vmem %s4, %s1289
      %p1291 = scmp.lt.s32.totalorder %s21, 1
      %s1292 = scalar_select %p1291, %s21, 1
      %s1293 = scalar_lea.vmem %s5, %s1292
      // Predicated region
      $region45: #{resnet1d_forward.14} parent=31 // pred_check
        %p1294 = pneg %p130
      $region46: #{resnet1d_forward.14} parent=31 // pred_check_branch
        %1296 = sbr.rel (%p1294) target = $region48
      $region47: #{resnet1d_forward.14} parent=31 // pred_region
        %s1297 = smul.u32 7, %s22
      $region48: #{resnet1d_forward.14} parent=31 // pred_fallthru
        _
      // Predicated region
      $region49: #{resnet1d_forward.14} parent=31 // pred_check
        %p1298 = pneg %p156
      $region50: #{resnet1d_forward.14} parent=31 // pred_check_branch
        %1300 = sbr.rel (%p1298) target = $region52
      $region51: #{resnet1d_forward.14} parent=31 // pred_region
        _
      $region52: #{resnet1d_forward.14} parent=31 // pred_fallthru
        _
      // Predicated region
      $region53: #{resnet1d_forward.14} parent=31 // pred_check
        %p1301 = pneg %p182
      $region54: #{resnet1d_forward.14} parent=31 // pred_check_branch
        %1303 = sbr.rel (%p1301) target = $region56
      $region55: #{resnet1d_forward.14} parent=31 // pred_region
        _
      $region56: #{resnet1d_forward.14} parent=31 // pred_fallthru
        _
    $region32: #{resnet1d_forward.14} parent=5 // pred_fallthru
      _
    %p1304 = scmp.le.s32.totalorder 2, %s12
    // Predicated region
    $region57: #{resnet1d_forward.14} parent=5 // pred_check
      %p1305 = pneg %p1304
    $region58: #{resnet1d_forward.14} parent=5 // pred_check_branch
      %1307 = sbr.rel (%p1305) target = $region60
    $region59: #{resnet1d_forward.14} parent=5 // pred_region
      %s1308 = ssub.s32 %s12, 2
      // Predicated region
      $region61: #{resnet1d_forward.14} parent=59 // pred_check
        %p1309 = pneg %p136
      $region62: #{resnet1d_forward.14} parent=59 // pred_check_branch
        %1311 = sbr.rel (%p1309) target = $region64
      $region63: #{resnet1d_forward.14} parent=59 // pred_region
        %s1312 = smul.u32 7, %s24
        %p1313 = scmp.lt.s32.totalorder %s23, 1
        %s1314 = scalar_select %p1313, %s23, 1
        %p1315 = scmp.lt.s32.totalorder %s1312, 6
        %s1316 = scalar_select %p1315, %s1312, 6
        %s1317 = smul.addr %s1314, 7
        %s1318 = sadd.s32 %s1316, %s1317
        %s1319 = smul.addr %s1318, 4
        %s1320 = scalar_lea.vmem %s3, %s1319
      $region64: #{resnet1d_forward.14} parent=59 // pred_fallthru
        _
      // Predicated region
      $region65: #{resnet1d_forward.14} parent=59 // pred_check
        %p1321 = pneg %p162
      $region66: #{resnet1d_forward.14} parent=59 // pred_check_branch
        %1323 = sbr.rel (%p1321) target = $region68
      $region67: #{resnet1d_forward.14} parent=59 // pred_region
        %p1324 = scmp.lt.s32.totalorder %s23, 1
        %s1325 = scalar_select %p1324, %s23, 1
        %s1326 = scalar_lea.vmem %s4, %s1325
      $region68: #{resnet1d_forward.14} parent=59 // pred_fallthru
        _
      // Predicated region
      $region69: #{resnet1d_forward.14} parent=59 // pred_check
        %p1327 = pneg %p188
      $region70: #{resnet1d_forward.14} parent=59 // pred_check_branch
        %1329 = sbr.rel (%p1327) target = $region72
      $region71: #{resnet1d_forward.14} parent=59 // pred_region
        %p1330 = scmp.lt.s32.totalorder %s23, 1
        %s1331 = scalar_select %p1330, %s23, 1
        %s1332 = scalar_lea.vmem %s5, %s1331
      $region72: #{resnet1d_forward.14} parent=59 // pred_fallthru
        _
    $region60: #{resnet1d_forward.14} parent=5 // pred_fallthru
      _
  $region6: #{resnet1d_forward.14} parent=0 // loop_footer
    %s16 = sadd.s32 1, %s12
  $region7: #{resnet1d_forward.14} parent=0 // loop_footer_branch
    %11 = sbr.rel target = $region3
  $region8: #{resnet1d_forward.14} parent=0 // loop_exit
    _

// kernel: resnet1d_forward.20
$region0: #{resnet1d_forward.20}
  #allocation0 [shape = 'u32[]', space=smem, size = 0x4, offset = 0x4, fixed_abs, tag = 'smem constant byte address 0x4 - core index']
  #allocation1 [shape = 'u32[144,128]{1,0:T(1,128)}', space=vmem, size = 0x12000, scoped, tag = 'internal scratch']
  %s0 = inlined_call_operand.vmem [shape: bf16[2,32,128], index: 0, kind: input, shape index: {}]
  %s1 = inlined_call_operand.vmem [shape: f32[1,128], index: 1, kind: input, shape index: {}]
  %s2 = inlined_call_operand.vmem [shape: f32[1,128], index: 2, kind: input, shape index: {}]
  %s3 = inlined_call_operand.vmem [shape: bf16[2,32,128], index: 3, kind: input, shape index: {}]
  %s4 = inlined_call_operand.vmem [shape: bf16[2,32,128], index: 4, kind: output, shape index: {}]
  %s5 = sld [smem:[#allocation0]]
  $region49: #{resnet1d_forward.20} parent=0
    _
  %s7 = ssub.s32 1, %s5
  %s8 = scalar_select 0, %s7, %s5
  loop: start=0, step=1, limit=4
  $region2: #{resnet1d_forward.20} parent=0 // loop_pre_header
    _
  $region3: #{resnet1d_forward.20} parent=0 // loop_header
    %s10 = sphi 0, %s14
    %p11 = scmp.ge.s32.totalorder %s10, 4
    %s17 = sphi 0, %s29
    %s18 = sphi 0, %s25
    %s19 = sphi 0, %s17
    %s20 = sphi 0, %s18
    %s21 = sphi 0, %s19
    %s22 = sphi 0, %s20
    %s34 = sphi 0, %s36
    %s37 = sphi 0, %s34
    %s38 = sphi 0, %s37
    %s54 = sphi 0, %s38
    %s58 = sphi 0, %s58
    %s60 = sphi 0, %s58
    %s61 = sphi 0, %s60
    %s75 = sphi 0, %s61
    %s79 = sphi 0, %s79
    %s81 = sphi 0, %s79
    %s82 = sphi 0, %s81
    %s96 = sphi 0, %s82
    %s104 = sphi 0, %s106
    %s107 = sphi 0, %s104
    %s108 = sphi 0, %s107
    %s124 = sphi 0, %s108
    %s132 = sphi 0, %s134
    %s135 = sphi 0, %s132
    %s136 = sphi 0, %s135
    %s152 = sphi 0, %s136
  $region4: #{resnet1d_forward.20} parent=0 // loop_header_branch
    %13 = sbr.rel (%p11) target = $region8
  $region5: #{resnet1d_forward.20} parent=0 // loop_body
    %s15 = ssub.s32 %s10, 1
    %s16 = ssub.s32 %s10, 2
    %s23 = sadd.s32 1, %s18
    %p24 = scmp.ge.s32.totalorder %s23, 1
    %s25 = scalar_select %p24, 0, %s23
    %s26 = sadd.s32 1, %s17
    %s27 = scalar_select %p24, %s26, %s17
    %p28 = scmp.ge.s32.totalorder %s27, 2
    %s29 = scalar_select %p28, 0, %s27
    %s30 = ssub.s32 %s17, %s29
    %s31 = ssub.s32 %s18, %s25
    %s32 = sor.u32 %s30, %s31
    %p33 = scmp.eq.s32.totalorder %s32, 0
    %s35 = sadd.s32 %s34, 1
    %s36 = scalar_select %p33, %s34, %s35
    %p39 = pneg %p33
    %p40 = scmp.eq.s32.totalorder %s10, 1
    %p41 = por %p39, %p40
    %p42 = scmp.ne.s32.totalorder %s34, %s37
    %p43 = scmp.eq.s32.totalorder %s10, 0
    %p44 = por %p42, %p43
    %p45 = scmp.ne.s32.totalorder %s34, %s37
    %p46 = scmp.eq.s32.totalorder %s15, 1
    %p47 = por %p45, %p46
    %p48 = scmp.ne.s32.totalorder %s37, %s38
    %p49 = scmp.eq.s32.totalorder %s15, 0
    %p50 = por %p48, %p49
    %p51 = scmp.ne.s32.totalorder %s37, %s38
    %p52 = scmp.eq.s32.totalorder %s16, 1
    %p53 = por %p51, %p52
    %p55 = scmp.ne.s32.totalorder %s38, %s54
    %p56 = scmp.eq.s32.totalorder %s16, 0
    %p57 = por %p55, %p56
    %s59 = sadd.s32 %s58, 1
    %p62 = scmp.eq.s32.totalorder %s10, 1
    %p63 = scmp.ne.s32.totalorder %s58, %s60
    %p64 = scmp.eq.s32.totalorder %s10, 0
    %p65 = por %p63, %p64
    %p66 = scmp.ne.s32.totalorder %s58, %s60
    %p67 = scmp.eq.s32.totalorder %s15, 1
    %p68 = por %p66, %p67
    %p69 = scmp.ne.s32.totalorder %s60, %s61
    %p70 = scmp.eq.s32.totalorder %s15, 0
    %p71 = por %p69, %p70
    %p72 = scmp.ne.s32.totalorder %s60, %s61
    %p73 = scmp.eq.s32.totalorder %s16, 1
    %p74 = por %p72, %p73
    %p76 = scmp.ne.s32.totalorder %s61, %s75
    %p77 = scmp.eq.s32.totalorder %s16, 0
    %p78 = por %p76, %p77
    %s80 = sadd.s32 %s79, 1
    %p83 = scmp.eq.s32.totalorder %s10, 1
    %p84 = scmp.ne.s32.totalorder %s79, %s81
    %p85 = scmp.eq.s32.totalorder %s10, 0
    %p86 = por %p84, %p85
    %p87 = scmp.ne.s32.totalorder %s79, %s81
    %p88 = scmp.eq.s32.totalorder %s15, 1
    %p89 = por %p87, %p88
    %p90 = scmp.ne.s32.totalorder %s81, %s82
    %p91 = scmp.eq.s32.totalorder %s15, 0
    %p92 = por %p90, %p91
    %p93 = scmp.ne.s32.totalorder %s81, %s82
    %p94 = scmp.eq.s32.totalorder %s16, 1
    %p95 = por %p93, %p94
    %p97 = scmp.ne.s32.totalorder %s82, %s96
    %p98 = scmp.eq.s32.totalorder %s16, 0
    %p99 = por %p97, %p98
    %s100 = ssub.s32 %s17, %s29
    %s101 = ssub.s32 %s18, %s25
    %s102 = sor.u32 %s100, %s101
    %p103 = scmp.eq.s32.totalorder %s102, 0
    %s105 = sadd.s32 %s104, 1
    %s106 = scalar_select %p103, %s104, %s105
    %p109 = pneg %p103
    %p110 = scmp.eq.s32.totalorder %s10, 1
    %p111 = por %p109, %p110
    %p112 = scmp.ne.s32.totalorder %s104, %s107
    %p113 = scmp.eq.s32.totalorder %s10, 0
    %p114 = por %p112, %p113
    %p115 = scmp.ne.s32.totalorder %s104, %s107
    %p116 = scmp.eq.s32.totalorder %s15, 1
    %p117 = por %p115, %p116
    %p118 = scmp.ne.s32.totalorder %s107, %s108
    %p119 = scmp.eq.s32.totalorder %s15, 0
    %p120 = por %p118, %p119
    %p121 = scmp.ne.s32.totalorder %s107, %s108
    %p122 = scmp.eq.s32.totalorder %s16, 1
    %p123 = por %p121, %p122
    %p125 = scmp.ne.s32.totalorder %s108, %s124
    %p126 = scmp.eq.s32.totalorder %s16, 0
    %p127 = por %p125, %p126
    %s128 = ssub.s32 %s17, %s29
    %s129 = ssub.s32 %s18, %s25
    %s130 = sor.u32 %s128, %s129
    %p131 = scmp.eq.s32.totalorder %s130, 0
    %s133 = sadd.s32 %s132, 1
    %s134 = scalar_select %p131, %s132, %s133
    %p137 = pneg %p131
    %p138 = scmp.eq.s32.totalorder %s10, 1
    %p139 = por %p137, %p138
    %p140 = scmp.ne.s32.totalorder %s132, %s135
    %p141 = scmp.eq.s32.totalorder %s10, 0
    %p142 = por %p140, %p141
    %p143 = scmp.ne.s32.totalorder %s132, %s135
    %p144 = scmp.eq.s32.totalorder %s15, 1
    %p145 = por %p143, %p144
    %p146 = scmp.ne.s32.totalorder %s135, %s136
    %p147 = scmp.eq.s32.totalorder %s15, 0
    %p148 = por %p146, %p147
    %p149 = scmp.ne.s32.totalorder %s135, %s136
    %p150 = scmp.eq.s32.totalorder %s16, 1
    %p151 = por %p149, %p150
    %p153 = scmp.ne.s32.totalorder %s136, %s152
    %p154 = scmp.eq.s32.totalorder %s16, 0
    %p155 = por %p153, %p154
    %p156 = scmp.le.s32.totalorder 1, %s10
    %p157 = scmp.lt.s32.totalorder %s10, 3
    %p158 = pnand %p156, %p157
    %p159 = pneg %p158
    // Predicated region
    $region9: #{resnet1d_forward.20} parent=5 // pred_check
      _
    $region10: #{resnet1d_forward.20} parent=5 // pred_check_branch
      %161 = sbr.rel (%p158) target = $region12
    $region11: #{resnet1d_forward.20} parent=5 // pred_region
      %s162 = ssub.s32 %s10, 1
      // Predicated region
      $region13: #{resnet1d_forward.20} parent=11 // pred_check
        %p163 = pneg %p71
      $region14: #{resnet1d_forward.20} parent=11 // pred_check_branch
        %165 = sbr.rel (%p163) target = $region16
      $region15: #{resnet1d_forward.20} parent=11 // pred_region
        _
      $region16: #{resnet1d_forward.20} parent=11 // pred_fallthru
        _
      // Predicated region
      $region17: #{resnet1d_forward.20} parent=11 // pred_check
        %p166 = pneg %p92
      $region18: #{resnet1d_forward.20} parent=11 // pred_check_branch
        %168 = sbr.rel (%p166) target = $region20
      $region19: #{resnet1d_forward.20} parent=11 // pred_region
        _
      $region20: #{resnet1d_forward.20} parent=11 // pred_fallthru
        _
    $region12: #{resnet1d_forward.20} parent=5 // pred_fallthru
      _
    %p169 = scmp.lt.s32.totalorder %s10, 2
    // Predicated region
    $region21: #{resnet1d_forward.20} parent=5 // pred_check
      %p170 = pneg %p169
    $region22: #{resnet1d_forward.20} parent=5 // pred_check_branch
      %172 = sbr.rel (%p170) target = $region24
    $region23: #{resnet1d_forward.20} parent=5 // pred_region
      // Predicated region
      $region25: #{resnet1d_forward.20} parent=23 // pred_check
        %p173 = pneg %p44
      $region26: #{resnet1d_forward.20} parent=23 // pred_check_branch
        %175 = sbr.rel (%p173) target = $region28
      $region27: #{resnet1d_forward.20} parent=23 // pred_region
        %s176 = smul.u32 4, %s18
        %p177 = scmp.lt.s32.totalorder %s17, 1
        %s178 = scalar_select %p177, %s17, 1
        %p179 = scmp.lt.s32.totalorder %s176, 3
        %s180 = scalar_select %p179, %s176, 3
        %s181 = smul.addr %s178, 4
        %s182 = sadd.s32 %s180, %s181
        %s183 = smul.addr %s182, 4
        %s184 = scalar_lea.vmem %s0, %s183
        %s185 = smul.u32 4, %s18
      $region28: #{resnet1d_forward.20} parent=23 // pred_fallthru
        _
      // Predicated region
      $region29: #{resnet1d_forward.20} parent=23 // pred_check
        %p186 = pneg %p114
      $region30: #{resnet1d_forward.20} parent=23 // pred_check_branch
        %188 = sbr.rel (%p186) target = $region32
      $region31: #{resnet1d_forward.20} parent=23 // pred_region
        %s189 = smul.u32 4, %s18
        %p190 = scmp.lt.s32.totalorder %s17, 1
        %s191 = scalar_select %p190, %s17, 1
        %p192 = scmp.lt.s32.totalorder %s189, 3
        %s193 = scalar_select %p192, %s189, 3
        %s194 = smul.addr %s191, 4
        %s195 = sadd.s32 %s193, %s194
        %s196 = smul.addr %s195, 4
        %s197 = scalar_lea.vmem %s3, %s196
        %s198 = smul.u32 4, %s18
      $region32: #{resnet1d_forward.20} parent=23 // pred_fallthru
        _
    $region24: #{resnet1d_forward.20} parent=5 // pred_fallthru
      _
    %p199 = scmp.le.s32.totalorder 1, %s10
    %p200 = scmp.lt.s32.totalorder %s10, 3
    %p201 = pnand %p199, %p200
    %p202 = pneg %p201
    // Predicated region
    $region33: #{resnet1d_forward.20} parent=5 // pred_check
      _
    $region34: #{resnet1d_forward.20} parent=5 // pred_check_branch
      %204 = sbr.rel (%p201) target = $region36
    $region35: #{resnet1d_forward.20} parent=5 // pred_region
      %s205 = ssub.s32 %s10, 1
      %s206 = smul.u32 4, %s20
      %p207 = scmp.lt.s32.totalorder %s19, 1
      %s208 = scalar_select %p207, %s19, 1
      %p209 = scmp.lt.s32.totalorder %s206, 3
      %s210 = scalar_select %p209, %s206, 3
      %s211 = smul.addr %s208, 4
      %s212 = sadd.s32 %s210, %s211
      %s213 = smul.addr %s212, 4
      %s214 = scalar_lea.vmem %s0, %s213
      %p215 = pneg %p50
      %p216 = pneg %p47
      %p217 = pneg %p71
      %p218 = pneg %p68
      %p219 = pneg %p92
      %p220 = pneg %p89
      %s221 = smul.u32 4, %s20
      %p222 = scmp.lt.s32.totalorder %s19, 1
      %s223 = scalar_select %p222, %s19, 1
      %p224 = scmp.lt.s32.totalorder %s221, 3
      %s225 = scalar_select %p224, %s221, 3
      %s226 = smul.addr %s223, 4
      %s227 = sadd.s32 %s225, %s226
      %s228 = smul.addr %s227, 4
      %s229 = scalar_lea.vmem %s3, %s228
      %p230 = pneg %p120
      %p231 = pneg %p117
      %p232 = pneg %p148
      %p233 = pneg %p145
      %s234 = smul.u32 4, %s20
      %p235 = scmp.lt.s32.totalorder %s19, 1
      %s236 = scalar_select %p235, %s19, 1
      %p237 = scmp.lt.s32.totalorder %s234, 3
      %s238 = scalar_select %p237, %s234, 3
      %s239 = smul.addr %s236, 4
      %s240 = sadd.s32 %s238, %s239
      %s241 = smul.addr %s240, 4
      %s242 = scalar_lea.vmem %s4, %s241
      %s243 = smul.u32 4, %s20
      %p244 = scmp.lt.s32.totalorder %s19, 1
      %s245 = scalar_select %p244, %s19, 1
      %p246 = scmp.lt.s32.totalorder %s243, 3
      %s247 = scalar_select %p246, %s243, 3
      %s248 = smul.addr %s245, 4
      %s249 = sadd.s32 %s247, %s248
      %s250 = smul.addr %s249, 4
      %s251 = scalar_lea.vmem %s0, %s250
      %s252 = smul.u32 4, %s20
      %s253 = smul.u32 4, %s20
      %p254 = scmp.lt.s32.totalorder %s19, 1
      %s255 = scalar_select %p254, %s19, 1
      %p256 = scmp.lt.s32.totalorder %s253, 3
      %s257 = scalar_select %p256, %s253, 3
      %s258 = smul.addr %s255, 4
      %s259 = sadd.s32 %s257, %s258
      %s260 = smul.addr %s259, 4
      %s261 = scalar_lea.vmem %s3, %s260
      %s262 = smul.u32 4, %s20
      %s263 = smul.u32 4, %s20
      %p264 = scmp.lt.s32.totalorder %s19, 1
      %s265 = scalar_select %p264, %s19, 1
      %p266 = scmp.lt.s32.totalorder %s263, 3
      %s267 = scalar_select %p266, %s263, 3
      %s268 = smul.addr %s265, 4
      %s269 = sadd.s32 %s267, %s268
      %s270 = smul.addr %s269, 4
      %s271 = scalar_lea.vmem %s4, %s270
      %s272 = smul.u32 4, %s20
      %v273 = vld [vmem:[%s251] sm:$0xf]
      %v274 = vld [vmem:[%s251 + $0x4] sm:$0xf]
      %v275 = vld [vmem:[%s251 + $0x8] sm:$0xf]
      %v276 = vld [vmem:[%s251 + $0xc] sm:$0xf]
      %v277 = vunpack.c.l.bf16 %v273
      %v278 = vunpack.c.l.bf16 %v274
      %v279 = vunpack.c.l.bf16 %v275
      %v280 = vunpack.c.l.bf16 %v276
      %v281 = vld [vmem:[%s1] sm:$0x1]
      %v283 = vlaneseq
      %v284 = vshrl.u32 %v283, 7
      %v285 = vsub.s32 0, %v284
      %v286 = vrot.slane %v281, %v285
      %v288 = vmul.f32 %v277, %v286
      %v289 = vmul.f32 %v278, %v286
      %v290 = vmul.f32 %v279, %v286
      %v291 = vmul.f32 %v280, %v286
      %v292 = vld [vmem:[%s2] sm:$0x1]
      %v294 = vlaneseq
      %v295 = vshrl.u32 %v294, 7
      %v296 = vsub.s32 0, %v295
      %v297 = vrot.slane %v292, %v296
      %v299 = vadd.f32 %v288, %v297
      %v300 = vadd.f32 %v289, %v297
      %v301 = vadd.f32 %v290, %v297
      %v302 = vadd.f32 %v291, %v297
      %v303 = vld [vmem:[%s261] sm:$0xf]
      %v304 = vld [vmem:[%s261 + $0x4] sm:$0xf]
      %v305 = vld [vmem:[%s261 + $0x8] sm:$0xf]
      %v306 = vld [vmem:[%s261 + $0xc] sm:$0xf]
      %v307 = vunpack.c.l.bf16 %v303
      %v308 = vunpack.c.l.bf16 %v304
      %v309 = vunpack.c.l.bf16 %v305
      %v310 = vunpack.c.l.bf16 %v306
      %v311 = vadd.f32 %v299, %v307
      %v312 = vadd.f32 %v300, %v308
      %v313 = vadd.f32 %v301, %v309
      %v314 = vadd.f32 %v302, %v310
      %v315 = vmax.f32 %v311, 0.0
      %v316 = vmax.f32 %v312, 0.0
      %v317 = vmax.f32 %v313, 0.0
      %v318 = vmax.f32 %v314, 0.0
      %v319 = vpack.c.bf16 %v316, %v315
      %v320 = vpack.c.bf16 %v318, %v317
      %v323 = vunpack.c.l.b16 %v319
      %v324 = vunpack.c.h.b16 %v319
      %v325 = vunpack.c.l.b16 %v320
      %v326 = vunpack.c.h.b16 %v320
      %v327 = vpack.c.b16 %v323, %v323
      %v328 = vpack.c.b16 %v324, %v324
      %v329 = vpack.c.b16 %v325, %v325
      %v330 = vpack.c.b16 %v326, %v326
      %335 = vst [vmem:[%s271] sm:$0xf] %v327
      %336 = vst [vmem:[%s271 + $0x4] sm:$0xf] %v328
      %337 = vst [vmem:[%s271 + $0x8] sm:$0xf] %v329
      %338 = vst [vmem:[%s271 + $0xc] sm:$0xf] %v330
      %s339 = smul.u32 4, %s20
      %p340 = scmp.lt.s32.totalorder %s19, 1
      %s341 = scalar_select %p340, %s19, 1
      %p342 = scmp.lt.s32.totalorder %s339, 3
      %s343 = scalar_select %p342, %s339, 3
      %s344 = smul.addr %s341, 4
      %s345 = sadd.s32 %s343, %s344
      %s346 = smul.addr %s345, 4
      %s347 = scalar_lea.vmem %s4, %s346
      // Predicated region
      $region37: #{resnet1d_forward.20} parent=35 // pred_check
        %p348 = pneg %p145
      $region38: #{resnet1d_forward.20} parent=35 // pred_check_branch
        %350 = sbr.rel (%p348) target = $region40
      $region39: #{resnet1d_forward.20} parent=35 // pred_region
        %s351 = smul.u32 4, %s20
      $region40: #{resnet1d_forward.20} parent=35 // pred_fallthru
        _
    $region36: #{resnet1d_forward.20} parent=5 // pred_fallthru
      _
    %p352 = scmp.le.s32.totalorder 2, %s10
    // Predicated region
    $region41: #{resnet1d_forward.20} parent=5 // pred_check
      %p353 = pneg %p352
    $region42: #{resnet1d_forward.20} parent=5 // pred_check_branch
      %355 = sbr.rel (%p353) target = $region44
    $region43: #{resnet1d_forward.20} parent=5 // pred_region
      %s356 = ssub.s32 %s10, 2
      // Predicated region
      $region45: #{resnet1d_forward.20} parent=43 // pred_check
        %p357 = pneg %p151
      $region46: #{resnet1d_forward.20} parent=43 // pred_check_branch
        %359 = sbr.rel (%p357) target = $region48
      $region47: #{resnet1d_forward.20} parent=43 // pred_region
        %s360 = smul.u32 4, %s22
        %p361 = scmp.lt.s32.totalorder %s21, 1
        %s362 = scalar_select %p361, %s21, 1
        %p363 = scmp.lt.s32.totalorder %s360, 3
        %s364 = scalar_select %p363, %s360, 3
        %s365 = smul.addr %s362, 4
        %s366 = sadd.s32 %s364, %s365
        %s367 = smul.addr %s366, 4
        %s368 = scalar_lea.vmem %s4, %s367
      $region48: #{resnet1d_forward.20} parent=43 // pred_fallthru
        _
    $region44: #{resnet1d_forward.20} parent=5 // pred_fallthru
      _
  $region6: #{resnet1d_forward.20} parent=0 // loop_footer
    %s14 = sadd.s32 1, %s10
  $region7: #{resnet1d_forward.20} parent=0 // loop_footer_branch
    %9 = sbr.rel target = $region3
  $region8: #{resnet1d_forward.20} parent=0 // loop_exit
    _

// kernel: resnet1d_forward.17
$region0: #{resnet1d_forward.17}
  #allocation0 [shape = 'u32[]', space=smem, size = 0x4, offset = 0x4, fixed_abs, tag = 'smem constant byte address 0x4 - core index']
  #allocation1 [shape = 'u32[144,128]{1,0:T(1,128)}', space=vmem, size = 0x12000, scoped, tag = 'internal scratch']
  #allocation2 [shape = 'f32[40,128]{1,0:T(8,128)}', space=vmem, size = 0x5000, scoped, tag = 'scratch operand']
  %s0 = inlined_call_operand.vmem [shape: bf16[2,40,128], index: 0, kind: input, shape index: {}, may-alias: {0,1}]
  %s1 = inlined_call_operand.vmem [shape: bf16[2,40,128], index: 1, kind: input, shape index: {}, may-alias: {0,1}]
  %s2 = inlined_call_operand.vmem [shape: bf16[384,128], index: 2, kind: input, shape index: {}]
  %s3 = inlined_call_operand.vmem [shape: bf16[2,32,128], index: 3, kind: output, shape index: {0}]
  %s4 = inlined_call_operand.vmem [shape: f32[2,1,128], index: 4, kind: output, shape index: {1}]
  %s5 = inlined_call_operand.vmem [shape: f32[2,1,128], index: 5, kind: output, shape index: {2}]
  %6 = xla_tuple %s3, %s4, %s5
  %s7 = sld [smem:[#allocation0]]
  $region73: #{resnet1d_forward.17} parent=0
    _
  %s9 = ssub.s32 1, %s7
  %s10 = scalar_select 0, %s9, %s7
  loop: start=0, step=1, limit=4
  $region2: #{resnet1d_forward.17} parent=0 // loop_pre_header
    _
  $region3: #{resnet1d_forward.17} parent=0 // loop_header
    %s12 = sphi 0, %s16
    %p13 = scmp.ge.s32.totalorder %s12, 4
    %s19 = sphi 0, %s31
    %s20 = sphi 0, %s27
    %s21 = sphi 0, %s19
    %s22 = sphi 0, %s20
    %s23 = sphi 0, %s21
    %s24 = sphi 0, %s22
    %s36 = sphi 0, %s38
    %s39 = sphi 0, %s36
    %s40 = sphi 0, %s39
    %s56 = sphi 0, %s40
    %s68 = sphi 0, %s70
    %s71 = sphi 0, %s68
    %s72 = sphi 0, %s71
    %s88 = sphi 0, %s72
    %s92 = sphi 0, %s92
    %s94 = sphi 0, %s92
    %s95 = sphi 0, %s94
    %s109 = sphi 0, %s95
    %s117 = sphi 0, %s119
    %s120 = sphi 0, %s117
    %s121 = sphi 0, %s120
    %s137 = sphi 0, %s121
    %s143 = sphi 0, %s145
    %s146 = sphi 0, %s143
    %s147 = sphi 0, %s146
    %s163 = sphi 0, %s147
    %s169 = sphi 0, %s171
    %s172 = sphi 0, %s169
    %s173 = sphi 0, %s172
    %s189 = sphi 0, %s173
  $region4: #{resnet1d_forward.17} parent=0 // loop_header_branch
    %15 = sbr.rel (%p13) target = $region8
  $region5: #{resnet1d_forward.17} parent=0 // loop_body
    %s17 = ssub.s32 %s12, 1
    %s18 = ssub.s32 %s12, 2
    %s25 = sadd.s32 1, %s20
    %p26 = scmp.ge.s32.totalorder %s25, 1
    %s27 = scalar_select %p26, 0, %s25
    %s28 = sadd.s32 1, %s19
    %s29 = scalar_select %p26, %s28, %s19
    %p30 = scmp.ge.s32.totalorder %s29, 2
    %s31 = scalar_select %p30, 0, %s29
    %s32 = ssub.s32 %s19, %s31
    %s33 = ssub.s32 %s20, %s27
    %s34 = sor.u32 %s32, %s33
    %p35 = scmp.eq.s32.totalorder %s34, 0
    %s37 = sadd.s32 %s36, 1
    %s38 = scalar_select %p35, %s36, %s37
    %p41 = pneg %p35
    %p42 = scmp.eq.s32.totalorder %s12, 1
    %p43 = por %p41, %p42
    %p44 = scmp.ne.s32.totalorder %s36, %s39
    %p45 = scmp.eq.s32.totalorder %s12, 0
    %p46 = por %p44, %p45
    %p47 = scmp.ne.s32.totalorder %s36, %s39
    %p48 = scmp.eq.s32.totalorder %s17, 1
    %p49 = por %p47, %p48
    %p50 = scmp.ne.s32.totalorder %s39, %s40
    %p51 = scmp.eq.s32.totalorder %s17, 0
    %p52 = por %p50, %p51
    %p53 = scmp.ne.s32.totalorder %s39, %s40
    %p54 = scmp.eq.s32.totalorder %s18, 1
    %p55 = por %p53, %p54
    %p57 = scmp.ne.s32.totalorder %s40, %s56
    %p58 = scmp.eq.s32.totalorder %s18, 0
    %p59 = por %p57, %p58
    %s60 = sadd.s32 %s20, 1
    %s61 = smul.u32 %s60, 4
    %s62 = sadd.s32 %s27, 1
    %s63 = smul.u32 %s62, 4
    %s64 = ssub.s32 %s19, %s31
    %s65 = ssub.s32 %s61, %s63
    %s66 = sor.u32 %s64, %s65
    %p67 = scmp.eq.s32.totalorder %s66, 0
    %s69 = sadd.s32 %s68, 1
    %s70 = scalar_select %p67, %s68, %s69
    %p73 = pneg %p67
    %p74 = scmp.eq.s32.totalorder %s12, 1
    %p75 = por %p73, %p74
    %p76 = scmp.ne.s32.totalorder %s68, %s71
    %p77 = scmp.eq.s32.totalorder %s12, 0
    %p78 = por %p76, %p77
    %p79 = scmp.ne.s32.totalorder %s68, %s71
    %p80 = scmp.eq.s32.totalorder %s17, 1
    %p81 = por %p79, %p80
    %p82 = scmp.ne.s32.totalorder %s71, %s72
    %p83 = scmp.eq.s32.totalorder %s17, 0
    %p84 = por %p82, %p83
    %p85 = scmp.ne.s32.totalorder %s71, %s72
    %p86 = scmp.eq.s32.totalorder %s18, 1
    %p87 = por %p85, %p86
    %p89 = scmp.ne.s32.totalorder %s72, %s88
    %p90 = scmp.eq.s32.totalorder %s18, 0
    %p91 = por %p89, %p90
    %s93 = sadd.s32 %s92, 1
    %p96 = scmp.eq.s32.totalorder %s12, 1
    %p97 = scmp.ne.s32.totalorder %s92, %s94
    %p98 = scmp.eq.s32.totalorder %s12, 0
    %p99 = por %p97, %p98
    %p100 = scmp.ne.s32.totalorder %s92, %s94
    %p101 = scmp.eq.s32.totalorder %s17, 1
    %p102 = por %p100, %p101
    %p103 = scmp.ne.s32.totalorder %s94, %s95
    %p104 = scmp.eq.s32.totalorder %s17, 0
    %p105 = por %p103, %p104
    %p106 = scmp.ne.s32.totalorder %s94, %s95
    %p107 = scmp.eq.s32.totalorder %s18, 1
    %p108 = por %p106, %p107
    %p110 = scmp.ne.s32.totalorder %s95, %s109
    %p111 = scmp.eq.s32.totalorder %s18, 0
    %p112 = por %p110, %p111
    %s113 = ssub.s32 %s19, %s31
    %s114 = ssub.s32 %s20, %s27
    %s115 = sor.u32 %s113, %s114
    %p116 = scmp.eq.s32.totalorder %s115, 0
    %s118 = sadd.s32 %s117, 1
    %s119 = scalar_select %p116, %s117, %s118
    %p122 = pneg %p116
    %p123 = scmp.eq.s32.totalorder %s12, 1
    %p124 = por %p122, %p123
    %p125 = scmp.ne.s32.totalorder %s117, %s120
    %p126 = scmp.eq.s32.totalorder %s12, 0
    %p127 = por %p125, %p126
    %p128 = scmp.ne.s32.totalorder %s117, %s120
    %p129 = scmp.eq.s32.totalorder %s17, 1
    %p130 = por %p128, %p129
    %p131 = scmp.ne.s32.totalorder %s120, %s121
    %p132 = scmp.eq.s32.totalorder %s17, 0
    %p133 = por %p131, %p132
    %p134 = scmp.ne.s32.totalorder %s120, %s121
    %p135 = scmp.eq.s32.totalorder %s18, 1
    %p136 = por %p134, %p135
    %p138 = scmp.ne.s32.totalorder %s121, %s137
    %p139 = scmp.eq.s32.totalorder %s18, 0
    %p140 = por %p138, %p139
    %s141 = ssub.s32 %s19, %s31
    %p142 = scmp.eq.s32.totalorder %s141, 0
    %s144 = sadd.s32 %s143, 1
    %s145 = scalar_select %p142, %s143, %s144
    %p148 = pneg %p142
    %p149 = scmp.eq.s32.totalorder %s12, 1
    %p150 = por %p148, %p149
    %p151 = scmp.ne.s32.totalorder %s143, %s146
    %p152 = scmp.eq.s32.totalorder %s12, 0
    %p153 = por %p151, %p152
    %p154 = scmp.ne.s32.totalorder %s143, %s146
    %p155 = scmp.eq.s32.totalorder %s17, 1
    %p156 = por %p154, %p155
    %p157 = scmp.ne.s32.totalorder %s146, %s147
    %p158 = scmp.eq.s32.totalorder %s17, 0
    %p159 = por %p157, %p158
    %p160 = scmp.ne.s32.totalorder %s146, %s147
    %p161 = scmp.eq.s32.totalorder %s18, 1
    %p162 = por %p160, %p161
    %p164 = scmp.ne.s32.totalorder %s147, %s163
    %p165 = scmp.eq.s32.totalorder %s18, 0
    %p166 = por %p164, %p165
    %s167 = ssub.s32 %s19, %s31
    %p168 = scmp.eq.s32.totalorder %s167, 0
    %s170 = sadd.s32 %s169, 1
    %s171 = scalar_select %p168, %s169, %s170
    %p174 = pneg %p168
    %p175 = scmp.eq.s32.totalorder %s12, 1
    %p176 = por %p174, %p175
    %p177 = scmp.ne.s32.totalorder %s169, %s172
    %p178 = scmp.eq.s32.totalorder %s12, 0
    %p179 = por %p177, %p178
    %p180 = scmp.ne.s32.totalorder %s169, %s172
    %p181 = scmp.eq.s32.totalorder %s17, 1
    %p182 = por %p180, %p181
    %p183 = scmp.ne.s32.totalorder %s172, %s173
    %p184 = scmp.eq.s32.totalorder %s17, 0
    %p185 = por %p183, %p184
    %p186 = scmp.ne.s32.totalorder %s172, %s173
    %p187 = scmp.eq.s32.totalorder %s18, 1
    %p188 = por %p186, %p187
    %p190 = scmp.ne.s32.totalorder %s173, %s189
    %p191 = scmp.eq.s32.totalorder %s18, 0
    %p192 = por %p190, %p191
    %p193 = scmp.le.s32.totalorder 1, %s12
    %p194 = scmp.lt.s32.totalorder %s12, 3
    %p195 = pnand %p193, %p194
    %p196 = pneg %p195
    // Predicated region
    $region9: #{resnet1d_forward.17} parent=5 // pred_check
      _
    $region10: #{resnet1d_forward.17} parent=5 // pred_check_branch
      %198 = sbr.rel (%p195) target = $region12
    $region11: #{resnet1d_forward.17} parent=5 // pred_region
      %s199 = ssub.s32 %s12, 1
      // Predicated region
      $region13: #{resnet1d_forward.17} parent=11 // pred_check
        %p200 = pneg %p105
      $region14: #{resnet1d_forward.17} parent=11 // pred_check_branch
        %202 = sbr.rel (%p200) target = $region16
      $region15: #{resnet1d_forward.17} parent=11 // pred_region
        _
      $region16: #{resnet1d_forward.17} parent=11 // pred_fallthru
        _
    $region12: #{resnet1d_forward.17} parent=5 // pred_fallthru
      _
    %p203 = scmp.lt.s32.totalorder %s12, 2
    // Predicated region
    $region17: #{resnet1d_forward.17} parent=5 // pred_check
      %p204 = pneg %p203
    $region18: #{resnet1d_forward.17} parent=5 // pred_check_branch
      %206 = sbr.rel (%p204) target = $region20
    $region19: #{resnet1d_forward.17} parent=5 // pred_region
      // Predicated region
      $region21: #{resnet1d_forward.17} parent=19 // pred_check
        %p207 = pneg %p46
      $region22: #{resnet1d_forward.17} parent=19 // pred_check_branch
        %209 = sbr.rel (%p207) target = $region24
      $region23: #{resnet1d_forward.17} parent=19 // pred_region
        %s210 = smul.u32 4, %s20
        %s211 = ssub.s32 5, %s210
        %p212 = scmp.lt.s32.totalorder %s211, 4
        %s213 = scalar_select %p212, %s211, 4
        %s214 = smul.u32 64, %s213
        %p215 = scmp.lt.s32.totalorder %s19, 1
        %s216 = scalar_select %p215, %s19, 1
        %p217 = scmp.lt.s32.totalorder %s210, 4
        %s218 = scalar_select %p217, %s210, 4
        %s219 = smul.addr %s216, 5
        %s220 = sadd.s32 %s218, %s219
        %s221 = smul.addr %s220, 4
        %s222 = scalar_lea.vmem %s0, %s221
        %s223 = smul.u32 4, %s20
        %s224 = ssub.s32 5, %s223
        %p225 = scmp.lt.s32.totalorder %s224, 4
        %s226 = scalar_select %p225, %s224, 4
        %s227 = smul.u32 64, %s226
      $region24: #{resnet1d_forward.17} parent=19 // pred_fallthru
        _
      // Predicated region
      $region25: #{resnet1d_forward.17} parent=19 // pred_check
        %p228 = pneg %p78
      $region26: #{resnet1d_forward.17} parent=19 // pred_check_branch
        %230 = sbr.rel (%p228) target = $region28
      $region27: #{resnet1d_forward.17} parent=19 // pred_region
        %s231 = sadd.s32 %s20, 1
        %s232 = smul.u32 %s231, 4
        %p233 = scmp.lt.s32.totalorder %s19, 1
        %s234 = scalar_select %p233, %s19, 1
        %p235 = scmp.lt.s32.totalorder %s232, 4
        %s236 = scalar_select %p235, %s232, 4
        %s237 = smul.addr %s234, 5
        %s238 = sadd.s32 %s236, %s237
        %s239 = smul.addr %s238, 4
        %s240 = scalar_lea.vmem %s1, %s239
        %s241 = sadd.s32 %s20, 1
        %s242 = smul.u32 %s241, 4
      $region28: #{resnet1d_forward.17} parent=19 // pred_fallthru
        _
    $region20: #{resnet1d_forward.17} parent=5 // pred_fallthru
      _
    %p243 = scmp.le.s32.totalorder 1, %s12
    %p244 = scmp.lt.s32.totalorder %s12, 3
    %p245 = pnand %p243, %p244
    %p246 = pneg %p245
    // Predicated region
    $region29: #{resnet1d_forward.17} parent=5 // pred_check
      _
    $region30: #{resnet1d_forward.17} parent=5 // pred_check_branch
      %248 = sbr.rel (%p245) target = $region32
    $region31: #{resnet1d_forward.17} parent=5 // pred_region
      %s249 = ssub.s32 %s12, 1
      %s250 = smul.u32 4, %s22
      %s251 = ssub.s32 5, %s250
      %p252 = scmp.lt.s32.totalorder %s251, 4
      %s253 = scalar_select %p252, %s251, 4
      %s254 = smul.u32 64, %s253
      %p255 = scmp.lt.s32.totalorder %s21, 1
      %s256 = scalar_select %p255, %s21, 1
      %p257 = scmp.lt.s32.totalorder %s250, 4
      %s258 = scalar_select %p257, %s250, 4
      %s259 = smul.addr %s256, 5
      %s260 = sadd.s32 %s258, %s259
      %s261 = smul.addr %s260, 4
      %s262 = scalar_lea.vmem %s0, %s261
      %p263 = pneg %p52
      %p264 = pneg %p49
      %s265 = sadd.s32 %s22, 1
      %s266 = smul.u32 %s265, 4
      %p267 = scmp.lt.s32.totalorder %s21, 1
      %s268 = scalar_select %p267, %s21, 1
      %p269 = scmp.lt.s32.totalorder %s266, 4
      %s270 = scalar_select %p269, %s266, 4
      %s271 = smul.addr %s268, 5
      %s272 = sadd.s32 %s270, %s271
      %s273 = smul.addr %s272, 4
      %s274 = scalar_lea.vmem %s1, %s273
      %p275 = pneg %p84
      %p276 = pneg %p81
      %p277 = pneg %p105
      %p278 = pneg %p102
      %p279 = pneg %p133
      %p280 = pneg %p130
      %s281 = smul.u32 4, %s22
      %p282 = scmp.lt.s32.totalorder %s21, 1
      %s283 = scalar_select %p282, %s21, 1
      %p284 = scmp.lt.s32.totalorder %s281, 3
      %s285 = scalar_select %p284, %s281, 3
      %s286 = smul.addr %s283, 4
      %s287 = sadd.s32 %s285, %s286
      %s288 = smul.addr %s287, 4
      %s289 = scalar_lea.vmem %s3, %s288
      %p290 = pneg %p159
      %p291 = pneg %p156
      %p292 = scmp.lt.s32.totalorder %s21, 1
      %s293 = scalar_select %p292, %s21, 1
      %s294 = scalar_lea.vmem %s4, %s293
      %p295 = pneg %p185
      %p296 = pneg %p182
      %p297 = scmp.lt.s32.totalorder %s21, 1
      %s298 = scalar_select %p297, %s21, 1
      %s299 = scalar_lea.vmem %s5, %s298
      %s300 = smul.u32 4, %s22
      %s301 = ssub.s32 5, %s300
      %p302 = scmp.lt.s32.totalorder %s301, 4
      %s303 = scalar_select %p302, %s301, 4
      %s304 = smul.u32 64, %s303
      %p305 = scmp.lt.s32.totalorder %s21, 1
      %s306 = scalar_select %p305, %s21, 1
      %p307 = scmp.lt.s32.totalorder %s300, 4
      %s308 = scalar_select %p307, %s300, 4
      %s309 = smul.addr %s306, 5
      %s310 = sadd.s32 %s308, %s309
      %s311 = smul.addr %s310, 4
      %s312 = scalar_lea.vmem %s0, %s311
      %s313 = smul.u32 4, %s22
      %s314 = ssub.s32 5, %s313
      %p315 = scmp.lt.s32.totalorder %s314, 4
      %s316 = scalar_select %p315, %s314, 4
      %s317 = smul.u32 64, %s316
      %s318 = sadd.s32 %s22, 1
      %s319 = smul.u32 %s318, 4
      %p320 = scmp.lt.s32.totalorder %s21, 1
      %s321 = scalar_select %p320, %s21, 1
      %p322 = scmp.lt.s32.totalorder %s319, 4
      %s323 = scalar_select %p322, %s319, 4
      %s324 = smul.addr %s321, 5
      %s325 = sadd.s32 %s323, %s324
      %s326 = smul.addr %s325, 4
      %s327 = scalar_lea.vmem %s1, %s326
      %s328 = sadd.s32 %s22, 1
      %s329 = smul.u32 %s328, 4
      %s330 = smul.u32 4, %s22
      %p331 = scmp.lt.s32.totalorder %s21, 1
      %s332 = scalar_select %p331, %s21, 1
      %p333 = scmp.lt.s32.totalorder %s330, 3
      %s334 = scalar_select %p333, %s330, 3
      %s335 = smul.addr %s332, 4
      %s336 = sadd.s32 %s334, %s335
      %s337 = smul.addr %s336, 4
      %s338 = scalar_lea.vmem %s3, %s337
      %s339 = smul.u32 4, %s22
      %p340 = scmp.lt.s32.totalorder %s21, 1
      %s341 = scalar_select %p340, %s21, 1
      %s342 = scalar_lea.vmem %s4, %s341
      %p343 = scmp.lt.s32.totalorder %s21, 1
      %s344 = scalar_select %p343, %s21, 1
      %s345 = scalar_lea.vmem %s5, %s344
      %p347 = scmp.eq.s32.totalorder %s22, 0
      // Predicated region
      $region33: #{resnet1d_forward.17} parent=31 // pred_check
        %p348 = pneg %p347
      $region34: #{resnet1d_forward.17} parent=31 // pred_check_branch
        %350 = sbr.rel (%p348) target = $region36
      $region35: #{resnet1d_forward.17} parent=31 // pred_region
        %351 = vst [vmem:[%s342] sm:$0x1] 0.0
        %352 = vst [vmem:[%s345] sm:$0x1] 0.0
      $region36: #{resnet1d_forward.17} parent=31 // pred_fallthru
        _
      %v353 = vld [vmem:[%s312] sm:$0xf]
      %v354 = vld [vmem:[%s312 + $0x4] sm:$0xf]
      %v355 = vld [vmem:[%s312 + $0x8] sm:$0xf]
      %v356 = vld [vmem:[%s312 + $0xc] sm:$0xf]
      %v357 = vunpack.c.l.bf16 %v353
      %v358 = vunpack.c.l.bf16 %v354
      %v359 = vunpack.c.l.bf16 %v355
      %v360 = vunpack.c.l.bf16 %v356
      %361 = vst [vmem:[#allocation2] sm:$0xff] %v357
      %362 = vst [vmem:[#allocation2 + $0x8] sm:$0xff] %v358
      %363 = vst [vmem:[#allocation2 + $0x10] sm:$0xff] %v359
      %364 = vst [vmem:[#allocation2 + $0x18] sm:$0xff] %v360
      %v365 = vld [vmem:[%s327] sm:$0xf]
      %v366 = vunpack.c.l.bf16 %v365
      %367 = vst [vmem:[#allocation2 + $0x20] sm:$0xff] %v366
      %v368 = vld [vmem:[#allocation2] sm:$0xff]
      %v369 = vld [vmem:[#allocation2 + $0x8] sm:$0xff]
      %v370 = vld [vmem:[#allocation2 + $0x10] sm:$0xff]
      %v371 = vld [vmem:[#allocation2 + $0x18] sm:$0xff]
      %v372 = vpack.c.bf16 %v369, %v368
      %v373 = vpack.c.bf16 %v371, %v370
      %v374 = vld [vmem:[#allocation2 + $0x1] sm:$0xff]
      %v375 = vld [vmem:[#allocation2 + $0x9] sm:$0xff]
      %v376 = vld [vmem:[#allocation2 + $0x11] sm:$0xff]
      %v377 = vld [vmem:[#allocation2 + $0x19] sm:$0xff]
      %v378 = vpack.c.bf16 %v375, %v374
      %v379 = vpack.c.bf16 %v377, %v376
      %v380 = vld [vmem:[#allocation2 + $0x2] sm:$0xff]
      %v381 = vld [vmem:[#allocation2 + $0xa] sm:$0xff]
      %v382 = vld [vmem:[#allocation2 + $0x12] sm:$0xff]
      %v383 = vld [vmem:[#allocation2 + $0x1a] sm:$0xff]
      %v384 = vpack.c.bf16 %v381, %v380
      %v385 = vpack.c.bf16 %v383, %v382
      %v386 = vld [vmem:[%s2] sm:$0xf]
      %v387 = vld [vmem:[%s2 + $0x4] sm:$0xf]
      %v388 = vld [vmem:[%s2 + $0x8] sm:$0xf]
      %v389 = vld [vmem:[%s2 + $0xc] sm:$0xf]
      %v390 = vld [vmem:[%s2 + $0x10] sm:$0xf]
      %v391 = vld [vmem:[%s2 + $0x14] sm:$0xf]
      %v392 = vld [vmem:[%s2 + $0x18] sm:$0xf]
      %v393 = vld [vmem:[%s2 + $0x1c] sm:$0xf]
      %v394 = vld [vmem:[%s2 + $0x20] sm:$0xf]
      %v395 = vld [vmem:[%s2 + $0x24] sm:$0xf]
      %v396 = vld [vmem:[%s2 + $0x28] sm:$0xf]
      %v397 = vld [vmem:[%s2 + $0x2c] sm:$0xf]
      %v398 = vld [vmem:[%s2 + $0x30] sm:$0xf]
      %v399 = vld [vmem:[%s2 + $0x34] sm:$0xf]
      %v400 = vld [vmem:[%s2 + $0x38] sm:$0xf]
      %v401 = vld [vmem:[%s2 + $0x3c] sm:$0xf]
      %v402 = vld [vmem:[%s2 + $0x40] sm:$0xf]
      %v403 = vld [vmem:[%s2 + $0x44] sm:$0xf]
      %v404 = vld [vmem:[%s2 + $0x48] sm:$0xf]
      %v405 = vld [vmem:[%s2 + $0x4c] sm:$0xf]
      %v406 = vld [vmem:[%s2 + $0x50] sm:$0xf]
      %v407 = vld [vmem:[%s2 + $0x54] sm:$0xf]
      %v408 = vld [vmem:[%s2 + $0x58] sm:$0xf]
      %v409 = vld [vmem:[%s2 + $0x5c] sm:$0xf]
      %v410 = vld [vmem:[%s2 + $0x60] sm:$0xf]
      %v411 = vld [vmem:[%s2 + $0x64] sm:$0xf]
      %v412 = vld [vmem:[%s2 + $0x68] sm:$0xf]
      %v413 = vld [vmem:[%s2 + $0x6c] sm:$0xf]
      %v414 = vld [vmem:[%s2 + $0x70] sm:$0xf]
      %v415 = vld [vmem:[%s2 + $0x74] sm:$0xf]
      %v416 = vld [vmem:[%s2 + $0x78] sm:$0xf]
      %v417 = vld [vmem:[%s2 + $0x7c] sm:$0xf]
      %v418 = vld [vmem:[%s2 + $0x80] sm:$0xf]
      %v419 = vld [vmem:[%s2 + $0x84] sm:$0xf]
      %v420 = vld [vmem:[%s2 + $0x88] sm:$0xf]
      %v421 = vld [vmem:[%s2 + $0x8c] sm:$0xf]
      %v422 = vld [vmem:[%s2 + $0x90] sm:$0xf]
      %v423 = vld [vmem:[%s2 + $0x94] sm:$0xf]
      %v424 = vld [vmem:[%s2 + $0x98] sm:$0xf]
      %v425 = vld [vmem:[%s2 + $0x9c] sm:$0xf]
      %v426 = vld [vmem:[%s2 + $0xa0] sm:$0xf]
      %v427 = vld [vmem:[%s2 + $0xa4] sm:$0xf]
      %v428 = vld [vmem:[%s2 + $0xa8] sm:$0xf]
      %v429 = vld [vmem:[%s2 + $0xac] sm:$0xf]
      %v430 = vld [vmem:[%s2 + $0xb0] sm:$0xf]
      %v431 = vld [vmem:[%s2 + $0xb4] sm:$0xf]
      %v432 = vld [vmem:[%s2 + $0xb8] sm:$0xf]
      %v433 = vld [vmem:[%s2 + $0xbc] sm:$0xf]
      %v482 = vunpack.c.l.b16 %v386
      %v483 = vunpack.c.l.b16 %v387
      %v484 = vunpack.c.l.b16 %v388
      %v485 = vunpack.c.l.b16 %v389
      %v486 = vunpack.c.l.b16 %v390
      %v487 = vunpack.c.l.b16 %v391
      %v488 = vunpack.c.l.b16 %v392
      %v489 = vunpack.c.l.b16 %v393
      %v490 = vunpack.c.l.b16 %v394
      %v491 = vunpack.c.l.b16 %v395
      %v492 = vunpack.c.l.b16 %v396
      %v493 = vunpack.c.l.b16 %v397
      %v494 = vunpack.c.l.b16 %v398
      %v495 = vunpack.c.l.b16 %v399
      %v496 = vunpack.c.l.b16 %v400
      %v497 = vunpack.c.l.b16 %v401
      %v498 = vunpack.c.l.b16 %v402
      %v499 = vunpack.c.l.b16 %v403
      %v500 = vunpack.c.l.b16 %v404
      %v501 = vunpack.c.l.b16 %v405
      %v502 = vunpack.c.l.b16 %v406
      %v503 = vunpack.c.l.b16 %v407
      %v504 = vunpack.c.l.b16 %v408
      %v505 = vunpack.c.l.b16 %v409
      %v506 = vunpack.c.l.b16 %v410
      %v507 = vunpack.c.l.b16 %v411
      %v508 = vunpack.c.l.b16 %v412
      %v509 = vunpack.c.l.b16 %v413
      %v510 = vunpack.c.l.b16 %v414
      %v511 = vunpack.c.l.b16 %v415
      %v512 = vunpack.c.l.b16 %v416
      %v513 = vunpack.c.l.b16 %v417
      %v514 = vunpack.c.l.b16 %v418
      %v515 = vunpack.c.l.b16 %v419
      %v516 = vunpack.c.l.b16 %v420
      %v517 = vunpack.c.l.b16 %v421
      %v518 = vunpack.c.l.b16 %v422
      %v519 = vunpack.c.l.b16 %v423
      %v520 = vunpack.c.l.b16 %v424
      %v521 = vunpack.c.l.b16 %v425
      %v522 = vunpack.c.l.b16 %v426
      %v523 = vunpack.c.l.b16 %v427
      %v524 = vunpack.c.l.b16 %v428
      %v525 = vunpack.c.l.b16 %v429
      %v526 = vunpack.c.l.b16 %v430
      %v527 = vunpack.c.l.b16 %v431
      %v528 = vunpack.c.l.b16 %v432
      %v529 = vunpack.c.l.b16 %v433
      %v530 = vpack.c.b16 %v483, %v482
      %v531 = vpack.c.b16 %v485, %v484
      %v532 = vpack.c.b16 %v487, %v486
      %v533 = vpack.c.b16 %v489, %v488
      %v534 = vpack.c.b16 %v491, %v490
      %v535 = vpack.c.b16 %v493, %v492
      %v536 = vpack.c.b16 %v495, %v494
      %v537 = vpack.c.b16 %v497, %v496
      %v538 = vpack.c.b16 %v499, %v498
      %v539 = vpack.c.b16 %v501, %v500
      %v540 = vpack.c.b16 %v503, %v502
      %v541 = vpack.c.b16 %v505, %v504
      %v542 = vpack.c.b16 %v507, %v506
      %v543 = vpack.c.b16 %v509, %v508
      %v544 = vpack.c.b16 %v511, %v510
      %v545 = vpack.c.b16 %v513, %v512
      %v546 = vpack.c.b16 %v515, %v514
      %v547 = vpack.c.b16 %v517, %v516
      %v548 = vpack.c.b16 %v519, %v518
      %v549 = vpack.c.b16 %v521, %v520
      %v550 = vpack.c.b16 %v523, %v522
      %v551 = vpack.c.b16 %v525, %v524
      %v552 = vpack.c.b16 %v527, %v526
      %v553 = vpack.c.b16 %v529, %v528
      %578 = vmatprep.subr.bf16.mxu0 0
      %579 = vmatpush1.bf16.msra.mxu0 %v530
      %580 = vmatprep.subr.bf16.mxu0 0
      %581 = vmatpush1.bf16.msra.mxu0 %v531
      %582 = vmatprep.subr.bf16.mxu0 0
      %583 = vmatpush1.bf16.msra.mxu0 %v532
      %584 = vmatprep.subr.bf16.mxu0 0
      %585 = vmatpush1.bf16.msra.mxu0 %v533
      %586 = vmatprep.subr.bf16.mxu0 0
      %587 = vmatpush1.bf16.msra.mxu0 %v534
      %588 = vmatprep.subr.bf16.mxu0 0
      %589 = vmatpush1.bf16.msra.mxu0 %v535
      %590 = vmatprep.subr.bf16.mxu0 0
      %591 = vmatpush1.bf16.msra.mxu0 %v536
      %592 = vmatprep.subr.bf16.mxu0 0
      %593 = vmatpush1.bf16.msra.mxu0 %v537
      %594 = vmatprep.subr.bf16.mxu0 0
      %595 = vmatpush1.bf16.msra.mxu0 %v538
      %596 = vmatprep.subr.bf16.mxu0 0
      %597 = vmatpush1.bf16.msra.mxu0 %v539
      %598 = vmatprep.subr.bf16.mxu0 0
      %599 = vmatpush1.bf16.msra.mxu0 %v540
      %600 = vmatprep.subr.bf16.mxu0 0
      %601 = vmatpush1.bf16.msra.mxu0 %v541
      %602 = vmatprep.subr.bf16.mxu0 0
      %603 = vmatpush1.bf16.msra.mxu0 %v542
      %604 = vmatprep.subr.bf16.mxu0 0
      %605 = vmatpush1.bf16.msra.mxu0 %v543
      %606 = vmatprep.subr.bf16.mxu0 0
      %607 = vmatpush1.bf16.msra.mxu0 %v544
      %608 = vmatprep.subr.bf16.mxu0 0
      %609 = vmatpush1.bf16.msra.mxu0 %v545
      %610 = vmatprep.mubr.bf16.mxu0 %v378
      %611 = vmatmul.mubr.bf16.gmra.mrb[0].mxu0 %v372
      %v612 = vpop.f32.mrb[0].mxu0
      %v613 = vadd.f32 0.0, %v612
      %v614 = vpop.f32.mrb[0].mxu0
      %v615 = vpop.f32.mrb[0].mxu0
      %v616 = vadd.f32 0.0, %v615
      %v617 = vpop.f32.mrb[0].mxu0
      %618 = vmatprep.mubr.bf16.mxu0 %v379
      %619 = vmatmul.mubr.bf16.gmra.mrb[0].mxu0 %v373
      %v620 = vpop.f32.mrb[0].mxu0
      %v621 = vadd.f32 0.0, %v620
      %v622 = vpop.f32.mrb[0].mxu0
      %v623 = vpop.f32.mrb[0].mxu0
      %v624 = vadd.f32 0.0, %v623
      %v625 = vpop.f32.mrb[0].mxu0
      %626 = vdwg.mxu0
      %627 = vmatprep.subr.bf16.mxu0 0
      %628 = vmatpush1.bf16.msra.mxu0 %v546
      %629 = vmatprep.subr.bf16.mxu0 0
      %630 = vmatpush1.bf16.msra.mxu0 %v547
      %631 = vmatprep.subr.bf16.mxu0 0
      %632 = vmatpush1.bf16.msra.mxu0 %v548
      %633 = vmatprep.subr.bf16.mxu0 0
      %634 = vmatpush1.bf16.msra.mxu0 %v549
      %635 = vmatprep.subr.bf16.mxu0 0
      %636 = vmatpush1.bf16.msra.mxu0 %v550
      %637 = vmatprep.subr.bf16.mxu0 0
      %638 = vmatpush1.bf16.msra.mxu0 %v551
      %639 = vmatprep.subr.bf16.mxu0 0
      %640 = vmatpush1.bf16.msra.mxu0 %v552
      %641 = vmatprep.subr.bf16.mxu0 0
      %642 = vmatpush1.bf16.msra.mxu0 %v553
      %643 = vmatprep.subr.bf16.mxu0 0
      %644 = vmatpush1.bf16.msra.mxu0 0
      %645 = vmatprep.subr.bf16.mxu0 0
      %646 = vmatpush1.bf16.msra.mxu0 0
      %647 = vmatprep.subr.bf16.mxu0 0
      %648 = vmatpush1.bf16.msra.mxu0 0
      %649 = vmatprep.subr.bf16.mxu0 0
      %650 = vmatpush1.bf16.msra.mxu0 0
      %651 = vmatprep.subr.bf16.mxu0 0
      %652 = vmatpush1.bf16.msra.mxu0 0
      %653 = vmatprep.subr.bf16.mxu0 0
      %654 = vmatpush1.bf16.msra.mxu0 0
      %655 = vmatprep.subr.bf16.mxu0 0
      %656 = vmatpush1.bf16.msra.mxu0 0
      %657 = vmatprep.subr.bf16.mxu0 0
      %658 = vmatpush1.bf16.msra.mxu0 0
      %659 = vmatprep.mubr.bf16.mxu0 0
      %660 = vmatmul.mubr.bf16.gmra.mrb[0].mxu0 %v384
      %v661 = vpop.f32.mrb[0].mxu0
      %v662 = vadd.f32 %v613, %v661
      %v663 = vpop.f32.mrb[0].mxu0
      %v664 = vpop.f32.mrb[0].mxu0
      %v665 = vadd.f32 %v616, %v664
      %v666 = vpop.f32.mrb[0].mxu0
      %667 = vmatprep.mubr.bf16.mxu0 0
      %668 = vmatmul.mubr.bf16.gmra.mrb[0].mxu0 %v385
      %v669 = vpop.f32.mrb[0].mxu0
      %v670 = vadd.f32 %v621, %v669
      %v671 = vpop.f32.mrb[0].mxu0
      %v672 = vpop.f32.mrb[0].mxu0
      %v673 = vadd.f32 %v624, %v672
      %v674 = vpop.f32.mrb[0].mxu0
      %675 = vdwg.mxu0
      %v676 = vpack.c.bf16 %v665, %v662
      %v677 = vpack.c.bf16 %v673, %v670
      %v680 = vunpack.c.l.b16 %v676
      %v681 = vunpack.c.h.b16 %v676
      %v682 = vunpack.c.l.b16 %v677
      %v683 = vunpack.c.h.b16 %v677
      %v684 = vpack.c.b16 %v680, %v680
      %v685 = vpack.c.b16 %v681, %v681
      %v686 = vpack.c.b16 %v682, %v682
      %v687 = vpack.c.b16 %v683, %v683
      %692 = vst [vmem:[%s338] sm:$0xf] %v684
      %693 = vst [vmem:[%s338 + $0x4] sm:$0xf] %v685
      %694 = vst [vmem:[%s338 + $0x8] sm:$0xf] %v686
      %695 = vst [vmem:[%s338 + $0xc] sm:$0xf] %v687
      // Predicated region
      $region37: #{resnet1d_forward.17} parent=31 // pred_check
        %p696 = pneg %p347
      $region38: #{resnet1d_forward.17} parent=31 // pred_check_branch
        %698 = sbr.rel (%p696) target = $region40
      $region39: #{resnet1d_forward.17} parent=31 // pred_region
        %v699 = vlaneseq
        %v700 = vshrl.u32 %v699, 7
        %v701 = vadd.s32 %v700, 8
        %v702 = vadd.s32 %v700, 16
        %v703 = vadd.s32 %v700, 24
        %vm704 = vcmp.lt.s32.totalorder %v700, 25
        %vm705 = vcmp.lt.s32.totalorder %v701, 25
        %vm706 = vcmp.lt.s32.totalorder %v702, 25
        %vm707 = vcmp.lt.s32.totalorder %v703, 25
        %v708 = vsel %vm704, 1, 0
        %v709 = vsel %vm705, 1, 0
        %v710 = vsel %vm706, 1, 0
        %v711 = vsel %vm707, 1, 0
        %vm712 = vcmp.eq.s32.totalorder %v708, 1
        %vm713 = vcmp.eq.s32.totalorder %v709, 1
        %vm714 = vcmp.eq.s32.totalorder %v710, 1
        %vm715 = vcmp.eq.s32.totalorder %v711, 1
        %v716 = vsel %vm712, %v662, 0.0
        %v717 = vsel %vm713, %v665, 0.0
        %v718 = vsel %vm714, %v670, 0.0
        %v719 = vsel %vm715, %v673, 0.0
        %v720 = vld [vmem:[%s342] sm:$0x1]
        %v721 = vadd.f32 %v716, %v717
        %v722 = vadd.f32 %v721, %v718
        %v723 = vadd.f32 %v722, %v719
        %v724 = vrot.slane %v723, 4
        %v725 = vadd.f32 %v723, %v724
        %v726 = vrot.slane %v725, 2
        %v727 = vadd.f32 %v725, %v726
        %v728 = vrot.slane %v727, 1
        %v729 = vadd.f32 %v727, %v728
        %v730 = vadd.f32 %v720, %v729
        %731 = vst [vmem:[%s342] sm:$0x1] %v730
        %v732 = vld [vmem:[%s345] sm:$0x1]
        %v733 = vmul.f32 %v716, %v716
        %v734 = vmul.f32 %v717, %v717
        %v735 = vmul.f32 %v718, %v718
        %v736 = vmul.f32 %v719, %v719
        %v737 = vadd.f32 %v733, %v734
        %v738 = vadd.f32 %v737, %v735
        %v739 = vadd.f32 %v738, %v736
        %v740 = vrot.slane %v739, 4
        %v741 = vadd.f32 %v739, %v740
        %v742 = vrot.slane %v741, 2
        %v743 = vadd.f32 %v741, %v742
        %v744 = vrot.slane %v743, 1
        %v745 = vadd.f32 %v743, %v744
        %v746 = vadd.f32 %v732, %v745
        %747 = vst [vmem:[%s345] sm:$0x1] %v746
      $region40: #{resnet1d_forward.17} parent=31 // pred_fallthru
        _
      %p748 = scmp.ne.s32.totalorder %s22, 0
      // Predicated region
      $region41: #{resnet1d_forward.17} parent=31 // pred_check
        %p749 = pneg %p748
      $region42: #{resnet1d_forward.17} parent=31 // pred_check_branch
        %751 = sbr.rel (%p749) target = $region44
      $region43: #{resnet1d_forward.17} parent=31 // pred_region
        %v752 = vld [vmem:[%s342] sm:$0x1]
        %v753 = vadd.f32 %v662, %v665
        %v754 = vadd.f32 %v753, %v670
        %v755 = vadd.f32 %v754, %v673
        %v756 = vrot.slane %v755, 4
        %v757 = vadd.f32 %v755, %v756
        %v758 = vrot.slane %v757, 2
        %v759 = vadd.f32 %v757, %v758
        %v760 = vrot.slane %v759, 1
        %v761 = vadd.f32 %v759, %v760
        %v762 = vadd.f32 %v752, %v761
        %763 = vst [vmem:[%s342] sm:$0x1] %v762
        %v764 = vld [vmem:[%s345] sm:$0x1]
        %v765 = vmul.f32 %v662, %v662
        %v766 = vmul.f32 %v665, %v665
        %v767 = vmul.f32 %v670, %v670
        %v768 = vmul.f32 %v673, %v673
        %v769 = vadd.f32 %v765, %v766
        %v770 = vadd.f32 %v769, %v767
        %v771 = vadd.f32 %v770, %v768
        %v772 = vrot.slane %v771, 4
        %v773 = vadd.f32 %v771, %v772
        %v774 = vrot.slane %v773, 2
        %v775 = vadd.f32 %v773, %v774
        %v776 = vrot.slane %v775, 1
        %v777 = vadd.f32 %v775, %v776
        %v778 = vadd.f32 %v764, %v777
        %779 = vst [vmem:[%s345] sm:$0x1] %v778
      $region44: #{resnet1d_forward.17} parent=31 // pred_fallthru
        _
      %s780 = smul.u32 4, %s22
      %p781 = scmp.lt.s32.totalorder %s21, 1
      %s782 = scalar_select %p781, %s21, 1
      %p783 = scmp.lt.s32.totalorder %s780, 3
      %s784 = scalar_select %p783, %s780, 3
      %s785 = smul.addr %s782, 4
      %s786 = sadd.s32 %s784, %s785
      %s787 = smul.addr %s786, 4
      %s788 = scalar_lea.vmem %s3, %s787
      %p789 = scmp.lt.s32.totalorder %s21, 1
      %s790 = scalar_select %p789, %s21, 1
      %s791 = scalar_lea.vmem %s4, %s790
      %p792 = scmp.lt.s32.totalorder %s21, 1
      %s793 = scalar_select %p792, %s21, 1
      %s794 = scalar_lea.vmem %s5, %s793
      // Predicated region
      $region45: #{resnet1d_forward.17} parent=31 // pred_check
        %p795 = pneg %p130
      $region46: #{resnet1d_forward.17} parent=31 // pred_check_branch
        %797 = sbr.rel (%p795) target = $region48
      $region47: #{resnet1d_forward.17} parent=31 // pred_region
        %s798 = smul.u32 4, %s22
      $region48: #{resnet1d_forward.17} parent=31 // pred_fallthru
        _
      // Predicated region
      $region49: #{resnet1d_forward.17} parent=31 // pred_check
        %p799 = pneg %p156
      $region50: #{resnet1d_forward.17} parent=31 // pred_check_branch
        %801 = sbr.rel (%p799) target = $region52
      $region51: #{resnet1d_forward.17} parent=31 // pred_region
        _
      $region52: #{resnet1d_forward.17} parent=31 // pred_fallthru
        _
      // Predicated region
      $region53: #{resnet1d_forward.17} parent=31 // pred_check
        %p802 = pneg %p182
      $region54: #{resnet1d_forward.17} parent=31 // pred_check_branch
        %804 = sbr.rel (%p802) target = $region56
      $region55: #{resnet1d_forward.17} parent=31 // pred_region
        _
      $region56: #{resnet1d_forward.17} parent=31 // pred_fallthru
        _
    $region32: #{resnet1d_forward.17} parent=5 // pred_fallthru
      _
    %p805 = scmp.le.s32.totalorder 2, %s12
    // Predicated region
    $region57: #{resnet1d_forward.17} parent=5 // pred_check
      %p806 = pneg %p805
    $region58: #{resnet1d_forward.17} parent=5 // pred_check_branch
      %808 = sbr.rel (%p806) target = $region60
    $region59: #{resnet1d_forward.17} parent=5 // pred_region
      %s809 = ssub.s32 %s12, 2
      // Predicated region
      $region61: #{resnet1d_forward.17} parent=59 // pred_check
        %p810 = pneg %p136
      $region62: #{resnet1d_forward.17} parent=59 // pred_check_branch
        %812 = sbr.rel (%p810) target = $region64
      $region63: #{resnet1d_forward.17} parent=59 // pred_region
        %s813 = smul.u32 4, %s24
        %p814 = scmp.lt.s32.totalorder %s23, 1
        %s815 = scalar_select %p814, %s23, 1
        %p816 = scmp.lt.s32.totalorder %s813, 3
        %s817 = scalar_select %p816, %s813, 3
        %s818 = smul.addr %s815, 4
        %s819 = sadd.s32 %s817, %s818
        %s820 = smul.addr %s819, 4
        %s821 = scalar_lea.vmem %s3, %s820
      $region64: #{resnet1d_forward.17} parent=59 // pred_fallthru
        _
      // Predicated region
      $region65: #{resnet1d_forward.17} parent=59 // pred_check
        %p822 = pneg %p162
      $region66: #{resnet1d_forward.17} parent=59 // pred_check_branch
        %824 = sbr.rel (%p822) target = $region68
      $region67: #{resnet1d_forward.17} parent=59 // pred_region
        %p825 = scmp.lt.s32.totalorder %s23, 1
        %s826 = scalar_select %p825, %s23, 1
        %s827 = scalar_lea.vmem %s4, %s826
      $region68: #{resnet1d_forward.17} parent=59 // pred_fallthru
        _
      // Predicated region
      $region69: #{resnet1d_forward.17} parent=59 // pred_check
        %p828 = pneg %p188
      $region70: #{resnet1d_forward.17} parent=59 // pred_check_branch
        %830 = sbr.rel (%p828) target = $region72
      $region71: #{resnet1d_forward.17} parent=59 // pred_region
        %p831 = scmp.lt.s32.totalorder %s23, 1
        %s832 = scalar_select %p831, %s23, 1
        %s833 = scalar_lea.vmem %s5, %s832
      $region72: #{resnet1d_forward.17} parent=59 // pred_fallthru
        _
    $region60: #{resnet1d_forward.17} parent=5 // pred_fallthru
      _
  $region6: #{resnet1d_forward.17} parent=0 // loop_footer
    %s16 = sadd.s32 1, %s12
  $region7: #{resnet1d_forward.17} parent=0 // loop_footer_branch
    %11 = sbr.rel target = $region3
  $region8: #{resnet1d_forward.17} parent=0 // loop_exit
    _

// kernel: resnet1d_forward.22
$region0: #{resnet1d_forward.22}
  #allocation0 [shape = 'u32[]', space=smem, size = 0x4, offset = 0x4, fixed_abs, tag = 'smem constant byte address 0x4 - core index']
  #allocation1 [shape = 'u32[144,128]{1,0:T(1,128)}', space=vmem, size = 0x12000, scoped, tag = 'internal scratch']
  %s0 = inlined_call_operand.vmem [shape: bf16[2,16,128], index: 0, kind: input, shape index: {}]
  %s1 = inlined_call_operand.vmem [shape: f32[1,128], index: 1, kind: input, shape index: {}]
  %s2 = inlined_call_operand.vmem [shape: f32[1,128], index: 2, kind: input, shape index: {}]
  %s3 = inlined_call_operand.vmem [shape: bf16[2,16,128], index: 3, kind: output, shape index: {}]
  %s4 = sld [smem:[#allocation0]]
  $region45: #{resnet1d_forward.22} parent=0
    _
  %s6 = ssub.s32 1, %s4
  %s7 = scalar_select 0, %s6, %s4
  loop: start=0, step=1, limit=4
  $region2: #{resnet1d_forward.22} parent=0 // loop_pre_header
    _
  $region3: #{resnet1d_forward.22} parent=0 // loop_header
    %s9 = sphi 0, %s13
    %p10 = scmp.ge.s32.totalorder %s9, 4
    %s16 = sphi 0, %s28
    %s17 = sphi 0, %s24
    %s18 = sphi 0, %s16
    %s19 = sphi 0, %s17
    %s20 = sphi 0, %s18
    %s21 = sphi 0, %s19
    %s33 = sphi 0, %s35
    %s36 = sphi 0, %s33
    %s37 = sphi 0, %s36
    %s53 = sphi 0, %s37
    %s57 = sphi 0, %s57
    %s59 = sphi 0, %s57
    %s60 = sphi 0, %s59
    %s74 = sphi 0, %s60
    %s78 = sphi 0, %s78
    %s80 = sphi 0, %s78
    %s81 = sphi 0, %s80
    %s95 = sphi 0, %s81
    %s103 = sphi 0, %s105
    %s106 = sphi 0, %s103
    %s107 = sphi 0, %s106
    %s123 = sphi 0, %s107
  $region4: #{resnet1d_forward.22} parent=0 // loop_header_branch
    %12 = sbr.rel (%p10) target = $region8
  $region5: #{resnet1d_forward.22} parent=0 // loop_body
    %s14 = ssub.s32 %s9, 1
    %s15 = ssub.s32 %s9, 2
    %s22 = sadd.s32 1, %s17
    %p23 = scmp.ge.s32.totalorder %s22, 1
    %s24 = scalar_select %p23, 0, %s22
    %s25 = sadd.s32 1, %s16
    %s26 = scalar_select %p23, %s25, %s16
    %p27 = scmp.ge.s32.totalorder %s26, 2
    %s28 = scalar_select %p27, 0, %s26
    %s29 = ssub.s32 %s16, %s28
    %s30 = ssub.s32 %s17, %s24
    %s31 = sor.u32 %s29, %s30
    %p32 = scmp.eq.s32.totalorder %s31, 0
    %s34 = sadd.s32 %s33, 1
    %s35 = scalar_select %p32, %s33, %s34
    %p38 = pneg %p32
    %p39 = scmp.eq.s32.totalorder %s9, 1
    %p40 = por %p38, %p39
    %p41 = scmp.ne.s32.totalorder %s33, %s36
    %p42 = scmp.eq.s32.totalorder %s9, 0
    %p43 = por %p41, %p42
    %p44 = scmp.ne.s32.totalorder %s33, %s36
    %p45 = scmp.eq.s32.totalorder %s14, 1
    %p46 = por %p44, %p45
    %p47 = scmp.ne.s32.totalorder %s36, %s37
    %p48 = scmp.eq.s32.totalorder %s14, 0
    %p49 = por %p47, %p48
    %p50 = scmp.ne.s32.totalorder %s36, %s37
    %p51 = scmp.eq.s32.totalorder %s15, 1
    %p52 = por %p50, %p51
    %p54 = scmp.ne.s32.totalorder %s37, %s53
    %p55 = scmp.eq.s32.totalorder %s15, 0
    %p56 = por %p54, %p55
    %s58 = sadd.s32 %s57, 1
    %p61 = scmp.eq.s32.totalorder %s9, 1
    %p62 = scmp.ne.s32.totalorder %s57, %s59
    %p63 = scmp.eq.s32.totalorder %s9, 0
    %p64 = por %p62, %p63
    %p65 = scmp.ne.s32.totalorder %s57, %s59
    %p66 = scmp.eq.s32.totalorder %s14, 1
    %p67 = por %p65, %p66
    %p68 = scmp.ne.s32.totalorder %s59, %s60
    %p69 = scmp.eq.s32.totalorder %s14, 0
    %p70 = por %p68, %p69
    %p71 = scmp.ne.s32.totalorder %s59, %s60
    %p72 = scmp.eq.s32.totalorder %s15, 1
    %p73 = por %p71, %p72
    %p75 = scmp.ne.s32.totalorder %s60, %s74
    %p76 = scmp.eq.s32.totalorder %s15, 0
    %p77 = por %p75, %p76
    %s79 = sadd.s32 %s78, 1
    %p82 = scmp.eq.s32.totalorder %s9, 1
    %p83 = scmp.ne.s32.totalorder %s78, %s80
    %p84 = scmp.eq.s32.totalorder %s9, 0
    %p85 = por %p83, %p84
    %p86 = scmp.ne.s32.totalorder %s78, %s80
    %p87 = scmp.eq.s32.totalorder %s14, 1
    %p88 = por %p86, %p87
    %p89 = scmp.ne.s32.totalorder %s80, %s81
    %p90 = scmp.eq.s32.totalorder %s14, 0
    %p91 = por %p89, %p90
    %p92 = scmp.ne.s32.totalorder %s80, %s81
    %p93 = scmp.eq.s32.totalorder %s15, 1
    %p94 = por %p92, %p93
    %p96 = scmp.ne.s32.totalorder %s81, %s95
    %p97 = scmp.eq.s32.totalorder %s15, 0
    %p98 = por %p96, %p97
    %s99 = ssub.s32 %s16, %s28
    %s100 = ssub.s32 %s17, %s24
    %s101 = sor.u32 %s99, %s100
    %p102 = scmp.eq.s32.totalorder %s101, 0
    %s104 = sadd.s32 %s103, 1
    %s105 = scalar_select %p102, %s103, %s104
    %p108 = pneg %p102
    %p109 = scmp.eq.s32.totalorder %s9, 1
    %p110 = por %p108, %p109
    %p111 = scmp.ne.s32.totalorder %s103, %s106
    %p112 = scmp.eq.s32.totalorder %s9, 0
    %p113 = por %p111, %p112
    %p114 = scmp.ne.s32.totalorder %s103, %s106
    %p115 = scmp.eq.s32.totalorder %s14, 1
    %p116 = por %p114, %p115
    %p117 = scmp.ne.s32.totalorder %s106, %s107
    %p118 = scmp.eq.s32.totalorder %s14, 0
    %p119 = por %p117, %p118
    %p120 = scmp.ne.s32.totalorder %s106, %s107
    %p121 = scmp.eq.s32.totalorder %s15, 1
    %p122 = por %p120, %p121
    %p124 = scmp.ne.s32.totalorder %s107, %s123
    %p125 = scmp.eq.s32.totalorder %s15, 0
    %p126 = por %p124, %p125
    %p127 = scmp.le.s32.totalorder 1, %s9
    %p128 = scmp.lt.s32.totalorder %s9, 3
    %p129 = pnand %p127, %p128
    %p130 = pneg %p129
    // Predicated region
    $region9: #{resnet1d_forward.22} parent=5 // pred_check
      _
    $region10: #{resnet1d_forward.22} parent=5 // pred_check_branch
      %132 = sbr.rel (%p129) target = $region12
    $region11: #{resnet1d_forward.22} parent=5 // pred_region
      %s133 = ssub.s32 %s9, 1
      // Predicated region
      $region13: #{resnet1d_forward.22} parent=11 // pred_check
        %p134 = pneg %p70
      $region14: #{resnet1d_forward.22} parent=11 // pred_check_branch
        %136 = sbr.rel (%p134) target = $region16
      $region15: #{resnet1d_forward.22} parent=11 // pred_region
        _
      $region16: #{resnet1d_forward.22} parent=11 // pred_fallthru
        _
      // Predicated region
      $region17: #{resnet1d_forward.22} parent=11 // pred_check
        %p137 = pneg %p91
      $region18: #{resnet1d_forward.22} parent=11 // pred_check_branch
        %139 = sbr.rel (%p137) target = $region20
      $region19: #{resnet1d_forward.22} parent=11 // pred_region
        _
      $region20: #{resnet1d_forward.22} parent=11 // pred_fallthru
        _
    $region12: #{resnet1d_forward.22} parent=5 // pred_fallthru
      _
    %p140 = scmp.lt.s32.totalorder %s9, 2
    // Predicated region
    $region21: #{resnet1d_forward.22} parent=5 // pred_check
      %p141 = pneg %p140
    $region22: #{resnet1d_forward.22} parent=5 // pred_check_branch
      %143 = sbr.rel (%p141) target = $region24
    $region23: #{resnet1d_forward.22} parent=5 // pred_region
      // Predicated region
      $region25: #{resnet1d_forward.22} parent=23 // pred_check
        %p144 = pneg %p43
      $region26: #{resnet1d_forward.22} parent=23 // pred_check_branch
        %146 = sbr.rel (%p144) target = $region28
      $region27: #{resnet1d_forward.22} parent=23 // pred_region
        %s147 = smul.u32 2, %s17
        %p148 = scmp.lt.s32.totalorder %s16, 1
        %s149 = scalar_select %p148, %s16, 1
        %p150 = scmp.lt.s32.totalorder %s147, 1
        %s151 = scalar_select %p150, %s147, 1
        %s152 = smul.addr %s149, 2
        %s153 = sadd.s32 %s151, %s152
        %s154 = smul.addr %s153, 4
        %s155 = scalar_lea.vmem %s0, %s154
        %s156 = smul.u32 2, %s17
      $region28: #{resnet1d_forward.22} parent=23 // pred_fallthru
        _
    $region24: #{resnet1d_forward.22} parent=5 // pred_fallthru
      _
    %p157 = scmp.le.s32.totalorder 1, %s9
    %p158 = scmp.lt.s32.totalorder %s9, 3
    %p159 = pnand %p157, %p158
    %p160 = pneg %p159
    // Predicated region
    $region29: #{resnet1d_forward.22} parent=5 // pred_check
      _
    $region30: #{resnet1d_forward.22} parent=5 // pred_check_branch
      %162 = sbr.rel (%p159) target = $region32
    $region31: #{resnet1d_forward.22} parent=5 // pred_region
      %s163 = ssub.s32 %s9, 1
      %s164 = smul.u32 2, %s19
      %p165 = scmp.lt.s32.totalorder %s18, 1
      %s166 = scalar_select %p165, %s18, 1
      %p167 = scmp.lt.s32.totalorder %s164, 1
      %s168 = scalar_select %p167, %s164, 1
      %s169 = smul.addr %s166, 2
      %s170 = sadd.s32 %s168, %s169
      %s171 = smul.addr %s170, 4
      %s172 = scalar_lea.vmem %s0, %s171
      %p173 = pneg %p49
      %p174 = pneg %p46
      %p175 = pneg %p70
      %p176 = pneg %p67
      %p177 = pneg %p91
      %p178 = pneg %p88
      %p179 = pneg %p119
      %p180 = pneg %p116
      %s181 = smul.u32 2, %s19
      %p182 = scmp.lt.s32.totalorder %s18, 1
      %s183 = scalar_select %p182, %s18, 1
      %p184 = scmp.lt.s32.totalorder %s181, 1
      %s185 = scalar_select %p184, %s181, 1
      %s186 = smul.addr %s183, 2
      %s187 = sadd.s32 %s185, %s186
      %s188 = smul.addr %s187, 4
      %s189 = scalar_lea.vmem %s3, %s188
      %s190 = smul.u32 2, %s19
      %p191 = scmp.lt.s32.totalorder %s18, 1
      %s192 = scalar_select %p191, %s18, 1
      %p193 = scmp.lt.s32.totalorder %s190, 1
      %s194 = scalar_select %p193, %s190, 1
      %s195 = smul.addr %s192, 2
      %s196 = sadd.s32 %s194, %s195
      %s197 = smul.addr %s196, 4
      %s198 = scalar_lea.vmem %s0, %s197
      %s199 = smul.u32 2, %s19
      %s200 = smul.u32 2, %s19
      %p201 = scmp.lt.s32.totalorder %s18, 1
      %s202 = scalar_select %p201, %s18, 1
      %p203 = scmp.lt.s32.totalorder %s200, 1
      %s204 = scalar_select %p203, %s200, 1
      %s205 = smul.addr %s202, 2
      %s206 = sadd.s32 %s204, %s205
      %s207 = smul.addr %s206, 4
      %s208 = scalar_lea.vmem %s3, %s207
      %s209 = smul.u32 2, %s19
      %v210 = vld [vmem:[%s198] sm:$0xf]
      %v211 = vld [vmem:[%s198 + $0x4] sm:$0xf]
      %v212 = vunpack.c.l.bf16 %v210
      %v213 = vunpack.c.l.bf16 %v211
      %v214 = vld [vmem:[%s1] sm:$0x1]
      %v216 = vlaneseq
      %v217 = vshrl.u32 %v216, 7
      %v218 = vsub.s32 0, %v217
      %v219 = vrot.slane %v214, %v218
      %v221 = vmul.f32 %v212, %v219
      %v222 = vmul.f32 %v213, %v219
      %v223 = vld [vmem:[%s2] sm:$0x1]
      %v225 = vlaneseq
      %v226 = vshrl.u32 %v225, 7
      %v227 = vsub.s32 0, %v226
      %v228 = vrot.slane %v223, %v227
      %v230 = vadd.f32 %v221, %v228
      %v231 = vadd.f32 %v222, %v228
      %v232 = vpack.c.bf16 %v231, %v230
      %v234 = vunpack.c.l.b16 %v232
      %v235 = vunpack.c.h.b16 %v232
      %v236 = vpack.c.b16 %v234, %v234
      %v237 = vpack.c.b16 %v235, %v235
      %240 = vst [vmem:[%s208] sm:$0xf] %v236
      %241 = vst [vmem:[%s208 + $0x4] sm:$0xf] %v237
      %s242 = smul.u32 2, %s19
      %p243 = scmp.lt.s32.totalorder %s18, 1
      %s244 = scalar_select %p243, %s18, 1
      %p245 = scmp.lt.s32.totalorder %s242, 1
      %s246 = scalar_select %p245, %s242, 1
      %s247 = smul.addr %s244, 2
      %s248 = sadd.s32 %s246, %s247
      %s249 = smul.addr %s248, 4
      %s250 = scalar_lea.vmem %s3, %s249
      // Predicated region
      $region33: #{resnet1d_forward.22} parent=31 // pred_check
        %p251 = pneg %p116
      $region34: #{resnet1d_forward.22} parent=31 // pred_check_branch
        %253 = sbr.rel (%p251) target = $region36
      $region35: #{resnet1d_forward.22} parent=31 // pred_region
        %s254 = smul.u32 2, %s19
      $region36: #{resnet1d_forward.22} parent=31 // pred_fallthru
        _
    $region32: #{resnet1d_forward.22} parent=5 // pred_fallthru
      _
    %p255 = scmp.le.s32.totalorder 2, %s9
    // Predicated region
    $region37: #{resnet1d_forward.22} parent=5 // pred_check
      %p256 = pneg %p255
    $region38: #{resnet1d_forward.22} parent=5 // pred_check_branch
      %258 = sbr.rel (%p256) target = $region40
    $region39: #{resnet1d_forward.22} parent=5 // pred_region
      %s259 = ssub.s32 %s9, 2
      // Predicated region
      $region41: #{resnet1d_forward.22} parent=39 // pred_check
        %p260 = pneg %p122
      $region42: #{resnet1d_forward.22} parent=39 // pred_check_branch
        %262 = sbr.rel (%p260) target = $region44
      $region43: #{resnet1d_forward.22} parent=39 // pred_region
        %s263 = smul.u32 2, %s21
        %p264 = scmp.lt.s32.totalorder %s20, 1
        %s265 = scalar_select %p264, %s20, 1
        %p266 = scmp.lt.s32.totalorder %s263, 1
        %s267 = scalar_select %p266, %s263, 1
        %s268 = smul.addr %s265, 2
        %s269 = sadd.s32 %s267, %s268
        %s270 = smul.addr %s269, 4
        %s271 = scalar_lea.vmem %s3, %s270
      $region44: #{resnet1d_forward.22} parent=39 // pred_fallthru
        _
    $region40: #{resnet1d_forward.22} parent=5 // pred_fallthru
      _
  $region6: #{resnet1d_forward.22} parent=0 // loop_footer
    %s13 = sadd.s32 1, %s9
  $region7: #{resnet1d_forward.22} parent=0 // loop_footer_branch
    %8 = sbr.rel target = $region3
  $region8: #{resnet1d_forward.22} parent=0 // loop_exit
    _

// kernel: resnet1d_forward.21
$region0: #{resnet1d_forward.21}
  #allocation0 [shape = 'u32[]', space=smem, size = 0x4, offset = 0x4, fixed_abs, tag = 'smem constant byte address 0x4 - core index']
  #allocation1 [shape = 'u32[144,128]{1,0:T(1,128)}', space=vmem, size = 0x12000, scoped, tag = 'internal scratch']
  #allocation2 [shape = 'f32[40,128]{1,0:T(8,128)}', space=vmem, size = 0x5000, scoped, tag = 'scratch operand']
  %s0 = inlined_call_operand.vmem [shape: bf16[2,40,128], index: 0, kind: input, shape index: {}, may-alias: {0,1}]
  %s1 = inlined_call_operand.vmem [shape: bf16[2,40,128], index: 1, kind: input, shape index: {}, may-alias: {0,1}]
  %s2 = inlined_call_operand.vmem [shape: bf16[128,128], index: 2, kind: input, shape index: {}]
  %s3 = inlined_call_operand.vmem [shape: bf16[2,16,128], index: 3, kind: output, shape index: {0}]
  %s4 = inlined_call_operand.vmem [shape: f32[2,1,128], index: 4, kind: output, shape index: {1}]
  %s5 = inlined_call_operand.vmem [shape: f32[2,1,128], index: 5, kind: output, shape index: {2}]
  %6 = xla_tuple %s3, %s4, %s5
  %s7 = sld [smem:[#allocation0]]
  $region73: #{resnet1d_forward.21} parent=0
    _
  %s9 = ssub.s32 1, %s7
  %s10 = scalar_select 0, %s9, %s7
  loop: start=0, step=1, limit=4
  $region2: #{resnet1d_forward.21} parent=0 // loop_pre_header
    _
  $region3: #{resnet1d_forward.21} parent=0 // loop_header
    %s12 = sphi 0, %s16
    %p13 = scmp.ge.s32.totalorder %s12, 4
    %s19 = sphi 0, %s31
    %s20 = sphi 0, %s27
    %s21 = sphi 0, %s19
    %s22 = sphi 0, %s20
    %s23 = sphi 0, %s21
    %s24 = sphi 0, %s22
    %s36 = sphi 0, %s38
    %s39 = sphi 0, %s36
    %s40 = sphi 0, %s39
    %s56 = sphi 0, %s40
    %s68 = sphi 0, %s70
    %s71 = sphi 0, %s68
    %s72 = sphi 0, %s71
    %s88 = sphi 0, %s72
    %s92 = sphi 0, %s92
    %s94 = sphi 0, %s92
    %s95 = sphi 0, %s94
    %s109 = sphi 0, %s95
    %s117 = sphi 0, %s119
    %s120 = sphi 0, %s117
    %s121 = sphi 0, %s120
    %s137 = sphi 0, %s121
    %s143 = sphi 0, %s145
    %s146 = sphi 0, %s143
    %s147 = sphi 0, %s146
    %s163 = sphi 0, %s147
    %s169 = sphi 0, %s171
    %s172 = sphi 0, %s169
    %s173 = sphi 0, %s172
    %s189 = sphi 0, %s173
  $region4: #{resnet1d_forward.21} parent=0 // loop_header_branch
    %15 = sbr.rel (%p13) target = $region8
  $region5: #{resnet1d_forward.21} parent=0 // loop_body
    %s17 = ssub.s32 %s12, 1
    %s18 = ssub.s32 %s12, 2
    %s25 = sadd.s32 1, %s20
    %p26 = scmp.ge.s32.totalorder %s25, 1
    %s27 = scalar_select %p26, 0, %s25
    %s28 = sadd.s32 1, %s19
    %s29 = scalar_select %p26, %s28, %s19
    %p30 = scmp.ge.s32.totalorder %s29, 2
    %s31 = scalar_select %p30, 0, %s29
    %s32 = ssub.s32 %s19, %s31
    %s33 = ssub.s32 %s20, %s27
    %s34 = sor.u32 %s32, %s33
    %p35 = scmp.eq.s32.totalorder %s34, 0
    %s37 = sadd.s32 %s36, 1
    %s38 = scalar_select %p35, %s36, %s37
    %p41 = pneg %p35
    %p42 = scmp.eq.s32.totalorder %s12, 1
    %p43 = por %p41, %p42
    %p44 = scmp.ne.s32.totalorder %s36, %s39
    %p45 = scmp.eq.s32.totalorder %s12, 0
    %p46 = por %p44, %p45
    %p47 = scmp.ne.s32.totalorder %s36, %s39
    %p48 = scmp.eq.s32.totalorder %s17, 1
    %p49 = por %p47, %p48
    %p50 = scmp.ne.s32.totalorder %s39, %s40
    %p51 = scmp.eq.s32.totalorder %s17, 0
    %p52 = por %p50, %p51
    %p53 = scmp.ne.s32.totalorder %s39, %s40
    %p54 = scmp.eq.s32.totalorder %s18, 1
    %p55 = por %p53, %p54
    %p57 = scmp.ne.s32.totalorder %s40, %s56
    %p58 = scmp.eq.s32.totalorder %s18, 0
    %p59 = por %p57, %p58
    %s60 = sadd.s32 %s20, 1
    %s61 = smul.u32 %s60, 4
    %s62 = sadd.s32 %s27, 1
    %s63 = smul.u32 %s62, 4
    %s64 = ssub.s32 %s19, %s31
    %s65 = ssub.s32 %s61, %s63
    %s66 = sor.u32 %s64, %s65
    %p67 = scmp.eq.s32.totalorder %s66, 0
    %s69 = sadd.s32 %s68, 1
    %s70 = scalar_select %p67, %s68, %s69
    %p73 = pneg %p67
    %p74 = scmp.eq.s32.totalorder %s12, 1
    %p75 = por %p73, %p74
    %p76 = scmp.ne.s32.totalorder %s68, %s71
    %p77 = scmp.eq.s32.totalorder %s12, 0
    %p78 = por %p76, %p77
    %p79 = scmp.ne.s32.totalorder %s68, %s71
    %p80 = scmp.eq.s32.totalorder %s17, 1
    %p81 = por %p79, %p80
    %p82 = scmp.ne.s32.totalorder %s71, %s72
    %p83 = scmp.eq.s32.totalorder %s17, 0
    %p84 = por %p82, %p83
    %p85 = scmp.ne.s32.totalorder %s71, %s72
    %p86 = scmp.eq.s32.totalorder %s18, 1
    %p87 = por %p85, %p86
    %p89 = scmp.ne.s32.totalorder %s72, %s88
    %p90 = scmp.eq.s32.totalorder %s18, 0
    %p91 = por %p89, %p90
    %s93 = sadd.s32 %s92, 1
    %p96 = scmp.eq.s32.totalorder %s12, 1
    %p97 = scmp.ne.s32.totalorder %s92, %s94
    %p98 = scmp.eq.s32.totalorder %s12, 0
    %p99 = por %p97, %p98
    %p100 = scmp.ne.s32.totalorder %s92, %s94
    %p101 = scmp.eq.s32.totalorder %s17, 1
    %p102 = por %p100, %p101
    %p103 = scmp.ne.s32.totalorder %s94, %s95
    %p104 = scmp.eq.s32.totalorder %s17, 0
    %p105 = por %p103, %p104
    %p106 = scmp.ne.s32.totalorder %s94, %s95
    %p107 = scmp.eq.s32.totalorder %s18, 1
    %p108 = por %p106, %p107
    %p110 = scmp.ne.s32.totalorder %s95, %s109
    %p111 = scmp.eq.s32.totalorder %s18, 0
    %p112 = por %p110, %p111
    %s113 = ssub.s32 %s19, %s31
    %s114 = ssub.s32 %s20, %s27
    %s115 = sor.u32 %s113, %s114
    %p116 = scmp.eq.s32.totalorder %s115, 0
    %s118 = sadd.s32 %s117, 1
    %s119 = scalar_select %p116, %s117, %s118
    %p122 = pneg %p116
    %p123 = scmp.eq.s32.totalorder %s12, 1
    %p124 = por %p122, %p123
    %p125 = scmp.ne.s32.totalorder %s117, %s120
    %p126 = scmp.eq.s32.totalorder %s12, 0
    %p127 = por %p125, %p126
    %p128 = scmp.ne.s32.totalorder %s117, %s120
    %p129 = scmp.eq.s32.totalorder %s17, 1
    %p130 = por %p128, %p129
    %p131 = scmp.ne.s32.totalorder %s120, %s121
    %p132 = scmp.eq.s32.totalorder %s17, 0
    %p133 = por %p131, %p132
    %p134 = scmp.ne.s32.totalorder %s120, %s121
    %p135 = scmp.eq.s32.totalorder %s18, 1
    %p136 = por %p134, %p135
    %p138 = scmp.ne.s32.totalorder %s121, %s137
    %p139 = scmp.eq.s32.totalorder %s18, 0
    %p140 = por %p138, %p139
    %s141 = ssub.s32 %s19, %s31
    %p142 = scmp.eq.s32.totalorder %s141, 0
    %s144 = sadd.s32 %s143, 1
    %s145 = scalar_select %p142, %s143, %s144
    %p148 = pneg %p142
    %p149 = scmp.eq.s32.totalorder %s12, 1
    %p150 = por %p148, %p149
    %p151 = scmp.ne.s32.totalorder %s143, %s146
    %p152 = scmp.eq.s32.totalorder %s12, 0
    %p153 = por %p151, %p152
    %p154 = scmp.ne.s32.totalorder %s143, %s146
    %p155 = scmp.eq.s32.totalorder %s17, 1
    %p156 = por %p154, %p155
    %p157 = scmp.ne.s32.totalorder %s146, %s147
    %p158 = scmp.eq.s32.totalorder %s17, 0
    %p159 = por %p157, %p158
    %p160 = scmp.ne.s32.totalorder %s146, %s147
    %p161 = scmp.eq.s32.totalorder %s18, 1
    %p162 = por %p160, %p161
    %p164 = scmp.ne.s32.totalorder %s147, %s163
    %p165 = scmp.eq.s32.totalorder %s18, 0
    %p166 = por %p164, %p165
    %s167 = ssub.s32 %s19, %s31
    %p168 = scmp.eq.s32.totalorder %s167, 0
    %s170 = sadd.s32 %s169, 1
    %s171 = scalar_select %p168, %s169, %s170
    %p174 = pneg %p168
    %p175 = scmp.eq.s32.totalorder %s12, 1
    %p176 = por %p174, %p175
    %p177 = scmp.ne.s32.totalorder %s169, %s172
    %p178 = scmp.eq.s32.totalorder %s12, 0
    %p179 = por %p177, %p178
    %p180 = scmp.ne.s32.totalorder %s169, %s172
    %p181 = scmp.eq.s32.totalorder %s17, 1
    %p182 = por %p180, %p181
    %p183 = scmp.ne.s32.totalorder %s172, %s173
    %p184 = scmp.eq.s32.totalorder %s17, 0
    %p185 = por %p183, %p184
    %p186 = scmp.ne.s32.totalorder %s172, %s173
    %p187 = scmp.eq.s32.totalorder %s18, 1
    %p188 = por %p186, %p187
    %p190 = scmp.ne.s32.totalorder %s173, %s189
    %p191 = scmp.eq.s32.totalorder %s18, 0
    %p192 = por %p190, %p191
    %p193 = scmp.le.s32.totalorder 1, %s12
    %p194 = scmp.lt.s32.totalorder %s12, 3
    %p195 = pnand %p193, %p194
    %p196 = pneg %p195
    // Predicated region
    $region9: #{resnet1d_forward.21} parent=5 // pred_check
      _
    $region10: #{resnet1d_forward.21} parent=5 // pred_check_branch
      %198 = sbr.rel (%p195) target = $region12
    $region11: #{resnet1d_forward.21} parent=5 // pred_region
      %s199 = ssub.s32 %s12, 1
      // Predicated region
      $region13: #{resnet1d_forward.21} parent=11 // pred_check
        %p200 = pneg %p105
      $region14: #{resnet1d_forward.21} parent=11 // pred_check_branch
        %202 = sbr.rel (%p200) target = $region16
      $region15: #{resnet1d_forward.21} parent=11 // pred_region
        _
      $region16: #{resnet1d_forward.21} parent=11 // pred_fallthru
        _
    $region12: #{resnet1d_forward.21} parent=5 // pred_fallthru
      _
    %p203 = scmp.lt.s32.totalorder %s12, 2
    // Predicated region
    $region17: #{resnet1d_forward.21} parent=5 // pred_check
      %p204 = pneg %p203
    $region18: #{resnet1d_forward.21} parent=5 // pred_check_branch
      %206 = sbr.rel (%p204) target = $region20
    $region19: #{resnet1d_forward.21} parent=5 // pred_region
      // Predicated region
      $region21: #{resnet1d_forward.21} parent=19 // pred_check
        %p207 = pneg %p46
      $region22: #{resnet1d_forward.21} parent=19 // pred_check_branch
        %209 = sbr.rel (%p207) target = $region24
      $region23: #{resnet1d_forward.21} parent=19 // pred_region
        %s210 = smul.u32 4, %s20
        %s211 = ssub.s32 5, %s210
        %p212 = scmp.lt.s32.totalorder %s211, 4
        %s213 = scalar_select %p212, %s211, 4
        %s214 = smul.u32 64, %s213
        %p215 = scmp.lt.s32.totalorder %s19, 1
        %s216 = scalar_select %p215, %s19, 1
        %p217 = scmp.lt.s32.totalorder %s210, 4
        %s218 = scalar_select %p217, %s210, 4
        %s219 = smul.addr %s216, 5
        %s220 = sadd.s32 %s218, %s219
        %s221 = smul.addr %s220, 4
        %s222 = scalar_lea.vmem %s0, %s221
        %s223 = smul.u32 4, %s20
        %s224 = ssub.s32 5, %s223
        %p225 = scmp.lt.s32.totalorder %s224, 4
        %s226 = scalar_select %p225, %s224, 4
        %s227 = smul.u32 64, %s226
      $region24: #{resnet1d_forward.21} parent=19 // pred_fallthru
        _
      // Predicated region
      $region25: #{resnet1d_forward.21} parent=19 // pred_check
        %p228 = pneg %p78
      $region26: #{resnet1d_forward.21} parent=19 // pred_check_branch
        %230 = sbr.rel (%p228) target = $region28
      $region27: #{resnet1d_forward.21} parent=19 // pred_region
        %s231 = sadd.s32 %s20, 1
        %s232 = smul.u32 %s231, 4
        %p233 = scmp.lt.s32.totalorder %s19, 1
        %s234 = scalar_select %p233, %s19, 1
        %p235 = scmp.lt.s32.totalorder %s232, 4
        %s236 = scalar_select %p235, %s232, 4
        %s237 = smul.addr %s234, 5
        %s238 = sadd.s32 %s236, %s237
        %s239 = smul.addr %s238, 4
        %s240 = scalar_lea.vmem %s1, %s239
        %s241 = sadd.s32 %s20, 1
        %s242 = smul.u32 %s241, 4
      $region28: #{resnet1d_forward.21} parent=19 // pred_fallthru
        _
    $region20: #{resnet1d_forward.21} parent=5 // pred_fallthru
      _
    %p243 = scmp.le.s32.totalorder 1, %s12
    %p244 = scmp.lt.s32.totalorder %s12, 3
    %p245 = pnand %p243, %p244
    %p246 = pneg %p245
    // Predicated region
    $region29: #{resnet1d_forward.21} parent=5 // pred_check
      _
    $region30: #{resnet1d_forward.21} parent=5 // pred_check_branch
      %248 = sbr.rel (%p245) target = $region32
    $region31: #{resnet1d_forward.21} parent=5 // pred_region
      %s249 = ssub.s32 %s12, 1
      %s250 = smul.u32 4, %s22
      %s251 = ssub.s32 5, %s250
      %p252 = scmp.lt.s32.totalorder %s251, 4
      %s253 = scalar_select %p252, %s251, 4
      %s254 = smul.u32 64, %s253
      %p255 = scmp.lt.s32.totalorder %s21, 1
      %s256 = scalar_select %p255, %s21, 1
      %p257 = scmp.lt.s32.totalorder %s250, 4
      %s258 = scalar_select %p257, %s250, 4
      %s259 = smul.addr %s256, 5
      %s260 = sadd.s32 %s258, %s259
      %s261 = smul.addr %s260, 4
      %s262 = scalar_lea.vmem %s0, %s261
      %p263 = pneg %p52
      %p264 = pneg %p49
      %s265 = sadd.s32 %s22, 1
      %s266 = smul.u32 %s265, 4
      %p267 = scmp.lt.s32.totalorder %s21, 1
      %s268 = scalar_select %p267, %s21, 1
      %p269 = scmp.lt.s32.totalorder %s266, 4
      %s270 = scalar_select %p269, %s266, 4
      %s271 = smul.addr %s268, 5
      %s272 = sadd.s32 %s270, %s271
      %s273 = smul.addr %s272, 4
      %s274 = scalar_lea.vmem %s1, %s273
      %p275 = pneg %p84
      %p276 = pneg %p81
      %p277 = pneg %p105
      %p278 = pneg %p102
      %p279 = pneg %p133
      %p280 = pneg %p130
      %s281 = smul.u32 2, %s22
      %p282 = scmp.lt.s32.totalorder %s21, 1
      %s283 = scalar_select %p282, %s21, 1
      %p284 = scmp.lt.s32.totalorder %s281, 1
      %s285 = scalar_select %p284, %s281, 1
      %s286 = smul.addr %s283, 2
      %s287 = sadd.s32 %s285, %s286
      %s288 = smul.addr %s287, 4
      %s289 = scalar_lea.vmem %s3, %s288
      %p290 = pneg %p159
      %p291 = pneg %p156
      %p292 = scmp.lt.s32.totalorder %s21, 1
      %s293 = scalar_select %p292, %s21, 1
      %s294 = scalar_lea.vmem %s4, %s293
      %p295 = pneg %p185
      %p296 = pneg %p182
      %p297 = scmp.lt.s32.totalorder %s21, 1
      %s298 = scalar_select %p297, %s21, 1
      %s299 = scalar_lea.vmem %s5, %s298
      %s300 = smul.u32 4, %s22
      %s301 = ssub.s32 5, %s300
      %p302 = scmp.lt.s32.totalorder %s301, 4
      %s303 = scalar_select %p302, %s301, 4
      %s304 = smul.u32 64, %s303
      %p305 = scmp.lt.s32.totalorder %s21, 1
      %s306 = scalar_select %p305, %s21, 1
      %p307 = scmp.lt.s32.totalorder %s300, 4
      %s308 = scalar_select %p307, %s300, 4
      %s309 = smul.addr %s306, 5
      %s310 = sadd.s32 %s308, %s309
      %s311 = smul.addr %s310, 4
      %s312 = scalar_lea.vmem %s0, %s311
      %s313 = smul.u32 4, %s22
      %s314 = ssub.s32 5, %s313
      %p315 = scmp.lt.s32.totalorder %s314, 4
      %s316 = scalar_select %p315, %s314, 4
      %s317 = smul.u32 64, %s316
      %s318 = sadd.s32 %s22, 1
      %s319 = smul.u32 %s318, 4
      %p320 = scmp.lt.s32.totalorder %s21, 1
      %s321 = scalar_select %p320, %s21, 1
      %p322 = scmp.lt.s32.totalorder %s319, 4
      %s323 = scalar_select %p322, %s319, 4
      %s324 = smul.addr %s321, 5
      %s325 = sadd.s32 %s323, %s324
      %s326 = smul.addr %s325, 4
      %s327 = scalar_lea.vmem %s1, %s326
      %s328 = sadd.s32 %s22, 1
      %s329 = smul.u32 %s328, 4
      %s330 = smul.u32 2, %s22
      %p331 = scmp.lt.s32.totalorder %s21, 1
      %s332 = scalar_select %p331, %s21, 1
      %p333 = scmp.lt.s32.totalorder %s330, 1
      %s334 = scalar_select %p333, %s330, 1
      %s335 = smul.addr %s332, 2
      %s336 = sadd.s32 %s334, %s335
      %s337 = smul.addr %s336, 4
      %s338 = scalar_lea.vmem %s3, %s337
      %s339 = smul.u32 2, %s22
      %p340 = scmp.lt.s32.totalorder %s21, 1
      %s341 = scalar_select %p340, %s21, 1
      %s342 = scalar_lea.vmem %s4, %s341
      %p343 = scmp.lt.s32.totalorder %s21, 1
      %s344 = scalar_select %p343, %s21, 1
      %s345 = scalar_lea.vmem %s5, %s344
      %p347 = scmp.eq.s32.totalorder %s22, 0
      // Predicated region
      $region33: #{resnet1d_forward.21} parent=31 // pred_check
        %p348 = pneg %p347
      $region34: #{resnet1d_forward.21} parent=31 // pred_check_branch
        %350 = sbr.rel (%p348) target = $region36
      $region35: #{resnet1d_forward.21} parent=31 // pred_region
        %351 = vst [vmem:[%s342] sm:$0x1] 0.0
        %352 = vst [vmem:[%s345] sm:$0x1] 0.0
      $region36: #{resnet1d_forward.21} parent=31 // pred_fallthru
        _
      %v353 = vld [vmem:[%s312] sm:$0xf]
      %v354 = vld [vmem:[%s312 + $0x4] sm:$0xf]
      %v355 = vld [vmem:[%s312 + $0x8] sm:$0xf]
      %v356 = vld [vmem:[%s312 + $0xc] sm:$0xf]
      %v357 = vunpack.c.l.bf16 %v353
      %v358 = vunpack.c.l.bf16 %v354
      %v359 = vunpack.c.l.bf16 %v355
      %v360 = vunpack.c.l.bf16 %v356
      %361 = vst [vmem:[#allocation2] sm:$0xff] %v357
      %362 = vst [vmem:[#allocation2 + $0x8] sm:$0xff] %v358
      %363 = vst [vmem:[#allocation2 + $0x10] sm:$0xff] %v359
      %364 = vst [vmem:[#allocation2 + $0x18] sm:$0xff] %v360
      %v365 = vld [vmem:[%s327] sm:$0xf]
      %v366 = vunpack.c.l.bf16 %v365
      %367 = vst [vmem:[#allocation2 + $0x20] sm:$0xff] %v366
      %v368 = vld [vmem:[#allocation2] ss:$2 sm:$0xff]
      %s369 = scalar_lea.vmem [#allocation2], 16
      %v370 = vld [vmem:[%s369] ss:$2 sm:$0xff]
      %v371 = vpack.c.bf16 %v370, %v368
      %v372 = vld [vmem:[%s2] sm:$0xf]
      %v373 = vld [vmem:[%s2 + $0x4] sm:$0xf]
      %v374 = vld [vmem:[%s2 + $0x8] sm:$0xf]
      %v375 = vld [vmem:[%s2 + $0xc] sm:$0xf]
      %v376 = vld [vmem:[%s2 + $0x10] sm:$0xf]
      %v377 = vld [vmem:[%s2 + $0x14] sm:$0xf]
      %v378 = vld [vmem:[%s2 + $0x18] sm:$0xf]
      %v379 = vld [vmem:[%s2 + $0x1c] sm:$0xf]
      %v380 = vld [vmem:[%s2 + $0x20] sm:$0xf]
      %v381 = vld [vmem:[%s2 + $0x24] sm:$0xf]
      %v382 = vld [vmem:[%s2 + $0x28] sm:$0xf]
      %v383 = vld [vmem:[%s2 + $0x2c] sm:$0xf]
      %v384 = vld [vmem:[%s2 + $0x30] sm:$0xf]
      %v385 = vld [vmem:[%s2 + $0x34] sm:$0xf]
      %v386 = vld [vmem:[%s2 + $0x38] sm:$0xf]
      %v387 = vld [vmem:[%s2 + $0x3c] sm:$0xf]
      %v404 = vunpack.c.l.b16 %v372
      %v405 = vunpack.c.l.b16 %v373
      %v406 = vunpack.c.l.b16 %v374
      %v407 = vunpack.c.l.b16 %v375
      %v408 = vunpack.c.l.b16 %v376
      %v409 = vunpack.c.l.b16 %v377
      %v410 = vunpack.c.l.b16 %v378
      %v411 = vunpack.c.l.b16 %v379
      %v412 = vunpack.c.l.b16 %v380
      %v413 = vunpack.c.l.b16 %v381
      %v414 = vunpack.c.l.b16 %v382
      %v415 = vunpack.c.l.b16 %v383
      %v416 = vunpack.c.l.b16 %v384
      %v417 = vunpack.c.l.b16 %v385
      %v418 = vunpack.c.l.b16 %v386
      %v419 = vunpack.c.l.b16 %v387
      %v420 = vpack.c.b16 %v405, %v404
      %v421 = vpack.c.b16 %v407, %v406
      %v422 = vpack.c.b16 %v409, %v408
      %v423 = vpack.c.b16 %v411, %v410
      %v424 = vpack.c.b16 %v413, %v412
      %v425 = vpack.c.b16 %v415, %v414
      %v426 = vpack.c.b16 %v417, %v416
      %v427 = vpack.c.b16 %v419, %v418
      %436 = vmatprep.subr.bf16.mxu0 0
      %437 = vmatpush1.bf16.msra.mxu0 %v420
      %438 = vmatprep.subr.bf16.mxu0 0
      %439 = vmatpush1.bf16.msra.mxu0 %v421
      %440 = vmatprep.subr.bf16.mxu0 0
      %441 = vmatpush1.bf16.msra.mxu0 %v422
      %442 = vmatprep.subr.bf16.mxu0 0
      %443 = vmatpush1.bf16.msra.mxu0 %v423
      %444 = vmatprep.subr.bf16.mxu0 0
      %445 = vmatpush1.bf16.msra.mxu0 %v424
      %446 = vmatprep.subr.bf16.mxu0 0
      %447 = vmatpush1.bf16.msra.mxu0 %v425
      %448 = vmatprep.subr.bf16.mxu0 0
      %449 = vmatpush1.bf16.msra.mxu0 %v426
      %450 = vmatprep.subr.bf16.mxu0 0
      %451 = vmatpush1.bf16.msra.mxu0 %v427
      %452 = vmatprep.subr.bf16.mxu0 0
      %453 = vmatpush1.bf16.msra.mxu0 0
      %454 = vmatprep.subr.bf16.mxu0 0
      %455 = vmatpush1.bf16.msra.mxu0 0
      %456 = vmatprep.subr.bf16.mxu0 0
      %457 = vmatpush1.bf16.msra.mxu0 0
      %458 = vmatprep.subr.bf16.mxu0 0
      %459 = vmatpush1.bf16.msra.mxu0 0
      %460 = vmatprep.subr.bf16.mxu0 0
      %461 = vmatpush1.bf16.msra.mxu0 0
      %462 = vmatprep.subr.bf16.mxu0 0
      %463 = vmatpush1.bf16.msra.mxu0 0
      %464 = vmatprep.subr.bf16.mxu0 0
      %465 = vmatpush1.bf16.msra.mxu0 0
      %466 = vmatprep.subr.bf16.mxu0 0
      %467 = vmatpush1.bf16.msra.mxu0 0
      %468 = vmatprep.mubr.bf16.mxu0 0
      %469 = vmatmul.mubr.bf16.gmra.mrb[0].mxu0 %v371
      %v470 = vpop.f32.mrb[0].mxu0
      %v471 = vadd.f32 0.0, %v470
      %v472 = vpop.f32.mrb[0].mxu0
      %v473 = vpop.f32.mrb[0].mxu0
      %v474 = vadd.f32 0.0, %v473
      %v475 = vpop.f32.mrb[0].mxu0
      %476 = vdwg.mxu0
      %v477 = vpack.c.bf16 %v474, %v471
      %v479 = vunpack.c.l.b16 %v477
      %v480 = vunpack.c.h.b16 %v477
      %v481 = vpack.c.b16 %v479, %v479
      %v482 = vpack.c.b16 %v480, %v480
      %485 = vst [vmem:[%s338] sm:$0xf] %v481
      %486 = vst [vmem:[%s338 + $0x4] sm:$0xf] %v482
      // Predicated region
      $region37: #{resnet1d_forward.21} parent=31 // pred_check
        %p487 = pneg %p347
      $region38: #{resnet1d_forward.21} parent=31 // pred_check_branch
        %489 = sbr.rel (%p487) target = $region40
      $region39: #{resnet1d_forward.21} parent=31 // pred_region
        %v490 = vlaneseq
        %v491 = vshrl.u32 %v490, 7
        %v492 = vadd.s32 %v491, 8
        %vm493 = vcmp.lt.s32.totalorder %v491, 13
        %vm494 = vcmp.lt.s32.totalorder %v492, 13
        %v495 = vsel %vm493, 1, 0
        %v496 = vsel %vm494, 1, 0
        %vm497 = vcmp.eq.s32.totalorder %v495, 1
        %vm498 = vcmp.eq.s32.totalorder %v496, 1
        %v499 = vsel %vm497, %v471, 0.0
        %v500 = vsel %vm498, %v474, 0.0
        %v501 = vld [vmem:[%s342] sm:$0x1]
        %v502 = vadd.f32 %v499, %v500
        %v503 = vrot.slane %v502, 4
        %v504 = vadd.f32 %v502, %v503
        %v505 = vrot.slane %v504, 2
        %v506 = vadd.f32 %v504, %v505
        %v507 = vrot.slane %v506, 1
        %v508 = vadd.f32 %v506, %v507
        %v509 = vadd.f32 %v501, %v508
        %510 = vst [vmem:[%s342] sm:$0x1] %v509
        %v511 = vld [vmem:[%s345] sm:$0x1]
        %v512 = vmul.f32 %v499, %v499
        %v513 = vmul.f32 %v500, %v500
        %v514 = vadd.f32 %v512, %v513
        %v515 = vrot.slane %v514, 4
        %v516 = vadd.f32 %v514, %v515
        %v517 = vrot.slane %v516, 2
        %v518 = vadd.f32 %v516, %v517
        %v519 = vrot.slane %v518, 1
        %v520 = vadd.f32 %v518, %v519
        %v521 = vadd.f32 %v511, %v520
        %522 = vst [vmem:[%s345] sm:$0x1] %v521
      $region40: #{resnet1d_forward.21} parent=31 // pred_fallthru
        _
      %p523 = scmp.ne.s32.totalorder %s22, 0
      // Predicated region
      $region41: #{resnet1d_forward.21} parent=31 // pred_check
        %p524 = pneg %p523
      $region42: #{resnet1d_forward.21} parent=31 // pred_check_branch
        %526 = sbr.rel (%p524) target = $region44
      $region43: #{resnet1d_forward.21} parent=31 // pred_region
        %v527 = vld [vmem:[%s342] sm:$0x1]
        %v528 = vadd.f32 %v471, %v474
        %v529 = vrot.slane %v528, 4
        %v530 = vadd.f32 %v528, %v529
        %v531 = vrot.slane %v530, 2
        %v532 = vadd.f32 %v530, %v531
        %v533 = vrot.slane %v532, 1
        %v534 = vadd.f32 %v532, %v533
        %v535 = vadd.f32 %v527, %v534
        %536 = vst [vmem:[%s342] sm:$0x1] %v535
        %v537 = vld [vmem:[%s345] sm:$0x1]
        %v538 = vmul.f32 %v471, %v471
        %v539 = vmul.f32 %v474, %v474
        %v540 = vadd.f32 %v538, %v539
        %v541 = vrot.slane %v540, 4
        %v542 = vadd.f32 %v540, %v541
        %v543 = vrot.slane %v542, 2
        %v544 = vadd.f32 %v542, %v543
        %v545 = vrot.slane %v544, 1
        %v546 = vadd.f32 %v544, %v545
        %v547 = vadd.f32 %v537, %v546
        %548 = vst [vmem:[%s345] sm:$0x1] %v547
      $region44: #{resnet1d_forward.21} parent=31 // pred_fallthru
        _
      %s549 = smul.u32 2, %s22
      %p550 = scmp.lt.s32.totalorder %s21, 1
      %s551 = scalar_select %p550, %s21, 1
      %p552 = scmp.lt.s32.totalorder %s549, 1
      %s553 = scalar_select %p552, %s549, 1
      %s554 = smul.addr %s551, 2
      %s555 = sadd.s32 %s553, %s554
      %s556 = smul.addr %s555, 4
      %s557 = scalar_lea.vmem %s3, %s556
      %p558 = scmp.lt.s32.totalorder %s21, 1
      %s559 = scalar_select %p558, %s21, 1
      %s560 = scalar_lea.vmem %s4, %s559
      %p561 = scmp.lt.s32.totalorder %s21, 1
      %s562 = scalar_select %p561, %s21, 1
      %s563 = scalar_lea.vmem %s5, %s562
      // Predicated region
      $region45: #{resnet1d_forward.21} parent=31 // pred_check
        %p564 = pneg %p130
      $region46: #{resnet1d_forward.21} parent=31 // pred_check_branch
        %566 = sbr.rel (%p564) target = $region48
      $region47: #{resnet1d_forward.21} parent=31 // pred_region
        %s567 = smul.u32 2, %s22
      $region48: #{resnet1d_forward.21} parent=31 // pred_fallthru
        _
      // Predicated region
      $region49: #{resnet1d_forward.21} parent=31 // pred_check
        %p568 = pneg %p156
      $region50: #{resnet1d_forward.21} parent=31 // pred_check_branch
        %570 = sbr.rel (%p568) target = $region52
      $region51: #{resnet1d_forward.21} parent=31 // pred_region
        _
      $region52: #{resnet1d_forward.21} parent=31 // pred_fallthru
        _
      // Predicated region
      $region53: #{resnet1d_forward.21} parent=31 // pred_check
        %p571 = pneg %p182
      $region54: #{resnet1d_forward.21} parent=31 // pred_check_branch
        %573 = sbr.rel (%p571) target = $region56
      $region55: #{resnet1d_forward.21} parent=31 // pred_region
        _
      $region56: #{resnet1d_forward.21} parent=31 // pred_fallthru
        _
    $region32: #{resnet1d_forward.21} parent=5 // pred_fallthru
      _
    %p574 = scmp.le.s32.totalorder 2, %s12
    // Predicated region
    $region57: #{resnet1d_forward.21} parent=5 // pred_check
      %p575 = pneg %p574
    $region58: #{resnet1d_forward.21} parent=5 // pred_check_branch
      %577 = sbr.rel (%p575) target = $region60
    $region59: #{resnet1d_forward.21} parent=5 // pred_region
      %s578 = ssub.s32 %s12, 2
      // Predicated region
      $region61: #{resnet1d_forward.21} parent=59 // pred_check
        %p579 = pneg %p136
      $region62: #{resnet1d_forward.21} parent=59 // pred_check_branch
        %581 = sbr.rel (%p579) target = $region64
      $region63: #{resnet1d_forward.21} parent=59 // pred_region
        %s582 = smul.u32 2, %s24
        %p583 = scmp.lt.s32.totalorder %s23, 1
        %s584 = scalar_select %p583, %s23, 1
        %p585 = scmp.lt.s32.totalorder %s582, 1
        %s586 = scalar_select %p585, %s582, 1
        %s587 = smul.addr %s584, 2
        %s588 = sadd.s32 %s586, %s587
        %s589 = smul.addr %s588, 4
        %s590 = scalar_lea.vmem %s3, %s589
      $region64: #{resnet1d_forward.21} parent=59 // pred_fallthru
        _
      // Predicated region
      $region65: #{resnet1d_forward.21} parent=59 // pred_check
        %p591 = pneg %p162
      $region66: #{resnet1d_forward.21} parent=59 // pred_check_branch
        %593 = sbr.rel (%p591) target = $region68
      $region67: #{resnet1d_forward.21} parent=59 // pred_region
        %p594 = scmp.lt.s32.totalorder %s23, 1
        %s595 = scalar_select %p594, %s23, 1
        %s596 = scalar_lea.vmem %s4, %s595
      $region68: #{resnet1d_forward.21} parent=59 // pred_fallthru
        _
      // Predicated region
      $region69: #{resnet1d_forward.21} parent=59 // pred_check
        %p597 = pneg %p188
      $region70: #{resnet1d_forward.21} parent=59 // pred_check_branch
        %599 = sbr.rel (%p597) target = $region72
      $region71: #{resnet1d_forward.21} parent=59 // pred_region
        %p600 = scmp.lt.s32.totalorder %s23, 1
        %s601 = scalar_select %p600, %s23, 1
        %s602 = scalar_lea.vmem %s5, %s601
      $region72: #{resnet1d_forward.21} parent=59 // pred_fallthru
        _
    $region60: #{resnet1d_forward.21} parent=5 // pred_fallthru
      _
  $region6: #{resnet1d_forward.21} parent=0 // loop_footer
    %s16 = sadd.s32 1, %s12
  $region7: #{resnet1d_forward.21} parent=0 // loop_footer_branch
    %11 = sbr.rel target = $region3
  $region8: #{resnet1d_forward.21} parent=0 // loop_exit
    _

// kernel: resnet1d_forward.24
$region0: #{resnet1d_forward.24}
  #allocation0 [shape = 'u32[]', space=smem, size = 0x4, offset = 0x4, fixed_abs, tag = 'smem constant byte address 0x4 - core index']
  #allocation1 [shape = 'u32[144,128]{1,0:T(1,128)}', space=vmem, size = 0x12000, scoped, tag = 'internal scratch']
  %s0 = inlined_call_operand.vmem [shape: bf16[2,16,128], index: 0, kind: input, shape index: {}]
  %s1 = inlined_call_operand.vmem [shape: f32[1,128], index: 1, kind: input, shape index: {}]
  %s2 = inlined_call_operand.vmem [shape: f32[1,128], index: 2, kind: input, shape index: {}]
  %s3 = inlined_call_operand.vmem [shape: bf16[2,16,128], index: 3, kind: output, shape index: {}]
  %s4 = sld [smem:[#allocation0]]
  $region45: #{resnet1d_forward.24} parent=0
    _
  %s6 = ssub.s32 1, %s4
  %s7 = scalar_select 0, %s6, %s4
  loop: start=0, step=1, limit=4
  $region2: #{resnet1d_forward.24} parent=0 // loop_pre_header
    _
  $region3: #{resnet1d_forward.24} parent=0 // loop_header
    %s9 = sphi 0, %s13
    %p10 = scmp.ge.s32.totalorder %s9, 4
    %s16 = sphi 0, %s28
    %s17 = sphi 0, %s24
    %s18 = sphi 0, %s16
    %s19 = sphi 0, %s17
    %s20 = sphi 0, %s18
    %s21 = sphi 0, %s19
    %s33 = sphi 0, %s35
    %s36 = sphi 0, %s33
    %s37 = sphi 0, %s36
    %s53 = sphi 0, %s37
    %s57 = sphi 0, %s57
    %s59 = sphi 0, %s57
    %s60 = sphi 0, %s59
    %s74 = sphi 0, %s60
    %s78 = sphi 0, %s78
    %s80 = sphi 0, %s78
    %s81 = sphi 0, %s80
    %s95 = sphi 0, %s81
    %s103 = sphi 0, %s105
    %s106 = sphi 0, %s103
    %s107 = sphi 0, %s106
    %s123 = sphi 0, %s107
  $region4: #{resnet1d_forward.24} parent=0 // loop_header_branch
    %12 = sbr.rel (%p10) target = $region8
  $region5: #{resnet1d_forward.24} parent=0 // loop_body
    %s14 = ssub.s32 %s9, 1
    %s15 = ssub.s32 %s9, 2
    %s22 = sadd.s32 1, %s17
    %p23 = scmp.ge.s32.totalorder %s22, 1
    %s24 = scalar_select %p23, 0, %s22
    %s25 = sadd.s32 1, %s16
    %s26 = scalar_select %p23, %s25, %s16
    %p27 = scmp.ge.s32.totalorder %s26, 2
    %s28 = scalar_select %p27, 0, %s26
    %s29 = ssub.s32 %s16, %s28
    %s30 = ssub.s32 %s17, %s24
    %s31 = sor.u32 %s29, %s30
    %p32 = scmp.eq.s32.totalorder %s31, 0
    %s34 = sadd.s32 %s33, 1
    %s35 = scalar_select %p32, %s33, %s34
    %p38 = pneg %p32
    %p39 = scmp.eq.s32.totalorder %s9, 1
    %p40 = por %p38, %p39
    %p41 = scmp.ne.s32.totalorder %s33, %s36
    %p42 = scmp.eq.s32.totalorder %s9, 0
    %p43 = por %p41, %p42
    %p44 = scmp.ne.s32.totalorder %s33, %s36
    %p45 = scmp.eq.s32.totalorder %s14, 1
    %p46 = por %p44, %p45
    %p47 = scmp.ne.s32.totalorder %s36, %s37
    %p48 = scmp.eq.s32.totalorder %s14, 0
    %p49 = por %p47, %p48
    %p50 = scmp.ne.s32.totalorder %s36, %s37
    %p51 = scmp.eq.s32.totalorder %s15, 1
    %p52 = por %p50, %p51
    %p54 = scmp.ne.s32.totalorder %s37, %s53
    %p55 = scmp.eq.s32.totalorder %s15, 0
    %p56 = por %p54, %p55
    %s58 = sadd.s32 %s57, 1
    %p61 = scmp.eq.s32.totalorder %s9, 1
    %p62 = scmp.ne.s32.totalorder %s57, %s59
    %p63 = scmp.eq.s32.totalorder %s9, 0
    %p64 = por %p62, %p63
    %p65 = scmp.ne.s32.totalorder %s57, %s59
    %p66 = scmp.eq.s32.totalorder %s14, 1
    %p67 = por %p65, %p66
    %p68 = scmp.ne.s32.totalorder %s59, %s60
    %p69 = scmp.eq.s32.totalorder %s14, 0
    %p70 = por %p68, %p69
    %p71 = scmp.ne.s32.totalorder %s59, %s60
    %p72 = scmp.eq.s32.totalorder %s15, 1
    %p73 = por %p71, %p72
    %p75 = scmp.ne.s32.totalorder %s60, %s74
    %p76 = scmp.eq.s32.totalorder %s15, 0
    %p77 = por %p75, %p76
    %s79 = sadd.s32 %s78, 1
    %p82 = scmp.eq.s32.totalorder %s9, 1
    %p83 = scmp.ne.s32.totalorder %s78, %s80
    %p84 = scmp.eq.s32.totalorder %s9, 0
    %p85 = por %p83, %p84
    %p86 = scmp.ne.s32.totalorder %s78, %s80
    %p87 = scmp.eq.s32.totalorder %s14, 1
    %p88 = por %p86, %p87
    %p89 = scmp.ne.s32.totalorder %s80, %s81
    %p90 = scmp.eq.s32.totalorder %s14, 0
    %p91 = por %p89, %p90
    %p92 = scmp.ne.s32.totalorder %s80, %s81
    %p93 = scmp.eq.s32.totalorder %s15, 1
    %p94 = por %p92, %p93
    %p96 = scmp.ne.s32.totalorder %s81, %s95
    %p97 = scmp.eq.s32.totalorder %s15, 0
    %p98 = por %p96, %p97
    %s99 = ssub.s32 %s16, %s28
    %s100 = ssub.s32 %s17, %s24
    %s101 = sor.u32 %s99, %s100
    %p102 = scmp.eq.s32.totalorder %s101, 0
    %s104 = sadd.s32 %s103, 1
    %s105 = scalar_select %p102, %s103, %s104
    %p108 = pneg %p102
    %p109 = scmp.eq.s32.totalorder %s9, 1
    %p110 = por %p108, %p109
    %p111 = scmp.ne.s32.totalorder %s103, %s106
    %p112 = scmp.eq.s32.totalorder %s9, 0
    %p113 = por %p111, %p112
    %p114 = scmp.ne.s32.totalorder %s103, %s106
    %p115 = scmp.eq.s32.totalorder %s14, 1
    %p116 = por %p114, %p115
    %p117 = scmp.ne.s32.totalorder %s106, %s107
    %p118 = scmp.eq.s32.totalorder %s14, 0
    %p119 = por %p117, %p118
    %p120 = scmp.ne.s32.totalorder %s106, %s107
    %p121 = scmp.eq.s32.totalorder %s15, 1
    %p122 = por %p120, %p121
    %p124 = scmp.ne.s32.totalorder %s107, %s123
    %p125 = scmp.eq.s32.totalorder %s15, 0
    %p126 = por %p124, %p125
    %p127 = scmp.le.s32.totalorder 1, %s9
    %p128 = scmp.lt.s32.totalorder %s9, 3
    %p129 = pnand %p127, %p128
    %p130 = pneg %p129
    // Predicated region
    $region9: #{resnet1d_forward.24} parent=5 // pred_check
      _
    $region10: #{resnet1d_forward.24} parent=5 // pred_check_branch
      %132 = sbr.rel (%p129) target = $region12
    $region11: #{resnet1d_forward.24} parent=5 // pred_region
      %s133 = ssub.s32 %s9, 1
      // Predicated region
      $region13: #{resnet1d_forward.24} parent=11 // pred_check
        %p134 = pneg %p70
      $region14: #{resnet1d_forward.24} parent=11 // pred_check_branch
        %136 = sbr.rel (%p134) target = $region16
      $region15: #{resnet1d_forward.24} parent=11 // pred_region
        _
      $region16: #{resnet1d_forward.24} parent=11 // pred_fallthru
        _
      // Predicated region
      $region17: #{resnet1d_forward.24} parent=11 // pred_check
        %p137 = pneg %p91
      $region18: #{resnet1d_forward.24} parent=11 // pred_check_branch
        %139 = sbr.rel (%p137) target = $region20
      $region19: #{resnet1d_forward.24} parent=11 // pred_region
        _
      $region20: #{resnet1d_forward.24} parent=11 // pred_fallthru
        _
    $region12: #{resnet1d_forward.24} parent=5 // pred_fallthru
      _
    %p140 = scmp.lt.s32.totalorder %s9, 2
    // Predicated region
    $region21: #{resnet1d_forward.24} parent=5 // pred_check
      %p141 = pneg %p140
    $region22: #{resnet1d_forward.24} parent=5 // pred_check_branch
      %143 = sbr.rel (%p141) target = $region24
    $region23: #{resnet1d_forward.24} parent=5 // pred_region
      // Predicated region
      $region25: #{resnet1d_forward.24} parent=23 // pred_check
        %p144 = pneg %p43
      $region26: #{resnet1d_forward.24} parent=23 // pred_check_branch
        %146 = sbr.rel (%p144) target = $region28
      $region27: #{resnet1d_forward.24} parent=23 // pred_region
        %s147 = smul.u32 2, %s17
        %p148 = scmp.lt.s32.totalorder %s16, 1
        %s149 = scalar_select %p148, %s16, 1
        %p150 = scmp.lt.s32.totalorder %s147, 1
        %s151 = scalar_select %p150, %s147, 1
        %s152 = smul.addr %s149, 2
        %s153 = sadd.s32 %s151, %s152
        %s154 = smul.addr %s153, 4
        %s155 = scalar_lea.vmem %s0, %s154
        %s156 = smul.u32 2, %s17
      $region28: #{resnet1d_forward.24} parent=23 // pred_fallthru
        _
    $region24: #{resnet1d_forward.24} parent=5 // pred_fallthru
      _
    %p157 = scmp.le.s32.totalorder 1, %s9
    %p158 = scmp.lt.s32.totalorder %s9, 3
    %p159 = pnand %p157, %p158
    %p160 = pneg %p159
    // Predicated region
    $region29: #{resnet1d_forward.24} parent=5 // pred_check
      _
    $region30: #{resnet1d_forward.24} parent=5 // pred_check_branch
      %162 = sbr.rel (%p159) target = $region32
    $region31: #{resnet1d_forward.24} parent=5 // pred_region
      %s163 = ssub.s32 %s9, 1
      %s164 = smul.u32 2, %s19
      %p165 = scmp.lt.s32.totalorder %s18, 1
      %s166 = scalar_select %p165, %s18, 1
      %p167 = scmp.lt.s32.totalorder %s164, 1
      %s168 = scalar_select %p167, %s164, 1
      %s169 = smul.addr %s166, 2
      %s170 = sadd.s32 %s168, %s169
      %s171 = smul.addr %s170, 4
      %s172 = scalar_lea.vmem %s0, %s171
      %p173 = pneg %p49
      %p174 = pneg %p46
      %p175 = pneg %p70
      %p176 = pneg %p67
      %p177 = pneg %p91
      %p178 = pneg %p88
      %p179 = pneg %p119
      %p180 = pneg %p116
      %s181 = smul.u32 2, %s19
      %p182 = scmp.lt.s32.totalorder %s18, 1
      %s183 = scalar_select %p182, %s18, 1
      %p184 = scmp.lt.s32.totalorder %s181, 1
      %s185 = scalar_select %p184, %s181, 1
      %s186 = smul.addr %s183, 2
      %s187 = sadd.s32 %s185, %s186
      %s188 = smul.addr %s187, 4
      %s189 = scalar_lea.vmem %s3, %s188
      %s190 = smul.u32 2, %s19
      %p191 = scmp.lt.s32.totalorder %s18, 1
      %s192 = scalar_select %p191, %s18, 1
      %p193 = scmp.lt.s32.totalorder %s190, 1
      %s194 = scalar_select %p193, %s190, 1
      %s195 = smul.addr %s192, 2
      %s196 = sadd.s32 %s194, %s195
      %s197 = smul.addr %s196, 4
      %s198 = scalar_lea.vmem %s0, %s197
      %s199 = smul.u32 2, %s19
      %s200 = smul.u32 2, %s19
      %p201 = scmp.lt.s32.totalorder %s18, 1
      %s202 = scalar_select %p201, %s18, 1
      %p203 = scmp.lt.s32.totalorder %s200, 1
      %s204 = scalar_select %p203, %s200, 1
      %s205 = smul.addr %s202, 2
      %s206 = sadd.s32 %s204, %s205
      %s207 = smul.addr %s206, 4
      %s208 = scalar_lea.vmem %s3, %s207
      %s209 = smul.u32 2, %s19
      %v210 = vld [vmem:[%s198] sm:$0xf]
      %v211 = vld [vmem:[%s198 + $0x4] sm:$0xf]
      %v212 = vunpack.c.l.bf16 %v210
      %v213 = vunpack.c.l.bf16 %v211
      %v214 = vld [vmem:[%s1] sm:$0x1]
      %v216 = vlaneseq
      %v217 = vshrl.u32 %v216, 7
      %v218 = vsub.s32 0, %v217
      %v219 = vrot.slane %v214, %v218
      %v221 = vmul.f32 %v212, %v219
      %v222 = vmul.f32 %v213, %v219
      %v223 = vld [vmem:[%s2] sm:$0x1]
      %v225 = vlaneseq
      %v226 = vshrl.u32 %v225, 7
      %v227 = vsub.s32 0, %v226
      %v228 = vrot.slane %v223, %v227
      %v230 = vadd.f32 %v221, %v228
      %v231 = vadd.f32 %v222, %v228
      %v232 = vmax.f32 %v230, 0.0
      %v233 = vmax.f32 %v231, 0.0
      %v234 = vpack.c.bf16 %v233, %v232
      %v236 = vunpack.c.l.b16 %v234
      %v237 = vunpack.c.h.b16 %v234
      %v238 = vpack.c.b16 %v236, %v236
      %v239 = vpack.c.b16 %v237, %v237
      %242 = vst [vmem:[%s208] sm:$0xf] %v238
      %243 = vst [vmem:[%s208 + $0x4] sm:$0xf] %v239
      %s244 = smul.u32 2, %s19
      %p245 = scmp.lt.s32.totalorder %s18, 1
      %s246 = scalar_select %p245, %s18, 1
      %p247 = scmp.lt.s32.totalorder %s244, 1
      %s248 = scalar_select %p247, %s244, 1
      %s249 = smul.addr %s246, 2
      %s250 = sadd.s32 %s248, %s249
      %s251 = smul.addr %s250, 4
      %s252 = scalar_lea.vmem %s3, %s251
      // Predicated region
      $region33: #{resnet1d_forward.24} parent=31 // pred_check
        %p253 = pneg %p116
      $region34: #{resnet1d_forward.24} parent=31 // pred_check_branch
        %255 = sbr.rel (%p253) target = $region36
      $region35: #{resnet1d_forward.24} parent=31 // pred_region
        %s256 = smul.u32 2, %s19
      $region36: #{resnet1d_forward.24} parent=31 // pred_fallthru
        _
    $region32: #{resnet1d_forward.24} parent=5 // pred_fallthru
      _
    %p257 = scmp.le.s32.totalorder 2, %s9
    // Predicated region
    $region37: #{resnet1d_forward.24} parent=5 // pred_check
      %p258 = pneg %p257
    $region38: #{resnet1d_forward.24} parent=5 // pred_check_branch
      %260 = sbr.rel (%p258) target = $region40
    $region39: #{resnet1d_forward.24} parent=5 // pred_region
      %s261 = ssub.s32 %s9, 2
      // Predicated region
      $region41: #{resnet1d_forward.24} parent=39 // pred_check
        %p262 = pneg %p122
      $region42: #{resnet1d_forward.24} parent=39 // pred_check_branch
        %264 = sbr.rel (%p262) target = $region44
      $region43: #{resnet1d_forward.24} parent=39 // pred_region
        %s265 = smul.u32 2, %s21
        %p266 = scmp.lt.s32.totalorder %s20, 1
        %s267 = scalar_select %p266, %s20, 1
        %p268 = scmp.lt.s32.totalorder %s265, 1
        %s269 = scalar_select %p268, %s265, 1
        %s270 = smul.addr %s267, 2
        %s271 = sadd.s32 %s269, %s270
        %s272 = smul.addr %s271, 4
        %s273 = scalar_lea.vmem %s3, %s272
      $region44: #{resnet1d_forward.24} parent=39 // pred_fallthru
        _
    $region40: #{resnet1d_forward.24} parent=5 // pred_fallthru
      _
  $region6: #{resnet1d_forward.24} parent=0 // loop_footer
    %s13 = sadd.s32 1, %s9
  $region7: #{resnet1d_forward.24} parent=0 // loop_footer_branch
    %8 = sbr.rel target = $region3
  $region8: #{resnet1d_forward.24} parent=0 // loop_exit
    _

// kernel: resnet1d_forward.26
$region0: #{resnet1d_forward.26}
  #allocation0 [shape = 'u32[]', space=smem, size = 0x4, offset = 0x4, fixed_abs, tag = 'smem constant byte address 0x4 - core index']
  #allocation1 [shape = 'u32[144,128]{1,0:T(1,128)}', space=vmem, size = 0x12000, scoped, tag = 'internal scratch']
  %s0 = inlined_call_operand.vmem [shape: bf16[2,16,128], index: 0, kind: input, shape index: {}]
  %s1 = inlined_call_operand.vmem [shape: f32[1,128], index: 1, kind: input, shape index: {}]
  %s2 = inlined_call_operand.vmem [shape: f32[1,128], index: 2, kind: input, shape index: {}]
  %s3 = inlined_call_operand.vmem [shape: bf16[2,16,128], index: 3, kind: input, shape index: {}]
  %s4 = inlined_call_operand.vmem [shape: bf16[2,16,128], index: 4, kind: output, shape index: {}]
  %s5 = sld [smem:[#allocation0]]
  $region49: #{resnet1d_forward.26} parent=0
    _
  %s7 = ssub.s32 1, %s5
  %s8 = scalar_select 0, %s7, %s5
  loop: start=0, step=1, limit=4
  $region2: #{resnet1d_forward.26} parent=0 // loop_pre_header
    _
  $region3: #{resnet1d_forward.26} parent=0 // loop_header
    %s10 = sphi 0, %s14
    %p11 = scmp.ge.s32.totalorder %s10, 4
    %s17 = sphi 0, %s29
    %s18 = sphi 0, %s25
    %s19 = sphi 0, %s17
    %s20 = sphi 0, %s18
    %s21 = sphi 0, %s19
    %s22 = sphi 0, %s20
    %s34 = sphi 0, %s36
    %s37 = sphi 0, %s34
    %s38 = sphi 0, %s37
    %s54 = sphi 0, %s38
    %s58 = sphi 0, %s58
    %s60 = sphi 0, %s58
    %s61 = sphi 0, %s60
    %s75 = sphi 0, %s61
    %s79 = sphi 0, %s79
    %s81 = sphi 0, %s79
    %s82 = sphi 0, %s81
    %s96 = sphi 0, %s82
    %s104 = sphi 0, %s106
    %s107 = sphi 0, %s104
    %s108 = sphi 0, %s107
    %s124 = sphi 0, %s108
    %s132 = sphi 0, %s134
    %s135 = sphi 0, %s132
    %s136 = sphi 0, %s135
    %s152 = sphi 0, %s136
  $region4: #{resnet1d_forward.26} parent=0 // loop_header_branch
    %13 = sbr.rel (%p11) target = $region8
  $region5: #{resnet1d_forward.26} parent=0 // loop_body
    %s15 = ssub.s32 %s10, 1
    %s16 = ssub.s32 %s10, 2
    %s23 = sadd.s32 1, %s18
    %p24 = scmp.ge.s32.totalorder %s23, 1
    %s25 = scalar_select %p24, 0, %s23
    %s26 = sadd.s32 1, %s17
    %s27 = scalar_select %p24, %s26, %s17
    %p28 = scmp.ge.s32.totalorder %s27, 2
    %s29 = scalar_select %p28, 0, %s27
    %s30 = ssub.s32 %s17, %s29
    %s31 = ssub.s32 %s18, %s25
    %s32 = sor.u32 %s30, %s31
    %p33 = scmp.eq.s32.totalorder %s32, 0
    %s35 = sadd.s32 %s34, 1
    %s36 = scalar_select %p33, %s34, %s35
    %p39 = pneg %p33
    %p40 = scmp.eq.s32.totalorder %s10, 1
    %p41 = por %p39, %p40
    %p42 = scmp.ne.s32.totalorder %s34, %s37
    %p43 = scmp.eq.s32.totalorder %s10, 0
    %p44 = por %p42, %p43
    %p45 = scmp.ne.s32.totalorder %s34, %s37
    %p46 = scmp.eq.s32.totalorder %s15, 1
    %p47 = por %p45, %p46
    %p48 = scmp.ne.s32.totalorder %s37, %s38
    %p49 = scmp.eq.s32.totalorder %s15, 0
    %p50 = por %p48, %p49
    %p51 = scmp.ne.s32.totalorder %s37, %s38
    %p52 = scmp.eq.s32.totalorder %s16, 1
    %p53 = por %p51, %p52
    %p55 = scmp.ne.s32.totalorder %s38, %s54
    %p56 = scmp.eq.s32.totalorder %s16, 0
    %p57 = por %p55, %p56
    %s59 = sadd.s32 %s58, 1
    %p62 = scmp.eq.s32.totalorder %s10, 1
    %p63 = scmp.ne.s32.totalorder %s58, %s60
    %p64 = scmp.eq.s32.totalorder %s10, 0
    %p65 = por %p63, %p64
    %p66 = scmp.ne.s32.totalorder %s58, %s60
    %p67 = scmp.eq.s32.totalorder %s15, 1
    %p68 = por %p66, %p67
    %p69 = scmp.ne.s32.totalorder %s60, %s61
    %p70 = scmp.eq.s32.totalorder %s15, 0
    %p71 = por %p69, %p70
    %p72 = scmp.ne.s32.totalorder %s60, %s61
    %p73 = scmp.eq.s32.totalorder %s16, 1
    %p74 = por %p72, %p73
    %p76 = scmp.ne.s32.totalorder %s61, %s75
    %p77 = scmp.eq.s32.totalorder %s16, 0
    %p78 = por %p76, %p77
    %s80 = sadd.s32 %s79, 1
    %p83 = scmp.eq.s32.totalorder %s10, 1
    %p84 = scmp.ne.s32.totalorder %s79, %s81
    %p85 = scmp.eq.s32.totalorder %s10, 0
    %p86 = por %p84, %p85
    %p87 = scmp.ne.s32.totalorder %s79, %s81
    %p88 = scmp.eq.s32.totalorder %s15, 1
    %p89 = por %p87, %p88
    %p90 = scmp.ne.s32.totalorder %s81, %s82
    %p91 = scmp.eq.s32.totalorder %s15, 0
    %p92 = por %p90, %p91
    %p93 = scmp.ne.s32.totalorder %s81, %s82
    %p94 = scmp.eq.s32.totalorder %s16, 1
    %p95 = por %p93, %p94
    %p97 = scmp.ne.s32.totalorder %s82, %s96
    %p98 = scmp.eq.s32.totalorder %s16, 0
    %p99 = por %p97, %p98
    %s100 = ssub.s32 %s17, %s29
    %s101 = ssub.s32 %s18, %s25
    %s102 = sor.u32 %s100, %s101
    %p103 = scmp.eq.s32.totalorder %s102, 0
    %s105 = sadd.s32 %s104, 1
    %s106 = scalar_select %p103, %s104, %s105
    %p109 = pneg %p103
    %p110 = scmp.eq.s32.totalorder %s10, 1
    %p111 = por %p109, %p110
    %p112 = scmp.ne.s32.totalorder %s104, %s107
    %p113 = scmp.eq.s32.totalorder %s10, 0
    %p114 = por %p112, %p113
    %p115 = scmp.ne.s32.totalorder %s104, %s107
    %p116 = scmp.eq.s32.totalorder %s15, 1
    %p117 = por %p115, %p116
    %p118 = scmp.ne.s32.totalorder %s107, %s108
    %p119 = scmp.eq.s32.totalorder %s15, 0
    %p120 = por %p118, %p119
    %p121 = scmp.ne.s32.totalorder %s107, %s108
    %p122 = scmp.eq.s32.totalorder %s16, 1
    %p123 = por %p121, %p122
    %p125 = scmp.ne.s32.totalorder %s108, %s124
    %p126 = scmp.eq.s32.totalorder %s16, 0
    %p127 = por %p125, %p126
    %s128 = ssub.s32 %s17, %s29
    %s129 = ssub.s32 %s18, %s25
    %s130 = sor.u32 %s128, %s129
    %p131 = scmp.eq.s32.totalorder %s130, 0
    %s133 = sadd.s32 %s132, 1
    %s134 = scalar_select %p131, %s132, %s133
    %p137 = pneg %p131
    %p138 = scmp.eq.s32.totalorder %s10, 1
    %p139 = por %p137, %p138
    %p140 = scmp.ne.s32.totalorder %s132, %s135
    %p141 = scmp.eq.s32.totalorder %s10, 0
    %p142 = por %p140, %p141
    %p143 = scmp.ne.s32.totalorder %s132, %s135
    %p144 = scmp.eq.s32.totalorder %s15, 1
    %p145 = por %p143, %p144
    %p146 = scmp.ne.s32.totalorder %s135, %s136
    %p147 = scmp.eq.s32.totalorder %s15, 0
    %p148 = por %p146, %p147
    %p149 = scmp.ne.s32.totalorder %s135, %s136
    %p150 = scmp.eq.s32.totalorder %s16, 1
    %p151 = por %p149, %p150
    %p153 = scmp.ne.s32.totalorder %s136, %s152
    %p154 = scmp.eq.s32.totalorder %s16, 0
    %p155 = por %p153, %p154
    %p156 = scmp.le.s32.totalorder 1, %s10
    %p157 = scmp.lt.s32.totalorder %s10, 3
    %p158 = pnand %p156, %p157
    %p159 = pneg %p158
    // Predicated region
    $region9: #{resnet1d_forward.26} parent=5 // pred_check
      _
    $region10: #{resnet1d_forward.26} parent=5 // pred_check_branch
      %161 = sbr.rel (%p158) target = $region12
    $region11: #{resnet1d_forward.26} parent=5 // pred_region
      %s162 = ssub.s32 %s10, 1
      // Predicated region
      $region13: #{resnet1d_forward.26} parent=11 // pred_check
        %p163 = pneg %p71
      $region14: #{resnet1d_forward.26} parent=11 // pred_check_branch
        %165 = sbr.rel (%p163) target = $region16
      $region15: #{resnet1d_forward.26} parent=11 // pred_region
        _
      $region16: #{resnet1d_forward.26} parent=11 // pred_fallthru
        _
      // Predicated region
      $region17: #{resnet1d_forward.26} parent=11 // pred_check
        %p166 = pneg %p92
      $region18: #{resnet1d_forward.26} parent=11 // pred_check_branch
        %168 = sbr.rel (%p166) target = $region20
      $region19: #{resnet1d_forward.26} parent=11 // pred_region
        _
      $region20: #{resnet1d_forward.26} parent=11 // pred_fallthru
        _
    $region12: #{resnet1d_forward.26} parent=5 // pred_fallthru
      _
    %p169 = scmp.lt.s32.totalorder %s10, 2
    // Predicated region
    $region21: #{resnet1d_forward.26} parent=5 // pred_check
      %p170 = pneg %p169
    $region22: #{resnet1d_forward.26} parent=5 // pred_check_branch
      %172 = sbr.rel (%p170) target = $region24
    $region23: #{resnet1d_forward.26} parent=5 // pred_region
      // Predicated region
      $region25: #{resnet1d_forward.26} parent=23 // pred_check
        %p173 = pneg %p44
      $region26: #{resnet1d_forward.26} parent=23 // pred_check_branch
        %175 = sbr.rel (%p173) target = $region28
      $region27: #{resnet1d_forward.26} parent=23 // pred_region
        %s176 = smul.u32 2, %s18
        %p177 = scmp.lt.s32.totalorder %s17, 1
        %s178 = scalar_select %p177, %s17, 1
        %p179 = scmp.lt.s32.totalorder %s176, 1
        %s180 = scalar_select %p179, %s176, 1
        %s181 = smul.addr %s178, 2
        %s182 = sadd.s32 %s180, %s181
        %s183 = smul.addr %s182, 4
        %s184 = scalar_lea.vmem %s0, %s183
        %s185 = smul.u32 2, %s18
      $region28: #{resnet1d_forward.26} parent=23 // pred_fallthru
        _
      // Predicated region
      $region29: #{resnet1d_forward.26} parent=23 // pred_check
        %p186 = pneg %p114
      $region30: #{resnet1d_forward.26} parent=23 // pred_check_branch
        %188 = sbr.rel (%p186) target = $region32
      $region31: #{resnet1d_forward.26} parent=23 // pred_region
        %s189 = smul.u32 2, %s18
        %p190 = scmp.lt.s32.totalorder %s17, 1
        %s191 = scalar_select %p190, %s17, 1
        %p192 = scmp.lt.s32.totalorder %s189, 1
        %s193 = scalar_select %p192, %s189, 1
        %s194 = smul.addr %s191, 2
        %s195 = sadd.s32 %s193, %s194
        %s196 = smul.addr %s195, 4
        %s197 = scalar_lea.vmem %s3, %s196
        %s198 = smul.u32 2, %s18
      $region32: #{resnet1d_forward.26} parent=23 // pred_fallthru
        _
    $region24: #{resnet1d_forward.26} parent=5 // pred_fallthru
      _
    %p199 = scmp.le.s32.totalorder 1, %s10
    %p200 = scmp.lt.s32.totalorder %s10, 3
    %p201 = pnand %p199, %p200
    %p202 = pneg %p201
    // Predicated region
    $region33: #{resnet1d_forward.26} parent=5 // pred_check
      _
    $region34: #{resnet1d_forward.26} parent=5 // pred_check_branch
      %204 = sbr.rel (%p201) target = $region36
    $region35: #{resnet1d_forward.26} parent=5 // pred_region
      %s205 = ssub.s32 %s10, 1
      %s206 = smul.u32 2, %s20
      %p207 = scmp.lt.s32.totalorder %s19, 1
      %s208 = scalar_select %p207, %s19, 1
      %p209 = scmp.lt.s32.totalorder %s206, 1
      %s210 = scalar_select %p209, %s206, 1
      %s211 = smul.addr %s208, 2
      %s212 = sadd.s32 %s210, %s211
      %s213 = smul.addr %s212, 4
      %s214 = scalar_lea.vmem %s0, %s213
      %p215 = pneg %p50
      %p216 = pneg %p47
      %p217 = pneg %p71
      %p218 = pneg %p68
      %p219 = pneg %p92
      %p220 = pneg %p89
      %s221 = smul.u32 2, %s20
      %p222 = scmp.lt.s32.totalorder %s19, 1
      %s223 = scalar_select %p222, %s19, 1
      %p224 = scmp.lt.s32.totalorder %s221, 1
      %s225 = scalar_select %p224, %s221, 1
      %s226 = smul.addr %s223, 2
      %s227 = sadd.s32 %s225, %s226
      %s228 = smul.addr %s227, 4
      %s229 = scalar_lea.vmem %s3, %s228
      %p230 = pneg %p120
      %p231 = pneg %p117
      %p232 = pneg %p148
      %p233 = pneg %p145
      %s234 = smul.u32 2, %s20
      %p235 = scmp.lt.s32.totalorder %s19, 1
      %s236 = scalar_select %p235, %s19, 1
      %p237 = scmp.lt.s32.totalorder %s234, 1
      %s238 = scalar_select %p237, %s234, 1
      %s239 = smul.addr %s236, 2
      %s240 = sadd.s32 %s238, %s239
      %s241 = smul.addr %s240, 4
      %s242 = scalar_lea.vmem %s4, %s241
      %s243 = smul.u32 2, %s20
      %p244 = scmp.lt.s32.totalorder %s19, 1
      %s245 = scalar_select %p244, %s19, 1
      %p246 = scmp.lt.s32.totalorder %s243, 1
      %s247 = scalar_select %p246, %s243, 1
      %s248 = smul.addr %s245, 2
      %s249 = sadd.s32 %s247, %s248
      %s250 = smul.addr %s249, 4
      %s251 = scalar_lea.vmem %s0, %s250
      %s252 = smul.u32 2, %s20
      %s253 = smul.u32 2, %s20
      %p254 = scmp.lt.s32.totalorder %s19, 1
      %s255 = scalar_select %p254, %s19, 1
      %p256 = scmp.lt.s32.totalorder %s253, 1
      %s257 = scalar_select %p256, %s253, 1
      %s258 = smul.addr %s255, 2
      %s259 = sadd.s32 %s257, %s258
      %s260 = smul.addr %s259, 4
      %s261 = scalar_lea.vmem %s3, %s260
      %s262 = smul.u32 2, %s20
      %s263 = smul.u32 2, %s20
      %p264 = scmp.lt.s32.totalorder %s19, 1
      %s265 = scalar_select %p264, %s19, 1
      %p266 = scmp.lt.s32.totalorder %s263, 1
      %s267 = scalar_select %p266, %s263, 1
      %s268 = smul.addr %s265, 2
      %s269 = sadd.s32 %s267, %s268
      %s270 = smul.addr %s269, 4
      %s271 = scalar_lea.vmem %s4, %s270
      %s272 = smul.u32 2, %s20
      %v273 = vld [vmem:[%s251] sm:$0xf]
      %v274 = vld [vmem:[%s251 + $0x4] sm:$0xf]
      %v275 = vunpack.c.l.bf16 %v273
      %v276 = vunpack.c.l.bf16 %v274
      %v277 = vld [vmem:[%s1] sm:$0x1]
      %v279 = vlaneseq
      %v280 = vshrl.u32 %v279, 7
      %v281 = vsub.s32 0, %v280
      %v282 = vrot.slane %v277, %v281
      %v284 = vmul.f32 %v275, %v282
      %v285 = vmul.f32 %v276, %v282
      %v286 = vld [vmem:[%s2] sm:$0x1]
      %v288 = vlaneseq
      %v289 = vshrl.u32 %v288, 7
      %v290 = vsub.s32 0, %v289
      %v291 = vrot.slane %v286, %v290
      %v293 = vadd.f32 %v284, %v291
      %v294 = vadd.f32 %v285, %v291
      %v295 = vld [vmem:[%s261] sm:$0xf]
      %v296 = vld [vmem:[%s261 + $0x4] sm:$0xf]
      %v297 = vunpack.c.l.bf16 %v295
      %v298 = vunpack.c.l.bf16 %v296
      %v299 = vadd.f32 %v293, %v297
      %v300 = vadd.f32 %v294, %v298
      %v301 = vmax.f32 %v299, 0.0
      %v302 = vmax.f32 %v300, 0.0
      %v303 = vpack.c.bf16 %v302, %v301
      %v305 = vunpack.c.l.b16 %v303
      %v306 = vunpack.c.h.b16 %v303
      %v307 = vpack.c.b16 %v305, %v305
      %v308 = vpack.c.b16 %v306, %v306
      %311 = vst [vmem:[%s271] sm:$0xf] %v307
      %312 = vst [vmem:[%s271 + $0x4] sm:$0xf] %v308
      %s313 = smul.u32 2, %s20
      %p314 = scmp.lt.s32.totalorder %s19, 1
      %s315 = scalar_select %p314, %s19, 1
      %p316 = scmp.lt.s32.totalorder %s313, 1
      %s317 = scalar_select %p316, %s313, 1
      %s318 = smul.addr %s315, 2
      %s319 = sadd.s32 %s317, %s318
      %s320 = smul.addr %s319, 4
      %s321 = scalar_lea.vmem %s4, %s320
      // Predicated region
      $region37: #{resnet1d_forward.26} parent=35 // pred_check
        %p322 = pneg %p145
      $region38: #{resnet1d_forward.26} parent=35 // pred_check_branch
        %324 = sbr.rel (%p322) target = $region40
      $region39: #{resnet1d_forward.26} parent=35 // pred_region
        %s325 = smul.u32 2, %s20
      $region40: #{resnet1d_forward.26} parent=35 // pred_fallthru
        _
    $region36: #{resnet1d_forward.26} parent=5 // pred_fallthru
      _
    %p326 = scmp.le.s32.totalorder 2, %s10
    // Predicated region
    $region41: #{resnet1d_forward.26} parent=5 // pred_check
      %p327 = pneg %p326
    $region42: #{resnet1d_forward.26} parent=5 // pred_check_branch
      %329 = sbr.rel (%p327) target = $region44
    $region43: #{resnet1d_forward.26} parent=5 // pred_region
      %s330 = ssub.s32 %s10, 2
      // Predicated region
      $region45: #{resnet1d_forward.26} parent=43 // pred_check
        %p331 = pneg %p151
      $region46: #{resnet1d_forward.26} parent=43 // pred_check_branch
        %333 = sbr.rel (%p331) target = $region48
      $region47: #{resnet1d_forward.26} parent=43 // pred_region
        %s334 = smul.u32 2, %s22
        %p335 = scmp.lt.s32.totalorder %s21, 1
        %s336 = scalar_select %p335, %s21, 1
        %p337 = scmp.lt.s32.totalorder %s334, 1
        %s338 = scalar_select %p337, %s334, 1
        %s339 = smul.addr %s336, 2
        %s340 = sadd.s32 %s338, %s339
        %s341 = smul.addr %s340, 4
        %s342 = scalar_lea.vmem %s4, %s341
      $region48: #{resnet1d_forward.26} parent=43 // pred_fallthru
        _
    $region44: #{resnet1d_forward.26} parent=5 // pred_fallthru
      _
  $region6: #{resnet1d_forward.26} parent=0 // loop_footer
    %s14 = sadd.s32 1, %s10
  $region7: #{resnet1d_forward.26} parent=0 // loop_footer_branch
    %9 = sbr.rel target = $region3
  $region8: #{resnet1d_forward.26} parent=0 // loop_exit
    _

// kernel: resnet1d_forward.23
$region0: #{resnet1d_forward.23}
  #allocation0 [shape = 'u32[]', space=smem, size = 0x4, offset = 0x4, fixed_abs, tag = 'smem constant byte address 0x4 - core index']
  #allocation1 [shape = 'u32[144,128]{1,0:T(1,128)}', space=vmem, size = 0x12000, scoped, tag = 'internal scratch']
  #allocation2 [shape = 'f32[40,128]{1,0:T(8,128)}', space=vmem, size = 0x5000, scoped, tag = 'scratch operand']
  %s0 = inlined_call_operand.vmem [shape: bf16[2,40,128], index: 0, kind: input, shape index: {}, may-alias: {0,1}]
  %s1 = inlined_call_operand.vmem [shape: bf16[2,40,128], index: 1, kind: input, shape index: {}, may-alias: {0,1}]
  %s2 = inlined_call_operand.vmem [shape: bf16[384,128], index: 2, kind: input, shape index: {}]
  %s3 = inlined_call_operand.vmem [shape: bf16[2,16,128], index: 3, kind: output, shape index: {0}]
  %s4 = inlined_call_operand.vmem [shape: f32[2,1,128], index: 4, kind: output, shape index: {1}]
  %s5 = inlined_call_operand.vmem [shape: f32[2,1,128], index: 5, kind: output, shape index: {2}]
  %6 = xla_tuple %s3, %s4, %s5
  %s7 = sld [smem:[#allocation0]]
  $region73: #{resnet1d_forward.23} parent=0
    _
  %s9 = ssub.s32 1, %s7
  %s10 = scalar_select 0, %s9, %s7
  loop: start=0, step=1, limit=4
  $region2: #{resnet1d_forward.23} parent=0 // loop_pre_header
    _
  $region3: #{resnet1d_forward.23} parent=0 // loop_header
    %s12 = sphi 0, %s16
    %p13 = scmp.ge.s32.totalorder %s12, 4
    %s19 = sphi 0, %s31
    %s20 = sphi 0, %s27
    %s21 = sphi 0, %s19
    %s22 = sphi 0, %s20
    %s23 = sphi 0, %s21
    %s24 = sphi 0, %s22
    %s36 = sphi 0, %s38
    %s39 = sphi 0, %s36
    %s40 = sphi 0, %s39
    %s56 = sphi 0, %s40
    %s68 = sphi 0, %s70
    %s71 = sphi 0, %s68
    %s72 = sphi 0, %s71
    %s88 = sphi 0, %s72
    %s92 = sphi 0, %s92
    %s94 = sphi 0, %s92
    %s95 = sphi 0, %s94
    %s109 = sphi 0, %s95
    %s117 = sphi 0, %s119
    %s120 = sphi 0, %s117
    %s121 = sphi 0, %s120
    %s137 = sphi 0, %s121
    %s143 = sphi 0, %s145
    %s146 = sphi 0, %s143
    %s147 = sphi 0, %s146
    %s163 = sphi 0, %s147
    %s169 = sphi 0, %s171
    %s172 = sphi 0, %s169
    %s173 = sphi 0, %s172
    %s189 = sphi 0, %s173
  $region4: #{resnet1d_forward.23} parent=0 // loop_header_branch
    %15 = sbr.rel (%p13) target = $region8
  $region5: #{resnet1d_forward.23} parent=0 // loop_body
    %s17 = ssub.s32 %s12, 1
    %s18 = ssub.s32 %s12, 2
    %s25 = sadd.s32 1, %s20
    %p26 = scmp.ge.s32.totalorder %s25, 1
    %s27 = scalar_select %p26, 0, %s25
    %s28 = sadd.s32 1, %s19
    %s29 = scalar_select %p26, %s28, %s19
    %p30 = scmp.ge.s32.totalorder %s29, 2
    %s31 = scalar_select %p30, 0, %s29
    %s32 = ssub.s32 %s19, %s31
    %s33 = ssub.s32 %s20, %s27
    %s34 = sor.u32 %s32, %s33
    %p35 = scmp.eq.s32.totalorder %s34, 0
    %s37 = sadd.s32 %s36, 1
    %s38 = scalar_select %p35, %s36, %s37
    %p41 = pneg %p35
    %p42 = scmp.eq.s32.totalorder %s12, 1
    %p43 = por %p41, %p42
    %p44 = scmp.ne.s32.totalorder %s36, %s39
    %p45 = scmp.eq.s32.totalorder %s12, 0
    %p46 = por %p44, %p45
    %p47 = scmp.ne.s32.totalorder %s36, %s39
    %p48 = scmp.eq.s32.totalorder %s17, 1
    %p49 = por %p47, %p48
    %p50 = scmp.ne.s32.totalorder %s39, %s40
    %p51 = scmp.eq.s32.totalorder %s17, 0
    %p52 = por %p50, %p51
    %p53 = scmp.ne.s32.totalorder %s39, %s40
    %p54 = scmp.eq.s32.totalorder %s18, 1
    %p55 = por %p53, %p54
    %p57 = scmp.ne.s32.totalorder %s40, %s56
    %p58 = scmp.eq.s32.totalorder %s18, 0
    %p59 = por %p57, %p58
    %s60 = sadd.s32 %s20, 1
    %s61 = smul.u32 %s60, 4
    %s62 = sadd.s32 %s27, 1
    %s63 = smul.u32 %s62, 4
    %s64 = ssub.s32 %s19, %s31
    %s65 = ssub.s32 %s61, %s63
    %s66 = sor.u32 %s64, %s65
    %p67 = scmp.eq.s32.totalorder %s66, 0
    %s69 = sadd.s32 %s68, 1
    %s70 = scalar_select %p67, %s68, %s69
    %p73 = pneg %p67
    %p74 = scmp.eq.s32.totalorder %s12, 1
    %p75 = por %p73, %p74
    %p76 = scmp.ne.s32.totalorder %s68, %s71
    %p77 = scmp.eq.s32.totalorder %s12, 0
    %p78 = por %p76, %p77
    %p79 = scmp.ne.s32.totalorder %s68, %s71
    %p80 = scmp.eq.s32.totalorder %s17, 1
    %p81 = por %p79, %p80
    %p82 = scmp.ne.s32.totalorder %s71, %s72
    %p83 = scmp.eq.s32.totalorder %s17, 0
    %p84 = por %p82, %p83
    %p85 = scmp.ne.s32.totalorder %s71, %s72
    %p86 = scmp.eq.s32.totalorder %s18, 1
    %p87 = por %p85, %p86
    %p89 = scmp.ne.s32.totalorder %s72, %s88
    %p90 = scmp.eq.s32.totalorder %s18, 0
    %p91 = por %p89, %p90
    %s93 = sadd.s32 %s92, 1
    %p96 = scmp.eq.s32.totalorder %s12, 1
    %p97 = scmp.ne.s32.totalorder %s92, %s94
    %p98 = scmp.eq.s32.totalorder %s12, 0
    %p99 = por %p97, %p98
    %p100 = scmp.ne.s32.totalorder %s92, %s94
    %p101 = scmp.eq.s32.totalorder %s17, 1
    %p102 = por %p100, %p101
    %p103 = scmp.ne.s32.totalorder %s94, %s95
    %p104 = scmp.eq.s32.totalorder %s17, 0
    %p105 = por %p103, %p104
    %p106 = scmp.ne.s32.totalorder %s94, %s95
    %p107 = scmp.eq.s32.totalorder %s18, 1
    %p108 = por %p106, %p107
    %p110 = scmp.ne.s32.totalorder %s95, %s109
    %p111 = scmp.eq.s32.totalorder %s18, 0
    %p112 = por %p110, %p111
    %s113 = ssub.s32 %s19, %s31
    %s114 = ssub.s32 %s20, %s27
    %s115 = sor.u32 %s113, %s114
    %p116 = scmp.eq.s32.totalorder %s115, 0
    %s118 = sadd.s32 %s117, 1
    %s119 = scalar_select %p116, %s117, %s118
    %p122 = pneg %p116
    %p123 = scmp.eq.s32.totalorder %s12, 1
    %p124 = por %p122, %p123
    %p125 = scmp.ne.s32.totalorder %s117, %s120
    %p126 = scmp.eq.s32.totalorder %s12, 0
    %p127 = por %p125, %p126
    %p128 = scmp.ne.s32.totalorder %s117, %s120
    %p129 = scmp.eq.s32.totalorder %s17, 1
    %p130 = por %p128, %p129
    %p131 = scmp.ne.s32.totalorder %s120, %s121
    %p132 = scmp.eq.s32.totalorder %s17, 0
    %p133 = por %p131, %p132
    %p134 = scmp.ne.s32.totalorder %s120, %s121
    %p135 = scmp.eq.s32.totalorder %s18, 1
    %p136 = por %p134, %p135
    %p138 = scmp.ne.s32.totalorder %s121, %s137
    %p139 = scmp.eq.s32.totalorder %s18, 0
    %p140 = por %p138, %p139
    %s141 = ssub.s32 %s19, %s31
    %p142 = scmp.eq.s32.totalorder %s141, 0
    %s144 = sadd.s32 %s143, 1
    %s145 = scalar_select %p142, %s143, %s144
    %p148 = pneg %p142
    %p149 = scmp.eq.s32.totalorder %s12, 1
    %p150 = por %p148, %p149
    %p151 = scmp.ne.s32.totalorder %s143, %s146
    %p152 = scmp.eq.s32.totalorder %s12, 0
    %p153 = por %p151, %p152
    %p154 = scmp.ne.s32.totalorder %s143, %s146
    %p155 = scmp.eq.s32.totalorder %s17, 1
    %p156 = por %p154, %p155
    %p157 = scmp.ne.s32.totalorder %s146, %s147
    %p158 = scmp.eq.s32.totalorder %s17, 0
    %p159 = por %p157, %p158
    %p160 = scmp.ne.s32.totalorder %s146, %s147
    %p161 = scmp.eq.s32.totalorder %s18, 1
    %p162 = por %p160, %p161
    %p164 = scmp.ne.s32.totalorder %s147, %s163
    %p165 = scmp.eq.s32.totalorder %s18, 0
    %p166 = por %p164, %p165
    %s167 = ssub.s32 %s19, %s31
    %p168 = scmp.eq.s32.totalorder %s167, 0
    %s170 = sadd.s32 %s169, 1
    %s171 = scalar_select %p168, %s169, %s170
    %p174 = pneg %p168
    %p175 = scmp.eq.s32.totalorder %s12, 1
    %p176 = por %p174, %p175
    %p177 = scmp.ne.s32.totalorder %s169, %s172
    %p178 = scmp.eq.s32.totalorder %s12, 0
    %p179 = por %p177, %p178
    %p180 = scmp.ne.s32.totalorder %s169, %s172
    %p181 = scmp.eq.s32.totalorder %s17, 1
    %p182 = por %p180, %p181
    %p183 = scmp.ne.s32.totalorder %s172, %s173
    %p184 = scmp.eq.s32.totalorder %s17, 0
    %p185 = por %p183, %p184
    %p186 = scmp.ne.s32.totalorder %s172, %s173
    %p187 = scmp.eq.s32.totalorder %s18, 1
    %p188 = por %p186, %p187
    %p190 = scmp.ne.s32.totalorder %s173, %s189
    %p191 = scmp.eq.s32.totalorder %s18, 0
    %p192 = por %p190, %p191
    %p193 = scmp.le.s32.totalorder 1, %s12
    %p194 = scmp.lt.s32.totalorder %s12, 3
    %p195 = pnand %p193, %p194
    %p196 = pneg %p195
    // Predicated region
    $region9: #{resnet1d_forward.23} parent=5 // pred_check
      _
    $region10: #{resnet1d_forward.23} parent=5 // pred_check_branch
      %198 = sbr.rel (%p195) target = $region12
    $region11: #{resnet1d_forward.23} parent=5 // pred_region
      %s199 = ssub.s32 %s12, 1
      // Predicated region
      $region13: #{resnet1d_forward.23} parent=11 // pred_check
        %p200 = pneg %p105
      $region14: #{resnet1d_forward.23} parent=11 // pred_check_branch
        %202 = sbr.rel (%p200) target = $region16
      $region15: #{resnet1d_forward.23} parent=11 // pred_region
        _
      $region16: #{resnet1d_forward.23} parent=11 // pred_fallthru
        _
    $region12: #{resnet1d_forward.23} parent=5 // pred_fallthru
      _
    %p203 = scmp.lt.s32.totalorder %s12, 2
    // Predicated region
    $region17: #{resnet1d_forward.23} parent=5 // pred_check
      %p204 = pneg %p203
    $region18: #{resnet1d_forward.23} parent=5 // pred_check_branch
      %206 = sbr.rel (%p204) target = $region20
    $region19: #{resnet1d_forward.23} parent=5 // pred_region
      // Predicated region
      $region21: #{resnet1d_forward.23} parent=19 // pred_check
        %p207 = pneg %p46
      $region22: #{resnet1d_forward.23} parent=19 // pred_check_branch
        %209 = sbr.rel (%p207) target = $region24
      $region23: #{resnet1d_forward.23} parent=19 // pred_region
        %s210 = smul.u32 4, %s20
        %s211 = ssub.s32 5, %s210
        %p212 = scmp.lt.s32.totalorder %s211, 4
        %s213 = scalar_select %p212, %s211, 4
        %s214 = smul.u32 64, %s213
        %p215 = scmp.lt.s32.totalorder %s19, 1
        %s216 = scalar_select %p215, %s19, 1
        %p217 = scmp.lt.s32.totalorder %s210, 4
        %s218 = scalar_select %p217, %s210, 4
        %s219 = smul.addr %s216, 5
        %s220 = sadd.s32 %s218, %s219
        %s221 = smul.addr %s220, 4
        %s222 = scalar_lea.vmem %s0, %s221
        %s223 = smul.u32 4, %s20
        %s224 = ssub.s32 5, %s223
        %p225 = scmp.lt.s32.totalorder %s224, 4
        %s226 = scalar_select %p225, %s224, 4
        %s227 = smul.u32 64, %s226
      $region24: #{resnet1d_forward.23} parent=19 // pred_fallthru
        _
      // Predicated region
      $region25: #{resnet1d_forward.23} parent=19 // pred_check
        %p228 = pneg %p78
      $region26: #{resnet1d_forward.23} parent=19 // pred_check_branch
        %230 = sbr.rel (%p228) target = $region28
      $region27: #{resnet1d_forward.23} parent=19 // pred_region
        %s231 = sadd.s32 %s20, 1
        %s232 = smul.u32 %s231, 4
        %p233 = scmp.lt.s32.totalorder %s19, 1
        %s234 = scalar_select %p233, %s19, 1
        %p235 = scmp.lt.s32.totalorder %s232, 4
        %s236 = scalar_select %p235, %s232, 4
        %s237 = smul.addr %s234, 5
        %s238 = sadd.s32 %s236, %s237
        %s239 = smul.addr %s238, 4
        %s240 = scalar_lea.vmem %s1, %s239
        %s241 = sadd.s32 %s20, 1
        %s242 = smul.u32 %s241, 4
      $region28: #{resnet1d_forward.23} parent=19 // pred_fallthru
        _
    $region20: #{resnet1d_forward.23} parent=5 // pred_fallthru
      _
    %p243 = scmp.le.s32.totalorder 1, %s12
    %p244 = scmp.lt.s32.totalorder %s12, 3
    %p245 = pnand %p243, %p244
    %p246 = pneg %p245
    // Predicated region
    $region29: #{resnet1d_forward.23} parent=5 // pred_check
      _
    $region30: #{resnet1d_forward.23} parent=5 // pred_check_branch
      %248 = sbr.rel (%p245) target = $region32
    $region31: #{resnet1d_forward.23} parent=5 // pred_region
      %s249 = ssub.s32 %s12, 1
      %s250 = smul.u32 4, %s22
      %s251 = ssub.s32 5, %s250
      %p252 = scmp.lt.s32.totalorder %s251, 4
      %s253 = scalar_select %p252, %s251, 4
      %s254 = smul.u32 64, %s253
      %p255 = scmp.lt.s32.totalorder %s21, 1
      %s256 = scalar_select %p255, %s21, 1
      %p257 = scmp.lt.s32.totalorder %s250, 4
      %s258 = scalar_select %p257, %s250, 4
      %s259 = smul.addr %s256, 5
      %s260 = sadd.s32 %s258, %s259
      %s261 = smul.addr %s260, 4
      %s262 = scalar_lea.vmem %s0, %s261
      %p263 = pneg %p52
      %p264 = pneg %p49
      %s265 = sadd.s32 %s22, 1
      %s266 = smul.u32 %s265, 4
      %p267 = scmp.lt.s32.totalorder %s21, 1
      %s268 = scalar_select %p267, %s21, 1
      %p269 = scmp.lt.s32.totalorder %s266, 4
      %s270 = scalar_select %p269, %s266, 4
      %s271 = smul.addr %s268, 5
      %s272 = sadd.s32 %s270, %s271
      %s273 = smul.addr %s272, 4
      %s274 = scalar_lea.vmem %s1, %s273
      %p275 = pneg %p84
      %p276 = pneg %p81
      %p277 = pneg %p105
      %p278 = pneg %p102
      %p279 = pneg %p133
      %p280 = pneg %p130
      %s281 = smul.u32 2, %s22
      %p282 = scmp.lt.s32.totalorder %s21, 1
      %s283 = scalar_select %p282, %s21, 1
      %p284 = scmp.lt.s32.totalorder %s281, 1
      %s285 = scalar_select %p284, %s281, 1
      %s286 = smul.addr %s283, 2
      %s287 = sadd.s32 %s285, %s286
      %s288 = smul.addr %s287, 4
      %s289 = scalar_lea.vmem %s3, %s288
      %p290 = pneg %p159
      %p291 = pneg %p156
      %p292 = scmp.lt.s32.totalorder %s21, 1
      %s293 = scalar_select %p292, %s21, 1
      %s294 = scalar_lea.vmem %s4, %s293
      %p295 = pneg %p185
      %p296 = pneg %p182
      %p297 = scmp.lt.s32.totalorder %s21, 1
      %s298 = scalar_select %p297, %s21, 1
      %s299 = scalar_lea.vmem %s5, %s298
      %s300 = smul.u32 4, %s22
      %s301 = ssub.s32 5, %s300
      %p302 = scmp.lt.s32.totalorder %s301, 4
      %s303 = scalar_select %p302, %s301, 4
      %s304 = smul.u32 64, %s303
      %p305 = scmp.lt.s32.totalorder %s21, 1
      %s306 = scalar_select %p305, %s21, 1
      %p307 = scmp.lt.s32.totalorder %s300, 4
      %s308 = scalar_select %p307, %s300, 4
      %s309 = smul.addr %s306, 5
      %s310 = sadd.s32 %s308, %s309
      %s311 = smul.addr %s310, 4
      %s312 = scalar_lea.vmem %s0, %s311
      %s313 = smul.u32 4, %s22
      %s314 = ssub.s32 5, %s313
      %p315 = scmp.lt.s32.totalorder %s314, 4
      %s316 = scalar_select %p315, %s314, 4
      %s317 = smul.u32 64, %s316
      %s318 = sadd.s32 %s22, 1
      %s319 = smul.u32 %s318, 4
      %p320 = scmp.lt.s32.totalorder %s21, 1
      %s321 = scalar_select %p320, %s21, 1
      %p322 = scmp.lt.s32.totalorder %s319, 4
      %s323 = scalar_select %p322, %s319, 4
      %s324 = smul.addr %s321, 5
      %s325 = sadd.s32 %s323, %s324
      %s326 = smul.addr %s325, 4
      %s327 = scalar_lea.vmem %s1, %s326
      %s328 = sadd.s32 %s22, 1
      %s329 = smul.u32 %s328, 4
      %s330 = smul.u32 2, %s22
      %p331 = scmp.lt.s32.totalorder %s21, 1
      %s332 = scalar_select %p331, %s21, 1
      %p333 = scmp.lt.s32.totalorder %s330, 1
      %s334 = scalar_select %p333, %s330, 1
      %s335 = smul.addr %s332, 2
      %s336 = sadd.s32 %s334, %s335
      %s337 = smul.addr %s336, 4
      %s338 = scalar_lea.vmem %s3, %s337
      %s339 = smul.u32 2, %s22
      %p340 = scmp.lt.s32.totalorder %s21, 1
      %s341 = scalar_select %p340, %s21, 1
      %s342 = scalar_lea.vmem %s4, %s341
      %p343 = scmp.lt.s32.totalorder %s21, 1
      %s344 = scalar_select %p343, %s21, 1
      %s345 = scalar_lea.vmem %s5, %s344
      %p347 = scmp.eq.s32.totalorder %s22, 0
      // Predicated region
      $region33: #{resnet1d_forward.23} parent=31 // pred_check
        %p348 = pneg %p347
      $region34: #{resnet1d_forward.23} parent=31 // pred_check_branch
        %350 = sbr.rel (%p348) target = $region36
      $region35: #{resnet1d_forward.23} parent=31 // pred_region
        %351 = vst [vmem:[%s342] sm:$0x1] 0.0
        %352 = vst [vmem:[%s345] sm:$0x1] 0.0
      $region36: #{resnet1d_forward.23} parent=31 // pred_fallthru
        _
      %v353 = vld [vmem:[%s312] sm:$0xf]
      %v354 = vld [vmem:[%s312 + $0x4] sm:$0xf]
      %v355 = vld [vmem:[%s312 + $0x8] sm:$0xf]
      %v356 = vld [vmem:[%s312 + $0xc] sm:$0xf]
      %v357 = vunpack.c.l.bf16 %v353
      %v358 = vunpack.c.l.bf16 %v354
      %v359 = vunpack.c.l.bf16 %v355
      %v360 = vunpack.c.l.bf16 %v356
      %361 = vst [vmem:[#allocation2] sm:$0xff] %v357
      %362 = vst [vmem:[#allocation2 + $0x8] sm:$0xff] %v358
      %363 = vst [vmem:[#allocation2 + $0x10] sm:$0xff] %v359
      %364 = vst [vmem:[#allocation2 + $0x18] sm:$0xff] %v360
      %v365 = vld [vmem:[%s327] sm:$0xf]
      %v366 = vunpack.c.l.bf16 %v365
      %367 = vst [vmem:[#allocation2 + $0x20] sm:$0xff] %v366
      %v368 = vld [vmem:[#allocation2] ss:$2 sm:$0xff]
      %s369 = scalar_lea.vmem [#allocation2], 16
      %v370 = vld [vmem:[%s369] ss:$2 sm:$0xff]
      %v371 = vpack.c.bf16 %v370, %v368
      %s372 = scalar_lea.vmem [#allocation2], 1
      %v373 = vld [vmem:[%s372] ss:$2 sm:$0xff]
      %s374 = scalar_lea.vmem [#allocation2], 17
      %v375 = vld [vmem:[%s374] ss:$2 sm:$0xff]
      %v376 = vpack.c.bf16 %v375, %v373
      %s377 = scalar_lea.vmem [#allocation2], 2
      %v378 = vld [vmem:[%s377] ss:$2 sm:$0xff]
      %s379 = scalar_lea.vmem [#allocation2], 18
      %v380 = vld [vmem:[%s379] ss:$2 sm:$0xff]
      %v381 = vpack.c.bf16 %v380, %v378
      %v382 = vld [vmem:[%s2] sm:$0xf]
      %v383 = vld [vmem:[%s2 + $0x4] sm:$0xf]
      %v384 = vld [vmem:[%s2 + $0x8] sm:$0xf]
      %v385 = vld [vmem:[%s2 + $0xc] sm:$0xf]
      %v386 = vld [vmem:[%s2 + $0x10] sm:$0xf]
      %v387 = vld [vmem:[%s2 + $0x14] sm:$0xf]
      %v388 = vld [vmem:[%s2 + $0x18] sm:$0xf]
      %v389 = vld [vmem:[%s2 + $0x1c] sm:$0xf]
      %v390 = vld [vmem:[%s2 + $0x20] sm:$0xf]
      %v391 = vld [vmem:[%s2 + $0x24] sm:$0xf]
      %v392 = vld [vmem:[%s2 + $0x28] sm:$0xf]
      %v393 = vld [vmem:[%s2 + $0x2c] sm:$0xf]
      %v394 = vld [vmem:[%s2 + $0x30] sm:$0xf]
      %v395 = vld [vmem:[%s2 + $0x34] sm:$0xf]
      %v396 = vld [vmem:[%s2 + $0x38] sm:$0xf]
      %v397 = vld [vmem:[%s2 + $0x3c] sm:$0xf]
      %v398 = vld [vmem:[%s2 + $0x40] sm:$0xf]
      %v399 = vld [vmem:[%s2 + $0x44] sm:$0xf]
      %v400 = vld [vmem:[%s2 + $0x48] sm:$0xf]
      %v401 = vld [vmem:[%s2 + $0x4c] sm:$0xf]
      %v402 = vld [vmem:[%s2 + $0x50] sm:$0xf]
      %v403 = vld [vmem:[%s2 + $0x54] sm:$0xf]
      %v404 = vld [vmem:[%s2 + $0x58] sm:$0xf]
      %v405 = vld [vmem:[%s2 + $0x5c] sm:$0xf]
      %v406 = vld [vmem:[%s2 + $0x60] sm:$0xf]
      %v407 = vld [vmem:[%s2 + $0x64] sm:$0xf]
      %v408 = vld [vmem:[%s2 + $0x68] sm:$0xf]
      %v409 = vld [vmem:[%s2 + $0x6c] sm:$0xf]
      %v410 = vld [vmem:[%s2 + $0x70] sm:$0xf]
      %v411 = vld [vmem:[%s2 + $0x74] sm:$0xf]
      %v412 = vld [vmem:[%s2 + $0x78] sm:$0xf]
      %v413 = vld [vmem:[%s2 + $0x7c] sm:$0xf]
      %v414 = vld [vmem:[%s2 + $0x80] sm:$0xf]
      %v415 = vld [vmem:[%s2 + $0x84] sm:$0xf]
      %v416 = vld [vmem:[%s2 + $0x88] sm:$0xf]
      %v417 = vld [vmem:[%s2 + $0x8c] sm:$0xf]
      %v418 = vld [vmem:[%s2 + $0x90] sm:$0xf]
      %v419 = vld [vmem:[%s2 + $0x94] sm:$0xf]
      %v420 = vld [vmem:[%s2 + $0x98] sm:$0xf]
      %v421 = vld [vmem:[%s2 + $0x9c] sm:$0xf]
      %v422 = vld [vmem:[%s2 + $0xa0] sm:$0xf]
      %v423 = vld [vmem:[%s2 + $0xa4] sm:$0xf]
      %v424 = vld [vmem:[%s2 + $0xa8] sm:$0xf]
      %v425 = vld [vmem:[%s2 + $0xac] sm:$0xf]
      %v426 = vld [vmem:[%s2 + $0xb0] sm:$0xf]
      %v427 = vld [vmem:[%s2 + $0xb4] sm:$0xf]
      %v428 = vld [vmem:[%s2 + $0xb8] sm:$0xf]
      %v429 = vld [vmem:[%s2 + $0xbc] sm:$0xf]
      %v478 = vunpack.c.l.b16 %v382
      %v479 = vunpack.c.l.b16 %v383
      %v480 = vunpack.c.l.b16 %v384
      %v481 = vunpack.c.l.b16 %v385
      %v482 = vunpack.c.l.b16 %v386
      %v483 = vunpack.c.l.b16 %v387
      %v484 = vunpack.c.l.b16 %v388
      %v485 = vunpack.c.l.b16 %v389
      %v486 = vunpack.c.l.b16 %v390
      %v487 = vunpack.c.l.b16 %v391
      %v488 = vunpack.c.l.b16 %v392
      %v489 = vunpack.c.l.b16 %v393
      %v490 = vunpack.c.l.b16 %v394
      %v491 = vunpack.c.l.b16 %v395
      %v492 = vunpack.c.l.b16 %v396
      %v493 = vunpack.c.l.b16 %v397
      %v494 = vunpack.c.l.b16 %v398
      %v495 = vunpack.c.l.b16 %v399
      %v496 = vunpack.c.l.b16 %v400
      %v497 = vunpack.c.l.b16 %v401
      %v498 = vunpack.c.l.b16 %v402
      %v499 = vunpack.c.l.b16 %v403
      %v500 = vunpack.c.l.b16 %v404
      %v501 = vunpack.c.l.b16 %v405
      %v502 = vunpack.c.l.b16 %v406
      %v503 = vunpack.c.l.b16 %v407
      %v504 = vunpack.c.l.b16 %v408
      %v505 = vunpack.c.l.b16 %v409
      %v506 = vunpack.c.l.b16 %v410
      %v507 = vunpack.c.l.b16 %v411
      %v508 = vunpack.c.l.b16 %v412
      %v509 = vunpack.c.l.b16 %v413
      %v510 = vunpack.c.l.b16 %v414
      %v511 = vunpack.c.l.b16 %v415
      %v512 = vunpack.c.l.b16 %v416
      %v513 = vunpack.c.l.b16 %v417
      %v514 = vunpack.c.l.b16 %v418
      %v515 = vunpack.c.l.b16 %v419
      %v516 = vunpack.c.l.b16 %v420
      %v517 = vunpack.c.l.b16 %v421
      %v518 = vunpack.c.l.b16 %v422
      %v519 = vunpack.c.l.b16 %v423
      %v520 = vunpack.c.l.b16 %v424
      %v521 = vunpack.c.l.b16 %v425
      %v522 = vunpack.c.l.b16 %v426
      %v523 = vunpack.c.l.b16 %v427
      %v524 = vunpack.c.l.b16 %v428
      %v525 = vunpack.c.l.b16 %v429
      %v526 = vpack.c.b16 %v479, %v478
      %v527 = vpack.c.b16 %v481, %v480
      %v528 = vpack.c.b16 %v483, %v482
      %v529 = vpack.c.b16 %v485, %v484
      %v530 = vpack.c.b16 %v487, %v486
      %v531 = vpack.c.b16 %v489, %v488
      %v532 = vpack.c.b16 %v491, %v490
      %v533 = vpack.c.b16 %v493, %v492
      %v534 = vpack.c.b16 %v495, %v494
      %v535 = vpack.c.b16 %v497, %v496
      %v536 = vpack.c.b16 %v499, %v498
      %v537 = vpack.c.b16 %v501, %v500
      %v538 = vpack.c.b16 %v503, %v502
      %v539 = vpack.c.b16 %v505, %v504
      %v540 = vpack.c.b16 %v507, %v506
      %v541 = vpack.c.b16 %v509, %v508
      %v542 = vpack.c.b16 %v511, %v510
      %v543 = vpack.c.b16 %v513, %v512
      %v544 = vpack.c.b16 %v515, %v514
      %v545 = vpack.c.b16 %v517, %v516
      %v546 = vpack.c.b16 %v519, %v518
      %v547 = vpack.c.b16 %v521, %v520
      %v548 = vpack.c.b16 %v523, %v522
      %v549 = vpack.c.b16 %v525, %v524
      %574 = vmatprep.subr.bf16.mxu0 0
      %575 = vmatpush1.bf16.msra.mxu0 %v526
      %576 = vmatprep.subr.bf16.mxu0 0
      %577 = vmatpush1.bf16.msra.mxu0 %v527
      %578 = vmatprep.subr.bf16.mxu0 0
      %579 = vmatpush1.bf16.msra.mxu0 %v528
      %580 = vmatprep.subr.bf16.mxu0 0
      %581 = vmatpush1.bf16.msra.mxu0 %v529
      %582 = vmatprep.subr.bf16.mxu0 0
      %583 = vmatpush1.bf16.msra.mxu0 %v530
      %584 = vmatprep.subr.bf16.mxu0 0
      %585 = vmatpush1.bf16.msra.mxu0 %v531
      %586 = vmatprep.subr.bf16.mxu0 0
      %587 = vmatpush1.bf16.msra.mxu0 %v532
      %588 = vmatprep.subr.bf16.mxu0 0
      %589 = vmatpush1.bf16.msra.mxu0 %v533
      %590 = vmatprep.subr.bf16.mxu0 0
      %591 = vmatpush1.bf16.msra.mxu0 %v534
      %592 = vmatprep.subr.bf16.mxu0 0
      %593 = vmatpush1.bf16.msra.mxu0 %v535
      %594 = vmatprep.subr.bf16.mxu0 0
      %595 = vmatpush1.bf16.msra.mxu0 %v536
      %596 = vmatprep.subr.bf16.mxu0 0
      %597 = vmatpush1.bf16.msra.mxu0 %v537
      %598 = vmatprep.subr.bf16.mxu0 0
      %599 = vmatpush1.bf16.msra.mxu0 %v538
      %600 = vmatprep.subr.bf16.mxu0 0
      %601 = vmatpush1.bf16.msra.mxu0 %v539
      %602 = vmatprep.subr.bf16.mxu0 0
      %603 = vmatpush1.bf16.msra.mxu0 %v540
      %604 = vmatprep.subr.bf16.mxu0 0
      %605 = vmatpush1.bf16.msra.mxu0 %v541
      %606 = vmatprep.mubr.bf16.mxu0 %v376
      %607 = vmatmul.mubr.bf16.gmra.mrb[0].mxu0 %v371
      %v608 = vpop.f32.mrb[0].mxu0
      %v609 = vadd.f32 0.0, %v608
      %v610 = vpop.f32.mrb[0].mxu0
      %v611 = vpop.f32.mrb[0].mxu0
      %v612 = vadd.f32 0.0, %v611
      %v613 = vpop.f32.mrb[0].mxu0
      %614 = vdwg.mxu0
      %615 = vmatprep.subr.bf16.mxu0 0
      %616 = vmatpush1.bf16.msra.mxu0 %v542
      %617 = vmatprep.subr.bf16.mxu0 0
      %618 = vmatpush1.bf16.msra.mxu0 %v543
      %619 = vmatprep.subr.bf16.mxu0 0
      %620 = vmatpush1.bf16.msra.mxu0 %v544
      %621 = vmatprep.subr.bf16.mxu0 0
      %622 = vmatpush1.bf16.msra.mxu0 %v545
      %623 = vmatprep.subr.bf16.mxu0 0
      %624 = vmatpush1.bf16.msra.mxu0 %v546
      %625 = vmatprep.subr.bf16.mxu0 0
      %626 = vmatpush1.bf16.msra.mxu0 %v547
      %627 = vmatprep.subr.bf16.mxu0 0
      %628 = vmatpush1.bf16.msra.mxu0 %v548
      %629 = vmatprep.subr.bf16.mxu0 0
      %630 = vmatpush1.bf16.msra.mxu0 %v549
      %631 = vmatprep.subr.bf16.mxu0 0
      %632 = vmatpush1.bf16.msra.mxu0 0
      %633 = vmatprep.subr.bf16.mxu0 0
      %634 = vmatpush1.bf16.msra.mxu0 0
      %635 = vmatprep.subr.bf16.mxu0 0
      %636 = vmatpush1.bf16.msra.mxu0 0
      %637 = vmatprep.subr.bf16.mxu0 0
      %638 = vmatpush1.bf16.msra.mxu0 0
      %639 = vmatprep.subr.bf16.mxu0 0
      %640 = vmatpush1.bf16.msra.mxu0 0
      %641 = vmatprep.subr.bf16.mxu0 0
      %642 = vmatpush1.bf16.msra.mxu0 0
      %643 = vmatprep.subr.bf16.mxu0 0
      %644 = vmatpush1.bf16.msra.mxu0 0
      %645 = vmatprep.subr.bf16.mxu0 0
      %646 = vmatpush1.bf16.msra.mxu0 0
      %647 = vmatprep.mubr.bf16.mxu0 0
      %648 = vmatmul.mubr.bf16.gmra.mrb[0].mxu0 %v381
      %v649 = vpop.f32.mrb[0].mxu0
      %v650 = vadd.f32 %v609, %v649
      %v651 = vpop.f32.mrb[0].mxu0
      %v652 = vpop.f32.mrb[0].mxu0
      %v653 = vadd.f32 %v612, %v652
      %v654 = vpop.f32.mrb[0].mxu0
      %655 = vdwg.mxu0
      %v656 = vpack.c.bf16 %v653, %v650
      %v658 = vunpack.c.l.b16 %v656
      %v659 = vunpack.c.h.b16 %v656
      %v660 = vpack.c.b16 %v658, %v658
      %v661 = vpack.c.b16 %v659, %v659
      %664 = vst [vmem:[%s338] sm:$0xf] %v660
      %665 = vst [vmem:[%s338 + $0x4] sm:$0xf] %v661
      // Predicated region
      $region37: #{resnet1d_forward.23} parent=31 // pred_check
        %p666 = pneg %p347
      $region38: #{resnet1d_forward.23} parent=31 // pred_check_branch
        %668 = sbr.rel (%p666) target = $region40
      $region39: #{resnet1d_forward.23} parent=31 // pred_region
        %v669 = vlaneseq
        %v670 = vshrl.u32 %v669, 7
        %v671 = vadd.s32 %v670, 8
        %vm672 = vcmp.lt.s32.totalorder %v670, 13
        %vm673 = vcmp.lt.s32.totalorder %v671, 13
        %v674 = vsel %vm672, 1, 0
        %v675 = vsel %vm673, 1, 0
        %vm676 = vcmp.eq.s32.totalorder %v674, 1
        %vm677 = vcmp.eq.s32.totalorder %v675, 1
        %v678 = vsel %vm676, %v650, 0.0
        %v679 = vsel %vm677, %v653, 0.0
        %v680 = vld [vmem:[%s342] sm:$0x1]
        %v681 = vadd.f32 %v678, %v679
        %v682 = vrot.slane %v681, 4
        %v683 = vadd.f32 %v681, %v682
        %v684 = vrot.slane %v683, 2
        %v685 = vadd.f32 %v683, %v684
        %v686 = vrot.slane %v685, 1
        %v687 = vadd.f32 %v685, %v686
        %v688 = vadd.f32 %v680, %v687
        %689 = vst [vmem:[%s342] sm:$0x1] %v688
        %v690 = vld [vmem:[%s345] sm:$0x1]
        %v691 = vmul.f32 %v678, %v678
        %v692 = vmul.f32 %v679, %v679
        %v693 = vadd.f32 %v691, %v692
        %v694 = vrot.slane %v693, 4
        %v695 = vadd.f32 %v693, %v694
        %v696 = vrot.slane %v695, 2
        %v697 = vadd.f32 %v695, %v696
        %v698 = vrot.slane %v697, 1
        %v699 = vadd.f32 %v697, %v698
        %v700 = vadd.f32 %v690, %v699
        %701 = vst [vmem:[%s345] sm:$0x1] %v700
      $region40: #{resnet1d_forward.23} parent=31 // pred_fallthru
        _
      %p702 = scmp.ne.s32.totalorder %s22, 0
      // Predicated region
      $region41: #{resnet1d_forward.23} parent=31 // pred_check
        %p703 = pneg %p702
      $region42: #{resnet1d_forward.23} parent=31 // pred_check_branch
        %705 = sbr.rel (%p703) target = $region44
      $region43: #{resnet1d_forward.23} parent=31 // pred_region
        %v706 = vld [vmem:[%s342] sm:$0x1]
        %v707 = vadd.f32 %v650, %v653
        %v708 = vrot.slane %v707, 4
        %v709 = vadd.f32 %v707, %v708
        %v710 = vrot.slane %v709, 2
        %v711 = vadd.f32 %v709, %v710
        %v712 = vrot.slane %v711, 1
        %v713 = vadd.f32 %v711, %v712
        %v714 = vadd.f32 %v706, %v713
        %715 = vst [vmem:[%s342] sm:$0x1] %v714
        %v716 = vld [vmem:[%s345] sm:$0x1]
        %v717 = vmul.f32 %v650, %v650
        %v718 = vmul.f32 %v653, %v653
        %v719 = vadd.f32 %v717, %v718
        %v720 = vrot.slane %v719, 4
        %v721 = vadd.f32 %v719, %v720
        %v722 = vrot.slane %v721, 2
        %v723 = vadd.f32 %v721, %v722
        %v724 = vrot.slane %v723, 1
        %v725 = vadd.f32 %v723, %v724
        %v726 = vadd.f32 %v716, %v725
        %727 = vst [vmem:[%s345] sm:$0x1] %v726
      $region44: #{resnet1d_forward.23} parent=31 // pred_fallthru
        _
      %s728 = smul.u32 2, %s22
      %p729 = scmp.lt.s32.totalorder %s21, 1
      %s730 = scalar_select %p729, %s21, 1
      %p731 = scmp.lt.s32.totalorder %s728, 1
      %s732 = scalar_select %p731, %s728, 1
      %s733 = smul.addr %s730, 2
      %s734 = sadd.s32 %s732, %s733
      %s735 = smul.addr %s734, 4
      %s736 = scalar_lea.vmem %s3, %s735
      %p737 = scmp.lt.s32.totalorder %s21, 1
      %s738 = scalar_select %p737, %s21, 1
      %s739 = scalar_lea.vmem %s4, %s738
      %p740 = scmp.lt.s32.totalorder %s21, 1
      %s741 = scalar_select %p740, %s21, 1
      %s742 = scalar_lea.vmem %s5, %s741
      // Predicated region
      $region45: #{resnet1d_forward.23} parent=31 // pred_check
        %p743 = pneg %p130
      $region46: #{resnet1d_forward.23} parent=31 // pred_check_branch
        %745 = sbr.rel (%p743) target = $region48
      $region47: #{resnet1d_forward.23} parent=31 // pred_region
        %s746 = smul.u32 2, %s22
      $region48: #{resnet1d_forward.23} parent=31 // pred_fallthru
        _
      // Predicated region
      $region49: #{resnet1d_forward.23} parent=31 // pred_check
        %p747 = pneg %p156
      $region50: #{resnet1d_forward.23} parent=31 // pred_check_branch
        %749 = sbr.rel (%p747) target = $region52
      $region51: #{resnet1d_forward.23} parent=31 // pred_region
        _
      $region52: #{resnet1d_forward.23} parent=31 // pred_fallthru
        _
      // Predicated region
      $region53: #{resnet1d_forward.23} parent=31 // pred_check
        %p750 = pneg %p182
      $region54: #{resnet1d_forward.23} parent=31 // pred_check_branch
        %752 = sbr.rel (%p750) target = $region56
      $region55: #{resnet1d_forward.23} parent=31 // pred_region
        _
      $region56: #{resnet1d_forward.23} parent=31 // pred_fallthru
        _
    $region32: #{resnet1d_forward.23} parent=5 // pred_fallthru
      _
    %p753 = scmp.le.s32.totalorder 2, %s12
    // Predicated region
    $region57: #{resnet1d_forward.23} parent=5 // pred_check
      %p754 = pneg %p753
    $region58: #{resnet1d_forward.23} parent=5 // pred_check_branch
      %756 = sbr.rel (%p754) target = $region60
    $region59: #{resnet1d_forward.23} parent=5 // pred_region
      %s757 = ssub.s32 %s12, 2
      // Predicated region
      $region61: #{resnet1d_forward.23} parent=59 // pred_check
        %p758 = pneg %p136
      $region62: #{resnet1d_forward.23} parent=59 // pred_check_branch
        %760 = sbr.rel (%p758) target = $region64
      $region63: #{resnet1d_forward.23} parent=59 // pred_region
        %s761 = smul.u32 2, %s24
        %p762 = scmp.lt.s32.totalorder %s23, 1
        %s763 = scalar_select %p762, %s23, 1
        %p764 = scmp.lt.s32.totalorder %s761, 1
        %s765 = scalar_select %p764, %s761, 1
        %s766 = smul.addr %s763, 2
        %s767 = sadd.s32 %s765, %s766
        %s768 = smul.addr %s767, 4
        %s769 = scalar_lea.vmem %s3, %s768
      $region64: #{resnet1d_forward.23} parent=59 // pred_fallthru
        _
      // Predicated region
      $region65: #{resnet1d_forward.23} parent=59 // pred_check
        %p770 = pneg %p162
      $region66: #{resnet1d_forward.23} parent=59 // pred_check_branch
        %772 = sbr.rel (%p770) target = $region68
      $region67: #{resnet1d_forward.23} parent=59 // pred_region
        %p773 = scmp.lt.s32.totalorder %s23, 1
        %s774 = scalar_select %p773, %s23, 1
        %s775 = scalar_lea.vmem %s4, %s774
      $region68: #{resnet1d_forward.23} parent=59 // pred_fallthru
        _
      // Predicated region
      $region69: #{resnet1d_forward.23} parent=59 // pred_check
        %p776 = pneg %p188
      $region70: #{resnet1d_forward.23} parent=59 // pred_check_branch
        %778 = sbr.rel (%p776) target = $region72
      $region71: #{resnet1d_forward.23} parent=59 // pred_region
        %p779 = scmp.lt.s32.totalorder %s23, 1
        %s780 = scalar_select %p779, %s23, 1
        %s781 = scalar_lea.vmem %s5, %s780
      $region72: #{resnet1d_forward.23} parent=59 // pred_fallthru
        _
    $region60: #{resnet1d_forward.23} parent=5 // pred_fallthru
      _
  $region6: #{resnet1d_forward.23} parent=0 // loop_footer
    %s16 = sadd.s32 1, %s12
  $region7: #{resnet1d_forward.23} parent=0 // loop_footer_branch
    %11 = sbr.rel target = $region3
  $region8: #{resnet1d_forward.23} parent=0 // loop_exit
    _

// kernel: resnet1d_forward.25
$region0: #{resnet1d_forward.25}
  #allocation0 [shape = 'u32[]', space=smem, size = 0x4, offset = 0x4, fixed_abs, tag = 'smem constant byte address 0x4 - core index']
  #allocation1 [shape = 'u32[144,128]{1,0:T(1,128)}', space=vmem, size = 0x12000, scoped, tag = 'internal scratch']
  #allocation2 [shape = 'f32[24,128]{1,0:T(8,128)}', space=vmem, size = 0x3000, scoped, tag = 'scratch operand']
  %s0 = inlined_call_operand.vmem [shape: bf16[2,24,128], index: 0, kind: input, shape index: {}, may-alias: {0,1}]
  %s1 = inlined_call_operand.vmem [shape: bf16[2,24,128], index: 1, kind: input, shape index: {}, may-alias: {0,1}]
  %s2 = inlined_call_operand.vmem [shape: bf16[384,128], index: 2, kind: input, shape index: {}]
  %s3 = inlined_call_operand.vmem [shape: bf16[2,16,128], index: 3, kind: output, shape index: {0}]
  %s4 = inlined_call_operand.vmem [shape: f32[2,1,128], index: 4, kind: output, shape index: {1}]
  %s5 = inlined_call_operand.vmem [shape: f32[2,1,128], index: 5, kind: output, shape index: {2}]
  %6 = xla_tuple %s3, %s4, %s5
  %s7 = sld [smem:[#allocation0]]
  $region73: #{resnet1d_forward.25} parent=0
    _
  %s9 = ssub.s32 1, %s7
  %s10 = scalar_select 0, %s9, %s7
  loop: start=0, step=1, limit=4
  $region2: #{resnet1d_forward.25} parent=0 // loop_pre_header
    _
  $region3: #{resnet1d_forward.25} parent=0 // loop_header
    %s12 = sphi 0, %s16
    %p13 = scmp.ge.s32.totalorder %s12, 4
    %s19 = sphi 0, %s31
    %s20 = sphi 0, %s27
    %s21 = sphi 0, %s19
    %s22 = sphi 0, %s20
    %s23 = sphi 0, %s21
    %s24 = sphi 0, %s22
    %s36 = sphi 0, %s38
    %s39 = sphi 0, %s36
    %s40 = sphi 0, %s39
    %s56 = sphi 0, %s40
    %s68 = sphi 0, %s70
    %s71 = sphi 0, %s68
    %s72 = sphi 0, %s71
    %s88 = sphi 0, %s72
    %s92 = sphi 0, %s92
    %s94 = sphi 0, %s92
    %s95 = sphi 0, %s94
    %s109 = sphi 0, %s95
    %s117 = sphi 0, %s119
    %s120 = sphi 0, %s117
    %s121 = sphi 0, %s120
    %s137 = sphi 0, %s121
    %s143 = sphi 0, %s145
    %s146 = sphi 0, %s143
    %s147 = sphi 0, %s146
    %s163 = sphi 0, %s147
    %s169 = sphi 0, %s171
    %s172 = sphi 0, %s169
    %s173 = sphi 0, %s172
    %s189 = sphi 0, %s173
  $region4: #{resnet1d_forward.25} parent=0 // loop_header_branch
    %15 = sbr.rel (%p13) target = $region8
  $region5: #{resnet1d_forward.25} parent=0 // loop_body
    %s17 = ssub.s32 %s12, 1
    %s18 = ssub.s32 %s12, 2
    %s25 = sadd.s32 1, %s20
    %p26 = scmp.ge.s32.totalorder %s25, 1
    %s27 = scalar_select %p26, 0, %s25
    %s28 = sadd.s32 1, %s19
    %s29 = scalar_select %p26, %s28, %s19
    %p30 = scmp.ge.s32.totalorder %s29, 2
    %s31 = scalar_select %p30, 0, %s29
    %s32 = ssub.s32 %s19, %s31
    %s33 = ssub.s32 %s20, %s27
    %s34 = sor.u32 %s32, %s33
    %p35 = scmp.eq.s32.totalorder %s34, 0
    %s37 = sadd.s32 %s36, 1
    %s38 = scalar_select %p35, %s36, %s37
    %p41 = pneg %p35
    %p42 = scmp.eq.s32.totalorder %s12, 1
    %p43 = por %p41, %p42
    %p44 = scmp.ne.s32.totalorder %s36, %s39
    %p45 = scmp.eq.s32.totalorder %s12, 0
    %p46 = por %p44, %p45
    %p47 = scmp.ne.s32.totalorder %s36, %s39
    %p48 = scmp.eq.s32.totalorder %s17, 1
    %p49 = por %p47, %p48
    %p50 = scmp.ne.s32.totalorder %s39, %s40
    %p51 = scmp.eq.s32.totalorder %s17, 0
    %p52 = por %p50, %p51
    %p53 = scmp.ne.s32.totalorder %s39, %s40
    %p54 = scmp.eq.s32.totalorder %s18, 1
    %p55 = por %p53, %p54
    %p57 = scmp.ne.s32.totalorder %s40, %s56
    %p58 = scmp.eq.s32.totalorder %s18, 0
    %p59 = por %p57, %p58
    %s60 = sadd.s32 %s20, 1
    %s61 = smul.u32 %s60, 2
    %s62 = sadd.s32 %s27, 1
    %s63 = smul.u32 %s62, 2
    %s64 = ssub.s32 %s19, %s31
    %s65 = ssub.s32 %s61, %s63
    %s66 = sor.u32 %s64, %s65
    %p67 = scmp.eq.s32.totalorder %s66, 0
    %s69 = sadd.s32 %s68, 1
    %s70 = scalar_select %p67, %s68, %s69
    %p73 = pneg %p67
    %p74 = scmp.eq.s32.totalorder %s12, 1
    %p75 = por %p73, %p74
    %p76 = scmp.ne.s32.totalorder %s68, %s71
    %p77 = scmp.eq.s32.totalorder %s12, 0
    %p78 = por %p76, %p77
    %p79 = scmp.ne.s32.totalorder %s68, %s71
    %p80 = scmp.eq.s32.totalorder %s17, 1
    %p81 = por %p79, %p80
    %p82 = scmp.ne.s32.totalorder %s71, %s72
    %p83 = scmp.eq.s32.totalorder %s17, 0
    %p84 = por %p82, %p83
    %p85 = scmp.ne.s32.totalorder %s71, %s72
    %p86 = scmp.eq.s32.totalorder %s18, 1
    %p87 = por %p85, %p86
    %p89 = scmp.ne.s32.totalorder %s72, %s88
    %p90 = scmp.eq.s32.totalorder %s18, 0
    %p91 = por %p89, %p90
    %s93 = sadd.s32 %s92, 1
    %p96 = scmp.eq.s32.totalorder %s12, 1
    %p97 = scmp.ne.s32.totalorder %s92, %s94
    %p98 = scmp.eq.s32.totalorder %s12, 0
    %p99 = por %p97, %p98
    %p100 = scmp.ne.s32.totalorder %s92, %s94
    %p101 = scmp.eq.s32.totalorder %s17, 1
    %p102 = por %p100, %p101
    %p103 = scmp.ne.s32.totalorder %s94, %s95
    %p104 = scmp.eq.s32.totalorder %s17, 0
    %p105 = por %p103, %p104
    %p106 = scmp.ne.s32.totalorder %s94, %s95
    %p107 = scmp.eq.s32.totalorder %s18, 1
    %p108 = por %p106, %p107
    %p110 = scmp.ne.s32.totalorder %s95, %s109
    %p111 = scmp.eq.s32.totalorder %s18, 0
    %p112 = por %p110, %p111
    %s113 = ssub.s32 %s19, %s31
    %s114 = ssub.s32 %s20, %s27
    %s115 = sor.u32 %s113, %s114
    %p116 = scmp.eq.s32.totalorder %s115, 0
    %s118 = sadd.s32 %s117, 1
    %s119 = scalar_select %p116, %s117, %s118
    %p122 = pneg %p116
    %p123 = scmp.eq.s32.totalorder %s12, 1
    %p124 = por %p122, %p123
    %p125 = scmp.ne.s32.totalorder %s117, %s120
    %p126 = scmp.eq.s32.totalorder %s12, 0
    %p127 = por %p125, %p126
    %p128 = scmp.ne.s32.totalorder %s117, %s120
    %p129 = scmp.eq.s32.totalorder %s17, 1
    %p130 = por %p128, %p129
    %p131 = scmp.ne.s32.totalorder %s120, %s121
    %p132 = scmp.eq.s32.totalorder %s17, 0
    %p133 = por %p131, %p132
    %p134 = scmp.ne.s32.totalorder %s120, %s121
    %p135 = scmp.eq.s32.totalorder %s18, 1
    %p136 = por %p134, %p135
    %p138 = scmp.ne.s32.totalorder %s121, %s137
    %p139 = scmp.eq.s32.totalorder %s18, 0
    %p140 = por %p138, %p139
    %s141 = ssub.s32 %s19, %s31
    %p142 = scmp.eq.s32.totalorder %s141, 0
    %s144 = sadd.s32 %s143, 1
    %s145 = scalar_select %p142, %s143, %s144
    %p148 = pneg %p142
    %p149 = scmp.eq.s32.totalorder %s12, 1
    %p150 = por %p148, %p149
    %p151 = scmp.ne.s32.totalorder %s143, %s146
    %p152 = scmp.eq.s32.totalorder %s12, 0
    %p153 = por %p151, %p152
    %p154 = scmp.ne.s32.totalorder %s143, %s146
    %p155 = scmp.eq.s32.totalorder %s17, 1
    %p156 = por %p154, %p155
    %p157 = scmp.ne.s32.totalorder %s146, %s147
    %p158 = scmp.eq.s32.totalorder %s17, 0
    %p159 = por %p157, %p158
    %p160 = scmp.ne.s32.totalorder %s146, %s147
    %p161 = scmp.eq.s32.totalorder %s18, 1
    %p162 = por %p160, %p161
    %p164 = scmp.ne.s32.totalorder %s147, %s163
    %p165 = scmp.eq.s32.totalorder %s18, 0
    %p166 = por %p164, %p165
    %s167 = ssub.s32 %s19, %s31
    %p168 = scmp.eq.s32.totalorder %s167, 0
    %s170 = sadd.s32 %s169, 1
    %s171 = scalar_select %p168, %s169, %s170
    %p174 = pneg %p168
    %p175 = scmp.eq.s32.totalorder %s12, 1
    %p176 = por %p174, %p175
    %p177 = scmp.ne.s32.totalorder %s169, %s172
    %p178 = scmp.eq.s32.totalorder %s12, 0
    %p179 = por %p177, %p178
    %p180 = scmp.ne.s32.totalorder %s169, %s172
    %p181 = scmp.eq.s32.totalorder %s17, 1
    %p182 = por %p180, %p181
    %p183 = scmp.ne.s32.totalorder %s172, %s173
    %p184 = scmp.eq.s32.totalorder %s17, 0
    %p185 = por %p183, %p184
    %p186 = scmp.ne.s32.totalorder %s172, %s173
    %p187 = scmp.eq.s32.totalorder %s18, 1
    %p188 = por %p186, %p187
    %p190 = scmp.ne.s32.totalorder %s173, %s189
    %p191 = scmp.eq.s32.totalorder %s18, 0
    %p192 = por %p190, %p191
    %p193 = scmp.le.s32.totalorder 1, %s12
    %p194 = scmp.lt.s32.totalorder %s12, 3
    %p195 = pnand %p193, %p194
    %p196 = pneg %p195
    // Predicated region
    $region9: #{resnet1d_forward.25} parent=5 // pred_check
      _
    $region10: #{resnet1d_forward.25} parent=5 // pred_check_branch
      %198 = sbr.rel (%p195) target = $region12
    $region11: #{resnet1d_forward.25} parent=5 // pred_region
      %s199 = ssub.s32 %s12, 1
      // Predicated region
      $region13: #{resnet1d_forward.25} parent=11 // pred_check
        %p200 = pneg %p105
      $region14: #{resnet1d_forward.25} parent=11 // pred_check_branch
        %202 = sbr.rel (%p200) target = $region16
      $region15: #{resnet1d_forward.25} parent=11 // pred_region
        _
      $region16: #{resnet1d_forward.25} parent=11 // pred_fallthru
        _
    $region12: #{resnet1d_forward.25} parent=5 // pred_fallthru
      _
    %p203 = scmp.lt.s32.totalorder %s12, 2
    // Predicated region
    $region17: #{resnet1d_forward.25} parent=5 // pred_check
      %p204 = pneg %p203
    $region18: #{resnet1d_forward.25} parent=5 // pred_check_branch
      %206 = sbr.rel (%p204) target = $region20
    $region19: #{resnet1d_forward.25} parent=5 // pred_region
      // Predicated region
      $region21: #{resnet1d_forward.25} parent=19 // pred_check
        %p207 = pneg %p46
      $region22: #{resnet1d_forward.25} parent=19 // pred_check_branch
        %209 = sbr.rel (%p207) target = $region24
      $region23: #{resnet1d_forward.25} parent=19 // pred_region
        %s210 = smul.u32 2, %s20
        %s211 = ssub.s32 3, %s210
        %p212 = scmp.lt.s32.totalorder %s211, 2
        %s213 = scalar_select %p212, %s211, 2
        %s214 = smul.u32 64, %s213
        %p215 = scmp.lt.s32.totalorder %s19, 1
        %s216 = scalar_select %p215, %s19, 1
        %p217 = scmp.lt.s32.totalorder %s210, 2
        %s218 = scalar_select %p217, %s210, 2
        %s219 = smul.addr %s216, 3
        %s220 = sadd.s32 %s218, %s219
        %s221 = smul.addr %s220, 4
        %s222 = scalar_lea.vmem %s0, %s221
        %s223 = smul.u32 2, %s20
        %s224 = ssub.s32 3, %s223
        %p225 = scmp.lt.s32.totalorder %s224, 2
        %s226 = scalar_select %p225, %s224, 2
        %s227 = smul.u32 64, %s226
      $region24: #{resnet1d_forward.25} parent=19 // pred_fallthru
        _
      // Predicated region
      $region25: #{resnet1d_forward.25} parent=19 // pred_check
        %p228 = pneg %p78
      $region26: #{resnet1d_forward.25} parent=19 // pred_check_branch
        %230 = sbr.rel (%p228) target = $region28
      $region27: #{resnet1d_forward.25} parent=19 // pred_region
        %s231 = sadd.s32 %s20, 1
        %s232 = smul.u32 %s231, 2
        %p233 = scmp.lt.s32.totalorder %s19, 1
        %s234 = scalar_select %p233, %s19, 1
        %p235 = scmp.lt.s32.totalorder %s232, 2
        %s236 = scalar_select %p235, %s232, 2
        %s237 = smul.addr %s234, 3
        %s238 = sadd.s32 %s236, %s237
        %s239 = smul.addr %s238, 4
        %s240 = scalar_lea.vmem %s1, %s239
        %s241 = sadd.s32 %s20, 1
        %s242 = smul.u32 %s241, 2
      $region28: #{resnet1d_forward.25} parent=19 // pred_fallthru
        _
    $region20: #{resnet1d_forward.25} parent=5 // pred_fallthru
      _
    %p243 = scmp.le.s32.totalorder 1, %s12
    %p244 = scmp.lt.s32.totalorder %s12, 3
    %p245 = pnand %p243, %p244
    %p246 = pneg %p245
    // Predicated region
    $region29: #{resnet1d_forward.25} parent=5 // pred_check
      _
    $region30: #{resnet1d_forward.25} parent=5 // pred_check_branch
      %248 = sbr.rel (%p245) target = $region32
    $region31: #{resnet1d_forward.25} parent=5 // pred_region
      %s249 = ssub.s32 %s12, 1
      %s250 = smul.u32 2, %s22
      %s251 = ssub.s32 3, %s250
      %p252 = scmp.lt.s32.totalorder %s251, 2
      %s253 = scalar_select %p252, %s251, 2
      %s254 = smul.u32 64, %s253
      %p255 = scmp.lt.s32.totalorder %s21, 1
      %s256 = scalar_select %p255, %s21, 1
      %p257 = scmp.lt.s32.totalorder %s250, 2
      %s258 = scalar_select %p257, %s250, 2
      %s259 = smul.addr %s256, 3
      %s260 = sadd.s32 %s258, %s259
      %s261 = smul.addr %s260, 4
      %s262 = scalar_lea.vmem %s0, %s261
      %p263 = pneg %p52
      %p264 = pneg %p49
      %s265 = sadd.s32 %s22, 1
      %s266 = smul.u32 %s265, 2
      %p267 = scmp.lt.s32.totalorder %s21, 1
      %s268 = scalar_select %p267, %s21, 1
      %p269 = scmp.lt.s32.totalorder %s266, 2
      %s270 = scalar_select %p269, %s266, 2
      %s271 = smul.addr %s268, 3
      %s272 = sadd.s32 %s270, %s271
      %s273 = smul.addr %s272, 4
      %s274 = scalar_lea.vmem %s1, %s273
      %p275 = pneg %p84
      %p276 = pneg %p81
      %p277 = pneg %p105
      %p278 = pneg %p102
      %p279 = pneg %p133
      %p280 = pneg %p130
      %s281 = smul.u32 2, %s22
      %p282 = scmp.lt.s32.totalorder %s21, 1
      %s283 = scalar_select %p282, %s21, 1
      %p284 = scmp.lt.s32.totalorder %s281, 1
      %s285 = scalar_select %p284, %s281, 1
      %s286 = smul.addr %s283, 2
      %s287 = sadd.s32 %s285, %s286
      %s288 = smul.addr %s287, 4
      %s289 = scalar_lea.vmem %s3, %s288
      %p290 = pneg %p159
      %p291 = pneg %p156
      %p292 = scmp.lt.s32.totalorder %s21, 1
      %s293 = scalar_select %p292, %s21, 1
      %s294 = scalar_lea.vmem %s4, %s293
      %p295 = pneg %p185
      %p296 = pneg %p182
      %p297 = scmp.lt.s32.totalorder %s21, 1
      %s298 = scalar_select %p297, %s21, 1
      %s299 = scalar_lea.vmem %s5, %s298
      %s300 = smul.u32 2, %s22
      %s301 = ssub.s32 3, %s300
      %p302 = scmp.lt.s32.totalorder %s301, 2
      %s303 = scalar_select %p302, %s301, 2
      %s304 = smul.u32 64, %s303
      %p305 = scmp.lt.s32.totalorder %s21, 1
      %s306 = scalar_select %p305, %s21, 1
      %p307 = scmp.lt.s32.totalorder %s300, 2
      %s308 = scalar_select %p307, %s300, 2
      %s309 = smul.addr %s306, 3
      %s310 = sadd.s32 %s308, %s309
      %s311 = smul.addr %s310, 4
      %s312 = scalar_lea.vmem %s0, %s311
      %s313 = smul.u32 2, %s22
      %s314 = ssub.s32 3, %s313
      %p315 = scmp.lt.s32.totalorder %s314, 2
      %s316 = scalar_select %p315, %s314, 2
      %s317 = smul.u32 64, %s316
      %s318 = sadd.s32 %s22, 1
      %s319 = smul.u32 %s318, 2
      %p320 = scmp.lt.s32.totalorder %s21, 1
      %s321 = scalar_select %p320, %s21, 1
      %p322 = scmp.lt.s32.totalorder %s319, 2
      %s323 = scalar_select %p322, %s319, 2
      %s324 = smul.addr %s321, 3
      %s325 = sadd.s32 %s323, %s324
      %s326 = smul.addr %s325, 4
      %s327 = scalar_lea.vmem %s1, %s326
      %s328 = sadd.s32 %s22, 1
      %s329 = smul.u32 %s328, 2
      %s330 = smul.u32 2, %s22
      %p331 = scmp.lt.s32.totalorder %s21, 1
      %s332 = scalar_select %p331, %s21, 1
      %p333 = scmp.lt.s32.totalorder %s330, 1
      %s334 = scalar_select %p333, %s330, 1
      %s335 = smul.addr %s332, 2
      %s336 = sadd.s32 %s334, %s335
      %s337 = smul.addr %s336, 4
      %s338 = scalar_lea.vmem %s3, %s337
      %s339 = smul.u32 2, %s22
      %p340 = scmp.lt.s32.totalorder %s21, 1
      %s341 = scalar_select %p340, %s21, 1
      %s342 = scalar_lea.vmem %s4, %s341
      %p343 = scmp.lt.s32.totalorder %s21, 1
      %s344 = scalar_select %p343, %s21, 1
      %s345 = scalar_lea.vmem %s5, %s344
      %p347 = scmp.eq.s32.totalorder %s22, 0
      // Predicated region
      $region33: #{resnet1d_forward.25} parent=31 // pred_check
        %p348 = pneg %p347
      $region34: #{resnet1d_forward.25} parent=31 // pred_check_branch
        %350 = sbr.rel (%p348) target = $region36
      $region35: #{resnet1d_forward.25} parent=31 // pred_region
        %351 = vst [vmem:[%s342] sm:$0x1] 0.0
        %352 = vst [vmem:[%s345] sm:$0x1] 0.0
      $region36: #{resnet1d_forward.25} parent=31 // pred_fallthru
        _
      %v353 = vld [vmem:[%s312] sm:$0xf]
      %v354 = vld [vmem:[%s312 + $0x4] sm:$0xf]
      %v355 = vunpack.c.l.bf16 %v353
      %v356 = vunpack.c.l.bf16 %v354
      %357 = vst [vmem:[#allocation2] sm:$0xff] %v355
      %358 = vst [vmem:[#allocation2 + $0x8] sm:$0xff] %v356
      %v359 = vld [vmem:[%s327] sm:$0xf]
      %v360 = vunpack.c.l.bf16 %v359
      %361 = vst [vmem:[#allocation2 + $0x10] sm:$0xff] %v360
      %v362 = vld [vmem:[#allocation2] sm:$0xff]
      %v363 = vld [vmem:[#allocation2 + $0x8] sm:$0xff]
      %v364 = vpack.c.bf16 %v363, %v362
      %v365 = vld [vmem:[#allocation2 + $0x1] sm:$0xff]
      %v366 = vld [vmem:[#allocation2 + $0x9] sm:$0xff]
      %v367 = vpack.c.bf16 %v366, %v365
      %v368 = vld [vmem:[#allocation2 + $0x2] sm:$0xff]
      %v369 = vld [vmem:[#allocation2 + $0xa] sm:$0xff]
      %v370 = vpack.c.bf16 %v369, %v368
      %v371 = vld [vmem:[%s2] sm:$0xf]
      %v372 = vld [vmem:[%s2 + $0x4] sm:$0xf]
      %v373 = vld [vmem:[%s2 + $0x8] sm:$0xf]
      %v374 = vld [vmem:[%s2 + $0xc] sm:$0xf]
      %v375 = vld [vmem:[%s2 + $0x10] sm:$0xf]
      %v376 = vld [vmem:[%s2 + $0x14] sm:$0xf]
      %v377 = vld [vmem:[%s2 + $0x18] sm:$0xf]
      %v378 = vld [vmem:[%s2 + $0x1c] sm:$0xf]
      %v379 = vld [vmem:[%s2 + $0x20] sm:$0xf]
      %v380 = vld [vmem:[%s2 + $0x24] sm:$0xf]
      %v381 = vld [vmem:[%s2 + $0x28] sm:$0xf]
      %v382 = vld [vmem:[%s2 + $0x2c] sm:$0xf]
      %v383 = vld [vmem:[%s2 + $0x30] sm:$0xf]
      %v384 = vld [vmem:[%s2 + $0x34] sm:$0xf]
      %v385 = vld [vmem:[%s2 + $0x38] sm:$0xf]
      %v386 = vld [vmem:[%s2 + $0x3c] sm:$0xf]
      %v387 = vld [vmem:[%s2 + $0x40] sm:$0xf]
      %v388 = vld [vmem:[%s2 + $0x44] sm:$0xf]
      %v389 = vld [vmem:[%s2 + $0x48] sm:$0xf]
      %v390 = vld [vmem:[%s2 + $0x4c] sm:$0xf]
      %v391 = vld [vmem:[%s2 + $0x50] sm:$0xf]
      %v392 = vld [vmem:[%s2 + $0x54] sm:$0xf]
      %v393 = vld [vmem:[%s2 + $0x58] sm:$0xf]
      %v394 = vld [vmem:[%s2 + $0x5c] sm:$0xf]
      %v395 = vld [vmem:[%s2 + $0x60] sm:$0xf]
      %v396 = vld [vmem:[%s2 + $0x64] sm:$0xf]
      %v397 = vld [vmem:[%s2 + $0x68] sm:$0xf]
      %v398 = vld [vmem:[%s2 + $0x6c] sm:$0xf]
      %v399 = vld [vmem:[%s2 + $0x70] sm:$0xf]
      %v400 = vld [vmem:[%s2 + $0x74] sm:$0xf]
      %v401 = vld [vmem:[%s2 + $0x78] sm:$0xf]
      %v402 = vld [vmem:[%s2 + $0x7c] sm:$0xf]
      %v403 = vld [vmem:[%s2 + $0x80] sm:$0xf]
      %v404 = vld [vmem:[%s2 + $0x84] sm:$0xf]
      %v405 = vld [vmem:[%s2 + $0x88] sm:$0xf]
      %v406 = vld [vmem:[%s2 + $0x8c] sm:$0xf]
      %v407 = vld [vmem:[%s2 + $0x90] sm:$0xf]
      %v408 = vld [vmem:[%s2 + $0x94] sm:$0xf]
      %v409 = vld [vmem:[%s2 + $0x98] sm:$0xf]
      %v410 = vld [vmem:[%s2 + $0x9c] sm:$0xf]
      %v411 = vld [vmem:[%s2 + $0xa0] sm:$0xf]
      %v412 = vld [vmem:[%s2 + $0xa4] sm:$0xf]
      %v413 = vld [vmem:[%s2 + $0xa8] sm:$0xf]
      %v414 = vld [vmem:[%s2 + $0xac] sm:$0xf]
      %v415 = vld [vmem:[%s2 + $0xb0] sm:$0xf]
      %v416 = vld [vmem:[%s2 + $0xb4] sm:$0xf]
      %v417 = vld [vmem:[%s2 + $0xb8] sm:$0xf]
      %v418 = vld [vmem:[%s2 + $0xbc] sm:$0xf]
      %v467 = vunpack.c.l.b16 %v371
      %v468 = vunpack.c.l.b16 %v372
      %v469 = vunpack.c.l.b16 %v373
      %v470 = vunpack.c.l.b16 %v374
      %v471 = vunpack.c.l.b16 %v375
      %v472 = vunpack.c.l.b16 %v376
      %v473 = vunpack.c.l.b16 %v377
      %v474 = vunpack.c.l.b16 %v378
      %v475 = vunpack.c.l.b16 %v379
      %v476 = vunpack.c.l.b16 %v380
      %v477 = vunpack.c.l.b16 %v381
      %v478 = vunpack.c.l.b16 %v382
      %v479 = vunpack.c.l.b16 %v383
      %v480 = vunpack.c.l.b16 %v384
      %v481 = vunpack.c.l.b16 %v385
      %v482 = vunpack.c.l.b16 %v386
      %v483 = vunpack.c.l.b16 %v387
      %v484 = vunpack.c.l.b16 %v388
      %v485 = vunpack.c.l.b16 %v389
      %v486 = vunpack.c.l.b16 %v390
      %v487 = vunpack.c.l.b16 %v391
      %v488 = vunpack.c.l.b16 %v392
      %v489 = vunpack.c.l.b16 %v393
      %v490 = vunpack.c.l.b16 %v394
      %v491 = vunpack.c.l.b16 %v395
      %v492 = vunpack.c.l.b16 %v396
      %v493 = vunpack.c.l.b16 %v397
      %v494 = vunpack.c.l.b16 %v398
      %v495 = vunpack.c.l.b16 %v399
      %v496 = vunpack.c.l.b16 %v400
      %v497 = vunpack.c.l.b16 %v401
      %v498 = vunpack.c.l.b16 %v402
      %v499 = vunpack.c.l.b16 %v403
      %v500 = vunpack.c.l.b16 %v404
      %v501 = vunpack.c.l.b16 %v405
      %v502 = vunpack.c.l.b16 %v406
      %v503 = vunpack.c.l.b16 %v407
      %v504 = vunpack.c.l.b16 %v408
      %v505 = vunpack.c.l.b16 %v409
      %v506 = vunpack.c.l.b16 %v410
      %v507 = vunpack.c.l.b16 %v411
      %v508 = vunpack.c.l.b16 %v412
      %v509 = vunpack.c.l.b16 %v413
      %v510 = vunpack.c.l.b16 %v414
      %v511 = vunpack.c.l.b16 %v415
      %v512 = vunpack.c.l.b16 %v416
      %v513 = vunpack.c.l.b16 %v417
      %v514 = vunpack.c.l.b16 %v418
      %v515 = vpack.c.b16 %v468, %v467
      %v516 = vpack.c.b16 %v470, %v469
      %v517 = vpack.c.b16 %v472, %v471
      %v518 = vpack.c.b16 %v474, %v473
      %v519 = vpack.c.b16 %v476, %v475
      %v520 = vpack.c.b16 %v478, %v477
      %v521 = vpack.c.b16 %v480, %v479
      %v522 = vpack.c.b16 %v482, %v481
      %v523 = vpack.c.b16 %v484, %v483
      %v524 = vpack.c.b16 %v486, %v485
      %v525 = vpack.c.b16 %v488, %v487
      %v526 = vpack.c.b16 %v490, %v489
      %v527 = vpack.c.b16 %v492, %v491
      %v528 = vpack.c.b16 %v494, %v493
      %v529 = vpack.c.b16 %v496, %v495
      %v530 = vpack.c.b16 %v498, %v497
      %v531 = vpack.c.b16 %v500, %v499
      %v532 = vpack.c.b16 %v502, %v501
      %v533 = vpack.c.b16 %v504, %v503
      %v534 = vpack.c.b16 %v506, %v505
      %v535 = vpack.c.b16 %v508, %v507
      %v536 = vpack.c.b16 %v510, %v509
      %v537 = vpack.c.b16 %v512, %v511
      %v538 = vpack.c.b16 %v514, %v513
      %563 = vmatprep.subr.bf16.mxu0 0
      %564 = vmatpush1.bf16.msra.mxu0 %v515
      %565 = vmatprep.subr.bf16.mxu0 0
      %566 = vmatpush1.bf16.msra.mxu0 %v516
      %567 = vmatprep.subr.bf16.mxu0 0
      %568 = vmatpush1.bf16.msra.mxu0 %v517
      %569 = vmatprep.subr.bf16.mxu0 0
      %570 = vmatpush1.bf16.msra.mxu0 %v518
      %571 = vmatprep.subr.bf16.mxu0 0
      %572 = vmatpush1.bf16.msra.mxu0 %v519
      %573 = vmatprep.subr.bf16.mxu0 0
      %574 = vmatpush1.bf16.msra.mxu0 %v520
      %575 = vmatprep.subr.bf16.mxu0 0
      %576 = vmatpush1.bf16.msra.mxu0 %v521
      %577 = vmatprep.subr.bf16.mxu0 0
      %578 = vmatpush1.bf16.msra.mxu0 %v522
      %579 = vmatprep.subr.bf16.mxu0 0
      %580 = vmatpush1.bf16.msra.mxu0 %v523
      %581 = vmatprep.subr.bf16.mxu0 0
      %582 = vmatpush1.bf16.msra.mxu0 %v524
      %583 = vmatprep.subr.bf16.mxu0 0
      %584 = vmatpush1.bf16.msra.mxu0 %v525
      %585 = vmatprep.subr.bf16.mxu0 0
      %586 = vmatpush1.bf16.msra.mxu0 %v526
      %587 = vmatprep.subr.bf16.mxu0 0
      %588 = vmatpush1.bf16.msra.mxu0 %v527
      %589 = vmatprep.subr.bf16.mxu0 0
      %590 = vmatpush1.bf16.msra.mxu0 %v528
      %591 = vmatprep.subr.bf16.mxu0 0
      %592 = vmatpush1.bf16.msra.mxu0 %v529
      %593 = vmatprep.subr.bf16.mxu0 0
      %594 = vmatpush1.bf16.msra.mxu0 %v530
      %595 = vmatprep.mubr.bf16.mxu0 %v367
      %596 = vmatmul.mubr.bf16.gmra.mrb[0].mxu0 %v364
      %v597 = vpop.f32.mrb[0].mxu0
      %v598 = vadd.f32 0.0, %v597
      %v599 = vpop.f32.mrb[0].mxu0
      %v600 = vpop.f32.mrb[0].mxu0
      %v601 = vadd.f32 0.0, %v600
      %v602 = vpop.f32.mrb[0].mxu0
      %603 = vdwg.mxu0
      %604 = vmatprep.subr.bf16.mxu0 0
      %605 = vmatpush1.bf16.msra.mxu0 %v531
      %606 = vmatprep.subr.bf16.mxu0 0
      %607 = vmatpush1.bf16.msra.mxu0 %v532
      %608 = vmatprep.subr.bf16.mxu0 0
      %609 = vmatpush1.bf16.msra.mxu0 %v533
      %610 = vmatprep.subr.bf16.mxu0 0
      %611 = vmatpush1.bf16.msra.mxu0 %v534
      %612 = vmatprep.subr.bf16.mxu0 0
      %613 = vmatpush1.bf16.msra.mxu0 %v535
      %614 = vmatprep.subr.bf16.mxu0 0
      %615 = vmatpush1.bf16.msra.mxu0 %v536
      %616 = vmatprep.subr.bf16.mxu0 0
      %617 = vmatpush1.bf16.msra.mxu0 %v537
      %618 = vmatprep.subr.bf16.mxu0 0
      %619 = vmatpush1.bf16.msra.mxu0 %v538
      %620 = vmatprep.subr.bf16.mxu0 0
      %621 = vmatpush1.bf16.msra.mxu0 0
      %622 = vmatprep.subr.bf16.mxu0 0
      %623 = vmatpush1.bf16.msra.mxu0 0
      %624 = vmatprep.subr.bf16.mxu0 0
      %625 = vmatpush1.bf16.msra.mxu0 0
      %626 = vmatprep.subr.bf16.mxu0 0
      %627 = vmatpush1.bf16.msra.mxu0 0
      %628 = vmatprep.subr.bf16.mxu0 0
      %629 = vmatpush1.bf16.msra.mxu0 0
      %630 = vmatprep.subr.bf16.mxu0 0
      %631 = vmatpush1.bf16.msra.mxu0 0
      %632 = vmatprep.subr.bf16.mxu0 0
      %633 = vmatpush1.bf16.msra.mxu0 0
      %634 = vmatprep.subr.bf16.mxu0 0
      %635 = vmatpush1.bf16.msra.mxu0 0
      %636 = vmatprep.mubr.bf16.mxu0 0
      %637 = vmatmul.mubr.bf16.gmra.mrb[0].mxu0 %v370
      %v638 = vpop.f32.mrb[0].mxu0
      %v639 = vadd.f32 %v598, %v638
      %v640 = vpop.f32.mrb[0].mxu0
      %v641 = vpop.f32.mrb[0].mxu0
      %v642 = vadd.f32 %v601, %v641
      %v643 = vpop.f32.mrb[0].mxu0
      %644 = vdwg.mxu0
      %v645 = vpack.c.bf16 %v642, %v639
      %v647 = vunpack.c.l.b16 %v645
      %v648 = vunpack.c.h.b16 %v645
      %v649 = vpack.c.b16 %v647, %v647
      %v650 = vpack.c.b16 %v648, %v648
      %653 = vst [vmem:[%s338] sm:$0xf] %v649
      %654 = vst [vmem:[%s338 + $0x4] sm:$0xf] %v650
      // Predicated region
      $region37: #{resnet1d_forward.25} parent=31 // pred_check
        %p655 = pneg %p347
      $region38: #{resnet1d_forward.25} parent=31 // pred_check_branch
        %657 = sbr.rel (%p655) target = $region40
      $region39: #{resnet1d_forward.25} parent=31 // pred_region
        %v658 = vlaneseq
        %v659 = vshrl.u32 %v658, 7
        %v660 = vadd.s32 %v659, 8
        %vm661 = vcmp.lt.s32.totalorder %v659, 13
        %vm662 = vcmp.lt.s32.totalorder %v660, 13
        %v663 = vsel %vm661, 1, 0
        %v664 = vsel %vm662, 1, 0
        %vm665 = vcmp.eq.s32.totalorder %v663, 1
        %vm666 = vcmp.eq.s32.totalorder %v664, 1
        %v667 = vsel %vm665, %v639, 0.0
        %v668 = vsel %vm666, %v642, 0.0
        %v669 = vld [vmem:[%s342] sm:$0x1]
        %v670 = vadd.f32 %v667, %v668
        %v671 = vrot.slane %v670, 4
        %v672 = vadd.f32 %v670, %v671
        %v673 = vrot.slane %v672, 2
        %v674 = vadd.f32 %v672, %v673
        %v675 = vrot.slane %v674, 1
        %v676 = vadd.f32 %v674, %v675
        %v677 = vadd.f32 %v669, %v676
        %678 = vst [vmem:[%s342] sm:$0x1] %v677
        %v679 = vld [vmem:[%s345] sm:$0x1]
        %v680 = vmul.f32 %v667, %v667
        %v681 = vmul.f32 %v668, %v668
        %v682 = vadd.f32 %v680, %v681
        %v683 = vrot.slane %v682, 4
        %v684 = vadd.f32 %v682, %v683
        %v685 = vrot.slane %v684, 2
        %v686 = vadd.f32 %v684, %v685
        %v687 = vrot.slane %v686, 1
        %v688 = vadd.f32 %v686, %v687
        %v689 = vadd.f32 %v679, %v688
        %690 = vst [vmem:[%s345] sm:$0x1] %v689
      $region40: #{resnet1d_forward.25} parent=31 // pred_fallthru
        _
      %p691 = scmp.ne.s32.totalorder %s22, 0
      // Predicated region
      $region41: #{resnet1d_forward.25} parent=31 // pred_check
        %p692 = pneg %p691
      $region42: #{resnet1d_forward.25} parent=31 // pred_check_branch
        %694 = sbr.rel (%p692) target = $region44
      $region43: #{resnet1d_forward.25} parent=31 // pred_region
        %v695 = vld [vmem:[%s342] sm:$0x1]
        %v696 = vadd.f32 %v639, %v642
        %v697 = vrot.slane %v696, 4
        %v698 = vadd.f32 %v696, %v697
        %v699 = vrot.slane %v698, 2
        %v700 = vadd.f32 %v698, %v699
        %v701 = vrot.slane %v700, 1
        %v702 = vadd.f32 %v700, %v701
        %v703 = vadd.f32 %v695, %v702
        %704 = vst [vmem:[%s342] sm:$0x1] %v703
        %v705 = vld [vmem:[%s345] sm:$0x1]
        %v706 = vmul.f32 %v639, %v639
        %v707 = vmul.f32 %v642, %v642
        %v708 = vadd.f32 %v706, %v707
        %v709 = vrot.slane %v708, 4
        %v710 = vadd.f32 %v708, %v709
        %v711 = vrot.slane %v710, 2
        %v712 = vadd.f32 %v710, %v711
        %v713 = vrot.slane %v712, 1
        %v714 = vadd.f32 %v712, %v713
        %v715 = vadd.f32 %v705, %v714
        %716 = vst [vmem:[%s345] sm:$0x1] %v715
      $region44: #{resnet1d_forward.25} parent=31 // pred_fallthru
        _
      %s717 = smul.u32 2, %s22
      %p718 = scmp.lt.s32.totalorder %s21, 1
      %s719 = scalar_select %p718, %s21, 1
      %p720 = scmp.lt.s32.totalorder %s717, 1
      %s721 = scalar_select %p720, %s717, 1
      %s722 = smul.addr %s719, 2
      %s723 = sadd.s32 %s721, %s722
      %s724 = smul.addr %s723, 4
      %s725 = scalar_lea.vmem %s3, %s724
      %p726 = scmp.lt.s32.totalorder %s21, 1
      %s727 = scalar_select %p726, %s21, 1
      %s728 = scalar_lea.vmem %s4, %s727
      %p729 = scmp.lt.s32.totalorder %s21, 1
      %s730 = scalar_select %p729, %s21, 1
      %s731 = scalar_lea.vmem %s5, %s730
      // Predicated region
      $region45: #{resnet1d_forward.25} parent=31 // pred_check
        %p732 = pneg %p130
      $region46: #{resnet1d_forward.25} parent=31 // pred_check_branch
        %734 = sbr.rel (%p732) target = $region48
      $region47: #{resnet1d_forward.25} parent=31 // pred_region
        %s735 = smul.u32 2, %s22
      $region48: #{resnet1d_forward.25} parent=31 // pred_fallthru
        _
      // Predicated region
      $region49: #{resnet1d_forward.25} parent=31 // pred_check
        %p736 = pneg %p156
      $region50: #{resnet1d_forward.25} parent=31 // pred_check_branch
        %738 = sbr.rel (%p736) target = $region52
      $region51: #{resnet1d_forward.25} parent=31 // pred_region
        _
      $region52: #{resnet1d_forward.25} parent=31 // pred_fallthru
        _
      // Predicated region
      $region53: #{resnet1d_forward.25} parent=31 // pred_check
        %p739 = pneg %p182
      $region54: #{resnet1d_forward.25} parent=31 // pred_check_branch
        %741 = sbr.rel (%p739) target = $region56
      $region55: #{resnet1d_forward.25} parent=31 // pred_region
        _
      $region56: #{resnet1d_forward.25} parent=31 // pred_fallthru
        _
    $region32: #{resnet1d_forward.25} parent=5 // pred_fallthru
      _
    %p742 = scmp.le.s32.totalorder 2, %s12
    // Predicated region
    $region57: #{resnet1d_forward.25} parent=5 // pred_check
      %p743 = pneg %p742
    $region58: #{resnet1d_forward.25} parent=5 // pred_check_branch
      %745 = sbr.rel (%p743) target = $region60
    $region59: #{resnet1d_forward.25} parent=5 // pred_region
      %s746 = ssub.s32 %s12, 2
      // Predicated region
      $region61: #{resnet1d_forward.25} parent=59 // pred_check
        %p747 = pneg %p136
      $region62: #{resnet1d_forward.25} parent=59 // pred_check_branch
        %749 = sbr.rel (%p747) target = $region64
      $region63: #{resnet1d_forward.25} parent=59 // pred_region
        %s750 = smul.u32 2, %s24
        %p751 = scmp.lt.s32.totalorder %s23, 1
        %s752 = scalar_select %p751, %s23, 1
        %p753 = scmp.lt.s32.totalorder %s750, 1
        %s754 = scalar_select %p753, %s750, 1
        %s755 = smul.addr %s752, 2
        %s756 = sadd.s32 %s754, %s755
        %s757 = smul.addr %s756, 4
        %s758 = scalar_lea.vmem %s3, %s757
      $region64: #{resnet1d_forward.25} parent=59 // pred_fallthru
        _
      // Predicated region
      $region65: #{resnet1d_forward.25} parent=59 // pred_check
        %p759 = pneg %p162
      $region66: #{resnet1d_forward.25} parent=59 // pred_check_branch
        %761 = sbr.rel (%p759) target = $region68
      $region67: #{resnet1d_forward.25} parent=59 // pred_region
        %p762 = scmp.lt.s32.totalorder %s23, 1
        %s763 = scalar_select %p762, %s23, 1
        %s764 = scalar_lea.vmem %s4, %s763
      $region68: #{resnet1d_forward.25} parent=59 // pred_fallthru
        _
      // Predicated region
      $region69: #{resnet1d_forward.25} parent=59 // pred_check
        %p765 = pneg %p188
      $region70: #{resnet1d_forward.25} parent=59 // pred_check_branch
        %767 = sbr.rel (%p765) target = $region72
      $region71: #{resnet1d_forward.25} parent=59 // pred_region
        %p768 = scmp.lt.s32.totalorder %s23, 1
        %s769 = scalar_select %p768, %s23, 1
        %s770 = scalar_lea.vmem %s5, %s769
      $region72: #{resnet1d_forward.25} parent=59 // pred_fallthru
        _
    $region60: #{resnet1d_forward.25} parent=5 // pred_fallthru
      _
  $region6: #{resnet1d_forward.25} parent=0 // loop_footer
    %s16 = sadd.s32 1, %s12
  $region7: #{resnet1d_forward.25} parent=0 // loop_footer_branch
    %11 = sbr.rel target = $region3
  $region8: #{resnet1d_forward.25} parent=0 // loop_exit
    _

// kernel: resnet1d_forward.27
$region0: #{resnet1d_forward.27}
  #allocation0 [shape = 'u32[]', space=smem, size = 0x4, offset = 0x4, fixed_abs, tag = 'smem constant byte address 0x4 - core index']
  #allocation1 [shape = 'u32[144,128]{1,0:T(1,128)}', space=vmem, size = 0x12000, scoped, tag = 'internal scratch']
  #allocation2 [shape = 'f32[2,128]{1,0:T(2,128)}', space=vmem, size = 0x400, scoped, tag = 'scratch operand']
  #allocation3 [shape = 'f32[1,1]{1,0:T(1,128)S(1)}', space=vmem, size = 0x200, scoped, tag = 'scoped memory for resnet1d_forward.27']
  %s0 = inlined_call_operand.vmem [shape: bf16[2,16,128], index: 0, kind: input, shape index: {}]
  %s1 = inlined_call_operand.vmem [shape: f32[128,1], index: 1, kind: input, shape index: {}]
  %s2 = inlined_call_operand.<no memory space> [shape: f32[1,1], index: 2, kind: input, shape index: {}]
  %s3 = inlined_call_operand.vmem [shape: f32[2,1], index: 3, kind: output, shape index: {}]
  %s4 = sld [smem:[#allocation0]]
  $region30: #{resnet1d_forward.27} parent=0
    _
  %s6 = ssub.s32 1, %s4
  %s7 = scalar_select 0, %s6, %s4
  %v8 = vstv %s2
  %9 = vst [vmem:[#allocation3] sm:$0x1] %v8
  // Predicated region
  $region2: #{resnet1d_forward.27} parent=0 // pred_check
    _
  $region3: #{resnet1d_forward.27} parent=0 // pred_check_branch
    %11 = sbr.rel (0) target = $region5
  $region4: #{resnet1d_forward.27} parent=0 // pred_region
    _
  $region5: #{resnet1d_forward.27} parent=0 // pred_fallthru
    _
  // Predicated region
  $region6: #{resnet1d_forward.27} parent=0 // pred_check
    _
  $region7: #{resnet1d_forward.27} parent=0 // pred_check_branch
    %13 = sbr.rel (0) target = $region9
  $region8: #{resnet1d_forward.27} parent=0 // pred_region
    _
  $region9: #{resnet1d_forward.27} parent=0 // pred_fallthru
    _
  // Predicated region
  $region10: #{resnet1d_forward.27} parent=0 // pred_check
    _
  $region11: #{resnet1d_forward.27} parent=0 // pred_check_branch
    %15 = sbr.rel (0) target = $region13
  $region12: #{resnet1d_forward.27} parent=0 // pred_region
    _
  $region13: #{resnet1d_forward.27} parent=0 // pred_fallthru
    _
  %p16 = scmp.eq.s32.totalorder 0, 0
  // Predicated region
  $region14: #{resnet1d_forward.27} parent=0 // pred_check
    %p17 = pneg %p16
  $region15: #{resnet1d_forward.27} parent=0 // pred_check_branch
    %19 = sbr.rel (%p17) target = $region17
  $region16: #{resnet1d_forward.27} parent=0 // pred_region
    %20 = vst [vmem:[#allocation2] sm:$0x3] 0.0
  $region17: #{resnet1d_forward.27} parent=0 // pred_fallthru
    _
  %v21 = vld [vmem:[#allocation2] sm:$0x3]
  %v22 = vld [vmem:[%s0] sm:$0xf]
  %v23 = vld [vmem:[%s0 + $0x4] sm:$0xf]
  %v24 = vld [vmem:[%s0 + $0x8] sm:$0xf]
  %v25 = vld [vmem:[%s0 + $0xc] sm:$0xf]
  %v26 = vunpack.c.l.bf16 %v22
  %v27 = vunpack.c.l.bf16 %v23
  %v28 = vunpack.c.l.bf16 %v24
  %v29 = vunpack.c.l.bf16 %v25
  %v30 = vadd.f32 %v26, %v27
  %v31 = vrot.slane %v30, 4
  %v32 = vadd.f32 %v30, %v31
  %v33 = vrot.slane %v32, 2
  %v34 = vadd.f32 %v32, %v33
  %v35 = vrot.slane %v34, 1
  %v36 = vadd.f32 %v34, %v35
  %v37 = vadd.f32 %v28, %v29
  %v38 = vrot.slane %v37, 4
  %v39 = vadd.f32 %v37, %v38
  %v40 = vrot.slane %v39, 2
  %v41 = vadd.f32 %v39, %v40
  %v42 = vrot.slane %v41, 1
  %v43 = vadd.f32 %v41, %v42
  %vm46 = vcmask 1041409
  %v47 = vsel %vm46, %v43, %v36
  %v49 = vadd.f32 %v21, %v47
  %50 = vst [vmem:[#allocation2] sm:$0x3] %v49
  // Predicated region
  $region18: #{resnet1d_forward.27} parent=0 // pred_check
    %p51 = pneg %p16
  $region19: #{resnet1d_forward.27} parent=0 // pred_check_branch
    %53 = sbr.rel (%p51) target = $region21
  $region20: #{resnet1d_forward.27} parent=0 // pred_region
    %v54 = vld [vmem:[#allocation2] sm:$0x3]
    %v55 = vmul.f32 %v54, 0.07692308
    %v56 = vld [vmem:[%s1] sm:$0xff]
    %v57 = vld [vmem:[%s1 + $0x8] sm:$0xff]
    %v58 = vld [vmem:[%s1 + $0x10] sm:$0xff]
    %v59 = vld [vmem:[%s1 + $0x18] sm:$0xff]
    %v60 = vld [vmem:[%s1 + $0x20] sm:$0xff]
    %v61 = vld [vmem:[%s1 + $0x28] sm:$0xff]
    %v62 = vld [vmem:[%s1 + $0x30] sm:$0xff]
    %v63 = vld [vmem:[%s1 + $0x38] sm:$0xff]
    %v64 = vld [vmem:[%s1 + $0x40] sm:$0xff]
    %v65 = vld [vmem:[%s1 + $0x48] sm:$0xff]
    %v66 = vld [vmem:[%s1 + $0x50] sm:$0xff]
    %v67 = vld [vmem:[%s1 + $0x58] sm:$0xff]
    %v68 = vld [vmem:[%s1 + $0x60] sm:$0xff]
    %v69 = vld [vmem:[%s1 + $0x68] sm:$0xff]
    %v70 = vld [vmem:[%s1 + $0x70] sm:$0xff]
    %v71 = vld [vmem:[%s1 + $0x78] sm:$0xff]
    %v72 = vld [vmem:[#allocation3] sm:$0x1]
    %v74 = vlaneseq
    %v75 = vshrl.u32 %v74, 7
    %v76 = vsub.s32 0, %v75
    %v77 = vrot.slane %v72, %v76
    %79 = vmatprep.subr.mxu0 0.0
    %80 = vmatpush1.msra.mxu0 %v56
    %81 = vmatprep.subr.mxu0 0.0
    %82 = vmatpush1.msra.mxu0 %v57
    %83 = vmatprep.subr.mxu0 0.0
    %84 = vmatpush1.msra.mxu0 %v58
    %85 = vmatprep.subr.mxu0 0.0
    %86 = vmatpush1.msra.mxu0 %v59
    %87 = vmatprep.subr.mxu0 0.0
    %88 = vmatpush1.msra.mxu0 %v60
    %89 = vmatprep.subr.mxu0 0.0
    %90 = vmatpush1.msra.mxu0 %v61
    %91 = vmatprep.subr.mxu0 0.0
    %92 = vmatpush1.msra.mxu0 %v62
    %93 = vmatprep.subr.mxu0 0.0
    %94 = vmatpush1.msra.mxu0 %v63
    %95 = vmatprep.subr.mxu0 0.0
    %96 = vmatpush1.msra.mxu0 %v64
    %97 = vmatprep.subr.mxu0 0.0
    %98 = vmatpush1.msra.mxu0 %v65
    %99 = vmatprep.subr.mxu0 0.0
    %100 = vmatpush1.msra.mxu0 %v66
    %101 = vmatprep.subr.mxu0 0.0
    %102 = vmatpush1.msra.mxu0 %v67
    %103 = vmatprep.subr.mxu0 0.0
    %104 = vmatpush1.msra.mxu0 %v68
    %105 = vmatprep.subr.mxu0 0.0
    %106 = vmatpush1.msra.mxu0 %v69
    %107 = vmatprep.subr.mxu0 0.0
    %108 = vmatpush1.msra.mxu0 %v70
    %109 = vmatprep.subr.mxu0 0.0
    %110 = vmatpush1.msra.mxu0 %v71
    %111 = vmatprep.subr.mxu0 0.0
    %112 = vmatpush1.msra.mxu0 0.0
    %113 = vmatprep.subr.mxu0 0.0
    %114 = vmatpush1.msra.mxu0 0.0
    %115 = vmatprep.subr.mxu0 0.0
    %116 = vmatpush1.msra.mxu0 0.0
    %117 = vmatprep.subr.mxu0 0.0
    %118 = vmatpush1.msra.mxu0 0.0
    %119 = vmatprep.subr.mxu0 0.0
    %120 = vmatpush1.msra.mxu0 0.0
    %121 = vmatprep.subr.mxu0 0.0
    %122 = vmatpush1.msra.mxu0 0.0
    %123 = vmatprep.subr.mxu0 0.0
    %124 = vmatpush1.msra.mxu0 0.0
    %125 = vmatprep.subr.mxu0 0.0
    %126 = vmatpush1.msra.mxu0 0.0
    %127 = vmatprep.subr.mxu0 0.0
    %128 = vmatpush1.msra.mxu0 0.0
    %129 = vmatprep.subr.mxu0 0.0
    %130 = vmatpush1.msra.mxu0 0.0
    %131 = vmatprep.subr.mxu0 0.0
    %132 = vmatpush1.msra.mxu0 0.0
    %133 = vmatprep.subr.mxu0 0.0
    %134 = vmatpush1.msra.mxu0 0.0
    %135 = vmatprep.subr.mxu0 0.0
    %136 = vmatpush1.msra.mxu0 0.0
    %137 = vmatprep.subr.mxu0 0.0
    %138 = vmatpush1.msra.mxu0 0.0
    %139 = vmatprep.subr.mxu0 0.0
    %140 = vmatpush1.msra.mxu0 0.0
    %141 = vmatprep.subr.mxu0 0.0
    %142 = vmatpush1.msra.mxu0 0.0
    %143 = vmatprep.mubr.f32.mxu0 0.0
    %144 = vmatmul.mubr.f32.gmra.mrb[0].mxu0 %v55
    %v145 = vpop.f32.mrb[0].mxu0
    %v146 = vadd.f32 %v77, %v145
    %v147 = vpop.f32.mrb[0].mxu0
    %148 = vdwg.mxu0
    %v149 = vsub.f32 0.0, %v146
    %v150 = vmul.f32 %v149, 1.442695
    %v151 = vpow.pop %v150
    %v152 = vadd.f32 %v151, 1.0
    %v153 = vrcp.pop %v152
    %v154 = vmul.f32 1.0, %v153
    %vm155 = vcmask 1024
    %156 = vst.msk [vmem:[%s3] sm:$0x3] %vm155, %v154
  $region21: #{resnet1d_forward.27} parent=0 // pred_fallthru
    _
  // Predicated region
  $region22: #{resnet1d_forward.27} parent=0 // pred_check
    _
  $region23: #{resnet1d_forward.27} parent=0 // pred_check_branch
    %158 = sbr.rel (0) target = $region25
  $region24: #{resnet1d_forward.27} parent=0 // pred_region
    _
  $region25: #{resnet1d_forward.27} parent=0 // pred_fallthru
    _
  // Predicated region
  $region26: #{resnet1d_forward.27} parent=0 // pred_check
    _
  $region27: #{resnet1d_forward.27} parent=0 // pred_check_branch
    %160 = sbr.rel (0) target = $region29
  $region28: #{resnet1d_forward.27} parent=0 // pred_region
    _
  $region29: #{resnet1d_forward.27} parent=0 // pred_fallthru
    _

</llo_original>
